<compile_context>
chip_gen: v6e
topology: v6e:2x2x1
jax: 0.10.0
libtpu: 0.0.40
codegen_flags: <defaults>
</compile_context>

<pallas_src>
import functools

import jax
import jax.numpy as jnp
from jax.experimental import pallas as pl
from jax.experimental.pallas import tpu as pltpu

VMEM_LIMIT = 32 * 1024 * 1024   # safe on v5e/v6e (128 MiB) and v7x (64 MiB physical)
_LANE = 128
_SUBLANE = 8


def _round_up(n, m):
    return ((n + m - 1) // m) * m


def _pad2d(a, rows, cols):
    return jnp.pad(a, ((0, rows - a.shape[0]), (0, cols - a.shape[1])))


# ---------------------------------------------------------------------------
# Pallas kernels
# ---------------------------------------------------------------------------
def _conv_kernel(p_ref, w_ref, b_ref, o_ref, *, leaky):
    # im2col patches (bf16) x weights (bf16) on the MXU, f32 accumulate,
    # fused bias and (optional) LeakyReLU(0.2).
    y = jnp.dot(p_ref[...], w_ref[...], preferred_element_type=jnp.float32)
    y = y + b_ref[...]
    if leaky:
        y = jnp.where(y >= 0, y, 0.2 * y)
    o_ref[...] = y


def _conv_bn_stat_kernel(p_ref, w_ref, y_ref, s_ref, q_ref):
    # Conv (no bias) + cross-tile accumulation of per-channel sum / sum-of-squares
    # for training-mode BatchNorm.  s_ref/q_ref use a constant index_map so the
    # (1, C) block stays resident across the (arbitrary) M grid axis.
    i = pl.program_id(0)
    y = jnp.dot(p_ref[...], w_ref[...], preferred_element_type=jnp.float32)
    y_ref[...] = y

    @pl.when(i == 0)
    def _init():
        s_ref[...] = jnp.zeros_like(s_ref)
        q_ref[...] = jnp.zeros_like(q_ref)

    s_ref[...] += jnp.sum(y, axis=0, keepdims=True)
    q_ref[...] += jnp.sum(y * y, axis=0, keepdims=True)


def _bn_act_kernel(y_ref, sc_ref, sh_ref, o_ref):
    # y * scale + shift  (folded BatchNorm) followed by LeakyReLU(0.2).
    v = y_ref[...] * sc_ref[...] + sh_ref[...]
    o_ref[...] = jnp.where(v >= 0, v, 0.2 * v)


def _make_blur_kernel(fuse_bn_act):
    # Antialiasing Downsample: 3x3 [1,2,1]x[1,2,1]/16 depthwise blur with stride 2,
    # expressed on the four (even/odd) phases of the reflection-padded input so the
    # kernel only uses contiguous unit-stride slices (pure VPU work, channels on lanes).
    # Optionally fuses the preceding BatchNorm (scale/shift) + LeakyReLU.
    def kernel(*refs):
        if fuse_bn_act:
            ee_ref, eo_ref, oe_ref, oo_ref, sc_ref, sh_ref, o_ref = refs
        else:
            ee_ref, eo_ref, oe_ref, oo_ref, o_ref = refs

        def pre(v):
            if fuse_bn_act:
                v = v * sc_ref[...] + sh_ref[...]
                v = jnp.where(v >= 0, v, 0.2 * v)
            return v

        ee = pre(ee_ref[...])
        eo = pre(eo_ref[...])
        oe = pre(oe_ref[...])
        oo = pre(oo_ref[...])
        ho, wo = oo.shape[1], oo.shape[2]
        s = (ee[:, :ho, :wo, :] + ee[:, :ho, 1:, :]
             + ee[:, 1:, :wo, :] + ee[:, 1:, 1:, :]
             + 2.0 * (eo[:, :ho, :, :] + eo[:, 1:, :, :])
             + 2.0 * (oe[:, :, :wo, :] + oe[:, :, 1:, :])
             + 4.0 * oo)
        o_ref[...] = s * (1.0 / 16.0)

    return kernel


# ---------------------------------------------------------------------------
# Tiled matmul drivers
# ---------------------------------------------------------------------------
def _matmul_layout(patches, w_mat):
    m, k = patches.shape
    cout = w_mat.shape[1]
    tile_m = min(512, _round_up(m, _SUBLANE))
    mp = _round_up(m, tile_m)
    kp = _round_up(k, _LANE)
    return m, k, cout, tile_m, mp, kp


def _conv_matmul(patches, w_mat, bias, *, leaky):
    m, k, cout, tile_m, mp, kp = _matmul_layout(patches, w_mat)
    cout_p = _round_up(cout, _LANE)      # lane-dense output stores for small C_out
    p = _pad2d(patches.astype(jnp.bfloat16), mp, kp)
    w = _pad2d(w_mat.astype(jnp.bfloat16), kp, cout_p)
    b = _pad2d(bias.astype(jnp.float32).reshape(1, cout), 1, cout_p)

    y = pl.pallas_call(
        functools.partial(_conv_kernel, leaky=leaky),
        out_shape=jax.ShapeDtypeStruct((mp, cout_p), jnp.float32),
        grid=(mp // tile_m,),
        in_specs=[pl.BlockSpec((tile_m, kp), lambda i: (i, 0)),
                  pl.BlockSpec((kp, cout_p), lambda i: (0, 0)),
                  pl.BlockSpec((1, cout_p), lambda i: (0, 0))],
        out_specs=pl.BlockSpec((tile_m, cout_p), lambda i: (i, 0)),
        compiler_params=pltpu.CompilerParams(
            dimension_semantics=("parallel",), vmem_limit_bytes=VMEM_LIMIT),
    )(p, w, b)
    return y[:m, :cout]


def _conv_bn_matmul(patches, w_mat, gamma, beta, m_real):
    m, k, cout, tile_m, mp, kp = _matmul_layout(patches, w_mat)
    p = _pad2d(patches.astype(jnp.bfloat16), mp, kp)
    w = _pad2d(w_mat.astype(jnp.bfloat16), kp, cout)

    y, s, q = pl.pallas_call(
        _conv_bn_stat_kernel,
        out_shape=(jax.ShapeDtypeStruct((mp, cout), jnp.float32),
                   jax.ShapeDtypeStruct((1, cout), jnp.float32),
                   jax.ShapeDtypeStruct((1, cout), jnp.float32)),
        grid=(mp // tile_m,),
        in_specs=[pl.BlockSpec((tile_m, kp), lambda i: (i, 0)),
                  pl.BlockSpec((kp, cout), lambda i: (0, 0))],
        out_specs=(pl.BlockSpec((tile_m, cout), lambda i: (i, 0)),
                   pl.BlockSpec((1, cout), lambda i: (0, 0)),
                   pl.BlockSpec((1, cout), lambda i: (0, 0))),
        compiler_params=pltpu.CompilerParams(
            dimension_semantics=("arbitrary",),   # accumulator outputs revisit block 0
            vmem_limit_bytes=VMEM_LIMIT),
    )(p, w)

    # training-mode BatchNorm: batch stats, biased variance, eps=1e-5
    mean = s[0] / m_real
    var = q[0] / m_real - mean * mean
    scale = gamma * jax.lax.rsqrt(var + 1e-5)
    shift = beta - mean * scale
    return y[:m], scale, shift


# ---------------------------------------------------------------------------
# Layer wrappers (NHWC internal layout)
# ---------------------------------------------------------------------------
def _im2col_nhwc(xp, ho, wo):
    # xp: zero-padded (P, Hp, Wp, C); k=4, stride=1.  K ordered (kh, kw, c).
    cols = []
    for i in range(4):
        for j in range(4):
            cols.append(xp[:, i:i + ho, j:j + wo, :])
    cols = jnp.concatenate(cols, axis=-1)
    return cols.reshape(-1, cols.shape[-1])


def _conv2d_k4s1p1(x, w, b, *, leaky):
    p_, h_, w_sp, cin = x.shape
    cout = w.shape[0]
    ho, wo = h_ - 1, w_sp - 1
    xp = jnp.pad(x, ((0, 0), (1, 1), (1, 1), (0, 0)))
    patches = _im2col_nhwc(xp, ho, wo)
    w_mat = jnp.transpose(w, (2, 3, 1, 0)).reshape(16 * cin, cout)
    y = _conv_matmul(patches, w_mat, b, leaky=leaky)
    return y.reshape(p_, ho, wo, cout)


def _conv2d_bn_k4s1p1(x, w, gamma, beta):
    p_, h_, w_sp, cin = x.shape
    cout = w.shape[0]
    ho, wo = h_ - 1, w_sp - 1
    xp = jnp.pad(x, ((0, 0), (1, 1), (1, 1), (0, 0)))
    patches = _im2col_nhwc(xp, ho, wo)
    w_mat = jnp.transpose(w, (2, 3, 1, 0)).reshape(16 * cin, cout)
    y, scale, shift = _conv_bn_matmul(patches, w_mat, gamma, beta,
                                      float(p_ * ho * wo))
    return y.reshape(p_, ho, wo, cout), scale, shift


def _blur_downsample(x, scale=None, shift=None):
    # Downsample(channels): ReflectionPad2d(1) + depthwise [1,2,1]^T[1,2,1]/16, stride 2.
    # If scale/shift are given, BatchNorm + LeakyReLU are fused onto the inputs
    # (valid: reflection padding copies values, so elementwise ops commute with it).
    p_, h_, w_sp, c = x.shape
    assert h_ % 2 == 1 and w_sp % 2 == 1
    ho, wo = (h_ - 1) // 2 + 1, (w_sp - 1) // 2 + 1

    xp = jnp.pad(x, ((0, 0), (1, 1), (1, 1), (0, 0)), mode="reflect")
    ee = xp[:, 0::2, 0::2, :]
    eo = xp[:, 0::2, 1::2, :]
    oe = xp[:, 1::2, 0::2, :]
    oo = xp[:, 1::2, 1::2, :]
    assert ee.shape[1:3] == (ho + 1, wo + 1) and oo.shape[1:3] == (ho, wo)

    tp = min(8, p_)
    pp = _round_up(p_, tp)

    def _padp(a):
        return jnp.pad(a, ((0, pp - p_), (0, 0), (0, 0), (0, 0)))

    phases = [_padp(a) for a in (ee, eo, oe, oo)]
    fused = scale is not None
    args = list(phases)
    in_specs = [pl.BlockSpec((tp,) + a.shape[1:], lambda i: (i, 0, 0, 0))
                for a in phases]
    if fused:
        args += [scale.reshape(1, 1, 1, c), shift.reshape(1, 1, 1, c)]
        in_specs += [pl.BlockSpec((1, 1, 1, c), lambda i: (0, 0, 0, 0))] * 2

    out = pl.pallas_call(
        _make_blur_kernel(fused),
        out_shape=jax.ShapeDtypeStruct((pp, ho, wo, c), jnp.float32),
        grid=(pp // tp,),
        in_specs=in_specs,
        out_specs=pl.BlockSpec((tp, ho, wo, c), lambda i: (i, 0, 0, 0)),
        compiler_params=pltpu.CompilerParams(
            dimension_semantics=("parallel",), vmem_limit_bytes=VMEM_LIMIT),
    )(*args)
    return out[:p_]


def _bn_act(x, scale, shift):
    p_, h_, w_sp, c = x.shape
    m = p_ * h_ * w_sp
    tile_m = min(1024, _round_up(m, _SUBLANE))
    mp = _round_up(m, tile_m)
    y = _pad2d(x.reshape(m, c), mp, c)
    out = pl.pallas_call(
        _bn_act_kernel,
        out_shape=jax.ShapeDtypeStruct((mp, c), jnp.float32),
        grid=(mp // tile_m,),
        in_specs=[pl.BlockSpec((tile_m, c), lambda i: (i, 0)),
                  pl.BlockSpec((1, c), lambda i: (0, 0)),
                  pl.BlockSpec((1, c), lambda i: (0, 0))],
        out_specs=pl.BlockSpec((tile_m, c), lambda i: (i, 0)),
        compiler_params=pltpu.CompilerParams(
            dimension_semantics=("parallel",), vmem_limit_bytes=VMEM_LIMIT),
    )(y, scale.reshape(1, c), shift.reshape(1, c))
    return out[:m].reshape(p_, h_, w_sp, c)


# ---------------------------------------------------------------------------
# Full forward
# ---------------------------------------------------------------------------
def patch_discriminator_forward(x, params):
    """x: (B, C, H, W) f32, H/W multiples of 16.  Returns (B*Y*X, 1, 2, 2)."""
    b, c, h, w = x.shape
    size = 16
    yy, xx = h // size, w // size
    # PatchDiscriminator.forward patchification (view/permute/view)
    patches = (x.reshape(b, c, yy, size, xx, size)
                 .transpose(0, 2, 4, 1, 3, 5)
                 .reshape(b * yy * xx, c, size, size))
    # TODO(synk): NLayerDiscriminator.forward applies `input.unsqueeze(1)`, which would
    # feed a 5-D tensor to Conv2d and fail in PyTorch; treated as a no-op so the module
    # has a runnable forward (the 4-D patch batch is fed to the conv stack directly).
    h_act = jnp.transpose(patches, (0, 2, 3, 1))            # NHWC internally

    # Conv(C -> ndf) + bias + LeakyReLU (fused), then antialias Downsample
    h_act = _conv2d_k4s1p1(h_act, params["w1"], params["b1"], leaky=True)
    h_act = _blur_downsample(h_act)

    # Conv(ndf -> 2ndf, no bias) + BN stats; BN + LeakyReLU fused into Downsample blur
    h_act, sc2, sh2 = _conv2d_bn_k4s1p1(h_act, params["w2"], params["g2"], params["be2"])
    h_act = _blur_downsample(h_act, sc2, sh2)

    # Conv(2ndf -> 4ndf, no bias) + BN + LeakyReLU
    h_act, sc3, sh3 = _conv2d_bn_k4s1p1(h_act, params["w3"], params["g3"], params["be3"])
    h_act = _bn_act(h_act, sc3, sh3)

    # Conv(4ndf -> 1) + bias: PatchGAN logits
    h_act = _conv2d_k4s1p1(h_act, params["w4"], params["b4"], leaky=False)

    return jnp.transpose(h_act, (0, 3, 1, 2))               # NCHW (B*Y*X, 1, 2, 2)


# ---------------------------------------------------------------------------
# Driver
# ---------------------------------------------------------------------------
if __name__ == "__main__":
    input_nc, ndf = 3, 64
    B, H, W = 2, 32, 32

    key = jax.random.PRNGKey(0)
    ks = jax.random.split(key, 7)
    x = jax.random.normal(ks[0], (B, input_nc, H, W), jnp.float32)
    params = {
        # Conv2d(input_nc, ndf, 4, 1, 1) (bias=True)
        "w1": 0.05 * jax.random.normal(ks[1], (ndf, input_nc, 4, 4), jnp.float32),
        "b1": 0.05 * jax.random.normal(ks[2], (ndf,), jnp.float32),
        # Conv2d(ndf, 2ndf, 4, 1, 1, bias=False) + BatchNorm2d(2ndf)
        "w2": 0.05 * jax.random.normal(ks[3], (2 * ndf, ndf, 4, 4), jnp.float32),
        "g2": jnp.ones((2 * ndf,), jnp.float32),
        "be2": jnp.zeros((2 * ndf,), jnp.float32),
        # Conv2d(2ndf, 4ndf, 4, 1, 1, bias=False) + BatchNorm2d(4ndf)
        "w3": 0.05 * jax.random.normal(ks[4], (4 * ndf, 2 * ndf, 4, 4), jnp.float32),
        "g3": jnp.ones((4 * ndf,), jnp.float32),
        "be3": jnp.zeros((4 * ndf,), jnp.float32),
        # Conv2d(4ndf, 1, 4, 1, 1) (bias=True)
        "w4": 0.05 * jax.random.normal(ks[5], (1, 4 * ndf, 4, 4), jnp.float32),
        "b4": 0.05 * jax.random.normal(ks[6], (1,), jnp.float32),
    }

    fwd = jax.jit(patch_discriminator_forward)
    out = fwd(x, params)
    jax.block_until_ready(out)

    P = B * (H // 16) * (W // 16)
    assert out.shape == (P, 1, 2, 2), out.shape
    print("KERNEL_OK")
</pallas_src>

<mosaic_0001>
module attributes {stable_mosaic.version = 11 : i64} {
  func.func @_conv_kernel(%arg0: i32, %arg1: memref<512x128xbf16, #tpu.memory_space<vmem>>, %arg2: memref<128x128xbf16, #tpu.memory_space<vmem>>, %arg3: memref<1x128xf32, #tpu.memory_space<vmem>>, %arg4: memref<512x128xf32, #tpu.memory_space<vmem>>) attributes {dimension_semantics = [#tpu.dimension_semantics<parallel>], iteration_bounds = array<i64: 4>, scalar_prefetch = 0 : i64, scratch_operands = 0 : i64, tpu.core_type = #tpu.core_type<tc>, window_params = [{transform_indices = @transform_0, window_bounds = array<i64: 512, 128>}, {pipeline_mode = #tpu.pipeline_mode<synchronous>, transform_indices = @transform_1, window_bounds = array<i64: 128, 128>}, {pipeline_mode = #tpu.pipeline_mode<synchronous>, transform_indices = @transform_2, window_bounds = array<i64: 1, 128>}, {transform_indices = @transform_3, window_bounds = array<i64: 512, 128>}]} {
    %c0 = arith.constant 0 : index
    %c0_0 = arith.constant 0 : index
    %0 = vector.load %arg1[%c0, %c0_0] : memref<512x128xbf16, #tpu.memory_space<vmem>>, vector<512x128xbf16>
    %c0_1 = arith.constant 0 : index
    %c0_2 = arith.constant 0 : index
    %1 = vector.load %arg2[%c0_1, %c0_2] : memref<128x128xbf16, #tpu.memory_space<vmem>>, vector<128x128xbf16>
    %cst = arith.constant dense<0.000000e+00> : vector<512x128xf32>
    %2 = tpu.matmul %0, %1, %cst {dimension_numbers = #tpu.dot_dimension_numbers<[1], [0], [0], [1], [0, 0, 1, 1], [], []>} : vector<512x128xbf16>, vector<128x128xbf16>, vector<512x128xf32> -> vector<512x128xf32>
    %c0_3 = arith.constant 0 : index
    %c0_4 = arith.constant 0 : index
    %3 = vector.load %arg3[%c0_3, %c0_4] : memref<1x128xf32, #tpu.memory_space<vmem>>, vector<1x128xf32>
    %4 = vector.broadcast %3 : vector<1x128xf32> to vector<512x128xf32>
    %5 = arith.addf %2, %4 : vector<512x128xf32>
    %cst_5 = arith.constant 0.000000e+00 : f32
    %6 = vector.broadcast %cst_5 : f32 to vector<512x128xf32>
    %7 = arith.cmpf oge, %5, %6 : vector<512x128xf32>
    %cst_6 = arith.constant 2.000000e-01 : f32
    %8 = vector.broadcast %cst_6 : f32 to vector<512x128xf32>
    %9 = arith.mulf %8, %5 : vector<512x128xf32>
    %10 = arith.select %7, %5, %9 : vector<512x128xi1>, vector<512x128xf32>
    %c0_7 = arith.constant 0 : index
    %c0_8 = arith.constant 0 : index
    %11 = vector.load %arg4[%c0_7, %c0_8] : memref<512x128xf32, #tpu.memory_space<vmem>>, vector<512x128xf32>
    tpu.vector_store %arg4[%c0_7, %c0_8], %10 {strides = array<i32>} : memref<512x128xf32, #tpu.memory_space<vmem>>, vector<512x128xf32>,
    return
  }
  func.func @transform_0(%arg0: i32) -> (i32, i32) {
    %c0_i32 = arith.constant 0 : i32
    %c0_i32_0 = arith.constant 0 : i32
    return %arg0, %c0_i32 : i32, i32
  }
  func.func @transform_1(%arg0: i32) -> (i32, i32) {
    %c0_i32 = arith.constant 0 : i32
    %c0_i32_0 = arith.constant 0 : i32
    %c0_i32_1 = arith.constant 0 : i32
    return %c0_i32, %c0_i32_0 : i32, i32
  }
  func.func @transform_2(%arg0: i32) -> (i32, i32) {
    %c0_i32 = arith.constant 0 : i32
    %c0_i32_0 = arith.constant 0 : i32
    %c0_i32_1 = arith.constant 0 : i32
    return %c0_i32, %c0_i32_0 : i32, i32
  }
  func.func @transform_3(%arg0: i32) -> (i32, i32) {
    %c0_i32 = arith.constant 0 : i32
    %c0_i32_0 = arith.constant 0 : i32
    return %arg0, %c0_i32 : i32, i32
  }
}

module attributes {stable_mosaic.version = 11 : i64} {
  func.func @kernel(%arg0: i32, %arg1: memref<8x9x9x64xf32, #tpu.memory_space<vmem>>, %arg2: memref<8x9x8x64xf32, #tpu.memory_space<vmem>>, %arg3: memref<8x8x9x64xf32, #tpu.memory_space<vmem>>, %arg4: memref<8x8x8x64xf32, #tpu.memory_space<vmem>>, %arg5: memref<8x8x8x64xf32, #tpu.memory_space<vmem>>) attributes {dimension_semantics = [#tpu.dimension_semantics<parallel>], iteration_bounds = array<i64: 1>, scalar_prefetch = 0 : i64, scratch_operands = 0 : i64, tpu.core_type = #tpu.core_type<tc>, window_params = [{transform_indices = @transform_0, window_bounds = array<i64: 8, 9, 9, 64>}, {transform_indices = @transform_1, window_bounds = array<i64: 8, 9, 8, 64>}, {transform_indices = @transform_2, window_bounds = array<i64: 8, 8, 9, 64>}, {transform_indices = @transform_3, window_bounds = array<i64: 8, 8, 8, 64>}, {transform_indices = @transform_4, window_bounds = array<i64: 8, 8, 8, 64>}]} {
    %c0 = arith.constant 0 : index
    %c0_0 = arith.constant 0 : index
    %c0_1 = arith.constant 0 : index
    %c0_2 = arith.constant 0 : index
    %0 = vector.load %arg1[%c0, %c0_0, %c0_1, %c0_2] : memref<8x9x9x64xf32, #tpu.memory_space<vmem>>, vector<8x9x9x64xf32>
    %c0_3 = arith.constant 0 : index
    %c0_4 = arith.constant 0 : index
    %c0_5 = arith.constant 0 : index
    %c0_6 = arith.constant 0 : index
    %1 = vector.load %arg2[%c0_3, %c0_4, %c0_5, %c0_6] : memref<8x9x8x64xf32, #tpu.memory_space<vmem>>, vector<8x9x8x64xf32>
    %c0_7 = arith.constant 0 : index
    %c0_8 = arith.constant 0 : index
    %c0_9 = arith.constant 0 : index
    %c0_10 = arith.constant 0 : index
    %2 = vector.load %arg3[%c0_7, %c0_8, %c0_9, %c0_10] : memref<8x8x9x64xf32, #tpu.memory_space<vmem>>, vector<8x8x9x64xf32>
    %c0_11 = arith.constant 0 : index
    %c0_12 = arith.constant 0 : index
    %c0_13 = arith.constant 0 : index
    %c0_14 = arith.constant 0 : index
    %3 = vector.load %arg4[%c0_11, %c0_12, %c0_13, %c0_14] : memref<8x8x8x64xf32, #tpu.memory_space<vmem>>, vector<8x8x8x64xf32>
    %4 = vector.extract_strided_slice %0 {offsets = [0, 0, 0, 0], sizes = [8, 8, 8, 64], strides = [1, 1, 1, 1]} : vector<8x9x9x64xf32> to vector<8x8x8x64xf32>
    %5 = vector.extract_strided_slice %0 {offsets = [0, 0, 1, 0], sizes = [8, 8, 8, 64], strides = [1, 1, 1, 1]} : vector<8x9x9x64xf32> to vector<8x8x8x64xf32>
    %6 = arith.addf %4, %5 : vector<8x8x8x64xf32>
    %7 = vector.extract_strided_slice %0 {offsets = [0, 1, 0, 0], sizes = [8, 8, 8, 64], strides = [1, 1, 1, 1]} : vector<8x9x9x64xf32> to vector<8x8x8x64xf32>
    %8 = arith.addf %6, %7 : vector<8x8x8x64xf32>
    %9 = vector.extract_strided_slice %0 {offsets = [0, 1, 1, 0], sizes = [8, 8, 8, 64], strides = [1, 1, 1, 1]} : vector<8x9x9x64xf32> to vector<8x8x8x64xf32>
    %10 = arith.addf %8, %9 : vector<8x8x8x64xf32>
    %11 = vector.extract_strided_slice %1 {offsets = [0, 0, 0, 0], sizes = [8, 8, 8, 64], strides = [1, 1, 1, 1]} : vector<8x9x8x64xf32> to vector<8x8x8x64xf32>
    %12 = vector.extract_strided_slice %1 {offsets = [0, 1, 0, 0], sizes = [8, 8, 8, 64], strides = [1, 1, 1, 1]} : vector<8x9x8x64xf32> to vector<8x8x8x64xf32>
    %13 = arith.addf %11, %12 : vector<8x8x8x64xf32>
    %cst = arith.constant 2.000000e+00 : f32
    %14 = vector.broadcast %cst : f32 to vector<8x8x8x64xf32>
    %15 = arith.mulf %14, %13 : vector<8x8x8x64xf32>
    %16 = arith.addf %10, %15 : vector<8x8x8x64xf32>
    %17 = vector.extract_strided_slice %2 {offsets = [0, 0, 0, 0], sizes = [8, 8, 8, 64], strides = [1, 1, 1, 1]} : vector<8x8x9x64xf32> to vector<8x8x8x64xf32>
    %18 = vector.extract_strided_slice %2 {offsets = [0, 0, 1, 0], sizes = [8, 8, 8, 64], strides = [1, 1, 1, 1]} : vector<8x8x9x64xf32> to vector<8x8x8x64xf32>
    %19 = arith.addf %17, %18 : vector<8x8x8x64xf32>
    %cst_15 = arith.constant 2.000000e+00 : f32
    %20 = vector.broadcast %cst_15 : f32 to vector<8x8x8x64xf32>
    %21 = arith.mulf %20, %19 : vector<8x8x8x64xf32>
    %22 = arith.addf %16, %21 : vector<8x8x8x64xf32>
    %cst_16 = arith.constant 4.000000e+00 : f32
    %23 = vector.broadcast %cst_16 : f32 to vector<8x8x8x64xf32>
    %24 = arith.mulf %23, %3 : vector<8x8x8x64xf32>
    %25 = arith.addf %22, %24 : vector<8x8x8x64xf32>
    %cst_17 = arith.constant 6.250000e-02 : f32
    %26 = vector.broadcast %cst_17 : f32 to vector<8x8x8x64xf32>
    %27 = arith.mulf %25, %26 : vector<8x8x8x64xf32>
    %c0_18 = arith.constant 0 : index
    %c0_19 = arith.constant 0 : index
    %c0_20 = arith.constant 0 : index
    %c0_21 = arith.constant 0 : index
    %28 = vector.load %arg5[%c0_18, %c0_19, %c0_20, %c0_21] : memref<8x8x8x64xf32, #tpu.memory_space<vmem>>, vector<8x8x8x64xf32>
    tpu.vector_store %arg5[%c0_18, %c0_19, %c0_20, %c0_21], %27 {strides = array<i32>} : memref<8x8x8x64xf32, #tpu.memory_space<vmem>>, vector<8x8x8x64xf32>,
    return
  }
  func.func @transform_0(%arg0: i32) -> (i32, i32, i32, i32) {
    %c0_i32 = arith.constant 0 : i32
    %c0_i32_0 = arith.constant 0 : i32
    %c0_i32_1 = arith.constant 0 : i32
    %c0_i32_2 = arith.constant 0 : i32
    return %arg0, %c0_i32, %c0_i32_0, %c0_i32_1 : i32, i32, i32, i32
  }
  func.func @transform_1(%arg0: i32) -> (i32, i32, i32, i32) {
    %c0_i32 = arith.constant 0 : i32
    %c0_i32_0 = arith.constant 0 : i32
    %c0_i32_1 = arith.constant 0 : i32
    %c0_i32_2 = arith.constant 0 : i32
    return %arg0, %c0_i32, %c0_i32_0, %c0_i32_1 : i32, i32, i32, i32
  }
  func.func @transform_2(%arg0: i32) -> (i32, i32, i32, i32) {
    %c0_i32 = arith.constant 0 : i32
    %c0_i32_0 = arith.constant 0 : i32
    %c0_i32_1 = arith.constant 0 : i32
    %c0_i32_2 = arith.constant 0 : i32
    return %arg0, %c0_i32, %c0_i32_0, %c0_i32_1 : i32, i32, i32, i32
  }
  func.func @transform_3(%arg0: i32) -> (i32, i32, i32, i32) {
    %c0_i32 = arith.constant 0 : i32
    %c0_i32_0 = arith.constant 0 : i32
    %c0_i32_1 = arith.constant 0 : i32
    %c0_i32_2 = arith.constant 0 : i32
    return %arg0, %c0_i32, %c0_i32_0, %c0_i32_1 : i32, i32, i32, i32
  }
  func.func @transform_4(%arg0: i32) -> (i32, i32, i32, i32) {
    %c0_i32 = arith.constant 0 : i32
    %c0_i32_0 = arith.constant 0 : i32
    %c0_i32_1 = arith.constant 0 : i32
    %c0_i32_2 = arith.constant 0 : i32
    return %arg0, %c0_i32, %c0_i32_0, %c0_i32_1 : i32, i32, i32, i32
  }
}

module attributes {stable_mosaic.version = 11 : i64} {
  func.func @_conv_bn_stat_kernel(%arg0: i32, %arg1: memref<392x1024xbf16, #tpu.memory_space<vmem>>, %arg2: memref<1024x128xbf16, #tpu.memory_space<vmem>>, %arg3: memref<392x128xf32, #tpu.memory_space<vmem>>, %arg4: memref<1x128xf32, #tpu.memory_space<vmem>>, %arg5: memref<1x128xf32, #tpu.memory_space<vmem>>) attributes {dimension_semantics = [#tpu.dimension_semantics<arbitrary>], iteration_bounds = array<i64: 1>, scalar_prefetch = 0 : i64, scratch_operands = 0 : i64, tpu.core_type = #tpu.core_type<tc>, window_params = [{transform_indices = @transform_0, window_bounds = array<i64: 392, 1024>}, {pipeline_mode = #tpu.pipeline_mode<synchronous>, transform_indices = @transform_1, window_bounds = array<i64: 1024, 128>}, {transform_indices = @transform_2, window_bounds = array<i64: 392, 128>}, {pipeline_mode = #tpu.pipeline_mode<synchronous>, transform_indices = @transform_3, window_bounds = array<i64: 1, 128>}, {pipeline_mode = #tpu.pipeline_mode<synchronous>, transform_indices = @transform_4, window_bounds = array<i64: 1, 128>}]} {
    %c0 = arith.constant 0 : index
    %c0_0 = arith.constant 0 : index
    %0 = vector.load %arg1[%c0, %c0_0] : memref<392x1024xbf16, #tpu.memory_space<vmem>>, vector<392x1024xbf16>
    %c0_1 = arith.constant 0 : index
    %c0_2 = arith.constant 0 : index
    %1 = vector.load %arg2[%c0_1, %c0_2] : memref<1024x128xbf16, #tpu.memory_space<vmem>>, vector<1024x128xbf16>
    %cst = arith.constant dense<0.000000e+00> : vector<392x128xf32>
    %2 = tpu.matmul %0, %1, %cst {dimension_numbers = #tpu.dot_dimension_numbers<[1], [0], [0], [1], [0, 0, 1, 1], [], []>} : vector<392x1024xbf16>, vector<1024x128xbf16>, vector<392x128xf32> -> vector<392x128xf32>
    %c0_3 = arith.constant 0 : index
    %c0_4 = arith.constant 0 : index
    %3 = vector.load %arg3[%c0_3, %c0_4] : memref<392x128xf32, #tpu.memory_space<vmem>>, vector<392x128xf32>
    tpu.vector_store %arg3[%c0_3, %c0_4], %2 {strides = array<i32>} : memref<392x128xf32, #tpu.memory_space<vmem>>, vector<392x128xf32>,
    %c0_i32 = arith.constant 0 : i32
    %4 = arith.cmpi eq, %arg0, %c0_i32 : i32
    %5 = arith.extui %4 : i1 to i32
    %c0_i32_5 = arith.constant 0 : i32
    %6 = arith.cmpi ne, %5, %c0_i32_5 : i32
    scf.if %6 {
      %cst_16 = arith.constant 0.000000e+00 : f32
      %18 = vector.broadcast %cst_16 : f32 to vector<1x128xf32>
      %c0_17 = arith.constant 0 : index
      %c0_18 = arith.constant 0 : index
      %19 = vector.load %arg4[%c0_17, %c0_18] : memref<1x128xf32, #tpu.memory_space<vmem>>, vector<1x128xf32>
      tpu.vector_store %arg4[%c0_17, %c0_18], %18 {strides = array<i32>} : memref<1x128xf32, #tpu.memory_space<vmem>>, vector<1x128xf32>,
      %cst_19 = arith.constant 0.000000e+00 : f32
      %20 = vector.broadcast %cst_19 : f32 to vector<1x128xf32>
      %c0_20 = arith.constant 0 : index
      %c0_21 = arith.constant 0 : index
      %21 = vector.load %arg5[%c0_20, %c0_21] : memref<1x128xf32, #tpu.memory_space<vmem>>, vector<1x128xf32>
      tpu.vector_store %arg5[%c0_20, %c0_21], %20 {strides = array<i32>} : memref<1x128xf32, #tpu.memory_space<vmem>>, vector<1x128xf32>,
    } else {
    }
    %c0_6 = arith.constant 0 : index
    %c0_7 = arith.constant 0 : index
    %7 = vector.load %arg4[%c0_6, %c0_7] : memref<1x128xf32, #tpu.memory_space<vmem>>, vector<1x128xf32>
    %cst_8 = arith.constant dense<0.000000e+00> : vector<128xf32>
    %8 = vector.multi_reduction <add>, %2, %cst_8 [0] : vector<392x128xf32> to vector<128xf32>
    %9 = vector.shape_cast %8 : vector<128xf32> to vector<1x128xf32>
    %10 = arith.addf %7, %9 : vector<1x128xf32>
    %c0_9 = arith.constant 0 : index
    %c0_10 = arith.constant 0 : index
    %11 = vector.load %arg4[%c0_9, %c0_10] : memref<1x128xf32, #tpu.memory_space<vmem>>, vector<1x128xf32>
    tpu.vector_store %arg4[%c0_9, %c0_10], %10 {strides = array<i32>} : memref<1x128xf32, #tpu.memory_space<vmem>>, vector<1x128xf32>,
    %c0_11 = arith.constant 0 : index
    %c0_12 = arith.constant 0 : index
    %12 = vector.load %arg5[%c0_11, %c0_12] : memref<1x128xf32, #tpu.memory_space<vmem>>, vector<1x128xf32>
    %13 = arith.mulf %2, %2 : vector<392x128xf32>
    %cst_13 = arith.constant dense<0.000000e+00> : vector<128xf32>
    %14 = vector.multi_reduction <add>, %13, %cst_13 [0] : vector<392x128xf32> to vector<128xf32>
    %15 = vector.shape_cast %14 : vector<128xf32> to vector<1x128xf32>
    %16 = arith.addf %12, %15 : vector<1x128xf32>
    %c0_14 = arith.constant 0 : index
    %c0_15 = arith.constant 0 : index
    %17 = vector.load %arg5[%c0_14, %c0_15] : memref<1x128xf32, #tpu.memory_space<vmem>>, vector<1x128xf32>
    tpu.vector_store %arg5[%c0_14, %c0_15], %16 {strides = array<i32>} : memref<1x128xf32, #tpu.memory_space<vmem>>, vector<1x128xf32>,
    return
  }
  func.func @transform_0(%arg0: i32) -> (i32, i32) {
    %c0_i32 = arith.constant 0 : i32
    %c0_i32_0 = arith.constant 0 : i32
    return %arg0, %c0_i32 : i32, i32
  }
  func.func @transform_1(%arg0: i32) -> (i32, i32) {
    %c0_i32 = arith.constant 0 : i32
    %c0_i32_0 = arith.constant 0 : i32
    %c0_i32_1 = arith.constant 0 : i32
    return %c0_i32, %c0_i32_0 : i32, i32
  }
  func.func @transform_2(%arg0: i32) -> (i32, i32) {
    %c0_i32 = arith.constant 0 : i32
    %c0_i32_0 = arith.constant 0 : i32
    return %arg0, %c0_i32 : i32, i32
  }
  func.func @transform_3(%arg0: i32) -> (i32, i32) {
    %c0_i32 = arith.constant 0 : i32
    %c0_i32_0 = arith.constant 0 : i32
    %c0_i32_1 = arith.constant 0 : i32
    return %c0_i32, %c0_i32_0 : i32, i32
  }
  func.func @transform_4(%arg0: i32) -> (i32, i32) {
    %c0_i32 = arith.constant 0 : i32
    %c0_i32_0 = arith.constant 0 : i32
    %c0_i32_1 = arith.constant 0 : i32
    return %c0_i32, %c0_i32_0 : i32, i32
  }
}

module attributes {stable_mosaic.version = 11 : i64} {
  func.func @kernel(%arg0: i32, %arg1: memref<8x5x5x128xf32, #tpu.memory_space<vmem>>, %arg2: memref<8x5x4x128xf32, #tpu.memory_space<vmem>>, %arg3: memref<8x4x5x128xf32, #tpu.memory_space<vmem>>, %arg4: memref<8x4x4x128xf32, #tpu.memory_space<vmem>>, %arg5: memref<1x1x1x128xf32, #tpu.memory_space<vmem>>, %arg6: memref<1x1x1x128xf32, #tpu.memory_space<vmem>>, %arg7: memref<8x4x4x128xf32, #tpu.memory_space<vmem>>) attributes {dimension_semantics = [#tpu.dimension_semantics<parallel>], iteration_bounds = array<i64: 1>, scalar_prefetch = 0 : i64, scratch_operands = 0 : i64, tpu.core_type = #tpu.core_type<tc>, window_params = [{transform_indices = @transform_0, window_bounds = array<i64: 8, 5, 5, 128>}, {transform_indices = @transform_1, window_bounds = array<i64: 8, 5, 4, 128>}, {transform_indices = @transform_2, window_bounds = array<i64: 8, 4, 5, 128>}, {transform_indices = @transform_3, window_bounds = array<i64: 8, 4, 4, 128>}, {pipeline_mode = #tpu.pipeline_mode<synchronous>, transform_indices = @transform_4, window_bounds = array<i64: 1, 1, 1, 128>}, {pipeline_mode = #tpu.pipeline_mode<synchronous>, transform_indices = @transform_5, window_bounds = array<i64: 1, 1, 1, 128>}, {transform_indices = @transform_6, window_bounds = array<i64: 8, 4, 4, 128>}]} {
    %c0 = arith.constant 0 : index
    %c0_0 = arith.constant 0 : index
    %c0_1 = arith.constant 0 : index
    %c0_2 = arith.constant 0 : index
    %0 = vector.load %arg1[%c0, %c0_0, %c0_1, %c0_2] : memref<8x5x5x128xf32, #tpu.memory_space<vmem>>, vector<8x5x5x128xf32>
    %c0_3 = arith.constant 0 : index
    %c0_4 = arith.constant 0 : index
    %c0_5 = arith.constant 0 : index
    %c0_6 = arith.constant 0 : index
    %1 = vector.load %arg5[%c0_3, %c0_4, %c0_5, %c0_6] : memref<1x1x1x128xf32, #tpu.memory_space<vmem>>, vector<1x1x1x128xf32>
    %2 = vector.broadcast %1 : vector<1x1x1x128xf32> to vector<8x5x5x128xf32>
    %3 = arith.mulf %0, %2 : vector<8x5x5x128xf32>
    %c0_7 = arith.constant 0 : index
    %c0_8 = arith.constant 0 : index
    %c0_9 = arith.constant 0 : index
    %c0_10 = arith.constant 0 : index
    %4 = vector.load %arg6[%c0_7, %c0_8, %c0_9, %c0_10] : memref<1x1x1x128xf32, #tpu.memory_space<vmem>>, vector<1x1x1x128xf32>
    %5 = vector.broadcast %4 : vector<1x1x1x128xf32> to vector<8x5x5x128xf32>
    %6 = arith.addf %3, %5 : vector<8x5x5x128xf32>
    %cst = arith.constant 0.000000e+00 : f32
    %7 = vector.broadcast %cst : f32 to vector<8x5x5x128xf32>
    %8 = arith.cmpf oge, %6, %7 : vector<8x5x5x128xf32>
    %cst_11 = arith.constant 2.000000e-01 : f32
    %9 = vector.broadcast %cst_11 : f32 to vector<8x5x5x128xf32>
    %10 = arith.mulf %9, %6 : vector<8x5x5x128xf32>
    %11 = arith.select %8, %6, %10 : vector<8x5x5x128xi1>, vector<8x5x5x128xf32>
    %c0_12 = arith.constant 0 : index
    %c0_13 = arith.constant 0 : index
    %c0_14 = arith.constant 0 : index
    %c0_15 = arith.constant 0 : index
    %12 = vector.load %arg2[%c0_12, %c0_13, %c0_14, %c0_15] : memref<8x5x4x128xf32, #tpu.memory_space<vmem>>, vector<8x5x4x128xf32>
    %c0_16 = arith.constant 0 : index
    %c0_17 = arith.constant 0 : index
    %c0_18 = arith.constant 0 : index
    %c0_19 = arith.constant 0 : index
    %13 = vector.load %arg5[%c0_16, %c0_17, %c0_18, %c0_19] : memref<1x1x1x128xf32, #tpu.memory_space<vmem>>, vector<1x1x1x128xf32>
    %14 = vector.broadcast %13 : vector<1x1x1x128xf32> to vector<8x5x4x128xf32>
    %15 = arith.mulf %12, %14 : vector<8x5x4x128xf32>
    %c0_20 = arith.constant 0 : index
    %c0_21 = arith.constant 0 : index
    %c0_22 = arith.constant 0 : index
    %c0_23 = arith.constant 0 : index
    %16 = vector.load %arg6[%c0_20, %c0_21, %c0_22, %c0_23] : memref<1x1x1x128xf32, #tpu.memory_space<vmem>>, vector<1x1x1x128xf32>
    %17 = vector.broadcast %16 : vector<1x1x1x128xf32> to vector<8x5x4x128xf32>
    %18 = arith.addf %15, %17 : vector<8x5x4x128xf32>
    %cst_24 = arith.constant 0.000000e+00 : f32
    %19 = vector.broadcast %cst_24 : f32 to vector<8x5x4x128xf32>
    %20 = arith.cmpf oge, %18, %19 : vector<8x5x4x128xf32>
    %cst_25 = arith.constant 2.000000e-01 : f32
    %21 = vector.broadcast %cst_25 : f32 to vector<8x5x4x128xf32>
    %22 = arith.mulf %21, %18 : vector<8x5x4x128xf32>
    %23 = arith.select %20, %18, %22 : vector<8x5x4x128xi1>, vector<8x5x4x128xf32>
    %c0_26 = arith.constant 0 : index
    %c0_27 = arith.constant 0 : index
    %c0_28 = arith.constant 0 : index
    %c0_29 = arith.constant 0 : index
    %24 = vector.load %arg3[%c0_26, %c0_27, %c0_28, %c0_29] : memref<8x4x5x128xf32, #tpu.memory_space<vmem>>, vector<8x4x5x128xf32>
    %c0_30 = arith.constant 0 : index
    %c0_31 = arith.constant 0 : index
    %c0_32 = arith.constant 0 : index
    %c0_33 = arith.constant 0 : index
    %25 = vector.load %arg5[%c0_30, %c0_31, %c0_32, %c0_33] : memref<1x1x1x128xf32, #tpu.memory_space<vmem>>, vector<1x1x1x128xf32>
    %26 = vector.broadcast %25 : vector<1x1x1x128xf32> to vector<8x4x5x128xf32>
    %27 = arith.mulf %24, %26 : vector<8x4x5x128xf32>
    %c0_34 = arith.constant 0 : index
    %c0_35 = arith.constant 0 : index
    %c0_36 = arith.constant 0 : index
    %c0_37 = arith.constant 0 : index
    %28 = vector.load %arg6[%c0_34, %c0_35, %c0_36, %c0_37] : memref<1x1x1x128xf32, #tpu.memory_space<vmem>>, vector<1x1x1x128xf32>
    %29 = vector.broadcast %28 : vector<1x1x1x128xf32> to vector<8x4x5x128xf32>
    %30 = arith.addf %27, %29 : vector<8x4x5x128xf32>
    %cst_38 = arith.constant 0.000000e+00 : f32
    %31 = vector.broadcast %cst_38 : f32 to vector<8x4x5x128xf32>
    %32 = arith.cmpf oge, %30, %31 : vector<8x4x5x128xf32>
    %cst_39 = arith.constant 2.000000e-01 : f32
    %33 = vector.broadcast %cst_39 : f32 to vector<8x4x5x128xf32>
    %34 = arith.mulf %33, %30 : vector<8x4x5x128xf32>
    %35 = arith.select %32, %30, %34 : vector<8x4x5x128xi1>, vector<8x4x5x128xf32>
    %c0_40 = arith.constant 0 : index
    %c0_41 = arith.constant 0 : index
    %c0_42 = arith.constant 0 : index
    %c0_43 = arith.constant 0 : index
    %36 = vector.load %arg4[%c0_40, %c0_41, %c0_42, %c0_43] : memref<8x4x4x128xf32, #tpu.memory_space<vmem>>, vector<8x4x4x128xf32>
    %c0_44 = arith.constant 0 : index
    %c0_45 = arith.constant 0 : index
    %c0_46 = arith.constant 0 : index
    %c0_47 = arith.constant 0 : index
    %37 = vector.load %arg5[%c0_44, %c0_45, %c0_46, %c0_47] : memref<1x1x1x128xf32, #tpu.memory_space<vmem>>, vector<1x1x1x128xf32>
    %38 = vector.broadcast %37 : vector<1x1x1x128xf32> to vector<8x4x4x128xf32>
    %39 = arith.mulf %36, %38 : vector<8x4x4x128xf32>
    %c0_48 = arith.constant 0 : index
    %c0_49 = arith.constant 0 : index
    %c0_50 = arith.constant 0 : index
    %c0_51 = arith.constant 0 : index
    %40 = vector.load %arg6[%c0_48, %c0_49, %c0_50, %c0_51] : memref<1x1x1x128xf32, #tpu.memory_space<vmem>>, vector<1x1x1x128xf32>
    %41 = vector.broadcast %40 : vector<1x1x1x128xf32> to vector<8x4x4x128xf32>
    %42 = arith.addf %39, %41 : vector<8x4x4x128xf32>
    %cst_52 = arith.constant 0.000000e+00 : f32
    %43 = vector.broadcast %cst_52 : f32 to vector<8x4x4x128xf32>
    %44 = arith.cmpf oge, %42, %43 : vector<8x4x4x128xf32>
    %cst_53 = arith.constant 2.000000e-01 : f32
    %45 = vector.broadcast %cst_53 : f32 to vector<8x4x4x128xf32>
    %46 = arith.mulf %45, %42 : vector<8x4x4x128xf32>
    %47 = arith.select %44, %42, %46 : vector<8x4x4x128xi1>, vector<8x4x4x128xf32>
    %48 = vector.extract_strided_slice %11 {offsets = [0, 0, 0, 0], sizes = [8, 4, 4, 128], strides = [1, 1, 1, 1]} : vector<8x5x5x128xf32> to vector<8x4x4x128xf32>
    %49 = vector.extract_strided_slice %11 {offsets = [0, 0, 1, 0], sizes = [8, 4, 4, 128], strides = [1, 1, 1, 1]} : vector<8x5x5x128xf32> to vector<8x4x4x128xf32>
    %50 = arith.addf %48, %49 : vector<8x4x4x128xf32>
    %51 = vector.extract_strided_slice %11 {offsets = [0, 1, 0, 0], sizes = [8, 4, 4, 128], strides = [1, 1, 1, 1]} : vector<8x5x5x128xf32> to vector<8x4x4x128xf32>
    %52 = arith.addf %50, %51 : vector<8x4x4x128xf32>
    %53 = vector.extract_strided_slice %11 {offsets = [0, 1, 1, 0], sizes = [8, 4, 4, 128], strides = [1, 1, 1, 1]} : vector<8x5x5x128xf32> to vector<8x4x4x128xf32>
    %54 = arith.addf %52, %53 : vector<8x4x4x128xf32>
    %55 = vector.extract_strided_slice %23 {offsets = [0, 0, 0, 0], sizes = [8, 4, 4, 128], strides = [1, 1, 1, 1]} : vector<8x5x4x128xf32> to vector<8x4x4x128xf32>
    %56 = vector.extract_strided_slice %23 {offsets = [0, 1, 0, 0], sizes = [8, 4, 4, 128], strides = [1, 1, 1, 1]} : vector<8x5x4x128xf32> to vector<8x4x4x128xf32>
    %57 = arith.addf %55, %56 : vector<8x4x4x128xf32>
    %cst_54 = arith.constant 2.000000e+00 : f32
    %58 = vector.broadcast %cst_54 : f32 to vector<8x4x4x128xf32>
    %59 = arith.mulf %58, %57 : vector<8x4x4x128xf32>
    %60 = arith.addf %54, %59 : vector<8x4x4x128xf32>
    %61 = vector.extract_strided_slice %35 {offsets = [0, 0, 0, 0], sizes = [8, 4, 4, 128], strides = [1, 1, 1, 1]} : vector<8x4x5x128xf32> to vector<8x4x4x128xf32>
    %62 = vector.extract_strided_slice %35 {offsets = [0, 0, 1, 0], sizes = [8, 4, 4, 128], strides = [1, 1, 1, 1]} : vector<8x4x5x128xf32> to vector<8x4x4x128xf32>
    %63 = arith.addf %61, %62 : vector<8x4x4x128xf32>
    %cst_55 = arith.constant 2.000000e+00 : f32
    %64 = vector.broadcast %cst_55 : f32 to vector<8x4x4x128xf32>
    %65 = arith.mulf %64, %63 : vector<8x4x4x128xf32>
    %66 = arith.addf %60, %65 : vector<8x4x4x128xf32>
    %cst_56 = arith.constant 4.000000e+00 : f32
    %67 = vector.broadcast %cst_56 : f32 to vector<8x4x4x128xf32>
    %68 = arith.mulf %67, %47 : vector<8x4x4x128xf32>
    %69 = arith.addf %66, %68 : vector<8x4x4x128xf32>
    %cst_57 = arith.constant 6.250000e-02 : f32
    %70 = vector.broadcast %cst_57 : f32 to vector<8x4x4x128xf32>
    %71 = arith.mulf %69, %70 : vector<8x4x4x128xf32>
    %c0_58 = arith.constant 0 : index
    %c0_59 = arith.constant 0 : index
    %c0_60 = arith.constant 0 : index
    %c0_61 = arith.constant 0 : index
    %72 = vector.load %arg7[%c0_58, %c0_59, %c0_60, %c0_61] : memref<8x4x4x128xf32, #tpu.memory_space<vmem>>, vector<8x4x4x128xf32>
    tpu.vector_store %arg7[%c0_58, %c0_59, %c0_60, %c0_61], %71 {strides = array<i32>} : memref<8x4x4x128xf32, #tpu.memory_space<vmem>>, vector<8x4x4x128xf32>,
    return
  }
  func.func @transform_0(%arg0: i32) -> (i32, i32, i32, i32) {
    %c0_i32 = arith.constant 0 : i32
    %c0_i32_0 = arith.constant 0 : i32
    %c0_i32_1 = arith.constant 0 : i32
    %c0_i32_2 = arith.constant 0 : i32
    return %arg0, %c0_i32, %c0_i32_0, %c0_i32_1 : i32, i32, i32, i32
  }
  func.func @transform_1(%arg0: i32) -> (i32, i32, i32, i32) {
    %c0_i32 = arith.constant 0 : i32
    %c0_i32_0 = arith.constant 0 : i32
    %c0_i32_1 = arith.constant 0 : i32
    %c0_i32_2 = arith.constant 0 : i32
    return %arg0, %c0_i32, %c0_i32_0, %c0_i32_1 : i32, i32, i32, i32
  }
  func.func @transform_2(%arg0: i32) -> (i32, i32, i32, i32) {
    %c0_i32 = arith.constant 0 : i32
    %c0_i32_0 = arith.constant 0 : i32
    %c0_i32_1 = arith.constant 0 : i32
    %c0_i32_2 = arith.constant 0 : i32
    return %arg0, %c0_i32, %c0_i32_0, %c0_i32_1 : i32, i32, i32, i32
  }
  func.func @transform_3(%arg0: i32) -> (i32, i32, i32, i32) {
    %c0_i32 = arith.constant 0 : i32
    %c0_i32_0 = arith.constant 0 : i32
    %c0_i32_1 = arith.constant 0 : i32
    %c0_i32_2 = arith.constant 0 : i32
    return %arg0, %c0_i32, %c0_i32_0, %c0_i32_1 : i32, i32, i32, i32
  }
  func.func @transform_4(%arg0: i32) -> (i32, i32, i32, i32) {
    %c0_i32 = arith.constant 0 : i32
    %c0_i32_0 = arith.constant 0 : i32
    %c0_i32_1 = arith.constant 0 : i32
    %c0_i32_2 = arith.constant 0 : i32
    %c0_i32_3 = arith.constant 0 : i32
    return %c0_i32, %c0_i32_0, %c0_i32_1, %c0_i32_2 : i32, i32, i32, i32
  }
  func.func @transform_5(%arg0: i32) -> (i32, i32, i32, i32) {
    %c0_i32 = arith.constant 0 : i32
    %c0_i32_0 = arith.constant 0 : i32
    %c0_i32_1 = arith.constant 0 : i32
    %c0_i32_2 = arith.constant 0 : i32
    %c0_i32_3 = arith.constant 0 : i32
    return %c0_i32, %c0_i32_0, %c0_i32_1, %c0_i32_2 : i32, i32, i32, i32
  }
  func.func @transform_6(%arg0: i32) -> (i32, i32, i32, i32) {
    %c0_i32 = arith.constant 0 : i32
    %c0_i32_0 = arith.constant 0 : i32
    %c0_i32_1 = arith.constant 0 : i32
    %c0_i32_2 = arith.constant 0 : i32
    return %arg0, %c0_i32, %c0_i32_0, %c0_i32_1 : i32, i32, i32, i32
  }
}

module attributes {stable_mosaic.version = 11 : i64} {
  func.func @_conv_bn_stat_kernel(%arg0: i32, %arg1: memref<72x2048xbf16, #tpu.memory_space<vmem>>, %arg2: memref<2048x256xbf16, #tpu.memory_space<vmem>>, %arg3: memref<72x256xf32, #tpu.memory_space<vmem>>, %arg4: memref<1x256xf32, #tpu.memory_space<vmem>>, %arg5: memref<1x256xf32, #tpu.memory_space<vmem>>) attributes {dimension_semantics = [#tpu.dimension_semantics<arbitrary>], iteration_bounds = array<i64: 1>, scalar_prefetch = 0 : i64, scratch_operands = 0 : i64, tpu.core_type = #tpu.core_type<tc>, window_params = [{transform_indices = @transform_0, window_bounds = array<i64: 72, 2048>}, {pipeline_mode = #tpu.pipeline_mode<synchronous>, transform_indices = @transform_1, window_bounds = array<i64: 2048, 256>}, {transform_indices = @transform_2, window_bounds = array<i64: 72, 256>}, {pipeline_mode = #tpu.pipeline_mode<synchronous>, transform_indices = @transform_3, window_bounds = array<i64: 1, 256>}, {pipeline_mode = #tpu.pipeline_mode<synchronous>, transform_indices = @transform_4, window_bounds = array<i64: 1, 256>}]} {
    %c0 = arith.constant 0 : index
    %c0_0 = arith.constant 0 : index
    %0 = vector.load %arg1[%c0, %c0_0] : memref<72x2048xbf16, #tpu.memory_space<vmem>>, vector<72x2048xbf16>
    %c0_1 = arith.constant 0 : index
    %c0_2 = arith.constant 0 : index
    %1 = vector.load %arg2[%c0_1, %c0_2] : memref<2048x256xbf16, #tpu.memory_space<vmem>>, vector<2048x256xbf16>
    %cst = arith.constant dense<0.000000e+00> : vector<72x256xf32>
    %2 = tpu.matmul %0, %1, %cst {dimension_numbers = #tpu.dot_dimension_numbers<[1], [0], [0], [1], [0, 0, 1, 1], [], []>} : vector<72x2048xbf16>, vector<2048x256xbf16>, vector<72x256xf32> -> vector<72x256xf32>
    %c0_3 = arith.constant 0 : index
    %c0_4 = arith.constant 0 : index
    %3 = vector.load %arg3[%c0_3, %c0_4] : memref<72x256xf32, #tpu.memory_space<vmem>>, vector<72x256xf32>
    tpu.vector_store %arg3[%c0_3, %c0_4], %2 {strides = array<i32>} : memref<72x256xf32, #tpu.memory_space<vmem>>, vector<72x256xf32>,
    %c0_i32 = arith.constant 0 : i32
    %4 = arith.cmpi eq, %arg0, %c0_i32 : i32
    %5 = arith.extui %4 : i1 to i32
    %c0_i32_5 = arith.constant 0 : i32
    %6 = arith.cmpi ne, %5, %c0_i32_5 : i32
    scf.if %6 {
      %cst_16 = arith.constant 0.000000e+00 : f32
      %18 = vector.broadcast %cst_16 : f32 to vector<1x256xf32>
      %c0_17 = arith.constant 0 : index
      %c0_18 = arith.constant 0 : index
      %19 = vector.load %arg4[%c0_17, %c0_18] : memref<1x256xf32, #tpu.memory_space<vmem>>, vector<1x256xf32>
      tpu.vector_store %arg4[%c0_17, %c0_18], %18 {strides = array<i32>} : memref<1x256xf32, #tpu.memory_space<vmem>>, vector<1x256xf32>,
      %cst_19 = arith.constant 0.000000e+00 : f32
      %20 = vector.broadcast %cst_19 : f32 to vector<1x256xf32>
      %c0_20 = arith.constant 0 : index
      %c0_21 = arith.constant 0 : index
      %21 = vector.load %arg5[%c0_20, %c0_21] : memref<1x256xf32, #tpu.memory_space<vmem>>, vector<1x256xf32>
      tpu.vector_store %arg5[%c0_20, %c0_21], %20 {strides = array<i32>} : memref<1x256xf32, #tpu.memory_space<vmem>>, vector<1x256xf32>,
    } else {
    }
    %c0_6 = arith.constant 0 : index
    %c0_7 = arith.constant 0 : index
    %7 = vector.load %arg4[%c0_6, %c0_7] : memref<1x256xf32, #tpu.memory_space<vmem>>, vector<1x256xf32>
    %cst_8 = arith.constant dense<0.000000e+00> : vector<256xf32>
    %8 = vector.multi_reduction <add>, %2, %cst_8 [0] : vector<72x256xf32> to vector<256xf32>
    %9 = vector.shape_cast %8 : vector<256xf32> to vector<1x256xf32>
    %10 = arith.addf %7, %9 : vector<1x256xf32>
    %c0_9 = arith.constant 0 : index
    %c0_10 = arith.constant 0 : index
    %11 = vector.load %arg4[%c0_9, %c0_10] : memref<1x256xf32, #tpu.memory_space<vmem>>, vector<1x256xf32>
    tpu.vector_store %arg4[%c0_9, %c0_10], %10 {strides = array<i32>} : memref<1x256xf32, #tpu.memory_space<vmem>>, vector<1x256xf32>,
    %c0_11 = arith.constant 0 : index
    %c0_12 = arith.constant 0 : index
    %12 = vector.load %arg5[%c0_11, %c0_12] : memref<1x256xf32, #tpu.memory_space<vmem>>, vector<1x256xf32>
    %13 = arith.mulf %2, %2 : vector<72x256xf32>
    %cst_13 = arith.constant dense<0.000000e+00> : vector<256xf32>
    %14 = vector.multi_reduction <add>, %13, %cst_13 [0] : vector<72x256xf32> to vector<256xf32>
    %15 = vector.shape_cast %14 : vector<256xf32> to vector<1x256xf32>
    %16 = arith.addf %12, %15 : vector<1x256xf32>
    %c0_14 = arith.constant 0 : index
    %c0_15 = arith.constant 0 : index
    %17 = vector.load %arg5[%c0_14, %c0_15] : memref<1x256xf32, #tpu.memory_space<vmem>>, vector<1x256xf32>
    tpu.vector_store %arg5[%c0_14, %c0_15], %16 {strides = array<i32>} : memref<1x256xf32, #tpu.memory_space<vmem>>, vector<1x256xf32>,
    return
  }
  func.func @transform_0(%arg0: i32) -> (i32, i32) {
    %c0_i32 = arith.constant 0 : i32
    %c0_i32_0 = arith.constant 0 : i32
    return %arg0, %c0_i32 : i32, i32
  }
  func.func @transform_1(%arg0: i32) -> (i32, i32) {
    %c0_i32 = arith.constant 0 : i32
    %c0_i32_0 = arith.constant 0 : i32
    %c0_i32_1 = arith.constant 0 : i32
    return %c0_i32, %c0_i32_0 : i32, i32
  }
  func.func @transform_2(%arg0: i32) -> (i32, i32) {
    %c0_i32 = arith.constant 0 : i32
    %c0_i32_0 = arith.constant 0 : i32
    return %arg0, %c0_i32 : i32, i32
  }
  func.func @transform_3(%arg0: i32) -> (i32, i32) {
    %c0_i32 = arith.constant 0 : i32
    %c0_i32_0 = arith.constant 0 : i32
    %c0_i32_1 = arith.constant 0 : i32
    return %c0_i32, %c0_i32_0 : i32, i32
  }
  func.func @transform_4(%arg0: i32) -> (i32, i32) {
    %c0_i32 = arith.constant 0 : i32
    %c0_i32_0 = arith.constant 0 : i32
    %c0_i32_1 = arith.constant 0 : i32
    return %c0_i32, %c0_i32_0 : i32, i32
  }
}

module attributes {stable_mosaic.version = 11 : i64} {
  func.func @_bn_act_kernel(%arg0: i32, %arg1: memref<72x256xf32, #tpu.memory_space<vmem>>, %arg2: memref<1x256xf32, #tpu.memory_space<vmem>>, %arg3: memref<1x256xf32, #tpu.memory_space<vmem>>, %arg4: memref<72x256xf32, #tpu.memory_space<vmem>>) attributes {dimension_semantics = [#tpu.dimension_semantics<parallel>], iteration_bounds = array<i64: 1>, scalar_prefetch = 0 : i64, scratch_operands = 0 : i64, tpu.core_type = #tpu.core_type<tc>, window_params = [{transform_indices = @transform_0, window_bounds = array<i64: 72, 256>}, {pipeline_mode = #tpu.pipeline_mode<synchronous>, transform_indices = @transform_1, window_bounds = array<i64: 1, 256>}, {pipeline_mode = #tpu.pipeline_mode<synchronous>, transform_indices = @transform_2, window_bounds = array<i64: 1, 256>}, {transform_indices = @transform_3, window_bounds = array<i64: 72, 256>}]} {
    %c0 = arith.constant 0 : index
    %c0_0 = arith.constant 0 : index
    %0 = vector.load %arg1[%c0, %c0_0] : memref<72x256xf32, #tpu.memory_space<vmem>>, vector<72x256xf32>
    %c0_1 = arith.constant 0 : index
    %c0_2 = arith.constant 0 : index
    %1 = vector.load %arg2[%c0_1, %c0_2] : memref<1x256xf32, #tpu.memory_space<vmem>>, vector<1x256xf32>
    %2 = vector.broadcast %1 : vector<1x256xf32> to vector<72x256xf32>
    %3 = arith.mulf %0, %2 : vector<72x256xf32>
    %c0_3 = arith.constant 0 : index
    %c0_4 = arith.constant 0 : index
    %4 = vector.load %arg3[%c0_3, %c0_4] : memref<1x256xf32, #tpu.memory_space<vmem>>, vector<1x256xf32>
    %5 = vector.broadcast %4 : vector<1x256xf32> to vector<72x256xf32>
    %6 = arith.addf %3, %5 : vector<72x256xf32>
    %cst = arith.constant 0.000000e+00 : f32
    %7 = vector.broadcast %cst : f32 to vector<72x256xf32>
    %8 = arith.cmpf oge, %6, %7 : vector<72x256xf32>
    %cst_5 = arith.constant 2.000000e-01 : f32
    %9 = vector.broadcast %cst_5 : f32 to vector<72x256xf32>
    %10 = arith.mulf %9, %6 : vector<72x256xf32>
    %11 = arith.select %8, %6, %10 : vector<72x256xi1>, vector<72x256xf32>
    %c0_6 = arith.constant 0 : index
    %c0_7 = arith.constant 0 : index
    %12 = vector.load %arg4[%c0_6, %c0_7] : memref<72x256xf32, #tpu.memory_space<vmem>>, vector<72x256xf32>
    tpu.vector_store %arg4[%c0_6, %c0_7], %11 {strides = array<i32>} : memref<72x256xf32, #tpu.memory_space<vmem>>, vector<72x256xf32>,
    return
  }
  func.func @transform_0(%arg0: i32) -> (i32, i32) {
    %c0_i32 = arith.constant 0 : i32
    %c0_i32_0 = arith.constant 0 : i32
    return %arg0, %c0_i32 : i32, i32
  }
  func.func @transform_1(%arg0: i32) -> (i32, i32) {
    %c0_i32 = arith.constant 0 : i32
    %c0_i32_0 = arith.constant 0 : i32
    %c0_i32_1 = arith.constant 0 : i32
    return %c0_i32, %c0_i32_0 : i32, i32
  }
  func.func @transform_2(%arg0: i32) -> (i32, i32) {
    %c0_i32 = arith.constant 0 : i32
    %c0_i32_0 = arith.constant 0 : i32
    %c0_i32_1 = arith.constant 0 : i32
    return %c0_i32, %c0_i32_0 : i32, i32
  }
  func.func @transform_3(%arg0: i32) -> (i32, i32) {
    %c0_i32 = arith.constant 0 : i32
    %c0_i32_0 = arith.constant 0 : i32
    return %arg0, %c0_i32 : i32, i32
  }
}

module attributes {stable_mosaic.version = 11 : i64} {
  func.func @_conv_kernel(%arg0: i32, %arg1: memref<32x4096xbf16, #tpu.memory_space<vmem>>, %arg2: memref<4096x128xbf16, #tpu.memory_space<vmem>>, %arg3: memref<1x128xf32, #tpu.memory_space<vmem>>, %arg4: memref<32x128xf32, #tpu.memory_space<vmem>>) attributes {dimension_semantics = [#tpu.dimension_semantics<parallel>], iteration_bounds = array<i64: 1>, scalar_prefetch = 0 : i64, scratch_operands = 0 : i64, tpu.core_type = #tpu.core_type<tc>, window_params = [{transform_indices = @transform_0, window_bounds = array<i64: 32, 4096>}, {pipeline_mode = #tpu.pipeline_mode<synchronous>, transform_indices = @transform_1, window_bounds = array<i64: 4096, 128>}, {pipeline_mode = #tpu.pipeline_mode<synchronous>, transform_indices = @transform_2, window_bounds = array<i64: 1, 128>}, {transform_indices = @transform_3, window_bounds = array<i64: 32, 128>}]} {
    %c0 = arith.constant 0 : index
    %c0_0 = arith.constant 0 : index
    %0 = vector.load %arg1[%c0, %c0_0] : memref<32x4096xbf16, #tpu.memory_space<vmem>>, vector<32x4096xbf16>
    %c0_1 = arith.constant 0 : index
    %c0_2 = arith.constant 0 : index
    %1 = vector.load %arg2[%c0_1, %c0_2] : memref<4096x128xbf16, #tpu.memory_space<vmem>>, vector<4096x128xbf16>
    %cst = arith.constant dense<0.000000e+00> : vector<32x128xf32>
    %2 = tpu.matmul %0, %1, %cst {dimension_numbers = #tpu.dot_dimension_numbers<[1], [0], [0], [1], [0, 0, 1, 1], [], []>} : vector<32x4096xbf16>, vector<4096x128xbf16>, vector<32x128xf32> -> vector<32x128xf32>
    %c0_3 = arith.constant 0 : index
    %c0_4 = arith.constant 0 : index
    %3 = vector.load %arg3[%c0_3, %c0_4] : memref<1x128xf32, #tpu.memory_space<vmem>>, vector<1x128xf32>
    %4 = vector.broadcast %3 : vector<1x128xf32> to vector<32x128xf32>
    %5 = arith.addf %2, %4 : vector<32x128xf32>
    %c0_5 = arith.constant 0 : index
    %c0_6 = arith.constant 0 : index
    %6 = vector.load %arg4[%c0_5, %c0_6] : memref<32x128xf32, #tpu.memory_space<vmem>>, vector<32x128xf32>
    tpu.vector_store %arg4[%c0_5, %c0_6], %5 {strides = array<i32>} : memref<32x128xf32, #tpu.memory_space<vmem>>, vector<32x128xf32>,
    return
  }
  func.func @transform_0(%arg0: i32) -> (i32, i32) {
    %c0_i32 = arith.constant 0 : i32
    %c0_i32_0 = arith.constant 0 : i32
    return %arg0, %c0_i32 : i32, i32
  }
  func.func @transform_1(%arg0: i32) -> (i32, i32) {
    %c0_i32 = arith.constant 0 : i32
    %c0_i32_0 = arith.constant 0 : i32
    %c0_i32_1 = arith.constant 0 : i32
    return %c0_i32, %c0_i32_0 : i32, i32
  }
  func.func @transform_2(%arg0: i32) -> (i32, i32) {
    %c0_i32 = arith.constant 0 : i32
    %c0_i32_0 = arith.constant 0 : i32
    %c0_i32_1 = arith.constant 0 : i32
    return %c0_i32, %c0_i32_0 : i32, i32
  }
  func.func @transform_3(%arg0: i32) -> (i32, i32) {
    %c0_i32 = arith.constant 0 : i32
    %c0_i32_0 = arith.constant 0 : i32
    return %arg0, %c0_i32 : i32, i32
  }
}

</mosaic_0001>

<llo_original>
// kernel: patch_discriminator_forward.7
$region0: #{patch_discriminator_forward.7}
  #allocation0 [shape = 'u32[]', space=smem, size = 0x4, offset = 0x4, fixed_abs, tag = 'smem constant byte address 0x4 - core index']
  #allocation1 [shape = 'u32[144,128]{1,0:T(1,128)}', space=vmem, size = 0x12000, scoped, tag = 'internal scratch']
  %s0 = inlined_call_operand.vmem [shape: bf16[2048,128], index: 0, kind: input, shape index: {}]
  %s1 = inlined_call_operand.vmem [shape: bf16[128,128], index: 1, kind: input, shape index: {}]
  %s2 = inlined_call_operand.vmem [shape: f32[1,128], index: 2, kind: input, shape index: {}]
  %s3 = inlined_call_operand.vmem [shape: f32[2048,128], index: 3, kind: output, shape index: {}]
  %s4 = sld [smem:[#allocation0]]
  $region45: #{patch_discriminator_forward.7} parent=0
    _
  %s6 = ssub.s32 1, %s4
  %s7 = scalar_select 0, %s6, %s4
  loop: start=0, step=1, limit=6
  $region2: #{patch_discriminator_forward.7} parent=0 // loop_pre_header
    _
  $region3: #{patch_discriminator_forward.7} parent=0 // loop_header
    %s9 = sphi 0, %s13
    %p10 = scmp.ge.s32.totalorder %s9, 6
    %s19 = sphi 0, %s21
    %s22 = sphi 0, %s19
    %s23 = sphi 0, %s22
    %s39 = sphi 0, %s23
    %s43 = sphi 0, %s43
    %s45 = sphi 0, %s43
    %s46 = sphi 0, %s45
    %s60 = sphi 0, %s46
    %s64 = sphi 0, %s64
    %s66 = sphi 0, %s64
    %s67 = sphi 0, %s66
    %s81 = sphi 0, %s67
    %s87 = sphi 0, %s89
    %s90 = sphi 0, %s87
    %s91 = sphi 0, %s90
    %s107 = sphi 0, %s91
  $region4: #{patch_discriminator_forward.7} parent=0 // loop_header_branch
    %12 = sbr.rel (%p10) target = $region8
  $region5: #{patch_discriminator_forward.7} parent=0 // loop_body
    %s14 = ssub.s32 %s9, 1
    %s15 = ssub.s32 %s9, 2
    %s16 = sadd.s32 %s9, 1
    %s17 = ssub.s32 %s9, %s16
    %p18 = scmp.eq.s32.totalorder %s17, 0
    %s20 = sadd.s32 %s19, 1
    %s21 = scalar_select %p18, %s19, %s20
    %p24 = pneg %p18
    %p25 = scmp.eq.s32.totalorder %s9, 3
    %p26 = por %p24, %p25
    %p27 = scmp.ne.s32.totalorder %s19, %s22
    %p28 = scmp.eq.s32.totalorder %s9, 0
    %p29 = por %p27, %p28
    %p30 = scmp.ne.s32.totalorder %s19, %s22
    %p31 = scmp.eq.s32.totalorder %s14, 3
    %p32 = por %p30, %p31
    %p33 = scmp.ne.s32.totalorder %s22, %s23
    %p34 = scmp.eq.s32.totalorder %s14, 0
    %p35 = por %p33, %p34
    %p36 = scmp.ne.s32.totalorder %s22, %s23
    %p37 = scmp.eq.s32.totalorder %s15, 3
    %p38 = por %p36, %p37
    %p40 = scmp.ne.s32.totalorder %s23, %s39
    %p41 = scmp.eq.s32.totalorder %s15, 0
    %p42 = por %p40, %p41
    %s44 = sadd.s32 %s43, 1
    %p47 = scmp.eq.s32.totalorder %s9, 3
    %p48 = scmp.ne.s32.totalorder %s43, %s45
    %p49 = scmp.eq.s32.totalorder %s9, 0
    %p50 = por %p48, %p49
    %p51 = scmp.ne.s32.totalorder %s43, %s45
    %p52 = scmp.eq.s32.totalorder %s14, 3
    %p53 = por %p51, %p52
    %p54 = scmp.ne.s32.totalorder %s45, %s46
    %p55 = scmp.eq.s32.totalorder %s14, 0
    %p56 = por %p54, %p55
    %p57 = scmp.ne.s32.totalorder %s45, %s46
    %p58 = scmp.eq.s32.totalorder %s15, 3
    %p59 = por %p57, %p58
    %p61 = scmp.ne.s32.totalorder %s46, %s60
    %p62 = scmp.eq.s32.totalorder %s15, 0
    %p63 = por %p61, %p62
    %s65 = sadd.s32 %s64, 1
    %p68 = scmp.eq.s32.totalorder %s9, 3
    %p69 = scmp.ne.s32.totalorder %s64, %s66
    %p70 = scmp.eq.s32.totalorder %s9, 0
    %p71 = por %p69, %p70
    %p72 = scmp.ne.s32.totalorder %s64, %s66
    %p73 = scmp.eq.s32.totalorder %s14, 3
    %p74 = por %p72, %p73
    %p75 = scmp.ne.s32.totalorder %s66, %s67
    %p76 = scmp.eq.s32.totalorder %s14, 0
    %p77 = por %p75, %p76
    %p78 = scmp.ne.s32.totalorder %s66, %s67
    %p79 = scmp.eq.s32.totalorder %s15, 3
    %p80 = por %p78, %p79
    %p82 = scmp.ne.s32.totalorder %s67, %s81
    %p83 = scmp.eq.s32.totalorder %s15, 0
    %p84 = por %p82, %p83
    %s85 = ssub.s32 %s9, %s16
    %p86 = scmp.eq.s32.totalorder %s85, 0
    %s88 = sadd.s32 %s87, 1
    %s89 = scalar_select %p86, %s87, %s88
    %p92 = pneg %p86
    %p93 = scmp.eq.s32.totalorder %s9, 3
    %p94 = por %p92, %p93
    %p95 = scmp.ne.s32.totalorder %s87, %s90
    %p96 = scmp.eq.s32.totalorder %s9, 0
    %p97 = por %p95, %p96
    %p98 = scmp.ne.s32.totalorder %s87, %s90
    %p99 = scmp.eq.s32.totalorder %s14, 3
    %p100 = por %p98, %p99
    %p101 = scmp.ne.s32.totalorder %s90, %s91
    %p102 = scmp.eq.s32.totalorder %s14, 0
    %p103 = por %p101, %p102
    %p104 = scmp.ne.s32.totalorder %s90, %s91
    %p105 = scmp.eq.s32.totalorder %s15, 3
    %p106 = por %p104, %p105
    %p108 = scmp.ne.s32.totalorder %s91, %s107
    %p109 = scmp.eq.s32.totalorder %s15, 0
    %p110 = por %p108, %p109
    %p111 = scmp.le.s32.totalorder 1, %s9
    %p112 = scmp.lt.s32.totalorder %s9, 5
    %p113 = pnand %p111, %p112
    %p114 = pneg %p113
    // Predicated region
    $region9: #{patch_discriminator_forward.7} parent=5 // pred_check
      _
    $region10: #{patch_discriminator_forward.7} parent=5 // pred_check_branch
      %116 = sbr.rel (%p113) target = $region12
    $region11: #{patch_discriminator_forward.7} parent=5 // pred_region
      %s117 = ssub.s32 %s9, 1
      // Predicated region
      $region13: #{patch_discriminator_forward.7} parent=11 // pred_check
        %p118 = pneg %p56
      $region14: #{patch_discriminator_forward.7} parent=11 // pred_check_branch
        %120 = sbr.rel (%p118) target = $region16
      $region15: #{patch_discriminator_forward.7} parent=11 // pred_region
        _
      $region16: #{patch_discriminator_forward.7} parent=11 // pred_fallthru
        _
      // Predicated region
      $region17: #{patch_discriminator_forward.7} parent=11 // pred_check
        %p121 = pneg %p77
      $region18: #{patch_discriminator_forward.7} parent=11 // pred_check_branch
        %123 = sbr.rel (%p121) target = $region20
      $region19: #{patch_discriminator_forward.7} parent=11 // pred_region
        _
      $region20: #{patch_discriminator_forward.7} parent=11 // pred_fallthru
        _
    $region12: #{patch_discriminator_forward.7} parent=5 // pred_fallthru
      _
    %p124 = scmp.lt.s32.totalorder %s9, 4
    // Predicated region
    $region21: #{patch_discriminator_forward.7} parent=5 // pred_check
      %p125 = pneg %p124
    $region22: #{patch_discriminator_forward.7} parent=5 // pred_check_branch
      %127 = sbr.rel (%p125) target = $region24
    $region23: #{patch_discriminator_forward.7} parent=5 // pred_region
      // Predicated region
      $region25: #{patch_discriminator_forward.7} parent=23 // pred_check
        %p128 = pneg %p29
      $region26: #{patch_discriminator_forward.7} parent=23 // pred_check_branch
        %130 = sbr.rel (%p128) target = $region28
      $region27: #{patch_discriminator_forward.7} parent=23 // pred_region
        %s131 = smul.u32 64, %s9
        %p132 = scmp.lt.s32.totalorder %s131, 255
        %s133 = scalar_select %p132, %s131, 255
        %s134 = smul.addr %s133, 4
        %s135 = scalar_lea.vmem %s0, %s134
        %s136 = smul.u32 64, %s9
      $region28: #{patch_discriminator_forward.7} parent=23 // pred_fallthru
        _
    $region24: #{patch_discriminator_forward.7} parent=5 // pred_fallthru
      _
    %p137 = scmp.le.s32.totalorder 1, %s9
    %p138 = scmp.lt.s32.totalorder %s9, 5
    %p139 = pnand %p137, %p138
    %p140 = pneg %p139
    // Predicated region
    $region29: #{patch_discriminator_forward.7} parent=5 // pred_check
      _
    $region30: #{patch_discriminator_forward.7} parent=5 // pred_check_branch
      %142 = sbr.rel (%p139) target = $region32
    $region31: #{patch_discriminator_forward.7} parent=5 // pred_region
      %s143 = ssub.s32 %s9, 1
      %s144 = smul.u32 64, %s14
      %p145 = scmp.lt.s32.totalorder %s144, 255
      %s146 = scalar_select %p145, %s144, 255
      %s147 = smul.addr %s146, 4
      %s148 = scalar_lea.vmem %s0, %s147
      %p149 = pneg %p35
      %p150 = pneg %p32
      %p151 = pneg %p56
      %p152 = pneg %p53
      %p153 = pneg %p77
      %p154 = pneg %p74
      %p155 = pneg %p103
      %p156 = pneg %p100
      %s157 = smul.u32 64, %s14
      %p158 = scmp.lt.s32.totalorder %s157, 255
      %s159 = scalar_select %p158, %s157, 255
      %s160 = smul.addr %s159, 8
      %s161 = scalar_lea.vmem %s3, %s160
      %s162 = smul.u32 64, %s14
      %p163 = scmp.lt.s32.totalorder %s162, 255
      %s164 = scalar_select %p163, %s162, 255
      %s165 = smul.addr %s164, 4
      %s166 = scalar_lea.vmem %s0, %s165
      %s167 = smul.u32 64, %s14
      %s168 = smul.u32 64, %s14
      %p169 = scmp.lt.s32.totalorder %s168, 255
      %s170 = scalar_select %p169, %s168, 255
      %s171 = smul.addr %s170, 8
      %s172 = scalar_lea.vmem %s3, %s171
      %s173 = smul.u32 64, %s14
      %v175 = vld [vmem:[%s166] sm:$0xf]
      %v176 = vld [vmem:[%s166 + $0x4] sm:$0xf]
      %v177 = vld [vmem:[%s166 + $0x8] sm:$0xf]
      %v178 = vld [vmem:[%s166 + $0xc] sm:$0xf]
      %v179 = vld [vmem:[%s166 + $0x10] sm:$0xf]
      %v180 = vld [vmem:[%s166 + $0x14] sm:$0xf]
      %v181 = vld [vmem:[%s166 + $0x18] sm:$0xf]
      %v182 = vld [vmem:[%s166 + $0x1c] sm:$0xf]
      %v183 = vld [vmem:[%s166 + $0x20] sm:$0xf]
      %v184 = vld [vmem:[%s166 + $0x24] sm:$0xf]
      %v185 = vld [vmem:[%s166 + $0x28] sm:$0xf]
      %v186 = vld [vmem:[%s166 + $0x2c] sm:$0xf]
      %v187 = vld [vmem:[%s166 + $0x30] sm:$0xf]
      %v188 = vld [vmem:[%s166 + $0x34] sm:$0xf]
      %v189 = vld [vmem:[%s166 + $0x38] sm:$0xf]
      %v190 = vld [vmem:[%s166 + $0x3c] sm:$0xf]
      %v191 = vld [vmem:[%s166 + $0x40] sm:$0xf]
      %v192 = vld [vmem:[%s166 + $0x44] sm:$0xf]
      %v193 = vld [vmem:[%s166 + $0x48] sm:$0xf]
      %v194 = vld [vmem:[%s166 + $0x4c] sm:$0xf]
      %v195 = vld [vmem:[%s166 + $0x50] sm:$0xf]
      %v196 = vld [vmem:[%s166 + $0x54] sm:$0xf]
      %v197 = vld [vmem:[%s166 + $0x58] sm:$0xf]
      %v198 = vld [vmem:[%s166 + $0x5c] sm:$0xf]
      %v199 = vld [vmem:[%s166 + $0x60] sm:$0xf]
      %v200 = vld [vmem:[%s166 + $0x64] sm:$0xf]
      %v201 = vld [vmem:[%s166 + $0x68] sm:$0xf]
      %v202 = vld [vmem:[%s166 + $0x6c] sm:$0xf]
      %v203 = vld [vmem:[%s166 + $0x70] sm:$0xf]
      %v204 = vld [vmem:[%s166 + $0x74] sm:$0xf]
      %v205 = vld [vmem:[%s166 + $0x78] sm:$0xf]
      %v206 = vld [vmem:[%s166 + $0x7c] sm:$0xf]
      %v207 = vld [vmem:[%s166 + $0x80] sm:$0xf]
      %v208 = vld [vmem:[%s166 + $0x84] sm:$0xf]
      %v209 = vld [vmem:[%s166 + $0x88] sm:$0xf]
      %v210 = vld [vmem:[%s166 + $0x8c] sm:$0xf]
      %v211 = vld [vmem:[%s166 + $0x90] sm:$0xf]
      %v212 = vld [vmem:[%s166 + $0x94] sm:$0xf]
      %v213 = vld [vmem:[%s166 + $0x98] sm:$0xf]
      %v214 = vld [vmem:[%s166 + $0x9c] sm:$0xf]
      %v215 = vld [vmem:[%s166 + $0xa0] sm:$0xf]
      %v216 = vld [vmem:[%s166 + $0xa4] sm:$0xf]
      %v217 = vld [vmem:[%s166 + $0xa8] sm:$0xf]
      %v218 = vld [vmem:[%s166 + $0xac] sm:$0xf]
      %v219 = vld [vmem:[%s166 + $0xb0] sm:$0xf]
      %v220 = vld [vmem:[%s166 + $0xb4] sm:$0xf]
      %v221 = vld [vmem:[%s166 + $0xb8] sm:$0xf]
      %v222 = vld [vmem:[%s166 + $0xbc] sm:$0xf]
      %v223 = vld [vmem:[%s166 + $0xc0] sm:$0xf]
      %v224 = vld [vmem:[%s166 + $0xc4] sm:$0xf]
      %v225 = vld [vmem:[%s166 + $0xc8] sm:$0xf]
      %v226 = vld [vmem:[%s166 + $0xcc] sm:$0xf]
      %v227 = vld [vmem:[%s166 + $0xd0] sm:$0xf]
      %v228 = vld [vmem:[%s166 + $0xd4] sm:$0xf]
      %v229 = vld [vmem:[%s166 + $0xd8] sm:$0xf]
      %v230 = vld [vmem:[%s166 + $0xdc] sm:$0xf]
      %v231 = vld [vmem:[%s166 + $0xe0] sm:$0xf]
      %v232 = vld [vmem:[%s166 + $0xe4] sm:$0xf]
      %v233 = vld [vmem:[%s166 + $0xe8] sm:$0xf]
      %v234 = vld [vmem:[%s166 + $0xec] sm:$0xf]
      %v235 = vld [vmem:[%s166 + $0xf0] sm:$0xf]
      %v236 = vld [vmem:[%s166 + $0xf4] sm:$0xf]
      %v237 = vld [vmem:[%s166 + $0xf8] sm:$0xf]
      %v238 = vld [vmem:[%s166 + $0xfc] sm:$0xf]
      %v239 = vld [vmem:[%s1] sm:$0xf]
      %v240 = vld [vmem:[%s1 + $0x4] sm:$0xf]
      %v241 = vld [vmem:[%s1 + $0x8] sm:$0xf]
      %v242 = vld [vmem:[%s1 + $0xc] sm:$0xf]
      %v243 = vld [vmem:[%s1 + $0x10] sm:$0xf]
      %v244 = vld [vmem:[%s1 + $0x14] sm:$0xf]
      %v245 = vld [vmem:[%s1 + $0x18] sm:$0xf]
      %v246 = vld [vmem:[%s1 + $0x1c] sm:$0xf]
      %v247 = vld [vmem:[%s1 + $0x20] sm:$0xf]
      %v248 = vld [vmem:[%s1 + $0x24] sm:$0xf]
      %v249 = vld [vmem:[%s1 + $0x28] sm:$0xf]
      %v250 = vld [vmem:[%s1 + $0x2c] sm:$0xf]
      %v251 = vld [vmem:[%s1 + $0x30] sm:$0xf]
      %v252 = vld [vmem:[%s1 + $0x34] sm:$0xf]
      %v253 = vld [vmem:[%s1 + $0x38] sm:$0xf]
      %v254 = vld [vmem:[%s1 + $0x3c] sm:$0xf]
      %v255 = vld [vmem:[%s2] sm:$0x1]
      %v257 = vlaneseq
      %v258 = vshrl.u32 %v257, 7
      %v259 = vsub.s32 0, %v258
      %v260 = vrot.slane %v255, %v259
      %v326 = vunpack.c.l.b16 %v175
      %v327 = vunpack.c.l.b16 %v176
      %v328 = vunpack.c.l.b16 %v177
      %v329 = vunpack.c.l.b16 %v178
      %v330 = vunpack.c.l.b16 %v179
      %v331 = vunpack.c.l.b16 %v180
      %v332 = vunpack.c.l.b16 %v181
      %v333 = vunpack.c.l.b16 %v182
      %v334 = vunpack.c.l.b16 %v183
      %v335 = vunpack.c.l.b16 %v184
      %v336 = vunpack.c.l.b16 %v185
      %v337 = vunpack.c.l.b16 %v186
      %v338 = vunpack.c.l.b16 %v187
      %v339 = vunpack.c.l.b16 %v188
      %v340 = vunpack.c.l.b16 %v189
      %v341 = vunpack.c.l.b16 %v190
      %v342 = vunpack.c.l.b16 %v191
      %v343 = vunpack.c.l.b16 %v192
      %v344 = vunpack.c.l.b16 %v193
      %v345 = vunpack.c.l.b16 %v194
      %v346 = vunpack.c.l.b16 %v195
      %v347 = vunpack.c.l.b16 %v196
      %v348 = vunpack.c.l.b16 %v197
      %v349 = vunpack.c.l.b16 %v198
      %v350 = vunpack.c.l.b16 %v199
      %v351 = vunpack.c.l.b16 %v200
      %v352 = vunpack.c.l.b16 %v201
      %v353 = vunpack.c.l.b16 %v202
      %v354 = vunpack.c.l.b16 %v203
      %v355 = vunpack.c.l.b16 %v204
      %v356 = vunpack.c.l.b16 %v205
      %v357 = vunpack.c.l.b16 %v206
      %v358 = vunpack.c.l.b16 %v207
      %v359 = vunpack.c.l.b16 %v208
      %v360 = vunpack.c.l.b16 %v209
      %v361 = vunpack.c.l.b16 %v210
      %v362 = vunpack.c.l.b16 %v211
      %v363 = vunpack.c.l.b16 %v212
      %v364 = vunpack.c.l.b16 %v213
      %v365 = vunpack.c.l.b16 %v214
      %v366 = vunpack.c.l.b16 %v215
      %v367 = vunpack.c.l.b16 %v216
      %v368 = vunpack.c.l.b16 %v217
      %v369 = vunpack.c.l.b16 %v218
      %v370 = vunpack.c.l.b16 %v219
      %v371 = vunpack.c.l.b16 %v220
      %v372 = vunpack.c.l.b16 %v221
      %v373 = vunpack.c.l.b16 %v222
      %v374 = vunpack.c.l.b16 %v223
      %v375 = vunpack.c.l.b16 %v224
      %v376 = vunpack.c.l.b16 %v225
      %v377 = vunpack.c.l.b16 %v226
      %v378 = vunpack.c.l.b16 %v227
      %v379 = vunpack.c.l.b16 %v228
      %v380 = vunpack.c.l.b16 %v229
      %v381 = vunpack.c.l.b16 %v230
      %v382 = vunpack.c.l.b16 %v231
      %v383 = vunpack.c.l.b16 %v232
      %v384 = vunpack.c.l.b16 %v233
      %v385 = vunpack.c.l.b16 %v234
      %v386 = vunpack.c.l.b16 %v235
      %v387 = vunpack.c.l.b16 %v236
      %v388 = vunpack.c.l.b16 %v237
      %v389 = vunpack.c.l.b16 %v238
      %v390 = vpack.c.b16 %v327, %v326
      %v391 = vpack.c.b16 %v329, %v328
      %v392 = vpack.c.b16 %v331, %v330
      %v393 = vpack.c.b16 %v333, %v332
      %v394 = vpack.c.b16 %v335, %v334
      %v395 = vpack.c.b16 %v337, %v336
      %v396 = vpack.c.b16 %v339, %v338
      %v397 = vpack.c.b16 %v341, %v340
      %v398 = vpack.c.b16 %v343, %v342
      %v399 = vpack.c.b16 %v345, %v344
      %v400 = vpack.c.b16 %v347, %v346
      %v401 = vpack.c.b16 %v349, %v348
      %v402 = vpack.c.b16 %v351, %v350
      %v403 = vpack.c.b16 %v353, %v352
      %v404 = vpack.c.b16 %v355, %v354
      %v405 = vpack.c.b16 %v357, %v356
      %v406 = vpack.c.b16 %v359, %v358
      %v407 = vpack.c.b16 %v361, %v360
      %v408 = vpack.c.b16 %v363, %v362
      %v409 = vpack.c.b16 %v365, %v364
      %v410 = vpack.c.b16 %v367, %v366
      %v411 = vpack.c.b16 %v369, %v368
      %v412 = vpack.c.b16 %v371, %v370
      %v413 = vpack.c.b16 %v373, %v372
      %v414 = vpack.c.b16 %v375, %v374
      %v415 = vpack.c.b16 %v377, %v376
      %v416 = vpack.c.b16 %v379, %v378
      %v417 = vpack.c.b16 %v381, %v380
      %v418 = vpack.c.b16 %v383, %v382
      %v419 = vpack.c.b16 %v385, %v384
      %v420 = vpack.c.b16 %v387, %v386
      %v421 = vpack.c.b16 %v389, %v388
      %v470 = vunpack.c.l.b16 %v239
      %v471 = vunpack.c.l.b16 %v240
      %v472 = vunpack.c.l.b16 %v241
      %v473 = vunpack.c.l.b16 %v242
      %v474 = vunpack.c.l.b16 %v243
      %v475 = vunpack.c.l.b16 %v244
      %v476 = vunpack.c.l.b16 %v245
      %v477 = vunpack.c.l.b16 %v246
      %v478 = vunpack.c.l.b16 %v247
      %v479 = vunpack.c.l.b16 %v248
      %v480 = vunpack.c.l.b16 %v249
      %v481 = vunpack.c.l.b16 %v250
      %v482 = vunpack.c.l.b16 %v251
      %v483 = vunpack.c.l.b16 %v252
      %v484 = vunpack.c.l.b16 %v253
      %v485 = vunpack.c.l.b16 %v254
      %v486 = vpack.c.b16 %v471, %v470
      %v487 = vpack.c.b16 %v473, %v472
      %v488 = vpack.c.b16 %v475, %v474
      %v489 = vpack.c.b16 %v477, %v476
      %v490 = vpack.c.b16 %v479, %v478
      %v491 = vpack.c.b16 %v481, %v480
      %v492 = vpack.c.b16 %v483, %v482
      %v493 = vpack.c.b16 %v485, %v484
      %502 = vmatprep.subr.bf16.mxu0 0
      %503 = vmatpush1.bf16.msra.mxu0 %v493
      %504 = vmatprep.subr.bf16.mxu0 0
      %505 = vmatpush1.bf16.msra.mxu0 %v492
      %506 = vmatprep.subr.bf16.mxu0 0
      %507 = vmatpush1.bf16.msra.mxu0 %v491
      %508 = vmatprep.subr.bf16.mxu0 0
      %509 = vmatpush1.bf16.msra.mxu0 %v490
      %510 = vmatprep.subr.bf16.mxu0 0
      %511 = vmatpush1.bf16.msra.mxu0 %v489
      %512 = vmatprep.subr.bf16.mxu0 0
      %513 = vmatpush1.bf16.msra.mxu0 %v488
      %514 = vmatprep.subr.bf16.mxu0 0
      %515 = vmatpush1.bf16.msra.mxu0 %v487
      %516 = vmatprep.subr.bf16.mxu0 0
      %517 = vmatpush1.bf16.msra.mxu0 %v486
      %518 = vmatprep.subr.bf16.mxu0 0
      %519 = vmatpush2.bf16.msra.mxu0 0
      %520 = vmatprep.subr.bf16.mxu0 0
      %521 = vmatpush2.bf16.msra.mxu0 0
      %522 = vmatprep.subr.bf16.mxu0 0
      %523 = vmatpush2.bf16.msra.mxu0 0
      %524 = vmatprep.subr.bf16.mxu0 0
      %525 = vmatpush2.bf16.msra.mxu0 0
      %526 = vmatprep.subr.bf16.mxu0 0
      %527 = vmatpush2.bf16.msra.mxu0 0
      %528 = vmatprep.subr.bf16.mxu0 0
      %529 = vmatpush2.bf16.msra.mxu0 0
      %530 = vmatprep.subr.bf16.mxu0 0
      %531 = vmatpush2.bf16.msra.mxu0 0
      %532 = vmatprep.subr.bf16.mxu0 0
      %533 = vmatpush2.bf16.msra.mxu0 0
      %534 = vmatprep.mubr.bf16.mxu0 0
      %535 = vmatmul.mubr.bf16.gmra.mxu0 %v390
      %v536 = vpop.f32.mrf.mxu0
      %v537 = vadd.f32 %v260, %v536
      %v538 = vpop.f32.mrf.mxu0
      %v539 = vpop.f32.mrf.mxu0
      %v540 = vadd.f32 %v260, %v539
      %v541 = vpop.f32.mrf.mxu0
      %542 = vmatprep.mubr.bf16.mxu0 0
      %543 = vmatmul.mubr.bf16.gmra.mxu0 %v391
      %v544 = vpop.f32.mrf.mxu0
      %v545 = vadd.f32 %v260, %v544
      %v546 = vpop.f32.mrf.mxu0
      %v547 = vpop.f32.mrf.mxu0
      %v548 = vadd.f32 %v260, %v547
      %v549 = vpop.f32.mrf.mxu0
      %550 = vmatprep.mubr.bf16.mxu0 0
      %551 = vmatmul.mubr.bf16.gmra.mxu0 %v392
      %v552 = vpop.f32.mrf.mxu0
      %v553 = vadd.f32 %v260, %v552
      %v554 = vpop.f32.mrf.mxu0
      %v555 = vpop.f32.mrf.mxu0
      %v556 = vadd.f32 %v260, %v555
      %v557 = vpop.f32.mrf.mxu0
      %558 = vmatprep.mubr.bf16.mxu0 0
      %559 = vmatmul.mubr.bf16.gmra.mxu0 %v393
      %v560 = vpop.f32.mrf.mxu0
      %v561 = vadd.f32 %v260, %v560
      %v562 = vpop.f32.mrf.mxu0
      %v563 = vpop.f32.mrf.mxu0
      %v564 = vadd.f32 %v260, %v563
      %v565 = vpop.f32.mrf.mxu0
      %566 = vmatprep.mubr.bf16.mxu0 0
      %567 = vmatmul.mubr.bf16.gmra.mxu0 %v394
      %v568 = vpop.f32.mrf.mxu0
      %v569 = vadd.f32 %v260, %v568
      %v570 = vpop.f32.mrf.mxu0
      %v571 = vpop.f32.mrf.mxu0
      %v572 = vadd.f32 %v260, %v571
      %v573 = vpop.f32.mrf.mxu0
      %574 = vmatprep.mubr.bf16.mxu0 0
      %575 = vmatmul.mubr.bf16.gmra.mxu0 %v395
      %v576 = vpop.f32.mrf.mxu0
      %v577 = vadd.f32 %v260, %v576
      %v578 = vpop.f32.mrf.mxu0
      %v579 = vpop.f32.mrf.mxu0
      %v580 = vadd.f32 %v260, %v579
      %v581 = vpop.f32.mrf.mxu0
      %582 = vmatprep.mubr.bf16.mxu0 0
      %583 = vmatmul.mubr.bf16.gmra.mxu0 %v396
      %v584 = vpop.f32.mrf.mxu0
      %v585 = vadd.f32 %v260, %v584
      %v586 = vpop.f32.mrf.mxu0
      %v587 = vpop.f32.mrf.mxu0
      %v588 = vadd.f32 %v260, %v587
      %v589 = vpop.f32.mrf.mxu0
      %590 = vmatprep.mubr.bf16.mxu0 0
      %591 = vmatmul.mubr.bf16.gmra.mxu0 %v397
      %v592 = vpop.f32.mrf.mxu0
      %v593 = vadd.f32 %v260, %v592
      %v594 = vpop.f32.mrf.mxu0
      %v595 = vpop.f32.mrf.mxu0
      %v596 = vadd.f32 %v260, %v595
      %v597 = vpop.f32.mrf.mxu0
      %598 = vmatprep.mubr.bf16.mxu0 0
      %599 = vmatmul.mubr.bf16.gmra.mxu0 %v398
      %v600 = vpop.f32.mrf.mxu0
      %v601 = vadd.f32 %v260, %v600
      %v602 = vpop.f32.mrf.mxu0
      %v603 = vpop.f32.mrf.mxu0
      %v604 = vadd.f32 %v260, %v603
      %v605 = vpop.f32.mrf.mxu0
      %606 = vmatprep.mubr.bf16.mxu0 0
      %607 = vmatmul.mubr.bf16.gmra.mxu0 %v399
      %v608 = vpop.f32.mrf.mxu0
      %v609 = vadd.f32 %v260, %v608
      %v610 = vpop.f32.mrf.mxu0
      %v611 = vpop.f32.mrf.mxu0
      %v612 = vadd.f32 %v260, %v611
      %v613 = vpop.f32.mrf.mxu0
      %614 = vmatprep.mubr.bf16.mxu0 0
      %615 = vmatmul.mubr.bf16.gmra.mxu0 %v400
      %v616 = vpop.f32.mrf.mxu0
      %v617 = vadd.f32 %v260, %v616
      %v618 = vpop.f32.mrf.mxu0
      %v619 = vpop.f32.mrf.mxu0
      %v620 = vadd.f32 %v260, %v619
      %v621 = vpop.f32.mrf.mxu0
      %622 = vmatprep.mubr.bf16.mxu0 0
      %623 = vmatmul.mubr.bf16.gmra.mxu0 %v401
      %v624 = vpop.f32.mrf.mxu0
      %v625 = vadd.f32 %v260, %v624
      %v626 = vpop.f32.mrf.mxu0
      %v627 = vpop.f32.mrf.mxu0
      %v628 = vadd.f32 %v260, %v627
      %v629 = vpop.f32.mrf.mxu0
      %630 = vmatprep.mubr.bf16.mxu0 0
      %631 = vmatmul.mubr.bf16.gmra.mxu0 %v402
      %v632 = vpop.f32.mrf.mxu0
      %v633 = vadd.f32 %v260, %v632
      %v634 = vpop.f32.mrf.mxu0
      %v635 = vpop.f32.mrf.mxu0
      %v636 = vadd.f32 %v260, %v635
      %v637 = vpop.f32.mrf.mxu0
      %638 = vmatprep.mubr.bf16.mxu0 0
      %639 = vmatmul.mubr.bf16.gmra.mxu0 %v403
      %v640 = vpop.f32.mrf.mxu0
      %v641 = vadd.f32 %v260, %v640
      %v642 = vpop.f32.mrf.mxu0
      %v643 = vpop.f32.mrf.mxu0
      %v644 = vadd.f32 %v260, %v643
      %v645 = vpop.f32.mrf.mxu0
      %646 = vmatprep.mubr.bf16.mxu0 0
      %647 = vmatmul.mubr.bf16.gmra.mxu0 %v404
      %v648 = vpop.f32.mrf.mxu0
      %v649 = vadd.f32 %v260, %v648
      %v650 = vpop.f32.mrf.mxu0
      %v651 = vpop.f32.mrf.mxu0
      %v652 = vadd.f32 %v260, %v651
      %v653 = vpop.f32.mrf.mxu0
      %654 = vmatprep.mubr.bf16.mxu0 0
      %655 = vmatmul.mubr.bf16.gmra.mxu0 %v405
      %v656 = vpop.f32.mrf.mxu0
      %v657 = vadd.f32 %v260, %v656
      %v658 = vpop.f32.mrf.mxu0
      %v659 = vpop.f32.mrf.mxu0
      %v660 = vadd.f32 %v260, %v659
      %v661 = vpop.f32.mrf.mxu0
      %662 = vmatprep.mubr.bf16.mxu0 0
      %663 = vmatmul.mubr.bf16.gmra.mxu0 %v406
      %v664 = vpop.f32.mrf.mxu0
      %v665 = vadd.f32 %v260, %v664
      %v666 = vpop.f32.mrf.mxu0
      %v667 = vpop.f32.mrf.mxu0
      %v668 = vadd.f32 %v260, %v667
      %v669 = vpop.f32.mrf.mxu0
      %670 = vmatprep.mubr.bf16.mxu0 0
      %671 = vmatmul.mubr.bf16.gmra.mxu0 %v407
      %v672 = vpop.f32.mrf.mxu0
      %v673 = vadd.f32 %v260, %v672
      %v674 = vpop.f32.mrf.mxu0
      %v675 = vpop.f32.mrf.mxu0
      %v676 = vadd.f32 %v260, %v675
      %v677 = vpop.f32.mrf.mxu0
      %678 = vmatprep.mubr.bf16.mxu0 0
      %679 = vmatmul.mubr.bf16.gmra.mxu0 %v408
      %v680 = vpop.f32.mrf.mxu0
      %v681 = vadd.f32 %v260, %v680
      %v682 = vpop.f32.mrf.mxu0
      %v683 = vpop.f32.mrf.mxu0
      %v684 = vadd.f32 %v260, %v683
      %v685 = vpop.f32.mrf.mxu0
      %686 = vmatprep.mubr.bf16.mxu0 0
      %687 = vmatmul.mubr.bf16.gmra.mxu0 %v409
      %v688 = vpop.f32.mrf.mxu0
      %v689 = vadd.f32 %v260, %v688
      %v690 = vpop.f32.mrf.mxu0
      %v691 = vpop.f32.mrf.mxu0
      %v692 = vadd.f32 %v260, %v691
      %v693 = vpop.f32.mrf.mxu0
      %694 = vmatprep.mubr.bf16.mxu0 0
      %695 = vmatmul.mubr.bf16.gmra.mxu0 %v410
      %v696 = vpop.f32.mrf.mxu0
      %v697 = vadd.f32 %v260, %v696
      %v698 = vpop.f32.mrf.mxu0
      %v699 = vpop.f32.mrf.mxu0
      %v700 = vadd.f32 %v260, %v699
      %v701 = vpop.f32.mrf.mxu0
      %702 = vmatprep.mubr.bf16.mxu0 0
      %703 = vmatmul.mubr.bf16.gmra.mxu0 %v411
      %v704 = vpop.f32.mrf.mxu0
      %v705 = vadd.f32 %v260, %v704
      %v706 = vpop.f32.mrf.mxu0
      %v707 = vpop.f32.mrf.mxu0
      %v708 = vadd.f32 %v260, %v707
      %v709 = vpop.f32.mrf.mxu0
      %710 = vmatprep.mubr.bf16.mxu0 0
      %711 = vmatmul.mubr.bf16.gmra.mxu0 %v412
      %v712 = vpop.f32.mrf.mxu0
      %v713 = vadd.f32 %v260, %v712
      %v714 = vpop.f32.mrf.mxu0
      %v715 = vpop.f32.mrf.mxu0
      %v716 = vadd.f32 %v260, %v715
      %v717 = vpop.f32.mrf.mxu0
      %718 = vmatprep.mubr.bf16.mxu0 0
      %719 = vmatmul.mubr.bf16.gmra.mxu0 %v413
      %v720 = vpop.f32.mrf.mxu0
      %v721 = vadd.f32 %v260, %v720
      %v722 = vpop.f32.mrf.mxu0
      %v723 = vpop.f32.mrf.mxu0
      %v724 = vadd.f32 %v260, %v723
      %v725 = vpop.f32.mrf.mxu0
      %726 = vmatprep.mubr.bf16.mxu0 0
      %727 = vmatmul.mubr.bf16.gmra.mxu0 %v414
      %v728 = vpop.f32.mrf.mxu0
      %v729 = vadd.f32 %v260, %v728
      %v730 = vpop.f32.mrf.mxu0
      %v731 = vpop.f32.mrf.mxu0
      %v732 = vadd.f32 %v260, %v731
      %v733 = vpop.f32.mrf.mxu0
      %734 = vmatprep.mubr.bf16.mxu0 0
      %735 = vmatmul.mubr.bf16.gmra.mxu0 %v415
      %v736 = vpop.f32.mrf.mxu0
      %v737 = vadd.f32 %v260, %v736
      %v738 = vpop.f32.mrf.mxu0
      %v739 = vpop.f32.mrf.mxu0
      %v740 = vadd.f32 %v260, %v739
      %v741 = vpop.f32.mrf.mxu0
      %742 = vmatprep.mubr.bf16.mxu0 0
      %743 = vmatmul.mubr.bf16.gmra.mxu0 %v416
      %v744 = vpop.f32.mrf.mxu0
      %v745 = vadd.f32 %v260, %v744
      %v746 = vpop.f32.mrf.mxu0
      %v747 = vpop.f32.mrf.mxu0
      %v748 = vadd.f32 %v260, %v747
      %v749 = vpop.f32.mrf.mxu0
      %750 = vmatprep.mubr.bf16.mxu0 0
      %751 = vmatmul.mubr.bf16.gmra.mxu0 %v417
      %v752 = vpop.f32.mrf.mxu0
      %v753 = vadd.f32 %v260, %v752
      %v754 = vpop.f32.mrf.mxu0
      %v755 = vpop.f32.mrf.mxu0
      %v756 = vadd.f32 %v260, %v755
      %v757 = vpop.f32.mrf.mxu0
      %758 = vmatprep.mubr.bf16.mxu0 0
      %759 = vmatmul.mubr.bf16.gmra.mxu0 %v418
      %v760 = vpop.f32.mrf.mxu0
      %v761 = vadd.f32 %v260, %v760
      %v762 = vpop.f32.mrf.mxu0
      %v763 = vpop.f32.mrf.mxu0
      %v764 = vadd.f32 %v260, %v763
      %v765 = vpop.f32.mrf.mxu0
      %766 = vmatprep.mubr.bf16.mxu0 0
      %767 = vmatmul.mubr.bf16.gmra.mxu0 %v419
      %v768 = vpop.f32.mrf.mxu0
      %v769 = vadd.f32 %v260, %v768
      %v770 = vpop.f32.mrf.mxu0
      %v771 = vpop.f32.mrf.mxu0
      %v772 = vadd.f32 %v260, %v771
      %v773 = vpop.f32.mrf.mxu0
      %774 = vmatprep.mubr.bf16.mxu0 0
      %775 = vmatmul.mubr.bf16.gmra.mxu0 %v420
      %v776 = vpop.f32.mrf.mxu0
      %v777 = vadd.f32 %v260, %v776
      %v778 = vpop.f32.mrf.mxu0
      %v779 = vpop.f32.mrf.mxu0
      %v780 = vadd.f32 %v260, %v779
      %v781 = vpop.f32.mrf.mxu0
      %782 = vmatprep.mubr.bf16.mxu0 0
      %783 = vmatmul.mubr.bf16.gmra.mxu0 %v421
      %v784 = vpop.f32.mrf.mxu0
      %v785 = vadd.f32 %v260, %v784
      %v786 = vpop.f32.mrf.mxu0
      %v787 = vpop.f32.mrf.mxu0
      %v788 = vadd.f32 %v260, %v787
      %v789 = vpop.f32.mrf.mxu0
      %790 = vdwg.mxu0
      %vm791 = vcmp.ge.f32.partialorder %v537, 0.0
      %vm792 = vcmp.ge.f32.partialorder %v540, 0.0
      %vm793 = vcmp.ge.f32.partialorder %v545, 0.0
      %vm794 = vcmp.ge.f32.partialorder %v548, 0.0
      %vm795 = vcmp.ge.f32.partialorder %v553, 0.0
      %vm796 = vcmp.ge.f32.partialorder %v556, 0.0
      %vm797 = vcmp.ge.f32.partialorder %v561, 0.0
      %vm798 = vcmp.ge.f32.partialorder %v564, 0.0
      %vm799 = vcmp.ge.f32.partialorder %v569, 0.0
      %vm800 = vcmp.ge.f32.partialorder %v572, 0.0
      %vm801 = vcmp.ge.f32.partialorder %v577, 0.0
      %vm802 = vcmp.ge.f32.partialorder %v580, 0.0
      %vm803 = vcmp.ge.f32.partialorder %v585, 0.0
      %vm804 = vcmp.ge.f32.partialorder %v588, 0.0
      %vm805 = vcmp.ge.f32.partialorder %v593, 0.0
      %vm806 = vcmp.ge.f32.partialorder %v596, 0.0
      %vm807 = vcmp.ge.f32.partialorder %v601, 0.0
      %vm808 = vcmp.ge.f32.partialorder %v604, 0.0
      %vm809 = vcmp.ge.f32.partialorder %v609, 0.0
      %vm810 = vcmp.ge.f32.partialorder %v612, 0.0
      %vm811 = vcmp.ge.f32.partialorder %v617, 0.0
      %vm812 = vcmp.ge.f32.partialorder %v620, 0.0
      %vm813 = vcmp.ge.f32.partialorder %v625, 0.0
      %vm814 = vcmp.ge.f32.partialorder %v628, 0.0
      %vm815 = vcmp.ge.f32.partialorder %v633, 0.0
      %vm816 = vcmp.ge.f32.partialorder %v636, 0.0
      %vm817 = vcmp.ge.f32.partialorder %v641, 0.0
      %vm818 = vcmp.ge.f32.partialorder %v644, 0.0
      %vm819 = vcmp.ge.f32.partialorder %v649, 0.0
      %vm820 = vcmp.ge.f32.partialorder %v652, 0.0
      %vm821 = vcmp.ge.f32.partialorder %v657, 0.0
      %vm822 = vcmp.ge.f32.partialorder %v660, 0.0
      %vm823 = vcmp.ge.f32.partialorder %v665, 0.0
      %vm824 = vcmp.ge.f32.partialorder %v668, 0.0
      %vm825 = vcmp.ge.f32.partialorder %v673, 0.0
      %vm826 = vcmp.ge.f32.partialorder %v676, 0.0
      %vm827 = vcmp.ge.f32.partialorder %v681, 0.0
      %vm828 = vcmp.ge.f32.partialorder %v684, 0.0
      %vm829 = vcmp.ge.f32.partialorder %v689, 0.0
      %vm830 = vcmp.ge.f32.partialorder %v692, 0.0
      %vm831 = vcmp.ge.f32.partialorder %v697, 0.0
      %vm832 = vcmp.ge.f32.partialorder %v700, 0.0
      %vm833 = vcmp.ge.f32.partialorder %v705, 0.0
      %vm834 = vcmp.ge.f32.partialorder %v708, 0.0
      %vm835 = vcmp.ge.f32.partialorder %v713, 0.0
      %vm836 = vcmp.ge.f32.partialorder %v716, 0.0
      %vm837 = vcmp.ge.f32.partialorder %v721, 0.0
      %vm838 = vcmp.ge.f32.partialorder %v724, 0.0
      %vm839 = vcmp.ge.f32.partialorder %v729, 0.0
      %vm840 = vcmp.ge.f32.partialorder %v732, 0.0
      %vm841 = vcmp.ge.f32.partialorder %v737, 0.0
      %vm842 = vcmp.ge.f32.partialorder %v740, 0.0
      %vm843 = vcmp.ge.f32.partialorder %v745, 0.0
      %vm844 = vcmp.ge.f32.partialorder %v748, 0.0
      %vm845 = vcmp.ge.f32.partialorder %v753, 0.0
      %vm846 = vcmp.ge.f32.partialorder %v756, 0.0
      %vm847 = vcmp.ge.f32.partialorder %v761, 0.0
      %vm848 = vcmp.ge.f32.partialorder %v764, 0.0
      %vm849 = vcmp.ge.f32.partialorder %v769, 0.0
      %vm850 = vcmp.ge.f32.partialorder %v772, 0.0
      %vm851 = vcmp.ge.f32.partialorder %v777, 0.0
      %vm852 = vcmp.ge.f32.partialorder %v780, 0.0
      %vm853 = vcmp.ge.f32.partialorder %v785, 0.0
      %vm854 = vcmp.ge.f32.partialorder %v788, 0.0
      %v855 = vmul.f32 %v537, 0.2
      %v856 = vmul.f32 %v540, 0.2
      %v857 = vmul.f32 %v545, 0.2
      %v858 = vmul.f32 %v548, 0.2
      %v859 = vmul.f32 %v553, 0.2
      %v860 = vmul.f32 %v556, 0.2
      %v861 = vmul.f32 %v561, 0.2
      %v862 = vmul.f32 %v564, 0.2
      %v863 = vmul.f32 %v569, 0.2
      %v864 = vmul.f32 %v572, 0.2
      %v865 = vmul.f32 %v577, 0.2
      %v866 = vmul.f32 %v580, 0.2
      %v867 = vmul.f32 %v585, 0.2
      %v868 = vmul.f32 %v588, 0.2
      %v869 = vmul.f32 %v593, 0.2
      %v870 = vmul.f32 %v596, 0.2
      %v871 = vmul.f32 %v601, 0.2
      %v872 = vmul.f32 %v604, 0.2
      %v873 = vmul.f32 %v609, 0.2
      %v874 = vmul.f32 %v612, 0.2
      %v875 = vmul.f32 %v617, 0.2
      %v876 = vmul.f32 %v620, 0.2
      %v877 = vmul.f32 %v625, 0.2
      %v878 = vmul.f32 %v628, 0.2
      %v879 = vmul.f32 %v633, 0.2
      %v880 = vmul.f32 %v636, 0.2
      %v881 = vmul.f32 %v641, 0.2
      %v882 = vmul.f32 %v644, 0.2
      %v883 = vmul.f32 %v649, 0.2
      %v884 = vmul.f32 %v652, 0.2
      %v885 = vmul.f32 %v657, 0.2
      %v886 = vmul.f32 %v660, 0.2
      %v887 = vmul.f32 %v665, 0.2
      %v888 = vmul.f32 %v668, 0.2
      %v889 = vmul.f32 %v673, 0.2
      %v890 = vmul.f32 %v676, 0.2
      %v891 = vmul.f32 %v681, 0.2
      %v892 = vmul.f32 %v684, 0.2
      %v893 = vmul.f32 %v689, 0.2
      %v894 = vmul.f32 %v692, 0.2
      %v895 = vmul.f32 %v697, 0.2
      %v896 = vmul.f32 %v700, 0.2
      %v897 = vmul.f32 %v705, 0.2
      %v898 = vmul.f32 %v708, 0.2
      %v899 = vmul.f32 %v713, 0.2
      %v900 = vmul.f32 %v716, 0.2
      %v901 = vmul.f32 %v721, 0.2
      %v902 = vmul.f32 %v724, 0.2
      %v903 = vmul.f32 %v729, 0.2
      %v904 = vmul.f32 %v732, 0.2
      %v905 = vmul.f32 %v737, 0.2
      %v906 = vmul.f32 %v740, 0.2
      %v907 = vmul.f32 %v745, 0.2
      %v908 = vmul.f32 %v748, 0.2
      %v909 = vmul.f32 %v753, 0.2
      %v910 = vmul.f32 %v756, 0.2
      %v911 = vmul.f32 %v761, 0.2
      %v912 = vmul.f32 %v764, 0.2
      %v913 = vmul.f32 %v769, 0.2
      %v914 = vmul.f32 %v772, 0.2
      %v915 = vmul.f32 %v777, 0.2
      %v916 = vmul.f32 %v780, 0.2
      %v917 = vmul.f32 %v785, 0.2
      %v918 = vmul.f32 %v788, 0.2
      %v919 = vsel %vm791, %v537, %v855
      %v920 = vsel %vm792, %v540, %v856
      %v921 = vsel %vm793, %v545, %v857
      %v922 = vsel %vm794, %v548, %v858
      %v923 = vsel %vm795, %v553, %v859
      %v924 = vsel %vm796, %v556, %v860
      %v925 = vsel %vm797, %v561, %v861
      %v926 = vsel %vm798, %v564, %v862
      %v927 = vsel %vm799, %v569, %v863
      %v928 = vsel %vm800, %v572, %v864
      %v929 = vsel %vm801, %v577, %v865
      %v930 = vsel %vm802, %v580, %v866
      %v931 = vsel %vm803, %v585, %v867
      %v932 = vsel %vm804, %v588, %v868
      %v933 = vsel %vm805, %v593, %v869
      %v934 = vsel %vm806, %v596, %v870
      %v935 = vsel %vm807, %v601, %v871
      %v936 = vsel %vm808, %v604, %v872
      %v937 = vsel %vm809, %v609, %v873
      %v938 = vsel %vm810, %v612, %v874
      %v939 = vsel %vm811, %v617, %v875
      %v940 = vsel %vm812, %v620, %v876
      %v941 = vsel %vm813, %v625, %v877
      %v942 = vsel %vm814, %v628, %v878
      %v943 = vsel %vm815, %v633, %v879
      %v944 = vsel %vm816, %v636, %v880
      %v945 = vsel %vm817, %v641, %v881
      %v946 = vsel %vm818, %v644, %v882
      %v947 = vsel %vm819, %v649, %v883
      %v948 = vsel %vm820, %v652, %v884
      %v949 = vsel %vm821, %v657, %v885
      %v950 = vsel %vm822, %v660, %v886
      %v951 = vsel %vm823, %v665, %v887
      %v952 = vsel %vm824, %v668, %v888
      %v953 = vsel %vm825, %v673, %v889
      %v954 = vsel %vm826, %v676, %v890
      %v955 = vsel %vm827, %v681, %v891
      %v956 = vsel %vm828, %v684, %v892
      %v957 = vsel %vm829, %v689, %v893
      %v958 = vsel %vm830, %v692, %v894
      %v959 = vsel %vm831, %v697, %v895
      %v960 = vsel %vm832, %v700, %v896
      %v961 = vsel %vm833, %v705, %v897
      %v962 = vsel %vm834, %v708, %v898
      %v963 = vsel %vm835, %v713, %v899
      %v964 = vsel %vm836, %v716, %v900
      %v965 = vsel %vm837, %v721, %v901
      %v966 = vsel %vm838, %v724, %v902
      %v967 = vsel %vm839, %v729, %v903
      %v968 = vsel %vm840, %v732, %v904
      %v969 = vsel %vm841, %v737, %v905
      %v970 = vsel %vm842, %v740, %v906
      %v971 = vsel %vm843, %v745, %v907
      %v972 = vsel %vm844, %v748, %v908
      %v973 = vsel %vm845, %v753, %v909
      %v974 = vsel %vm846, %v756, %v910
      %v975 = vsel %vm847, %v761, %v911
      %v976 = vsel %vm848, %v764, %v912
      %v977 = vsel %vm849, %v769, %v913
      %v978 = vsel %vm850, %v772, %v914
      %v979 = vsel %vm851, %v777, %v915
      %v980 = vsel %vm852, %v780, %v916
      %v981 = vsel %vm853, %v785, %v917
      %v982 = vsel %vm854, %v788, %v918
      %983 = vst [vmem:[%s172] sm:$0xff] %v919
      %984 = vst [vmem:[%s172 + $0x8] sm:$0xff] %v920
      %985 = vst [vmem:[%s172 + $0x10] sm:$0xff] %v921
      %986 = vst [vmem:[%s172 + $0x18] sm:$0xff] %v922
      %987 = vst [vmem:[%s172 + $0x20] sm:$0xff] %v923
      %988 = vst [vmem:[%s172 + $0x28] sm:$0xff] %v924
      %989 = vst [vmem:[%s172 + $0x30] sm:$0xff] %v925
      %990 = vst [vmem:[%s172 + $0x38] sm:$0xff] %v926
      %991 = vst [vmem:[%s172 + $0x40] sm:$0xff] %v927
      %992 = vst [vmem:[%s172 + $0x48] sm:$0xff] %v928
      %993 = vst [vmem:[%s172 + $0x50] sm:$0xff] %v929
      %994 = vst [vmem:[%s172 + $0x58] sm:$0xff] %v930
      %995 = vst [vmem:[%s172 + $0x60] sm:$0xff] %v931
      %996 = vst [vmem:[%s172 + $0x68] sm:$0xff] %v932
      %997 = vst [vmem:[%s172 + $0x70] sm:$0xff] %v933
      %998 = vst [vmem:[%s172 + $0x78] sm:$0xff] %v934
      %999 = vst [vmem:[%s172 + $0x80] sm:$0xff] %v935
      %1000 = vst [vmem:[%s172 + $0x88] sm:$0xff] %v936
      %1001 = vst [vmem:[%s172 + $0x90] sm:$0xff] %v937
      %1002 = vst [vmem:[%s172 + $0x98] sm:$0xff] %v938
      %1003 = vst [vmem:[%s172 + $0xa0] sm:$0xff] %v939
      %1004 = vst [vmem:[%s172 + $0xa8] sm:$0xff] %v940
      %1005 = vst [vmem:[%s172 + $0xb0] sm:$0xff] %v941
      %1006 = vst [vmem:[%s172 + $0xb8] sm:$0xff] %v942
      %1007 = vst [vmem:[%s172 + $0xc0] sm:$0xff] %v943
      %1008 = vst [vmem:[%s172 + $0xc8] sm:$0xff] %v944
      %1009 = vst [vmem:[%s172 + $0xd0] sm:$0xff] %v945
      %1010 = vst [vmem:[%s172 + $0xd8] sm:$0xff] %v946
      %1011 = vst [vmem:[%s172 + $0xe0] sm:$0xff] %v947
      %1012 = vst [vmem:[%s172 + $0xe8] sm:$0xff] %v948
      %1013 = vst [vmem:[%s172 + $0xf0] sm:$0xff] %v949
      %1014 = vst [vmem:[%s172 + $0xf8] sm:$0xff] %v950
      %1015 = vst [vmem:[%s172 + $0x100] sm:$0xff] %v951
      %1016 = vst [vmem:[%s172 + $0x108] sm:$0xff] %v952
      %1017 = vst [vmem:[%s172 + $0x110] sm:$0xff] %v953
      %1018 = vst [vmem:[%s172 + $0x118] sm:$0xff] %v954
      %1019 = vst [vmem:[%s172 + $0x120] sm:$0xff] %v955
      %1020 = vst [vmem:[%s172 + $0x128] sm:$0xff] %v956
      %1021 = vst [vmem:[%s172 + $0x130] sm:$0xff] %v957
      %1022 = vst [vmem:[%s172 + $0x138] sm:$0xff] %v958
      %1023 = vst [vmem:[%s172 + $0x140] sm:$0xff] %v959
      %1024 = vst [vmem:[%s172 + $0x148] sm:$0xff] %v960
      %1025 = vst [vmem:[%s172 + $0x150] sm:$0xff] %v961
      %1026 = vst [vmem:[%s172 + $0x158] sm:$0xff] %v962
      %1027 = vst [vmem:[%s172 + $0x160] sm:$0xff] %v963
      %1028 = vst [vmem:[%s172 + $0x168] sm:$0xff] %v964
      %1029 = vst [vmem:[%s172 + $0x170] sm:$0xff] %v965
      %1030 = vst [vmem:[%s172 + $0x178] sm:$0xff] %v966
      %1031 = vst [vmem:[%s172 + $0x180] sm:$0xff] %v967
      %1032 = vst [vmem:[%s172 + $0x188] sm:$0xff] %v968
      %1033 = vst [vmem:[%s172 + $0x190] sm:$0xff] %v969
      %1034 = vst [vmem:[%s172 + $0x198] sm:$0xff] %v970
      %1035 = vst [vmem:[%s172 + $0x1a0] sm:$0xff] %v971
      %1036 = vst [vmem:[%s172 + $0x1a8] sm:$0xff] %v972
      %1037 = vst [vmem:[%s172 + $0x1b0] sm:$0xff] %v973
      %1038 = vst [vmem:[%s172 + $0x1b8] sm:$0xff] %v974
      %1039 = vst [vmem:[%s172 + $0x1c0] sm:$0xff] %v975
      %1040 = vst [vmem:[%s172 + $0x1c8] sm:$0xff] %v976
      %1041 = vst [vmem:[%s172 + $0x1d0] sm:$0xff] %v977
      %1042 = vst [vmem:[%s172 + $0x1d8] sm:$0xff] %v978
      %1043 = vst [vmem:[%s172 + $0x1e0] sm:$0xff] %v979
      %1044 = vst [vmem:[%s172 + $0x1e8] sm:$0xff] %v980
      %1045 = vst [vmem:[%s172 + $0x1f0] sm:$0xff] %v981
      %1046 = vst [vmem:[%s172 + $0x1f8] sm:$0xff] %v982
      %s1047 = smul.u32 64, %s14
      %p1048 = scmp.lt.s32.totalorder %s1047, 255
      %s1049 = scalar_select %p1048, %s1047, 255
      %s1050 = smul.addr %s1049, 8
      %s1051 = scalar_lea.vmem %s3, %s1050
      // Predicated region
      $region33: #{patch_discriminator_forward.7} parent=31 // pred_check
        %p1052 = pneg %p100
      $region34: #{patch_discriminator_forward.7} parent=31 // pred_check_branch
        %1054 = sbr.rel (%p1052) target = $region36
      $region35: #{patch_discriminator_forward.7} parent=31 // pred_region
        %s1055 = smul.u32 64, %s14
      $region36: #{patch_discriminator_forward.7} parent=31 // pred_fallthru
        _
    $region32: #{patch_discriminator_forward.7} parent=5 // pred_fallthru
      _
    %p1056 = scmp.le.s32.totalorder 2, %s9
    // Predicated region
    $region37: #{patch_discriminator_forward.7} parent=5 // pred_check
      %p1057 = pneg %p1056
    $region38: #{patch_discriminator_forward.7} parent=5 // pred_check_branch
      %1059 = sbr.rel (%p1057) target = $region40
    $region39: #{patch_discriminator_forward.7} parent=5 // pred_region
      %s1060 = ssub.s32 %s9, 2
      // Predicated region
      $region41: #{patch_discriminator_forward.7} parent=39 // pred_check
        %p1061 = pneg %p106
      $region42: #{patch_discriminator_forward.7} parent=39 // pred_check_branch
        %1063 = sbr.rel (%p1061) target = $region44
      $region43: #{patch_discriminator_forward.7} parent=39 // pred_region
        %s1064 = smul.u32 64, %s15
        %p1065 = scmp.lt.s32.totalorder %s1064, 255
        %s1066 = scalar_select %p1065, %s1064, 255
        %s1067 = smul.addr %s1066, 8
        %s1068 = scalar_lea.vmem %s3, %s1067
      $region44: #{patch_discriminator_forward.7} parent=39 // pred_fallthru
        _
    $region40: #{patch_discriminator_forward.7} parent=5 // pred_fallthru
      _
  $region6: #{patch_discriminator_forward.7} parent=0 // loop_footer
    %s13 = sadd.s32 1, %s9
  $region7: #{patch_discriminator_forward.7} parent=0 // loop_footer_branch
    %8 = sbr.rel target = $region3
  $region8: #{patch_discriminator_forward.7} parent=0 // loop_exit
    _

// kernel: patch_discriminator_forward.8
$region0: #{patch_discriminator_forward.8}
  #allocation0 [shape = 'u32[]', space=smem, size = 0x4, offset = 0x4, fixed_abs, tag = 'smem constant byte address 0x4 - core index']
  #allocation1 [shape = 'u32[144,128]{1,0:T(1,128)}', space=vmem, size = 0x12000, scoped, tag = 'internal scratch']
  %s0 = inlined_call_operand.vmem [shape: f32[8,9,9,64], index: 0, kind: input, shape index: {}]
  %s1 = inlined_call_operand.vmem [shape: f32[8,9,8,64], index: 1, kind: input, shape index: {}]
  %s2 = inlined_call_operand.vmem [shape: f32[8,8,9,64], index: 2, kind: input, shape index: {}]
  %s3 = inlined_call_operand.vmem [shape: f32[8,8,8,64], index: 3, kind: input, shape index: {}]
  %s4 = inlined_call_operand.vmem [shape: f32[8,8,8,64], index: 4, kind: output, shape index: {}]
  %s5 = sld [smem:[#allocation0]]
  $region26: #{patch_discriminator_forward.8} parent=0
    _
  %s7 = ssub.s32 1, %s5
  %s8 = scalar_select 0, %s7, %s5
  // Predicated region
  $region2: #{patch_discriminator_forward.8} parent=0 // pred_check
    _
  $region3: #{patch_discriminator_forward.8} parent=0 // pred_check_branch
    %10 = sbr.rel (0) target = $region5
  $region4: #{patch_discriminator_forward.8} parent=0 // pred_region
    _
  $region5: #{patch_discriminator_forward.8} parent=0 // pred_fallthru
    _
  // Predicated region
  $region6: #{patch_discriminator_forward.8} parent=0 // pred_check
    _
  $region7: #{patch_discriminator_forward.8} parent=0 // pred_check_branch
    %12 = sbr.rel (0) target = $region9
  $region8: #{patch_discriminator_forward.8} parent=0 // pred_region
    _
  $region9: #{patch_discriminator_forward.8} parent=0 // pred_fallthru
    _
  // Predicated region
  $region10: #{patch_discriminator_forward.8} parent=0 // pred_check
    _
  $region11: #{patch_discriminator_forward.8} parent=0 // pred_check_branch
    %14 = sbr.rel (0) target = $region13
  $region12: #{patch_discriminator_forward.8} parent=0 // pred_region
    _
  $region13: #{patch_discriminator_forward.8} parent=0 // pred_fallthru
    _
  // Predicated region
  $region14: #{patch_discriminator_forward.8} parent=0 // pred_check
    _
  $region15: #{patch_discriminator_forward.8} parent=0 // pred_check_branch
    %16 = sbr.rel (0) target = $region17
  $region16: #{patch_discriminator_forward.8} parent=0 // pred_region
    _
  $region17: #{patch_discriminator_forward.8} parent=0 // pred_fallthru
    _
  %v17 = vld [vmem:[%s0] sm:$0xff]
  %v18 = vld [vmem:[%s0 + $0x8] sm:$0x1]
  %v19 = vld [vmem:[%s0 + $0x10] sm:$0xff]
  %v20 = vld [vmem:[%s0 + $0x18] sm:$0x1]
  %v21 = vld [vmem:[%s0 + $0x20] sm:$0xff]
  %v22 = vld [vmem:[%s0 + $0x28] sm:$0x1]
  %v23 = vld [vmem:[%s0 + $0x30] sm:$0xff]
  %v24 = vld [vmem:[%s0 + $0x38] sm:$0x1]
  %v25 = vld [vmem:[%s0 + $0x40] sm:$0xff]
  %v26 = vld [vmem:[%s0 + $0x48] sm:$0x1]
  %v27 = vld [vmem:[%s0 + $0x50] sm:$0xff]
  %v28 = vld [vmem:[%s0 + $0x58] sm:$0x1]
  %v29 = vld [vmem:[%s0 + $0x60] sm:$0xff]
  %v30 = vld [vmem:[%s0 + $0x68] sm:$0x1]
  %v31 = vld [vmem:[%s0 + $0x70] sm:$0xff]
  %v32 = vld [vmem:[%s0 + $0x78] sm:$0x1]
  %v33 = vld [vmem:[%s0 + $0x80] sm:$0xff]
  %v34 = vld [vmem:[%s0 + $0x88] sm:$0x1]
  %v35 = vld [vmem:[%s0 + $0x90] sm:$0xff]
  %v36 = vld [vmem:[%s0 + $0x98] sm:$0x1]
  %v37 = vld [vmem:[%s0 + $0xa0] sm:$0xff]
  %v38 = vld [vmem:[%s0 + $0xa8] sm:$0x1]
  %v39 = vld [vmem:[%s0 + $0xb0] sm:$0xff]
  %v40 = vld [vmem:[%s0 + $0xb8] sm:$0x1]
  %v41 = vld [vmem:[%s0 + $0xc0] sm:$0xff]
  %v42 = vld [vmem:[%s0 + $0xc8] sm:$0x1]
  %v43 = vld [vmem:[%s0 + $0xd0] sm:$0xff]
  %v44 = vld [vmem:[%s0 + $0xd8] sm:$0x1]
  %v45 = vld [vmem:[%s0 + $0xe0] sm:$0xff]
  %v46 = vld [vmem:[%s0 + $0xe8] sm:$0x1]
  %v47 = vld [vmem:[%s0 + $0xf0] sm:$0xff]
  %v48 = vld [vmem:[%s0 + $0xf8] sm:$0x1]
  %v49 = vld [vmem:[%s0 + $0x100] sm:$0xff]
  %v50 = vld [vmem:[%s0 + $0x108] sm:$0x1]
  %v51 = vld [vmem:[%s0 + $0x110] sm:$0xff]
  %v52 = vld [vmem:[%s0 + $0x118] sm:$0x1]
  %v53 = vld [vmem:[%s0 + $0x120] sm:$0xff]
  %v54 = vld [vmem:[%s0 + $0x128] sm:$0x1]
  %v55 = vld [vmem:[%s0 + $0x130] sm:$0xff]
  %v56 = vld [vmem:[%s0 + $0x138] sm:$0x1]
  %v57 = vld [vmem:[%s0 + $0x140] sm:$0xff]
  %v58 = vld [vmem:[%s0 + $0x148] sm:$0x1]
  %v59 = vld [vmem:[%s0 + $0x150] sm:$0xff]
  %v60 = vld [vmem:[%s0 + $0x158] sm:$0x1]
  %v61 = vld [vmem:[%s0 + $0x160] sm:$0xff]
  %v62 = vld [vmem:[%s0 + $0x168] sm:$0x1]
  %v63 = vld [vmem:[%s0 + $0x170] sm:$0xff]
  %v64 = vld [vmem:[%s0 + $0x178] sm:$0x1]
  %v65 = vld [vmem:[%s0 + $0x180] sm:$0xff]
  %v66 = vld [vmem:[%s0 + $0x188] sm:$0x1]
  %v67 = vld [vmem:[%s0 + $0x190] sm:$0xff]
  %v68 = vld [vmem:[%s0 + $0x198] sm:$0x1]
  %v69 = vld [vmem:[%s0 + $0x1a0] sm:$0xff]
  %v70 = vld [vmem:[%s0 + $0x1a8] sm:$0x1]
  %v71 = vld [vmem:[%s0 + $0x1b0] sm:$0xff]
  %v72 = vld [vmem:[%s0 + $0x1b8] sm:$0x1]
  %v73 = vld [vmem:[%s0 + $0x1c0] sm:$0xff]
  %v74 = vld [vmem:[%s0 + $0x1c8] sm:$0x1]
  %v75 = vld [vmem:[%s0 + $0x1d0] sm:$0xff]
  %v76 = vld [vmem:[%s0 + $0x1d8] sm:$0x1]
  %v77 = vld [vmem:[%s0 + $0x1e0] sm:$0xff]
  %v78 = vld [vmem:[%s0 + $0x1e8] sm:$0x1]
  %v79 = vld [vmem:[%s0 + $0x1f0] sm:$0xff]
  %v80 = vld [vmem:[%s0 + $0x1f8] sm:$0x1]
  %v81 = vld [vmem:[%s0 + $0x200] sm:$0xff]
  %v82 = vld [vmem:[%s0 + $0x208] sm:$0x1]
  %v83 = vld [vmem:[%s0 + $0x210] sm:$0xff]
  %v84 = vld [vmem:[%s0 + $0x218] sm:$0x1]
  %v85 = vld [vmem:[%s0 + $0x220] sm:$0xff]
  %v86 = vld [vmem:[%s0 + $0x228] sm:$0x1]
  %v87 = vld [vmem:[%s0 + $0x230] sm:$0xff]
  %v88 = vld [vmem:[%s0 + $0x238] sm:$0x1]
  %v89 = vld [vmem:[%s0 + $0x240] sm:$0xff]
  %v90 = vld [vmem:[%s0 + $0x248] sm:$0x1]
  %v91 = vld [vmem:[%s0 + $0x250] sm:$0xff]
  %v92 = vld [vmem:[%s0 + $0x258] sm:$0x1]
  %v93 = vld [vmem:[%s0 + $0x260] sm:$0xff]
  %v94 = vld [vmem:[%s0 + $0x268] sm:$0x1]
  %v95 = vld [vmem:[%s0 + $0x270] sm:$0xff]
  %v96 = vld [vmem:[%s0 + $0x278] sm:$0x1]
  %v97 = vld [vmem:[%s0 + $0x280] sm:$0xff]
  %v98 = vld [vmem:[%s0 + $0x288] sm:$0x1]
  %v99 = vld [vmem:[%s0 + $0x290] sm:$0xff]
  %v100 = vld [vmem:[%s0 + $0x298] sm:$0x1]
  %v101 = vld [vmem:[%s0 + $0x2a0] sm:$0xff]
  %v102 = vld [vmem:[%s0 + $0x2a8] sm:$0x1]
  %v103 = vld [vmem:[%s0 + $0x2b0] sm:$0xff]
  %v104 = vld [vmem:[%s0 + $0x2b8] sm:$0x1]
  %v105 = vld [vmem:[%s0 + $0x2c0] sm:$0xff]
  %v106 = vld [vmem:[%s0 + $0x2c8] sm:$0x1]
  %v107 = vld [vmem:[%s0 + $0x2d0] sm:$0xff]
  %v108 = vld [vmem:[%s0 + $0x2d8] sm:$0x1]
  %v109 = vld [vmem:[%s0 + $0x2e0] sm:$0xff]
  %v110 = vld [vmem:[%s0 + $0x2e8] sm:$0x1]
  %v111 = vld [vmem:[%s0 + $0x2f0] sm:$0xff]
  %v112 = vld [vmem:[%s0 + $0x2f8] sm:$0x1]
  %v113 = vld [vmem:[%s0 + $0x300] sm:$0xff]
  %v114 = vld [vmem:[%s0 + $0x308] sm:$0x1]
  %v115 = vld [vmem:[%s0 + $0x310] sm:$0xff]
  %v116 = vld [vmem:[%s0 + $0x318] sm:$0x1]
  %v117 = vld [vmem:[%s0 + $0x320] sm:$0xff]
  %v118 = vld [vmem:[%s0 + $0x328] sm:$0x1]
  %v119 = vld [vmem:[%s0 + $0x330] sm:$0xff]
  %v120 = vld [vmem:[%s0 + $0x338] sm:$0x1]
  %v121 = vld [vmem:[%s0 + $0x340] sm:$0xff]
  %v122 = vld [vmem:[%s0 + $0x348] sm:$0x1]
  %v123 = vld [vmem:[%s0 + $0x350] sm:$0xff]
  %v124 = vld [vmem:[%s0 + $0x358] sm:$0x1]
  %v125 = vld [vmem:[%s0 + $0x360] sm:$0xff]
  %v126 = vld [vmem:[%s0 + $0x368] sm:$0x1]
  %v127 = vld [vmem:[%s0 + $0x370] sm:$0xff]
  %v128 = vld [vmem:[%s0 + $0x378] sm:$0x1]
  %v129 = vld [vmem:[%s0 + $0x380] sm:$0xff]
  %v130 = vld [vmem:[%s0 + $0x388] sm:$0x1]
  %v131 = vld [vmem:[%s0 + $0x390] sm:$0xff]
  %v132 = vld [vmem:[%s0 + $0x398] sm:$0x1]
  %v133 = vld [vmem:[%s0 + $0x3a0] sm:$0xff]
  %v134 = vld [vmem:[%s0 + $0x3a8] sm:$0x1]
  %v135 = vld [vmem:[%s0 + $0x3b0] sm:$0xff]
  %v136 = vld [vmem:[%s0 + $0x3b8] sm:$0x1]
  %v137 = vld [vmem:[%s0 + $0x3c0] sm:$0xff]
  %v138 = vld [vmem:[%s0 + $0x3c8] sm:$0x1]
  %v139 = vld [vmem:[%s0 + $0x3d0] sm:$0xff]
  %v140 = vld [vmem:[%s0 + $0x3d8] sm:$0x1]
  %v141 = vld [vmem:[%s0 + $0x3e0] sm:$0xff]
  %v142 = vld [vmem:[%s0 + $0x3e8] sm:$0x1]
  %v143 = vld [vmem:[%s0 + $0x3f0] sm:$0xff]
  %v144 = vld [vmem:[%s0 + $0x3f8] sm:$0x1]
  %v145 = vld [vmem:[%s0 + $0x400] sm:$0xff]
  %v146 = vld [vmem:[%s0 + $0x408] sm:$0x1]
  %v147 = vld [vmem:[%s0 + $0x410] sm:$0xff]
  %v148 = vld [vmem:[%s0 + $0x418] sm:$0x1]
  %v149 = vld [vmem:[%s0 + $0x420] sm:$0xff]
  %v150 = vld [vmem:[%s0 + $0x428] sm:$0x1]
  %v151 = vld [vmem:[%s0 + $0x430] sm:$0xff]
  %v152 = vld [vmem:[%s0 + $0x438] sm:$0x1]
  %v153 = vld [vmem:[%s0 + $0x440] sm:$0xff]
  %v154 = vld [vmem:[%s0 + $0x448] sm:$0x1]
  %v155 = vld [vmem:[%s0 + $0x450] sm:$0xff]
  %v156 = vld [vmem:[%s0 + $0x458] sm:$0x1]
  %v157 = vld [vmem:[%s0 + $0x460] sm:$0xff]
  %v158 = vld [vmem:[%s0 + $0x468] sm:$0x1]
  %v159 = vld [vmem:[%s0 + $0x470] sm:$0xff]
  %v160 = vld [vmem:[%s0 + $0x478] sm:$0x1]
  %v161 = vld [vmem:[%s1] sm:$0xff]
  %v162 = vld [vmem:[%s1 + $0x8] sm:$0xff]
  %v163 = vld [vmem:[%s1 + $0x10] sm:$0xff]
  %v164 = vld [vmem:[%s1 + $0x18] sm:$0xff]
  %v165 = vld [vmem:[%s1 + $0x20] sm:$0xff]
  %v166 = vld [vmem:[%s1 + $0x28] sm:$0xff]
  %v167 = vld [vmem:[%s1 + $0x30] sm:$0xff]
  %v168 = vld [vmem:[%s1 + $0x38] sm:$0xff]
  %v169 = vld [vmem:[%s1 + $0x40] sm:$0xff]
  %v170 = vld [vmem:[%s1 + $0x48] sm:$0xff]
  %v171 = vld [vmem:[%s1 + $0x50] sm:$0xff]
  %v172 = vld [vmem:[%s1 + $0x58] sm:$0xff]
  %v173 = vld [vmem:[%s1 + $0x60] sm:$0xff]
  %v174 = vld [vmem:[%s1 + $0x68] sm:$0xff]
  %v175 = vld [vmem:[%s1 + $0x70] sm:$0xff]
  %v176 = vld [vmem:[%s1 + $0x78] sm:$0xff]
  %v177 = vld [vmem:[%s1 + $0x80] sm:$0xff]
  %v178 = vld [vmem:[%s1 + $0x88] sm:$0xff]
  %v179 = vld [vmem:[%s1 + $0x90] sm:$0xff]
  %v180 = vld [vmem:[%s1 + $0x98] sm:$0xff]
  %v181 = vld [vmem:[%s1 + $0xa0] sm:$0xff]
  %v182 = vld [vmem:[%s1 + $0xa8] sm:$0xff]
  %v183 = vld [vmem:[%s1 + $0xb0] sm:$0xff]
  %v184 = vld [vmem:[%s1 + $0xb8] sm:$0xff]
  %v185 = vld [vmem:[%s1 + $0xc0] sm:$0xff]
  %v186 = vld [vmem:[%s1 + $0xc8] sm:$0xff]
  %v187 = vld [vmem:[%s1 + $0xd0] sm:$0xff]
  %v188 = vld [vmem:[%s1 + $0xd8] sm:$0xff]
  %v189 = vld [vmem:[%s1 + $0xe0] sm:$0xff]
  %v190 = vld [vmem:[%s1 + $0xe8] sm:$0xff]
  %v191 = vld [vmem:[%s1 + $0xf0] sm:$0xff]
  %v192 = vld [vmem:[%s1 + $0xf8] sm:$0xff]
  %v193 = vld [vmem:[%s1 + $0x100] sm:$0xff]
  %v194 = vld [vmem:[%s1 + $0x108] sm:$0xff]
  %v195 = vld [vmem:[%s1 + $0x110] sm:$0xff]
  %v196 = vld [vmem:[%s1 + $0x118] sm:$0xff]
  %v197 = vld [vmem:[%s1 + $0x120] sm:$0xff]
  %v198 = vld [vmem:[%s1 + $0x128] sm:$0xff]
  %v199 = vld [vmem:[%s1 + $0x130] sm:$0xff]
  %v200 = vld [vmem:[%s1 + $0x138] sm:$0xff]
  %v201 = vld [vmem:[%s1 + $0x140] sm:$0xff]
  %v202 = vld [vmem:[%s1 + $0x148] sm:$0xff]
  %v203 = vld [vmem:[%s1 + $0x150] sm:$0xff]
  %v204 = vld [vmem:[%s1 + $0x158] sm:$0xff]
  %v205 = vld [vmem:[%s1 + $0x160] sm:$0xff]
  %v206 = vld [vmem:[%s1 + $0x168] sm:$0xff]
  %v207 = vld [vmem:[%s1 + $0x170] sm:$0xff]
  %v208 = vld [vmem:[%s1 + $0x178] sm:$0xff]
  %v209 = vld [vmem:[%s1 + $0x180] sm:$0xff]
  %v210 = vld [vmem:[%s1 + $0x188] sm:$0xff]
  %v211 = vld [vmem:[%s1 + $0x190] sm:$0xff]
  %v212 = vld [vmem:[%s1 + $0x198] sm:$0xff]
  %v213 = vld [vmem:[%s1 + $0x1a0] sm:$0xff]
  %v214 = vld [vmem:[%s1 + $0x1a8] sm:$0xff]
  %v215 = vld [vmem:[%s1 + $0x1b0] sm:$0xff]
  %v216 = vld [vmem:[%s1 + $0x1b8] sm:$0xff]
  %v217 = vld [vmem:[%s1 + $0x1c0] sm:$0xff]
  %v218 = vld [vmem:[%s1 + $0x1c8] sm:$0xff]
  %v219 = vld [vmem:[%s1 + $0x1d0] sm:$0xff]
  %v220 = vld [vmem:[%s1 + $0x1d8] sm:$0xff]
  %v221 = vld [vmem:[%s1 + $0x1e0] sm:$0xff]
  %v222 = vld [vmem:[%s1 + $0x1e8] sm:$0xff]
  %v223 = vld [vmem:[%s1 + $0x1f0] sm:$0xff]
  %v224 = vld [vmem:[%s1 + $0x1f8] sm:$0xff]
  %v225 = vld [vmem:[%s1 + $0x200] sm:$0xff]
  %v226 = vld [vmem:[%s1 + $0x208] sm:$0xff]
  %v227 = vld [vmem:[%s1 + $0x210] sm:$0xff]
  %v228 = vld [vmem:[%s1 + $0x218] sm:$0xff]
  %v229 = vld [vmem:[%s1 + $0x220] sm:$0xff]
  %v230 = vld [vmem:[%s1 + $0x228] sm:$0xff]
  %v231 = vld [vmem:[%s1 + $0x230] sm:$0xff]
  %v232 = vld [vmem:[%s1 + $0x238] sm:$0xff]
  %v233 = vld [vmem:[%s2] sm:$0xff]
  %v234 = vld [vmem:[%s2 + $0x8] sm:$0x1]
  %v235 = vld [vmem:[%s2 + $0x10] sm:$0xff]
  %v236 = vld [vmem:[%s2 + $0x18] sm:$0x1]
  %v237 = vld [vmem:[%s2 + $0x20] sm:$0xff]
  %v238 = vld [vmem:[%s2 + $0x28] sm:$0x1]
  %v239 = vld [vmem:[%s2 + $0x30] sm:$0xff]
  %v240 = vld [vmem:[%s2 + $0x38] sm:$0x1]
  %v241 = vld [vmem:[%s2 + $0x40] sm:$0xff]
  %v242 = vld [vmem:[%s2 + $0x48] sm:$0x1]
  %v243 = vld [vmem:[%s2 + $0x50] sm:$0xff]
  %v244 = vld [vmem:[%s2 + $0x58] sm:$0x1]
  %v245 = vld [vmem:[%s2 + $0x60] sm:$0xff]
  %v246 = vld [vmem:[%s2 + $0x68] sm:$0x1]
  %v247 = vld [vmem:[%s2 + $0x70] sm:$0xff]
  %v248 = vld [vmem:[%s2 + $0x78] sm:$0x1]
  %v249 = vld [vmem:[%s2 + $0x80] sm:$0xff]
  %v250 = vld [vmem:[%s2 + $0x88] sm:$0x1]
  %v251 = vld [vmem:[%s2 + $0x90] sm:$0xff]
  %v252 = vld [vmem:[%s2 + $0x98] sm:$0x1]
  %v253 = vld [vmem:[%s2 + $0xa0] sm:$0xff]
  %v254 = vld [vmem:[%s2 + $0xa8] sm:$0x1]
  %v255 = vld [vmem:[%s2 + $0xb0] sm:$0xff]
  %v256 = vld [vmem:[%s2 + $0xb8] sm:$0x1]
  %v257 = vld [vmem:[%s2 + $0xc0] sm:$0xff]
  %v258 = vld [vmem:[%s2 + $0xc8] sm:$0x1]
  %v259 = vld [vmem:[%s2 + $0xd0] sm:$0xff]
  %v260 = vld [vmem:[%s2 + $0xd8] sm:$0x1]
  %v261 = vld [vmem:[%s2 + $0xe0] sm:$0xff]
  %v262 = vld [vmem:[%s2 + $0xe8] sm:$0x1]
  %v263 = vld [vmem:[%s2 + $0xf0] sm:$0xff]
  %v264 = vld [vmem:[%s2 + $0xf8] sm:$0x1]
  %v265 = vld [vmem:[%s2 + $0x100] sm:$0xff]
  %v266 = vld [vmem:[%s2 + $0x108] sm:$0x1]
  %v267 = vld [vmem:[%s2 + $0x110] sm:$0xff]
  %v268 = vld [vmem:[%s2 + $0x118] sm:$0x1]
  %v269 = vld [vmem:[%s2 + $0x120] sm:$0xff]
  %v270 = vld [vmem:[%s2 + $0x128] sm:$0x1]
  %v271 = vld [vmem:[%s2 + $0x130] sm:$0xff]
  %v272 = vld [vmem:[%s2 + $0x138] sm:$0x1]
  %v273 = vld [vmem:[%s2 + $0x140] sm:$0xff]
  %v274 = vld [vmem:[%s2 + $0x148] sm:$0x1]
  %v275 = vld [vmem:[%s2 + $0x150] sm:$0xff]
  %v276 = vld [vmem:[%s2 + $0x158] sm:$0x1]
  %v277 = vld [vmem:[%s2 + $0x160] sm:$0xff]
  %v278 = vld [vmem:[%s2 + $0x168] sm:$0x1]
  %v279 = vld [vmem:[%s2 + $0x170] sm:$0xff]
  %v280 = vld [vmem:[%s2 + $0x178] sm:$0x1]
  %v281 = vld [vmem:[%s2 + $0x180] sm:$0xff]
  %v282 = vld [vmem:[%s2 + $0x188] sm:$0x1]
  %v283 = vld [vmem:[%s2 + $0x190] sm:$0xff]
  %v284 = vld [vmem:[%s2 + $0x198] sm:$0x1]
  %v285 = vld [vmem:[%s2 + $0x1a0] sm:$0xff]
  %v286 = vld [vmem:[%s2 + $0x1a8] sm:$0x1]
  %v287 = vld [vmem:[%s2 + $0x1b0] sm:$0xff]
  %v288 = vld [vmem:[%s2 + $0x1b8] sm:$0x1]
  %v289 = vld [vmem:[%s2 + $0x1c0] sm:$0xff]
  %v290 = vld [vmem:[%s2 + $0x1c8] sm:$0x1]
  %v291 = vld [vmem:[%s2 + $0x1d0] sm:$0xff]
  %v292 = vld [vmem:[%s2 + $0x1d8] sm:$0x1]
  %v293 = vld [vmem:[%s2 + $0x1e0] sm:$0xff]
  %v294 = vld [vmem:[%s2 + $0x1e8] sm:$0x1]
  %v295 = vld [vmem:[%s2 + $0x1f0] sm:$0xff]
  %v296 = vld [vmem:[%s2 + $0x1f8] sm:$0x1]
  %v297 = vld [vmem:[%s2 + $0x200] sm:$0xff]
  %v298 = vld [vmem:[%s2 + $0x208] sm:$0x1]
  %v299 = vld [vmem:[%s2 + $0x210] sm:$0xff]
  %v300 = vld [vmem:[%s2 + $0x218] sm:$0x1]
  %v301 = vld [vmem:[%s2 + $0x220] sm:$0xff]
  %v302 = vld [vmem:[%s2 + $0x228] sm:$0x1]
  %v303 = vld [vmem:[%s2 + $0x230] sm:$0xff]
  %v304 = vld [vmem:[%s2 + $0x238] sm:$0x1]
  %v305 = vld [vmem:[%s2 + $0x240] sm:$0xff]
  %v306 = vld [vmem:[%s2 + $0x248] sm:$0x1]
  %v307 = vld [vmem:[%s2 + $0x250] sm:$0xff]
  %v308 = vld [vmem:[%s2 + $0x258] sm:$0x1]
  %v309 = vld [vmem:[%s2 + $0x260] sm:$0xff]
  %v310 = vld [vmem:[%s2 + $0x268] sm:$0x1]
  %v311 = vld [vmem:[%s2 + $0x270] sm:$0xff]
  %v312 = vld [vmem:[%s2 + $0x278] sm:$0x1]
  %v313 = vld [vmem:[%s2 + $0x280] sm:$0xff]
  %v314 = vld [vmem:[%s2 + $0x288] sm:$0x1]
  %v315 = vld [vmem:[%s2 + $0x290] sm:$0xff]
  %v316 = vld [vmem:[%s2 + $0x298] sm:$0x1]
  %v317 = vld [vmem:[%s2 + $0x2a0] sm:$0xff]
  %v318 = vld [vmem:[%s2 + $0x2a8] sm:$0x1]
  %v319 = vld [vmem:[%s2 + $0x2b0] sm:$0xff]
  %v320 = vld [vmem:[%s2 + $0x2b8] sm:$0x1]
  %v321 = vld [vmem:[%s2 + $0x2c0] sm:$0xff]
  %v322 = vld [vmem:[%s2 + $0x2c8] sm:$0x1]
  %v323 = vld [vmem:[%s2 + $0x2d0] sm:$0xff]
  %v324 = vld [vmem:[%s2 + $0x2d8] sm:$0x1]
  %v325 = vld [vmem:[%s2 + $0x2e0] sm:$0xff]
  %v326 = vld [vmem:[%s2 + $0x2e8] sm:$0x1]
  %v327 = vld [vmem:[%s2 + $0x2f0] sm:$0xff]
  %v328 = vld [vmem:[%s2 + $0x2f8] sm:$0x1]
  %v329 = vld [vmem:[%s2 + $0x300] sm:$0xff]
  %v330 = vld [vmem:[%s2 + $0x308] sm:$0x1]
  %v331 = vld [vmem:[%s2 + $0x310] sm:$0xff]
  %v332 = vld [vmem:[%s2 + $0x318] sm:$0x1]
  %v333 = vld [vmem:[%s2 + $0x320] sm:$0xff]
  %v334 = vld [vmem:[%s2 + $0x328] sm:$0x1]
  %v335 = vld [vmem:[%s2 + $0x330] sm:$0xff]
  %v336 = vld [vmem:[%s2 + $0x338] sm:$0x1]
  %v337 = vld [vmem:[%s2 + $0x340] sm:$0xff]
  %v338 = vld [vmem:[%s2 + $0x348] sm:$0x1]
  %v339 = vld [vmem:[%s2 + $0x350] sm:$0xff]
  %v340 = vld [vmem:[%s2 + $0x358] sm:$0x1]
  %v341 = vld [vmem:[%s2 + $0x360] sm:$0xff]
  %v342 = vld [vmem:[%s2 + $0x368] sm:$0x1]
  %v343 = vld [vmem:[%s2 + $0x370] sm:$0xff]
  %v344 = vld [vmem:[%s2 + $0x378] sm:$0x1]
  %v345 = vld [vmem:[%s2 + $0x380] sm:$0xff]
  %v346 = vld [vmem:[%s2 + $0x388] sm:$0x1]
  %v347 = vld [vmem:[%s2 + $0x390] sm:$0xff]
  %v348 = vld [vmem:[%s2 + $0x398] sm:$0x1]
  %v349 = vld [vmem:[%s2 + $0x3a0] sm:$0xff]
  %v350 = vld [vmem:[%s2 + $0x3a8] sm:$0x1]
  %v351 = vld [vmem:[%s2 + $0x3b0] sm:$0xff]
  %v352 = vld [vmem:[%s2 + $0x3b8] sm:$0x1]
  %v353 = vld [vmem:[%s2 + $0x3c0] sm:$0xff]
  %v354 = vld [vmem:[%s2 + $0x3c8] sm:$0x1]
  %v355 = vld [vmem:[%s2 + $0x3d0] sm:$0xff]
  %v356 = vld [vmem:[%s2 + $0x3d8] sm:$0x1]
  %v357 = vld [vmem:[%s2 + $0x3e0] sm:$0xff]
  %v358 = vld [vmem:[%s2 + $0x3e8] sm:$0x1]
  %v359 = vld [vmem:[%s2 + $0x3f0] sm:$0xff]
  %v360 = vld [vmem:[%s2 + $0x3f8] sm:$0x1]
  %v361 = vld [vmem:[%s3] sm:$0xff]
  %v362 = vld [vmem:[%s3 + $0x8] sm:$0xff]
  %v363 = vld [vmem:[%s3 + $0x10] sm:$0xff]
  %v364 = vld [vmem:[%s3 + $0x18] sm:$0xff]
  %v365 = vld [vmem:[%s3 + $0x20] sm:$0xff]
  %v366 = vld [vmem:[%s3 + $0x28] sm:$0xff]
  %v367 = vld [vmem:[%s3 + $0x30] sm:$0xff]
  %v368 = vld [vmem:[%s3 + $0x38] sm:$0xff]
  %v369 = vld [vmem:[%s3 + $0x40] sm:$0xff]
  %v370 = vld [vmem:[%s3 + $0x48] sm:$0xff]
  %v371 = vld [vmem:[%s3 + $0x50] sm:$0xff]
  %v372 = vld [vmem:[%s3 + $0x58] sm:$0xff]
  %v373 = vld [vmem:[%s3 + $0x60] sm:$0xff]
  %v374 = vld [vmem:[%s3 + $0x68] sm:$0xff]
  %v375 = vld [vmem:[%s3 + $0x70] sm:$0xff]
  %v376 = vld [vmem:[%s3 + $0x78] sm:$0xff]
  %v377 = vld [vmem:[%s3 + $0x80] sm:$0xff]
  %v378 = vld [vmem:[%s3 + $0x88] sm:$0xff]
  %v379 = vld [vmem:[%s3 + $0x90] sm:$0xff]
  %v380 = vld [vmem:[%s3 + $0x98] sm:$0xff]
  %v381 = vld [vmem:[%s3 + $0xa0] sm:$0xff]
  %v382 = vld [vmem:[%s3 + $0xa8] sm:$0xff]
  %v383 = vld [vmem:[%s3 + $0xb0] sm:$0xff]
  %v384 = vld [vmem:[%s3 + $0xb8] sm:$0xff]
  %v385 = vld [vmem:[%s3 + $0xc0] sm:$0xff]
  %v386 = vld [vmem:[%s3 + $0xc8] sm:$0xff]
  %v387 = vld [vmem:[%s3 + $0xd0] sm:$0xff]
  %v388 = vld [vmem:[%s3 + $0xd8] sm:$0xff]
  %v389 = vld [vmem:[%s3 + $0xe0] sm:$0xff]
  %v390 = vld [vmem:[%s3 + $0xe8] sm:$0xff]
  %v391 = vld [vmem:[%s3 + $0xf0] sm:$0xff]
  %v392 = vld [vmem:[%s3 + $0xf8] sm:$0xff]
  %v393 = vld [vmem:[%s3 + $0x100] sm:$0xff]
  %v394 = vld [vmem:[%s3 + $0x108] sm:$0xff]
  %v395 = vld [vmem:[%s3 + $0x110] sm:$0xff]
  %v396 = vld [vmem:[%s3 + $0x118] sm:$0xff]
  %v397 = vld [vmem:[%s3 + $0x120] sm:$0xff]
  %v398 = vld [vmem:[%s3 + $0x128] sm:$0xff]
  %v399 = vld [vmem:[%s3 + $0x130] sm:$0xff]
  %v400 = vld [vmem:[%s3 + $0x138] sm:$0xff]
  %v401 = vld [vmem:[%s3 + $0x140] sm:$0xff]
  %v402 = vld [vmem:[%s3 + $0x148] sm:$0xff]
  %v403 = vld [vmem:[%s3 + $0x150] sm:$0xff]
  %v404 = vld [vmem:[%s3 + $0x158] sm:$0xff]
  %v405 = vld [vmem:[%s3 + $0x160] sm:$0xff]
  %v406 = vld [vmem:[%s3 + $0x168] sm:$0xff]
  %v407 = vld [vmem:[%s3 + $0x170] sm:$0xff]
  %v408 = vld [vmem:[%s3 + $0x178] sm:$0xff]
  %v409 = vld [vmem:[%s3 + $0x180] sm:$0xff]
  %v410 = vld [vmem:[%s3 + $0x188] sm:$0xff]
  %v411 = vld [vmem:[%s3 + $0x190] sm:$0xff]
  %v412 = vld [vmem:[%s3 + $0x198] sm:$0xff]
  %v413 = vld [vmem:[%s3 + $0x1a0] sm:$0xff]
  %v414 = vld [vmem:[%s3 + $0x1a8] sm:$0xff]
  %v415 = vld [vmem:[%s3 + $0x1b0] sm:$0xff]
  %v416 = vld [vmem:[%s3 + $0x1b8] sm:$0xff]
  %v417 = vld [vmem:[%s3 + $0x1c0] sm:$0xff]
  %v418 = vld [vmem:[%s3 + $0x1c8] sm:$0xff]
  %v419 = vld [vmem:[%s3 + $0x1d0] sm:$0xff]
  %v420 = vld [vmem:[%s3 + $0x1d8] sm:$0xff]
  %v421 = vld [vmem:[%s3 + $0x1e0] sm:$0xff]
  %v422 = vld [vmem:[%s3 + $0x1e8] sm:$0xff]
  %v423 = vld [vmem:[%s3 + $0x1f0] sm:$0xff]
  %v424 = vld [vmem:[%s3 + $0x1f8] sm:$0xff]
  %vm553 = vcmask 1046528
  %v554 = vrot.slane %v17, 1
  %v555 = vrot.slane %v18, 1
  %v556 = vsel %vm553, %v554, %v555
  %v557 = vrot.slane %v19, 1
  %v558 = vrot.slane %v20, 1
  %v559 = vsel %vm553, %v557, %v558
  %v560 = vrot.slane %v21, 1
  %v561 = vrot.slane %v22, 1
  %v562 = vsel %vm553, %v560, %v561
  %v563 = vrot.slane %v23, 1
  %v564 = vrot.slane %v24, 1
  %v565 = vsel %vm553, %v563, %v564
  %v566 = vrot.slane %v25, 1
  %v567 = vrot.slane %v26, 1
  %v568 = vsel %vm553, %v566, %v567
  %v569 = vrot.slane %v27, 1
  %v570 = vrot.slane %v28, 1
  %v571 = vsel %vm553, %v569, %v570
  %v572 = vrot.slane %v29, 1
  %v573 = vrot.slane %v30, 1
  %v574 = vsel %vm553, %v572, %v573
  %v575 = vrot.slane %v31, 1
  %v576 = vrot.slane %v32, 1
  %v577 = vsel %vm553, %v575, %v576
  %v578 = vrot.slane %v35, 1
  %v579 = vrot.slane %v36, 1
  %v580 = vsel %vm553, %v578, %v579
  %v581 = vrot.slane %v37, 1
  %v582 = vrot.slane %v38, 1
  %v583 = vsel %vm553, %v581, %v582
  %v584 = vrot.slane %v39, 1
  %v585 = vrot.slane %v40, 1
  %v586 = vsel %vm553, %v584, %v585
  %v587 = vrot.slane %v41, 1
  %v588 = vrot.slane %v42, 1
  %v589 = vsel %vm553, %v587, %v588
  %v590 = vrot.slane %v43, 1
  %v591 = vrot.slane %v44, 1
  %v592 = vsel %vm553, %v590, %v591
  %v593 = vrot.slane %v45, 1
  %v594 = vrot.slane %v46, 1
  %v595 = vsel %vm553, %v593, %v594
  %v596 = vrot.slane %v47, 1
  %v597 = vrot.slane %v48, 1
  %v598 = vsel %vm553, %v596, %v597
  %v599 = vrot.slane %v49, 1
  %v600 = vrot.slane %v50, 1
  %v601 = vsel %vm553, %v599, %v600
  %v602 = vrot.slane %v53, 1
  %v603 = vrot.slane %v54, 1
  %v604 = vsel %vm553, %v602, %v603
  %v605 = vrot.slane %v55, 1
  %v606 = vrot.slane %v56, 1
  %v607 = vsel %vm553, %v605, %v606
  %v608 = vrot.slane %v57, 1
  %v609 = vrot.slane %v58, 1
  %v610 = vsel %vm553, %v608, %v609
  %v611 = vrot.slane %v59, 1
  %v612 = vrot.slane %v60, 1
  %v613 = vsel %vm553, %v611, %v612
  %v614 = vrot.slane %v61, 1
  %v615 = vrot.slane %v62, 1
  %v616 = vsel %vm553, %v614, %v615
  %v617 = vrot.slane %v63, 1
  %v618 = vrot.slane %v64, 1
  %v619 = vsel %vm553, %v617, %v618
  %v620 = vrot.slane %v65, 1
  %v621 = vrot.slane %v66, 1
  %v622 = vsel %vm553, %v620, %v621
  %v623 = vrot.slane %v67, 1
  %v624 = vrot.slane %v68, 1
  %v625 = vsel %vm553, %v623, %v624
  %v626 = vrot.slane %v71, 1
  %v627 = vrot.slane %v72, 1
  %v628 = vsel %vm553, %v626, %v627
  %v629 = vrot.slane %v73, 1
  %v630 = vrot.slane %v74, 1
  %v631 = vsel %vm553, %v629, %v630
  %v632 = vrot.slane %v75, 1
  %v633 = vrot.slane %v76, 1
  %v634 = vsel %vm553, %v632, %v633
  %v635 = vrot.slane %v77, 1
  %v636 = vrot.slane %v78, 1
  %v637 = vsel %vm553, %v635, %v636
  %v638 = vrot.slane %v79, 1
  %v639 = vrot.slane %v80, 1
  %v640 = vsel %vm553, %v638, %v639
  %v641 = vrot.slane %v81, 1
  %v642 = vrot.slane %v82, 1
  %v643 = vsel %vm553, %v641, %v642
  %v644 = vrot.slane %v83, 1
  %v645 = vrot.slane %v84, 1
  %v646 = vsel %vm553, %v644, %v645
  %v647 = vrot.slane %v85, 1
  %v648 = vrot.slane %v86, 1
  %v649 = vsel %vm553, %v647, %v648
  %v650 = vrot.slane %v89, 1
  %v651 = vrot.slane %v90, 1
  %v652 = vsel %vm553, %v650, %v651
  %v653 = vrot.slane %v91, 1
  %v654 = vrot.slane %v92, 1
  %v655 = vsel %vm553, %v653, %v654
  %v656 = vrot.slane %v93, 1
  %v657 = vrot.slane %v94, 1
  %v658 = vsel %vm553, %v656, %v657
  %v659 = vrot.slane %v95, 1
  %v660 = vrot.slane %v96, 1
  %v661 = vsel %vm553, %v659, %v660
  %v662 = vrot.slane %v97, 1
  %v663 = vrot.slane %v98, 1
  %v664 = vsel %vm553, %v662, %v663
  %v665 = vrot.slane %v99, 1
  %v666 = vrot.slane %v100, 1
  %v667 = vsel %vm553, %v665, %v666
  %v668 = vrot.slane %v101, 1
  %v669 = vrot.slane %v102, 1
  %v670 = vsel %vm553, %v668, %v669
  %v671 = vrot.slane %v103, 1
  %v672 = vrot.slane %v104, 1
  %v673 = vsel %vm553, %v671, %v672
  %v674 = vrot.slane %v107, 1
  %v675 = vrot.slane %v108, 1
  %v676 = vsel %vm553, %v674, %v675
  %v677 = vrot.slane %v109, 1
  %v678 = vrot.slane %v110, 1
  %v679 = vsel %vm553, %v677, %v678
  %v680 = vrot.slane %v111, 1
  %v681 = vrot.slane %v112, 1
  %v682 = vsel %vm553, %v680, %v681
  %v683 = vrot.slane %v113, 1
  %v684 = vrot.slane %v114, 1
  %v685 = vsel %vm553, %v683, %v684
  %v686 = vrot.slane %v115, 1
  %v687 = vrot.slane %v116, 1
  %v688 = vsel %vm553, %v686, %v687
  %v689 = vrot.slane %v117, 1
  %v690 = vrot.slane %v118, 1
  %v691 = vsel %vm553, %v689, %v690
  %v692 = vrot.slane %v119, 1
  %v693 = vrot.slane %v120, 1
  %v694 = vsel %vm553, %v692, %v693
  %v695 = vrot.slane %v121, 1
  %v696 = vrot.slane %v122, 1
  %v697 = vsel %vm553, %v695, %v696
  %v698 = vrot.slane %v125, 1
  %v699 = vrot.slane %v126, 1
  %v700 = vsel %vm553, %v698, %v699
  %v701 = vrot.slane %v127, 1
  %v702 = vrot.slane %v128, 1
  %v703 = vsel %vm553, %v701, %v702
  %v704 = vrot.slane %v129, 1
  %v705 = vrot.slane %v130, 1
  %v706 = vsel %vm553, %v704, %v705
  %v707 = vrot.slane %v131, 1
  %v708 = vrot.slane %v132, 1
  %v709 = vsel %vm553, %v707, %v708
  %v710 = vrot.slane %v133, 1
  %v711 = vrot.slane %v134, 1
  %v712 = vsel %vm553, %v710, %v711
  %v713 = vrot.slane %v135, 1
  %v714 = vrot.slane %v136, 1
  %v715 = vsel %vm553, %v713, %v714
  %v716 = vrot.slane %v137, 1
  %v717 = vrot.slane %v138, 1
  %v718 = vsel %vm553, %v716, %v717
  %v719 = vrot.slane %v139, 1
  %v720 = vrot.slane %v140, 1
  %v721 = vsel %vm553, %v719, %v720
  %v722 = vrot.slane %v143, 1
  %v723 = vrot.slane %v144, 1
  %v724 = vsel %vm553, %v722, %v723
  %v725 = vrot.slane %v145, 1
  %v726 = vrot.slane %v146, 1
  %v727 = vsel %vm553, %v725, %v726
  %v728 = vrot.slane %v147, 1
  %v729 = vrot.slane %v148, 1
  %v730 = vsel %vm553, %v728, %v729
  %v731 = vrot.slane %v149, 1
  %v732 = vrot.slane %v150, 1
  %v733 = vsel %vm553, %v731, %v732
  %v734 = vrot.slane %v151, 1
  %v735 = vrot.slane %v152, 1
  %v736 = vsel %vm553, %v734, %v735
  %v737 = vrot.slane %v153, 1
  %v738 = vrot.slane %v154, 1
  %v739 = vsel %vm553, %v737, %v738
  %v740 = vrot.slane %v155, 1
  %v741 = vrot.slane %v156, 1
  %v742 = vsel %vm553, %v740, %v741
  %v743 = vrot.slane %v157, 1
  %v744 = vrot.slane %v158, 1
  %v745 = vsel %vm553, %v743, %v744
  %v810 = vadd.f32 %v17, %v556
  %v811 = vadd.f32 %v19, %v559
  %v812 = vadd.f32 %v21, %v562
  %v813 = vadd.f32 %v23, %v565
  %v814 = vadd.f32 %v25, %v568
  %v815 = vadd.f32 %v27, %v571
  %v816 = vadd.f32 %v29, %v574
  %v817 = vadd.f32 %v31, %v577
  %v818 = vadd.f32 %v35, %v580
  %v819 = vadd.f32 %v37, %v583
  %v820 = vadd.f32 %v39, %v586
  %v821 = vadd.f32 %v41, %v589
  %v822 = vadd.f32 %v43, %v592
  %v823 = vadd.f32 %v45, %v595
  %v824 = vadd.f32 %v47, %v598
  %v825 = vadd.f32 %v49, %v601
  %v826 = vadd.f32 %v53, %v604
  %v827 = vadd.f32 %v55, %v607
  %v828 = vadd.f32 %v57, %v610
  %v829 = vadd.f32 %v59, %v613
  %v830 = vadd.f32 %v61, %v616
  %v831 = vadd.f32 %v63, %v619
  %v832 = vadd.f32 %v65, %v622
  %v833 = vadd.f32 %v67, %v625
  %v834 = vadd.f32 %v71, %v628
  %v835 = vadd.f32 %v73, %v631
  %v836 = vadd.f32 %v75, %v634
  %v837 = vadd.f32 %v77, %v637
  %v838 = vadd.f32 %v79, %v640
  %v839 = vadd.f32 %v81, %v643
  %v840 = vadd.f32 %v83, %v646
  %v841 = vadd.f32 %v85, %v649
  %v842 = vadd.f32 %v89, %v652
  %v843 = vadd.f32 %v91, %v655
  %v844 = vadd.f32 %v93, %v658
  %v845 = vadd.f32 %v95, %v661
  %v846 = vadd.f32 %v97, %v664
  %v847 = vadd.f32 %v99, %v667
  %v848 = vadd.f32 %v101, %v670
  %v849 = vadd.f32 %v103, %v673
  %v850 = vadd.f32 %v107, %v676
  %v851 = vadd.f32 %v109, %v679
  %v852 = vadd.f32 %v111, %v682
  %v853 = vadd.f32 %v113, %v685
  %v854 = vadd.f32 %v115, %v688
  %v855 = vadd.f32 %v117, %v691
  %v856 = vadd.f32 %v119, %v694
  %v857 = vadd.f32 %v121, %v697
  %v858 = vadd.f32 %v125, %v700
  %v859 = vadd.f32 %v127, %v703
  %v860 = vadd.f32 %v129, %v706
  %v861 = vadd.f32 %v131, %v709
  %v862 = vadd.f32 %v133, %v712
  %v863 = vadd.f32 %v135, %v715
  %v864 = vadd.f32 %v137, %v718
  %v865 = vadd.f32 %v139, %v721
  %v866 = vadd.f32 %v143, %v724
  %v867 = vadd.f32 %v145, %v727
  %v868 = vadd.f32 %v147, %v730
  %v869 = vadd.f32 %v149, %v733
  %v870 = vadd.f32 %v151, %v736
  %v871 = vadd.f32 %v153, %v739
  %v872 = vadd.f32 %v155, %v742
  %v873 = vadd.f32 %v157, %v745
  %v874 = vadd.f32 %v810, %v19
  %v875 = vadd.f32 %v811, %v21
  %v876 = vadd.f32 %v812, %v23
  %v877 = vadd.f32 %v813, %v25
  %v878 = vadd.f32 %v814, %v27
  %v879 = vadd.f32 %v815, %v29
  %v880 = vadd.f32 %v816, %v31
  %v881 = vadd.f32 %v817, %v33
  %v882 = vadd.f32 %v818, %v37
  %v883 = vadd.f32 %v819, %v39
  %v884 = vadd.f32 %v820, %v41
  %v885 = vadd.f32 %v821, %v43
  %v886 = vadd.f32 %v822, %v45
  %v887 = vadd.f32 %v823, %v47
  %v888 = vadd.f32 %v824, %v49
  %v889 = vadd.f32 %v825, %v51
  %v890 = vadd.f32 %v826, %v55
  %v891 = vadd.f32 %v827, %v57
  %v892 = vadd.f32 %v828, %v59
  %v893 = vadd.f32 %v829, %v61
  %v894 = vadd.f32 %v830, %v63
  %v895 = vadd.f32 %v831, %v65
  %v896 = vadd.f32 %v832, %v67
  %v897 = vadd.f32 %v833, %v69
  %v898 = vadd.f32 %v834, %v73
  %v899 = vadd.f32 %v835, %v75
  %v900 = vadd.f32 %v836, %v77
  %v901 = vadd.f32 %v837, %v79
  %v902 = vadd.f32 %v838, %v81
  %v903 = vadd.f32 %v839, %v83
  %v904 = vadd.f32 %v840, %v85
  %v905 = vadd.f32 %v841, %v87
  %v906 = vadd.f32 %v842, %v91
  %v907 = vadd.f32 %v843, %v93
  %v908 = vadd.f32 %v844, %v95
  %v909 = vadd.f32 %v845, %v97
  %v910 = vadd.f32 %v846, %v99
  %v911 = vadd.f32 %v847, %v101
  %v912 = vadd.f32 %v848, %v103
  %v913 = vadd.f32 %v849, %v105
  %v914 = vadd.f32 %v850, %v109
  %v915 = vadd.f32 %v851, %v111
  %v916 = vadd.f32 %v852, %v113
  %v917 = vadd.f32 %v853, %v115
  %v918 = vadd.f32 %v854, %v117
  %v919 = vadd.f32 %v855, %v119
  %v920 = vadd.f32 %v856, %v121
  %v921 = vadd.f32 %v857, %v123
  %v922 = vadd.f32 %v858, %v127
  %v923 = vadd.f32 %v859, %v129
  %v924 = vadd.f32 %v860, %v131
  %v925 = vadd.f32 %v861, %v133
  %v926 = vadd.f32 %v862, %v135
  %v927 = vadd.f32 %v863, %v137
  %v928 = vadd.f32 %v864, %v139
  %v929 = vadd.f32 %v865, %v141
  %v930 = vadd.f32 %v866, %v145
  %v931 = vadd.f32 %v867, %v147
  %v932 = vadd.f32 %v868, %v149
  %v933 = vadd.f32 %v869, %v151
  %v934 = vadd.f32 %v870, %v153
  %v935 = vadd.f32 %v871, %v155
  %v936 = vadd.f32 %v872, %v157
  %v937 = vadd.f32 %v873, %v159
  %v954 = vrot.slane %v33, 1
  %v955 = vrot.slane %v34, 1
  %v956 = vsel %vm553, %v954, %v955
  %v957 = vrot.slane %v51, 1
  %v958 = vrot.slane %v52, 1
  %v959 = vsel %vm553, %v957, %v958
  %v960 = vrot.slane %v69, 1
  %v961 = vrot.slane %v70, 1
  %v962 = vsel %vm553, %v960, %v961
  %v963 = vrot.slane %v87, 1
  %v964 = vrot.slane %v88, 1
  %v965 = vsel %vm553, %v963, %v964
  %v966 = vrot.slane %v105, 1
  %v967 = vrot.slane %v106, 1
  %v968 = vsel %vm553, %v966, %v967
  %v969 = vrot.slane %v123, 1
  %v970 = vrot.slane %v124, 1
  %v971 = vsel %vm553, %v969, %v970
  %v972 = vrot.slane %v141, 1
  %v973 = vrot.slane %v142, 1
  %v974 = vsel %vm553, %v972, %v973
  %v975 = vrot.slane %v159, 1
  %v976 = vrot.slane %v160, 1
  %v977 = vsel %vm553, %v975, %v976
  %v986 = vadd.f32 %v874, %v559
  %v987 = vadd.f32 %v875, %v562
  %v988 = vadd.f32 %v876, %v565
  %v989 = vadd.f32 %v877, %v568
  %v990 = vadd.f32 %v878, %v571
  %v991 = vadd.f32 %v879, %v574
  %v992 = vadd.f32 %v880, %v577
  %v993 = vadd.f32 %v881, %v956
  %v994 = vadd.f32 %v882, %v583
  %v995 = vadd.f32 %v883, %v586
  %v996 = vadd.f32 %v884, %v589
  %v997 = vadd.f32 %v885, %v592
  %v998 = vadd.f32 %v886, %v595
  %v999 = vadd.f32 %v887, %v598
  %v1000 = vadd.f32 %v888, %v601
  %v1001 = vadd.f32 %v889, %v959
  %v1002 = vadd.f32 %v890, %v607
  %v1003 = vadd.f32 %v891, %v610
  %v1004 = vadd.f32 %v892, %v613
  %v1005 = vadd.f32 %v893, %v616
  %v1006 = vadd.f32 %v894, %v619
  %v1007 = vadd.f32 %v895, %v622
  %v1008 = vadd.f32 %v896, %v625
  %v1009 = vadd.f32 %v897, %v962
  %v1010 = vadd.f32 %v898, %v631
  %v1011 = vadd.f32 %v899, %v634
  %v1012 = vadd.f32 %v900, %v637
  %v1013 = vadd.f32 %v901, %v640
  %v1014 = vadd.f32 %v902, %v643
  %v1015 = vadd.f32 %v903, %v646
  %v1016 = vadd.f32 %v904, %v649
  %v1017 = vadd.f32 %v905, %v965
  %v1018 = vadd.f32 %v906, %v655
  %v1019 = vadd.f32 %v907, %v658
  %v1020 = vadd.f32 %v908, %v661
  %v1021 = vadd.f32 %v909, %v664
  %v1022 = vadd.f32 %v910, %v667
  %v1023 = vadd.f32 %v911, %v670
  %v1024 = vadd.f32 %v912, %v673
  %v1025 = vadd.f32 %v913, %v968
  %v1026 = vadd.f32 %v914, %v679
  %v1027 = vadd.f32 %v915, %v682
  %v1028 = vadd.f32 %v916, %v685
  %v1029 = vadd.f32 %v917, %v688
  %v1030 = vadd.f32 %v918, %v691
  %v1031 = vadd.f32 %v919, %v694
  %v1032 = vadd.f32 %v920, %v697
  %v1033 = vadd.f32 %v921, %v971
  %v1034 = vadd.f32 %v922, %v703
  %v1035 = vadd.f32 %v923, %v706
  %v1036 = vadd.f32 %v924, %v709
  %v1037 = vadd.f32 %v925, %v712
  %v1038 = vadd.f32 %v926, %v715
  %v1039 = vadd.f32 %v927, %v718
  %v1040 = vadd.f32 %v928, %v721
  %v1041 = vadd.f32 %v929, %v974
  %v1042 = vadd.f32 %v930, %v727
  %v1043 = vadd.f32 %v931, %v730
  %v1044 = vadd.f32 %v932, %v733
  %v1045 = vadd.f32 %v933, %v736
  %v1046 = vadd.f32 %v934, %v739
  %v1047 = vadd.f32 %v935, %v742
  %v1048 = vadd.f32 %v936, %v745
  %v1049 = vadd.f32 %v937, %v977
  %v1050 = vadd.f32 %v161, %v162
  %v1051 = vadd.f32 %v162, %v163
  %v1052 = vadd.f32 %v163, %v164
  %v1053 = vadd.f32 %v164, %v165
  %v1054 = vadd.f32 %v165, %v166
  %v1055 = vadd.f32 %v166, %v167
  %v1056 = vadd.f32 %v167, %v168
  %v1057 = vadd.f32 %v168, %v169
  %v1058 = vadd.f32 %v170, %v171
  %v1059 = vadd.f32 %v171, %v172
  %v1060 = vadd.f32 %v172, %v173
  %v1061 = vadd.f32 %v173, %v174
  %v1062 = vadd.f32 %v174, %v175
  %v1063 = vadd.f32 %v175, %v176
  %v1064 = vadd.f32 %v176, %v177
  %v1065 = vadd.f32 %v177, %v178
  %v1066 = vadd.f32 %v179, %v180
  %v1067 = vadd.f32 %v180, %v181
  %v1068 = vadd.f32 %v181, %v182
  %v1069 = vadd.f32 %v182, %v183
  %v1070 = vadd.f32 %v183, %v184
  %v1071 = vadd.f32 %v184, %v185
  %v1072 = vadd.f32 %v185, %v186
  %v1073 = vadd.f32 %v186, %v187
  %v1074 = vadd.f32 %v188, %v189
  %v1075 = vadd.f32 %v189, %v190
  %v1076 = vadd.f32 %v190, %v191
  %v1077 = vadd.f32 %v191, %v192
  %v1078 = vadd.f32 %v192, %v193
  %v1079 = vadd.f32 %v193, %v194
  %v1080 = vadd.f32 %v194, %v195
  %v1081 = vadd.f32 %v195, %v196
  %v1082 = vadd.f32 %v197, %v198
  %v1083 = vadd.f32 %v198, %v199
  %v1084 = vadd.f32 %v199, %v200
  %v1085 = vadd.f32 %v200, %v201
  %v1086 = vadd.f32 %v201, %v202
  %v1087 = vadd.f32 %v202, %v203
  %v1088 = vadd.f32 %v203, %v204
  %v1089 = vadd.f32 %v204, %v205
  %v1090 = vadd.f32 %v206, %v207
  %v1091 = vadd.f32 %v207, %v208
  %v1092 = vadd.f32 %v208, %v209
  %v1093 = vadd.f32 %v209, %v210
  %v1094 = vadd.f32 %v210, %v211
  %v1095 = vadd.f32 %v211, %v212
  %v1096 = vadd.f32 %v212, %v213
  %v1097 = vadd.f32 %v213, %v214
  %v1098 = vadd.f32 %v215, %v216
  %v1099 = vadd.f32 %v216, %v217
  %v1100 = vadd.f32 %v217, %v218
  %v1101 = vadd.f32 %v218, %v219
  %v1102 = vadd.f32 %v219, %v220
  %v1103 = vadd.f32 %v220, %v221
  %v1104 = vadd.f32 %v221, %v222
  %v1105 = vadd.f32 %v222, %v223
  %v1106 = vadd.f32 %v224, %v225
  %v1107 = vadd.f32 %v225, %v226
  %v1108 = vadd.f32 %v226, %v227
  %v1109 = vadd.f32 %v227, %v228
  %v1110 = vadd.f32 %v228, %v229
  %v1111 = vadd.f32 %v229, %v230
  %v1112 = vadd.f32 %v230, %v231
  %v1113 = vadd.f32 %v231, %v232
  %v1114 = vmul.f32 %v1050, 2.0
  %v1115 = vmul.f32 %v1051, 2.0
  %v1116 = vmul.f32 %v1052, 2.0
  %v1117 = vmul.f32 %v1053, 2.0
  %v1118 = vmul.f32 %v1054, 2.0
  %v1119 = vmul.f32 %v1055, 2.0
  %v1120 = vmul.f32 %v1056, 2.0
  %v1121 = vmul.f32 %v1057, 2.0
  %v1122 = vmul.f32 %v1058, 2.0
  %v1123 = vmul.f32 %v1059, 2.0
  %v1124 = vmul.f32 %v1060, 2.0
  %v1125 = vmul.f32 %v1061, 2.0
  %v1126 = vmul.f32 %v1062, 2.0
  %v1127 = vmul.f32 %v1063, 2.0
  %v1128 = vmul.f32 %v1064, 2.0
  %v1129 = vmul.f32 %v1065, 2.0
  %v1130 = vmul.f32 %v1066, 2.0
  %v1131 = vmul.f32 %v1067, 2.0
  %v1132 = vmul.f32 %v1068, 2.0
  %v1133 = vmul.f32 %v1069, 2.0
  %v1134 = vmul.f32 %v1070, 2.0
  %v1135 = vmul.f32 %v1071, 2.0
  %v1136 = vmul.f32 %v1072, 2.0
  %v1137 = vmul.f32 %v1073, 2.0
  %v1138 = vmul.f32 %v1074, 2.0
  %v1139 = vmul.f32 %v1075, 2.0
  %v1140 = vmul.f32 %v1076, 2.0
  %v1141 = vmul.f32 %v1077, 2.0
  %v1142 = vmul.f32 %v1078, 2.0
  %v1143 = vmul.f32 %v1079, 2.0
  %v1144 = vmul.f32 %v1080, 2.0
  %v1145 = vmul.f32 %v1081, 2.0
  %v1146 = vmul.f32 %v1082, 2.0
  %v1147 = vmul.f32 %v1083, 2.0
  %v1148 = vmul.f32 %v1084, 2.0
  %v1149 = vmul.f32 %v1085, 2.0
  %v1150 = vmul.f32 %v1086, 2.0
  %v1151 = vmul.f32 %v1087, 2.0
  %v1152 = vmul.f32 %v1088, 2.0
  %v1153 = vmul.f32 %v1089, 2.0
  %v1154 = vmul.f32 %v1090, 2.0
  %v1155 = vmul.f32 %v1091, 2.0
  %v1156 = vmul.f32 %v1092, 2.0
  %v1157 = vmul.f32 %v1093, 2.0
  %v1158 = vmul.f32 %v1094, 2.0
  %v1159 = vmul.f32 %v1095, 2.0
  %v1160 = vmul.f32 %v1096, 2.0
  %v1161 = vmul.f32 %v1097, 2.0
  %v1162 = vmul.f32 %v1098, 2.0
  %v1163 = vmul.f32 %v1099, 2.0
  %v1164 = vmul.f32 %v1100, 2.0
  %v1165 = vmul.f32 %v1101, 2.0
  %v1166 = vmul.f32 %v1102, 2.0
  %v1167 = vmul.f32 %v1103, 2.0
  %v1168 = vmul.f32 %v1104, 2.0
  %v1169 = vmul.f32 %v1105, 2.0
  %v1170 = vmul.f32 %v1106, 2.0
  %v1171 = vmul.f32 %v1107, 2.0
  %v1172 = vmul.f32 %v1108, 2.0
  %v1173 = vmul.f32 %v1109, 2.0
  %v1174 = vmul.f32 %v1110, 2.0
  %v1175 = vmul.f32 %v1111, 2.0
  %v1176 = vmul.f32 %v1112, 2.0
  %v1177 = vmul.f32 %v1113, 2.0
  %v1178 = vadd.f32 %v986, %v1114
  %v1179 = vadd.f32 %v987, %v1115
  %v1180 = vadd.f32 %v988, %v1116
  %v1181 = vadd.f32 %v989, %v1117
  %v1182 = vadd.f32 %v990, %v1118
  %v1183 = vadd.f32 %v991, %v1119
  %v1184 = vadd.f32 %v992, %v1120
  %v1185 = vadd.f32 %v993, %v1121
  %v1186 = vadd.f32 %v994, %v1122
  %v1187 = vadd.f32 %v995, %v1123
  %v1188 = vadd.f32 %v996, %v1124
  %v1189 = vadd.f32 %v997, %v1125
  %v1190 = vadd.f32 %v998, %v1126
  %v1191 = vadd.f32 %v999, %v1127
  %v1192 = vadd.f32 %v1000, %v1128
  %v1193 = vadd.f32 %v1001, %v1129
  %v1194 = vadd.f32 %v1002, %v1130
  %v1195 = vadd.f32 %v1003, %v1131
  %v1196 = vadd.f32 %v1004, %v1132
  %v1197 = vadd.f32 %v1005, %v1133
  %v1198 = vadd.f32 %v1006, %v1134
  %v1199 = vadd.f32 %v1007, %v1135
  %v1200 = vadd.f32 %v1008, %v1136
  %v1201 = vadd.f32 %v1009, %v1137
  %v1202 = vadd.f32 %v1010, %v1138
  %v1203 = vadd.f32 %v1011, %v1139
  %v1204 = vadd.f32 %v1012, %v1140
  %v1205 = vadd.f32 %v1013, %v1141
  %v1206 = vadd.f32 %v1014, %v1142
  %v1207 = vadd.f32 %v1015, %v1143
  %v1208 = vadd.f32 %v1016, %v1144
  %v1209 = vadd.f32 %v1017, %v1145
  %v1210 = vadd.f32 %v1018, %v1146
  %v1211 = vadd.f32 %v1019, %v1147
  %v1212 = vadd.f32 %v1020, %v1148
  %v1213 = vadd.f32 %v1021, %v1149
  %v1214 = vadd.f32 %v1022, %v1150
  %v1215 = vadd.f32 %v1023, %v1151
  %v1216 = vadd.f32 %v1024, %v1152
  %v1217 = vadd.f32 %v1025, %v1153
  %v1218 = vadd.f32 %v1026, %v1154
  %v1219 = vadd.f32 %v1027, %v1155
  %v1220 = vadd.f32 %v1028, %v1156
  %v1221 = vadd.f32 %v1029, %v1157
  %v1222 = vadd.f32 %v1030, %v1158
  %v1223 = vadd.f32 %v1031, %v1159
  %v1224 = vadd.f32 %v1032, %v1160
  %v1225 = vadd.f32 %v1033, %v1161
  %v1226 = vadd.f32 %v1034, %v1162
  %v1227 = vadd.f32 %v1035, %v1163
  %v1228 = vadd.f32 %v1036, %v1164
  %v1229 = vadd.f32 %v1037, %v1165
  %v1230 = vadd.f32 %v1038, %v1166
  %v1231 = vadd.f32 %v1039, %v1167
  %v1232 = vadd.f32 %v1040, %v1168
  %v1233 = vadd.f32 %v1041, %v1169
  %v1234 = vadd.f32 %v1042, %v1170
  %v1235 = vadd.f32 %v1043, %v1171
  %v1236 = vadd.f32 %v1044, %v1172
  %v1237 = vadd.f32 %v1045, %v1173
  %v1238 = vadd.f32 %v1046, %v1174
  %v1239 = vadd.f32 %v1047, %v1175
  %v1240 = vadd.f32 %v1048, %v1176
  %v1241 = vadd.f32 %v1049, %v1177
  %v1370 = vrot.slane %v233, 1
  %v1371 = vrot.slane %v234, 1
  %v1372 = vsel %vm553, %v1370, %v1371
  %v1373 = vrot.slane %v235, 1
  %v1374 = vrot.slane %v236, 1
  %v1375 = vsel %vm553, %v1373, %v1374
  %v1376 = vrot.slane %v237, 1
  %v1377 = vrot.slane %v238, 1
  %v1378 = vsel %vm553, %v1376, %v1377
  %v1379 = vrot.slane %v239, 1
  %v1380 = vrot.slane %v240, 1
  %v1381 = vsel %vm553, %v1379, %v1380
  %v1382 = vrot.slane %v241, 1
  %v1383 = vrot.slane %v242, 1
  %v1384 = vsel %vm553, %v1382, %v1383
  %v1385 = vrot.slane %v243, 1
  %v1386 = vrot.slane %v244, 1
  %v1387 = vsel %vm553, %v1385, %v1386
  %v1388 = vrot.slane %v245, 1
  %v1389 = vrot.slane %v246, 1
  %v1390 = vsel %vm553, %v1388, %v1389
  %v1391 = vrot.slane %v247, 1
  %v1392 = vrot.slane %v248, 1
  %v1393 = vsel %vm553, %v1391, %v1392
  %v1394 = vrot.slane %v249, 1
  %v1395 = vrot.slane %v250, 1
  %v1396 = vsel %vm553, %v1394, %v1395
  %v1397 = vrot.slane %v251, 1
  %v1398 = vrot.slane %v252, 1
  %v1399 = vsel %vm553, %v1397, %v1398
  %v1400 = vrot.slane %v253, 1
  %v1401 = vrot.slane %v254, 1
  %v1402 = vsel %vm553, %v1400, %v1401
  %v1403 = vrot.slane %v255, 1
  %v1404 = vrot.slane %v256, 1
  %v1405 = vsel %vm553, %v1403, %v1404
  %v1406 = vrot.slane %v257, 1
  %v1407 = vrot.slane %v258, 1
  %v1408 = vsel %vm553, %v1406, %v1407
  %v1409 = vrot.slane %v259, 1
  %v1410 = vrot.slane %v260, 1
  %v1411 = vsel %vm553, %v1409, %v1410
  %v1412 = vrot.slane %v261, 1
  %v1413 = vrot.slane %v262, 1
  %v1414 = vsel %vm553, %v1412, %v1413
  %v1415 = vrot.slane %v263, 1
  %v1416 = vrot.slane %v264, 1
  %v1417 = vsel %vm553, %v1415, %v1416
  %v1418 = vrot.slane %v265, 1
  %v1419 = vrot.slane %v266, 1
  %v1420 = vsel %vm553, %v1418, %v1419
  %v1421 = vrot.slane %v267, 1
  %v1422 = vrot.slane %v268, 1
  %v1423 = vsel %vm553, %v1421, %v1422
  %v1424 = vrot.slane %v269, 1
  %v1425 = vrot.slane %v270, 1
  %v1426 = vsel %vm553, %v1424, %v1425
  %v1427 = vrot.slane %v271, 1
  %v1428 = vrot.slane %v272, 1
  %v1429 = vsel %vm553, %v1427, %v1428
  %v1430 = vrot.slane %v273, 1
  %v1431 = vrot.slane %v274, 1
  %v1432 = vsel %vm553, %v1430, %v1431
  %v1433 = vrot.slane %v275, 1
  %v1434 = vrot.slane %v276, 1
  %v1435 = vsel %vm553, %v1433, %v1434
  %v1436 = vrot.slane %v277, 1
  %v1437 = vrot.slane %v278, 1
  %v1438 = vsel %vm553, %v1436, %v1437
  %v1439 = vrot.slane %v279, 1
  %v1440 = vrot.slane %v280, 1
  %v1441 = vsel %vm553, %v1439, %v1440
  %v1442 = vrot.slane %v281, 1
  %v1443 = vrot.slane %v282, 1
  %v1444 = vsel %vm553, %v1442, %v1443
  %v1445 = vrot.slane %v283, 1
  %v1446 = vrot.slane %v284, 1
  %v1447 = vsel %vm553, %v1445, %v1446
  %v1448 = vrot.slane %v285, 1
  %v1449 = vrot.slane %v286, 1
  %v1450 = vsel %vm553, %v1448, %v1449
  %v1451 = vrot.slane %v287, 1
  %v1452 = vrot.slane %v288, 1
  %v1453 = vsel %vm553, %v1451, %v1452
  %v1454 = vrot.slane %v289, 1
  %v1455 = vrot.slane %v290, 1
  %v1456 = vsel %vm553, %v1454, %v1455
  %v1457 = vrot.slane %v291, 1
  %v1458 = vrot.slane %v292, 1
  %v1459 = vsel %vm553, %v1457, %v1458
  %v1460 = vrot.slane %v293, 1
  %v1461 = vrot.slane %v294, 1
  %v1462 = vsel %vm553, %v1460, %v1461
  %v1463 = vrot.slane %v295, 1
  %v1464 = vrot.slane %v296, 1
  %v1465 = vsel %vm553, %v1463, %v1464
  %v1466 = vrot.slane %v297, 1
  %v1467 = vrot.slane %v298, 1
  %v1468 = vsel %vm553, %v1466, %v1467
  %v1469 = vrot.slane %v299, 1
  %v1470 = vrot.slane %v300, 1
  %v1471 = vsel %vm553, %v1469, %v1470
  %v1472 = vrot.slane %v301, 1
  %v1473 = vrot.slane %v302, 1
  %v1474 = vsel %vm553, %v1472, %v1473
  %v1475 = vrot.slane %v303, 1
  %v1476 = vrot.slane %v304, 1
  %v1477 = vsel %vm553, %v1475, %v1476
  %v1478 = vrot.slane %v305, 1
  %v1479 = vrot.slane %v306, 1
  %v1480 = vsel %vm553, %v1478, %v1479
  %v1481 = vrot.slane %v307, 1
  %v1482 = vrot.slane %v308, 1
  %v1483 = vsel %vm553, %v1481, %v1482
  %v1484 = vrot.slane %v309, 1
  %v1485 = vrot.slane %v310, 1
  %v1486 = vsel %vm553, %v1484, %v1485
  %v1487 = vrot.slane %v311, 1
  %v1488 = vrot.slane %v312, 1
  %v1489 = vsel %vm553, %v1487, %v1488
  %v1490 = vrot.slane %v313, 1
  %v1491 = vrot.slane %v314, 1
  %v1492 = vsel %vm553, %v1490, %v1491
  %v1493 = vrot.slane %v315, 1
  %v1494 = vrot.slane %v316, 1
  %v1495 = vsel %vm553, %v1493, %v1494
  %v1496 = vrot.slane %v317, 1
  %v1497 = vrot.slane %v318, 1
  %v1498 = vsel %vm553, %v1496, %v1497
  %v1499 = vrot.slane %v319, 1
  %v1500 = vrot.slane %v320, 1
  %v1501 = vsel %vm553, %v1499, %v1500
  %v1502 = vrot.slane %v321, 1
  %v1503 = vrot.slane %v322, 1
  %v1504 = vsel %vm553, %v1502, %v1503
  %v1505 = vrot.slane %v323, 1
  %v1506 = vrot.slane %v324, 1
  %v1507 = vsel %vm553, %v1505, %v1506
  %v1508 = vrot.slane %v325, 1
  %v1509 = vrot.slane %v326, 1
  %v1510 = vsel %vm553, %v1508, %v1509
  %v1511 = vrot.slane %v327, 1
  %v1512 = vrot.slane %v328, 1
  %v1513 = vsel %vm553, %v1511, %v1512
  %v1514 = vrot.slane %v329, 1
  %v1515 = vrot.slane %v330, 1
  %v1516 = vsel %vm553, %v1514, %v1515
  %v1517 = vrot.slane %v331, 1
  %v1518 = vrot.slane %v332, 1
  %v1519 = vsel %vm553, %v1517, %v1518
  %v1520 = vrot.slane %v333, 1
  %v1521 = vrot.slane %v334, 1
  %v1522 = vsel %vm553, %v1520, %v1521
  %v1523 = vrot.slane %v335, 1
  %v1524 = vrot.slane %v336, 1
  %v1525 = vsel %vm553, %v1523, %v1524
  %v1526 = vrot.slane %v337, 1
  %v1527 = vrot.slane %v338, 1
  %v1528 = vsel %vm553, %v1526, %v1527
  %v1529 = vrot.slane %v339, 1
  %v1530 = vrot.slane %v340, 1
  %v1531 = vsel %vm553, %v1529, %v1530
  %v1532 = vrot.slane %v341, 1
  %v1533 = vrot.slane %v342, 1
  %v1534 = vsel %vm553, %v1532, %v1533
  %v1535 = vrot.slane %v343, 1
  %v1536 = vrot.slane %v344, 1
  %v1537 = vsel %vm553, %v1535, %v1536
  %v1538 = vrot.slane %v345, 1
  %v1539 = vrot.slane %v346, 1
  %v1540 = vsel %vm553, %v1538, %v1539
  %v1541 = vrot.slane %v347, 1
  %v1542 = vrot.slane %v348, 1
  %v1543 = vsel %vm553, %v1541, %v1542
  %v1544 = vrot.slane %v349, 1
  %v1545 = vrot.slane %v350, 1
  %v1546 = vsel %vm553, %v1544, %v1545
  %v1547 = vrot.slane %v351, 1
  %v1548 = vrot.slane %v352, 1
  %v1549 = vsel %vm553, %v1547, %v1548
  %v1550 = vrot.slane %v353, 1
  %v1551 = vrot.slane %v354, 1
  %v1552 = vsel %vm553, %v1550, %v1551
  %v1553 = vrot.slane %v355, 1
  %v1554 = vrot.slane %v356, 1
  %v1555 = vsel %vm553, %v1553, %v1554
  %v1556 = vrot.slane %v357, 1
  %v1557 = vrot.slane %v358, 1
  %v1558 = vsel %vm553, %v1556, %v1557
  %v1559 = vrot.slane %v359, 1
  %v1560 = vrot.slane %v360, 1
  %v1561 = vsel %vm553, %v1559, %v1560
  %v1626 = vadd.f32 %v233, %v1372
  %v1627 = vadd.f32 %v235, %v1375
  %v1628 = vadd.f32 %v237, %v1378
  %v1629 = vadd.f32 %v239, %v1381
  %v1630 = vadd.f32 %v241, %v1384
  %v1631 = vadd.f32 %v243, %v1387
  %v1632 = vadd.f32 %v245, %v1390
  %v1633 = vadd.f32 %v247, %v1393
  %v1634 = vadd.f32 %v249, %v1396
  %v1635 = vadd.f32 %v251, %v1399
  %v1636 = vadd.f32 %v253, %v1402
  %v1637 = vadd.f32 %v255, %v1405
  %v1638 = vadd.f32 %v257, %v1408
  %v1639 = vadd.f32 %v259, %v1411
  %v1640 = vadd.f32 %v261, %v1414
  %v1641 = vadd.f32 %v263, %v1417
  %v1642 = vadd.f32 %v265, %v1420
  %v1643 = vadd.f32 %v267, %v1423
  %v1644 = vadd.f32 %v269, %v1426
  %v1645 = vadd.f32 %v271, %v1429
  %v1646 = vadd.f32 %v273, %v1432
  %v1647 = vadd.f32 %v275, %v1435
  %v1648 = vadd.f32 %v277, %v1438
  %v1649 = vadd.f32 %v279, %v1441
  %v1650 = vadd.f32 %v281, %v1444
  %v1651 = vadd.f32 %v283, %v1447
  %v1652 = vadd.f32 %v285, %v1450
  %v1653 = vadd.f32 %v287, %v1453
  %v1654 = vadd.f32 %v289, %v1456
  %v1655 = vadd.f32 %v291, %v1459
  %v1656 = vadd.f32 %v293, %v1462
  %v1657 = vadd.f32 %v295, %v1465
  %v1658 = vadd.f32 %v297, %v1468
  %v1659 = vadd.f32 %v299, %v1471
  %v1660 = vadd.f32 %v301, %v1474
  %v1661 = vadd.f32 %v303, %v1477
  %v1662 = vadd.f32 %v305, %v1480
  %v1663 = vadd.f32 %v307, %v1483
  %v1664 = vadd.f32 %v309, %v1486
  %v1665 = vadd.f32 %v311, %v1489
  %v1666 = vadd.f32 %v313, %v1492
  %v1667 = vadd.f32 %v315, %v1495
  %v1668 = vadd.f32 %v317, %v1498
  %v1669 = vadd.f32 %v319, %v1501
  %v1670 = vadd.f32 %v321, %v1504
  %v1671 = vadd.f32 %v323, %v1507
  %v1672 = vadd.f32 %v325, %v1510
  %v1673 = vadd.f32 %v327, %v1513
  %v1674 = vadd.f32 %v329, %v1516
  %v1675 = vadd.f32 %v331, %v1519
  %v1676 = vadd.f32 %v333, %v1522
  %v1677 = vadd.f32 %v335, %v1525
  %v1678 = vadd.f32 %v337, %v1528
  %v1679 = vadd.f32 %v339, %v1531
  %v1680 = vadd.f32 %v341, %v1534
  %v1681 = vadd.f32 %v343, %v1537
  %v1682 = vadd.f32 %v345, %v1540
  %v1683 = vadd.f32 %v347, %v1543
  %v1684 = vadd.f32 %v349, %v1546
  %v1685 = vadd.f32 %v351, %v1549
  %v1686 = vadd.f32 %v353, %v1552
  %v1687 = vadd.f32 %v355, %v1555
  %v1688 = vadd.f32 %v357, %v1558
  %v1689 = vadd.f32 %v359, %v1561
  %v1690 = vmul.f32 %v1626, 2.0
  %v1691 = vmul.f32 %v1627, 2.0
  %v1692 = vmul.f32 %v1628, 2.0
  %v1693 = vmul.f32 %v1629, 2.0
  %v1694 = vmul.f32 %v1630, 2.0
  %v1695 = vmul.f32 %v1631, 2.0
  %v1696 = vmul.f32 %v1632, 2.0
  %v1697 = vmul.f32 %v1633, 2.0
  %v1698 = vmul.f32 %v1634, 2.0
  %v1699 = vmul.f32 %v1635, 2.0
  %v1700 = vmul.f32 %v1636, 2.0
  %v1701 = vmul.f32 %v1637, 2.0
  %v1702 = vmul.f32 %v1638, 2.0
  %v1703 = vmul.f32 %v1639, 2.0
  %v1704 = vmul.f32 %v1640, 2.0
  %v1705 = vmul.f32 %v1641, 2.0
  %v1706 = vmul.f32 %v1642, 2.0
  %v1707 = vmul.f32 %v1643, 2.0
  %v1708 = vmul.f32 %v1644, 2.0
  %v1709 = vmul.f32 %v1645, 2.0
  %v1710 = vmul.f32 %v1646, 2.0
  %v1711 = vmul.f32 %v1647, 2.0
  %v1712 = vmul.f32 %v1648, 2.0
  %v1713 = vmul.f32 %v1649, 2.0
  %v1714 = vmul.f32 %v1650, 2.0
  %v1715 = vmul.f32 %v1651, 2.0
  %v1716 = vmul.f32 %v1652, 2.0
  %v1717 = vmul.f32 %v1653, 2.0
  %v1718 = vmul.f32 %v1654, 2.0
  %v1719 = vmul.f32 %v1655, 2.0
  %v1720 = vmul.f32 %v1656, 2.0
  %v1721 = vmul.f32 %v1657, 2.0
  %v1722 = vmul.f32 %v1658, 2.0
  %v1723 = vmul.f32 %v1659, 2.0
  %v1724 = vmul.f32 %v1660, 2.0
  %v1725 = vmul.f32 %v1661, 2.0
  %v1726 = vmul.f32 %v1662, 2.0
  %v1727 = vmul.f32 %v1663, 2.0
  %v1728 = vmul.f32 %v1664, 2.0
  %v1729 = vmul.f32 %v1665, 2.0
  %v1730 = vmul.f32 %v1666, 2.0
  %v1731 = vmul.f32 %v1667, 2.0
  %v1732 = vmul.f32 %v1668, 2.0
  %v1733 = vmul.f32 %v1669, 2.0
  %v1734 = vmul.f32 %v1670, 2.0
  %v1735 = vmul.f32 %v1671, 2.0
  %v1736 = vmul.f32 %v1672, 2.0
  %v1737 = vmul.f32 %v1673, 2.0
  %v1738 = vmul.f32 %v1674, 2.0
  %v1739 = vmul.f32 %v1675, 2.0
  %v1740 = vmul.f32 %v1676, 2.0
  %v1741 = vmul.f32 %v1677, 2.0
  %v1742 = vmul.f32 %v1678, 2.0
  %v1743 = vmul.f32 %v1679, 2.0
  %v1744 = vmul.f32 %v1680, 2.0
  %v1745 = vmul.f32 %v1681, 2.0
  %v1746 = vmul.f32 %v1682, 2.0
  %v1747 = vmul.f32 %v1683, 2.0
  %v1748 = vmul.f32 %v1684, 2.0
  %v1749 = vmul.f32 %v1685, 2.0
  %v1750 = vmul.f32 %v1686, 2.0
  %v1751 = vmul.f32 %v1687, 2.0
  %v1752 = vmul.f32 %v1688, 2.0
  %v1753 = vmul.f32 %v1689, 2.0
  %v1754 = vadd.f32 %v1178, %v1690
  %v1755 = vadd.f32 %v1179, %v1691
  %v1756 = vadd.f32 %v1180, %v1692
  %v1757 = vadd.f32 %v1181, %v1693
  %v1758 = vadd.f32 %v1182, %v1694
  %v1759 = vadd.f32 %v1183, %v1695
  %v1760 = vadd.f32 %v1184, %v1696
  %v1761 = vadd.f32 %v1185, %v1697
  %v1762 = vadd.f32 %v1186, %v1698
  %v1763 = vadd.f32 %v1187, %v1699
  %v1764 = vadd.f32 %v1188, %v1700
  %v1765 = vadd.f32 %v1189, %v1701
  %v1766 = vadd.f32 %v1190, %v1702
  %v1767 = vadd.f32 %v1191, %v1703
  %v1768 = vadd.f32 %v1192, %v1704
  %v1769 = vadd.f32 %v1193, %v1705
  %v1770 = vadd.f32 %v1194, %v1706
  %v1771 = vadd.f32 %v1195, %v1707
  %v1772 = vadd.f32 %v1196, %v1708
  %v1773 = vadd.f32 %v1197, %v1709
  %v1774 = vadd.f32 %v1198, %v1710
  %v1775 = vadd.f32 %v1199, %v1711
  %v1776 = vadd.f32 %v1200, %v1712
  %v1777 = vadd.f32 %v1201, %v1713
  %v1778 = vadd.f32 %v1202, %v1714
  %v1779 = vadd.f32 %v1203, %v1715
  %v1780 = vadd.f32 %v1204, %v1716
  %v1781 = vadd.f32 %v1205, %v1717
  %v1782 = vadd.f32 %v1206, %v1718
  %v1783 = vadd.f32 %v1207, %v1719
  %v1784 = vadd.f32 %v1208, %v1720
  %v1785 = vadd.f32 %v1209, %v1721
  %v1786 = vadd.f32 %v1210, %v1722
  %v1787 = vadd.f32 %v1211, %v1723
  %v1788 = vadd.f32 %v1212, %v1724
  %v1789 = vadd.f32 %v1213, %v1725
  %v1790 = vadd.f32 %v1214, %v1726
  %v1791 = vadd.f32 %v1215, %v1727
  %v1792 = vadd.f32 %v1216, %v1728
  %v1793 = vadd.f32 %v1217, %v1729
  %v1794 = vadd.f32 %v1218, %v1730
  %v1795 = vadd.f32 %v1219, %v1731
  %v1796 = vadd.f32 %v1220, %v1732
  %v1797 = vadd.f32 %v1221, %v1733
  %v1798 = vadd.f32 %v1222, %v1734
  %v1799 = vadd.f32 %v1223, %v1735
  %v1800 = vadd.f32 %v1224, %v1736
  %v1801 = vadd.f32 %v1225, %v1737
  %v1802 = vadd.f32 %v1226, %v1738
  %v1803 = vadd.f32 %v1227, %v1739
  %v1804 = vadd.f32 %v1228, %v1740
  %v1805 = vadd.f32 %v1229, %v1741
  %v1806 = vadd.f32 %v1230, %v1742
  %v1807 = vadd.f32 %v1231, %v1743
  %v1808 = vadd.f32 %v1232, %v1744
  %v1809 = vadd.f32 %v1233, %v1745
  %v1810 = vadd.f32 %v1234, %v1746
  %v1811 = vadd.f32 %v1235, %v1747
  %v1812 = vadd.f32 %v1236, %v1748
  %v1813 = vadd.f32 %v1237, %v1749
  %v1814 = vadd.f32 %v1238, %v1750
  %v1815 = vadd.f32 %v1239, %v1751
  %v1816 = vadd.f32 %v1240, %v1752
  %v1817 = vadd.f32 %v1241, %v1753
  %v1818 = vmul.f32 %v361, 4.0
  %v1819 = vmul.f32 %v362, 4.0
  %v1820 = vmul.f32 %v363, 4.0
  %v1821 = vmul.f32 %v364, 4.0
  %v1822 = vmul.f32 %v365, 4.0
  %v1823 = vmul.f32 %v366, 4.0
  %v1824 = vmul.f32 %v367, 4.0
  %v1825 = vmul.f32 %v368, 4.0
  %v1826 = vmul.f32 %v369, 4.0
  %v1827 = vmul.f32 %v370, 4.0
  %v1828 = vmul.f32 %v371, 4.0
  %v1829 = vmul.f32 %v372, 4.0
  %v1830 = vmul.f32 %v373, 4.0
  %v1831 = vmul.f32 %v374, 4.0
  %v1832 = vmul.f32 %v375, 4.0
  %v1833 = vmul.f32 %v376, 4.0
  %v1834 = vmul.f32 %v377, 4.0
  %v1835 = vmul.f32 %v378, 4.0
  %v1836 = vmul.f32 %v379, 4.0
  %v1837 = vmul.f32 %v380, 4.0
  %v1838 = vmul.f32 %v381, 4.0
  %v1839 = vmul.f32 %v382, 4.0
  %v1840 = vmul.f32 %v383, 4.0
  %v1841 = vmul.f32 %v384, 4.0
  %v1842 = vmul.f32 %v385, 4.0
  %v1843 = vmul.f32 %v386, 4.0
  %v1844 = vmul.f32 %v387, 4.0
  %v1845 = vmul.f32 %v388, 4.0
  %v1846 = vmul.f32 %v389, 4.0
  %v1847 = vmul.f32 %v390, 4.0
  %v1848 = vmul.f32 %v391, 4.0
  %v1849 = vmul.f32 %v392, 4.0
  %v1850 = vmul.f32 %v393, 4.0
  %v1851 = vmul.f32 %v394, 4.0
  %v1852 = vmul.f32 %v395, 4.0
  %v1853 = vmul.f32 %v396, 4.0
  %v1854 = vmul.f32 %v397, 4.0
  %v1855 = vmul.f32 %v398, 4.0
  %v1856 = vmul.f32 %v399, 4.0
  %v1857 = vmul.f32 %v400, 4.0
  %v1858 = vmul.f32 %v401, 4.0
  %v1859 = vmul.f32 %v402, 4.0
  %v1860 = vmul.f32 %v403, 4.0
  %v1861 = vmul.f32 %v404, 4.0
  %v1862 = vmul.f32 %v405, 4.0
  %v1863 = vmul.f32 %v406, 4.0
  %v1864 = vmul.f32 %v407, 4.0
  %v1865 = vmul.f32 %v408, 4.0
  %v1866 = vmul.f32 %v409, 4.0
  %v1867 = vmul.f32 %v410, 4.0
  %v1868 = vmul.f32 %v411, 4.0
  %v1869 = vmul.f32 %v412, 4.0
  %v1870 = vmul.f32 %v413, 4.0
  %v1871 = vmul.f32 %v414, 4.0
  %v1872 = vmul.f32 %v415, 4.0
  %v1873 = vmul.f32 %v416, 4.0
  %v1874 = vmul.f32 %v417, 4.0
  %v1875 = vmul.f32 %v418, 4.0
  %v1876 = vmul.f32 %v419, 4.0
  %v1877 = vmul.f32 %v420, 4.0
  %v1878 = vmul.f32 %v421, 4.0
  %v1879 = vmul.f32 %v422, 4.0
  %v1880 = vmul.f32 %v423, 4.0
  %v1881 = vmul.f32 %v424, 4.0
  %v1882 = vadd.f32 %v1754, %v1818
  %v1883 = vadd.f32 %v1755, %v1819
  %v1884 = vadd.f32 %v1756, %v1820
  %v1885 = vadd.f32 %v1757, %v1821
  %v1886 = vadd.f32 %v1758, %v1822
  %v1887 = vadd.f32 %v1759, %v1823
  %v1888 = vadd.f32 %v1760, %v1824
  %v1889 = vadd.f32 %v1761, %v1825
  %v1890 = vadd.f32 %v1762, %v1826
  %v1891 = vadd.f32 %v1763, %v1827
  %v1892 = vadd.f32 %v1764, %v1828
  %v1893 = vadd.f32 %v1765, %v1829
  %v1894 = vadd.f32 %v1766, %v1830
  %v1895 = vadd.f32 %v1767, %v1831
  %v1896 = vadd.f32 %v1768, %v1832
  %v1897 = vadd.f32 %v1769, %v1833
  %v1898 = vadd.f32 %v1770, %v1834
  %v1899 = vadd.f32 %v1771, %v1835
  %v1900 = vadd.f32 %v1772, %v1836
  %v1901 = vadd.f32 %v1773, %v1837
  %v1902 = vadd.f32 %v1774, %v1838
  %v1903 = vadd.f32 %v1775, %v1839
  %v1904 = vadd.f32 %v1776, %v1840
  %v1905 = vadd.f32 %v1777, %v1841
  %v1906 = vadd.f32 %v1778, %v1842
  %v1907 = vadd.f32 %v1779, %v1843
  %v1908 = vadd.f32 %v1780, %v1844
  %v1909 = vadd.f32 %v1781, %v1845
  %v1910 = vadd.f32 %v1782, %v1846
  %v1911 = vadd.f32 %v1783, %v1847
  %v1912 = vadd.f32 %v1784, %v1848
  %v1913 = vadd.f32 %v1785, %v1849
  %v1914 = vadd.f32 %v1786, %v1850
  %v1915 = vadd.f32 %v1787, %v1851
  %v1916 = vadd.f32 %v1788, %v1852
  %v1917 = vadd.f32 %v1789, %v1853
  %v1918 = vadd.f32 %v1790, %v1854
  %v1919 = vadd.f32 %v1791, %v1855
  %v1920 = vadd.f32 %v1792, %v1856
  %v1921 = vadd.f32 %v1793, %v1857
  %v1922 = vadd.f32 %v1794, %v1858
  %v1923 = vadd.f32 %v1795, %v1859
  %v1924 = vadd.f32 %v1796, %v1860
  %v1925 = vadd.f32 %v1797, %v1861
  %v1926 = vadd.f32 %v1798, %v1862
  %v1927 = vadd.f32 %v1799, %v1863
  %v1928 = vadd.f32 %v1800, %v1864
  %v1929 = vadd.f32 %v1801, %v1865
  %v1930 = vadd.f32 %v1802, %v1866
  %v1931 = vadd.f32 %v1803, %v1867
  %v1932 = vadd.f32 %v1804, %v1868
  %v1933 = vadd.f32 %v1805, %v1869
  %v1934 = vadd.f32 %v1806, %v1870
  %v1935 = vadd.f32 %v1807, %v1871
  %v1936 = vadd.f32 %v1808, %v1872
  %v1937 = vadd.f32 %v1809, %v1873
  %v1938 = vadd.f32 %v1810, %v1874
  %v1939 = vadd.f32 %v1811, %v1875
  %v1940 = vadd.f32 %v1812, %v1876
  %v1941 = vadd.f32 %v1813, %v1877
  %v1942 = vadd.f32 %v1814, %v1878
  %v1943 = vadd.f32 %v1815, %v1879
  %v1944 = vadd.f32 %v1816, %v1880
  %v1945 = vadd.f32 %v1817, %v1881
  %v1946 = vmul.f32 %v1882, 0.0625
  %v1947 = vmul.f32 %v1883, 0.0625
  %v1948 = vmul.f32 %v1884, 0.0625
  %v1949 = vmul.f32 %v1885, 0.0625
  %v1950 = vmul.f32 %v1886, 0.0625
  %v1951 = vmul.f32 %v1887, 0.0625
  %v1952 = vmul.f32 %v1888, 0.0625
  %v1953 = vmul.f32 %v1889, 0.0625
  %v1954 = vmul.f32 %v1890, 0.0625
  %v1955 = vmul.f32 %v1891, 0.0625
  %v1956 = vmul.f32 %v1892, 0.0625
  %v1957 = vmul.f32 %v1893, 0.0625
  %v1958 = vmul.f32 %v1894, 0.0625
  %v1959 = vmul.f32 %v1895, 0.0625
  %v1960 = vmul.f32 %v1896, 0.0625
  %v1961 = vmul.f32 %v1897, 0.0625
  %v1962 = vmul.f32 %v1898, 0.0625
  %v1963 = vmul.f32 %v1899, 0.0625
  %v1964 = vmul.f32 %v1900, 0.0625
  %v1965 = vmul.f32 %v1901, 0.0625
  %v1966 = vmul.f32 %v1902, 0.0625
  %v1967 = vmul.f32 %v1903, 0.0625
  %v1968 = vmul.f32 %v1904, 0.0625
  %v1969 = vmul.f32 %v1905, 0.0625
  %v1970 = vmul.f32 %v1906, 0.0625
  %v1971 = vmul.f32 %v1907, 0.0625
  %v1972 = vmul.f32 %v1908, 0.0625
  %v1973 = vmul.f32 %v1909, 0.0625
  %v1974 = vmul.f32 %v1910, 0.0625
  %v1975 = vmul.f32 %v1911, 0.0625
  %v1976 = vmul.f32 %v1912, 0.0625
  %v1977 = vmul.f32 %v1913, 0.0625
  %v1978 = vmul.f32 %v1914, 0.0625
  %v1979 = vmul.f32 %v1915, 0.0625
  %v1980 = vmul.f32 %v1916, 0.0625
  %v1981 = vmul.f32 %v1917, 0.0625
  %v1982 = vmul.f32 %v1918, 0.0625
  %v1983 = vmul.f32 %v1919, 0.0625
  %v1984 = vmul.f32 %v1920, 0.0625
  %v1985 = vmul.f32 %v1921, 0.0625
  %v1986 = vmul.f32 %v1922, 0.0625
  %v1987 = vmul.f32 %v1923, 0.0625
  %v1988 = vmul.f32 %v1924, 0.0625
  %v1989 = vmul.f32 %v1925, 0.0625
  %v1990 = vmul.f32 %v1926, 0.0625
  %v1991 = vmul.f32 %v1927, 0.0625
  %v1992 = vmul.f32 %v1928, 0.0625
  %v1993 = vmul.f32 %v1929, 0.0625
  %v1994 = vmul.f32 %v1930, 0.0625
  %v1995 = vmul.f32 %v1931, 0.0625
  %v1996 = vmul.f32 %v1932, 0.0625
  %v1997 = vmul.f32 %v1933, 0.0625
  %v1998 = vmul.f32 %v1934, 0.0625
  %v1999 = vmul.f32 %v1935, 0.0625
  %v2000 = vmul.f32 %v1936, 0.0625
  %v2001 = vmul.f32 %v1937, 0.0625
  %v2002 = vmul.f32 %v1938, 0.0625
  %v2003 = vmul.f32 %v1939, 0.0625
  %v2004 = vmul.f32 %v1940, 0.0625
  %v2005 = vmul.f32 %v1941, 0.0625
  %v2006 = vmul.f32 %v1942, 0.0625
  %v2007 = vmul.f32 %v1943, 0.0625
  %v2008 = vmul.f32 %v1944, 0.0625
  %v2009 = vmul.f32 %v1945, 0.0625
  %vm2010 = vcmask 523264
  %2011 = vst.msk [vmem:[%s4] sm:$0xff] %vm2010, %v1946
  %2012 = vst.msk [vmem:[%s4 + $0x8] sm:$0xff] %vm2010, %v1947
  %2013 = vst.msk [vmem:[%s4 + $0x10] sm:$0xff] %vm2010, %v1948
  %2014 = vst.msk [vmem:[%s4 + $0x18] sm:$0xff] %vm2010, %v1949
  %2015 = vst.msk [vmem:[%s4 + $0x20] sm:$0xff] %vm2010, %v1950
  %2016 = vst.msk [vmem:[%s4 + $0x28] sm:$0xff] %vm2010, %v1951
  %2017 = vst.msk [vmem:[%s4 + $0x30] sm:$0xff] %vm2010, %v1952
  %2018 = vst.msk [vmem:[%s4 + $0x38] sm:$0xff] %vm2010, %v1953
  %2019 = vst.msk [vmem:[%s4 + $0x40] sm:$0xff] %vm2010, %v1954
  %2020 = vst.msk [vmem:[%s4 + $0x48] sm:$0xff] %vm2010, %v1955
  %2021 = vst.msk [vmem:[%s4 + $0x50] sm:$0xff] %vm2010, %v1956
  %2022 = vst.msk [vmem:[%s4 + $0x58] sm:$0xff] %vm2010, %v1957
  %2023 = vst.msk [vmem:[%s4 + $0x60] sm:$0xff] %vm2010, %v1958
  %2024 = vst.msk [vmem:[%s4 + $0x68] sm:$0xff] %vm2010, %v1959
  %2025 = vst.msk [vmem:[%s4 + $0x70] sm:$0xff] %vm2010, %v1960
  %2026 = vst.msk [vmem:[%s4 + $0x78] sm:$0xff] %vm2010, %v1961
  %2027 = vst.msk [vmem:[%s4 + $0x80] sm:$0xff] %vm2010, %v1962
  %2028 = vst.msk [vmem:[%s4 + $0x88] sm:$0xff] %vm2010, %v1963
  %2029 = vst.msk [vmem:[%s4 + $0x90] sm:$0xff] %vm2010, %v1964
  %2030 = vst.msk [vmem:[%s4 + $0x98] sm:$0xff] %vm2010, %v1965
  %2031 = vst.msk [vmem:[%s4 + $0xa0] sm:$0xff] %vm2010, %v1966
  %2032 = vst.msk [vmem:[%s4 + $0xa8] sm:$0xff] %vm2010, %v1967
  %2033 = vst.msk [vmem:[%s4 + $0xb0] sm:$0xff] %vm2010, %v1968
  %2034 = vst.msk [vmem:[%s4 + $0xb8] sm:$0xff] %vm2010, %v1969
  %2035 = vst.msk [vmem:[%s4 + $0xc0] sm:$0xff] %vm2010, %v1970
  %2036 = vst.msk [vmem:[%s4 + $0xc8] sm:$0xff] %vm2010, %v1971
  %2037 = vst.msk [vmem:[%s4 + $0xd0] sm:$0xff] %vm2010, %v1972
  %2038 = vst.msk [vmem:[%s4 + $0xd8] sm:$0xff] %vm2010, %v1973
  %2039 = vst.msk [vmem:[%s4 + $0xe0] sm:$0xff] %vm2010, %v1974
  %2040 = vst.msk [vmem:[%s4 + $0xe8] sm:$0xff] %vm2010, %v1975
  %2041 = vst.msk [vmem:[%s4 + $0xf0] sm:$0xff] %vm2010, %v1976
  %2042 = vst.msk [vmem:[%s4 + $0xf8] sm:$0xff] %vm2010, %v1977
  %2043 = vst.msk [vmem:[%s4 + $0x100] sm:$0xff] %vm2010, %v1978
  %2044 = vst.msk [vmem:[%s4 + $0x108] sm:$0xff] %vm2010, %v1979
  %2045 = vst.msk [vmem:[%s4 + $0x110] sm:$0xff] %vm2010, %v1980
  %2046 = vst.msk [vmem:[%s4 + $0x118] sm:$0xff] %vm2010, %v1981
  %2047 = vst.msk [vmem:[%s4 + $0x120] sm:$0xff] %vm2010, %v1982
  %2048 = vst.msk [vmem:[%s4 + $0x128] sm:$0xff] %vm2010, %v1983
  %2049 = vst.msk [vmem:[%s4 + $0x130] sm:$0xff] %vm2010, %v1984
  %2050 = vst.msk [vmem:[%s4 + $0x138] sm:$0xff] %vm2010, %v1985
  %2051 = vst.msk [vmem:[%s4 + $0x140] sm:$0xff] %vm2010, %v1986
  %2052 = vst.msk [vmem:[%s4 + $0x148] sm:$0xff] %vm2010, %v1987
  %2053 = vst.msk [vmem:[%s4 + $0x150] sm:$0xff] %vm2010, %v1988
  %2054 = vst.msk [vmem:[%s4 + $0x158] sm:$0xff] %vm2010, %v1989
  %2055 = vst.msk [vmem:[%s4 + $0x160] sm:$0xff] %vm2010, %v1990
  %2056 = vst.msk [vmem:[%s4 + $0x168] sm:$0xff] %vm2010, %v1991
  %2057 = vst.msk [vmem:[%s4 + $0x170] sm:$0xff] %vm2010, %v1992
  %2058 = vst.msk [vmem:[%s4 + $0x178] sm:$0xff] %vm2010, %v1993
  %2059 = vst.msk [vmem:[%s4 + $0x180] sm:$0xff] %vm2010, %v1994
  %2060 = vst.msk [vmem:[%s4 + $0x188] sm:$0xff] %vm2010, %v1995
  %2061 = vst.msk [vmem:[%s4 + $0x190] sm:$0xff] %vm2010, %v1996
  %2062 = vst.msk [vmem:[%s4 + $0x198] sm:$0xff] %vm2010, %v1997
  %2063 = vst.msk [vmem:[%s4 + $0x1a0] sm:$0xff] %vm2010, %v1998
  %2064 = vst.msk [vmem:[%s4 + $0x1a8] sm:$0xff] %vm2010, %v1999
  %2065 = vst.msk [vmem:[%s4 + $0x1b0] sm:$0xff] %vm2010, %v2000
  %2066 = vst.msk [vmem:[%s4 + $0x1b8] sm:$0xff] %vm2010, %v2001
  %2067 = vst.msk [vmem:[%s4 + $0x1c0] sm:$0xff] %vm2010, %v2002
  %2068 = vst.msk [vmem:[%s4 + $0x1c8] sm:$0xff] %vm2010, %v2003
  %2069 = vst.msk [vmem:[%s4 + $0x1d0] sm:$0xff] %vm2010, %v2004
  %2070 = vst.msk [vmem:[%s4 + $0x1d8] sm:$0xff] %vm2010, %v2005
  %2071 = vst.msk [vmem:[%s4 + $0x1e0] sm:$0xff] %vm2010, %v2006
  %2072 = vst.msk [vmem:[%s4 + $0x1e8] sm:$0xff] %vm2010, %v2007
  %2073 = vst.msk [vmem:[%s4 + $0x1f0] sm:$0xff] %vm2010, %v2008
  %2074 = vst.msk [vmem:[%s4 + $0x1f8] sm:$0xff] %vm2010, %v2009
  // Predicated region
  $region18: #{patch_discriminator_forward.8} parent=0 // pred_check
    _
  $region19: #{patch_discriminator_forward.8} parent=0 // pred_check_branch
    %2076 = sbr.rel (0) target = $region21
  $region20: #{patch_discriminator_forward.8} parent=0 // pred_region
    _
  $region21: #{patch_discriminator_forward.8} parent=0 // pred_fallthru
    _
  // Predicated region
  $region22: #{patch_discriminator_forward.8} parent=0 // pred_check
    _
  $region23: #{patch_discriminator_forward.8} parent=0 // pred_check_branch
    %2078 = sbr.rel (0) target = $region25
  $region24: #{patch_discriminator_forward.8} parent=0 // pred_region
    _
  $region25: #{patch_discriminator_forward.8} parent=0 // pred_fallthru
    _

// kernel: patch_discriminator_forward.9
$region0: #{patch_discriminator_forward.9}
  #allocation0 [shape = 'u32[]', space=smem, size = 0x4, offset = 0x4, fixed_abs, tag = 'smem constant byte address 0x4 - core index']
  #allocation1 [shape = 'u32[144,128]{1,0:T(1,128)}', space=vmem, size = 0x12000, scoped, tag = 'internal scratch']
  %s0 = inlined_call_operand.vmem [shape: bf16[392,1024], index: 0, kind: input, shape index: {}]
  %s1 = inlined_call_operand.vmem [shape: bf16[1024,128], index: 1, kind: input, shape index: {}]
  %s2 = inlined_call_operand.vmem [shape: f32[392,128], index: 2, kind: output, shape index: {0}]
  %s3 = inlined_call_operand.vmem [shape: f32[1,128], index: 3, kind: output, shape index: {1}]
  %s4 = inlined_call_operand.vmem [shape: f32[1,128], index: 4, kind: output, shape index: {2}]
  %5 = xla_tuple %s2, %s3, %s4
  %s6 = sld [smem:[#allocation0]]
  $region38: #{patch_discriminator_forward.9} parent=0
    _
  %s8 = ssub.s32 1, %s6
  %s9 = scalar_select 0, %s8, %s6
  // Predicated region
  $region2: #{patch_discriminator_forward.9} parent=0 // pred_check
    _
  $region3: #{patch_discriminator_forward.9} parent=0 // pred_check_branch
    %11 = sbr.rel (0) target = $region5
  $region4: #{patch_discriminator_forward.9} parent=0 // pred_region
    _
  $region5: #{patch_discriminator_forward.9} parent=0 // pred_fallthru
    _
  // Predicated region
  $region6: #{patch_discriminator_forward.9} parent=0 // pred_check
    _
  $region7: #{patch_discriminator_forward.9} parent=0 // pred_check_branch
    %13 = sbr.rel (0) target = $region9
  $region8: #{patch_discriminator_forward.9} parent=0 // pred_region
    _
  $region9: #{patch_discriminator_forward.9} parent=0 // pred_fallthru
    _
  %v15 = vld [vmem:[%s0] sm:$0xff]
  %v16 = vld [vmem:[%s0 + $0x8] sm:$0xff]
  %v17 = vld [vmem:[%s0 + $0x10] sm:$0xff]
  %v18 = vld [vmem:[%s0 + $0x18] sm:$0xff]
  %v19 = vld [vmem:[%s0 + $0x20] sm:$0xff]
  %v20 = vld [vmem:[%s0 + $0x28] sm:$0xff]
  %v21 = vld [vmem:[%s0 + $0x30] sm:$0xff]
  %v22 = vld [vmem:[%s0 + $0x38] sm:$0xff]
  %v23 = vld [vmem:[%s0 + $0x40] sm:$0xff]
  %v24 = vld [vmem:[%s0 + $0x48] sm:$0xff]
  %v25 = vld [vmem:[%s0 + $0x50] sm:$0xff]
  %v26 = vld [vmem:[%s0 + $0x58] sm:$0xff]
  %v27 = vld [vmem:[%s0 + $0x60] sm:$0xff]
  %v28 = vld [vmem:[%s0 + $0x68] sm:$0xff]
  %v29 = vld [vmem:[%s0 + $0x70] sm:$0xff]
  %v30 = vld [vmem:[%s0 + $0x78] sm:$0xff]
  %v31 = vld [vmem:[%s0 + $0x80] sm:$0xff]
  %v32 = vld [vmem:[%s0 + $0x88] sm:$0xff]
  %v33 = vld [vmem:[%s0 + $0x90] sm:$0xff]
  %v34 = vld [vmem:[%s0 + $0x98] sm:$0xff]
  %v35 = vld [vmem:[%s0 + $0xa0] sm:$0xff]
  %v36 = vld [vmem:[%s0 + $0xa8] sm:$0xff]
  %v37 = vld [vmem:[%s0 + $0xb0] sm:$0xff]
  %v38 = vld [vmem:[%s0 + $0xb8] sm:$0xff]
  %v39 = vld [vmem:[%s0 + $0xc0] sm:$0xff]
  %v40 = vld [vmem:[%s0 + $0xc8] sm:$0xff]
  %v41 = vld [vmem:[%s0 + $0xd0] sm:$0xff]
  %v42 = vld [vmem:[%s0 + $0xd8] sm:$0xff]
  %v43 = vld [vmem:[%s0 + $0xe0] sm:$0xff]
  %v44 = vld [vmem:[%s0 + $0xe8] sm:$0xff]
  %v45 = vld [vmem:[%s0 + $0xf0] sm:$0xff]
  %v46 = vld [vmem:[%s0 + $0xf8] sm:$0xff]
  %v47 = vld [vmem:[%s0 + $0x100] sm:$0xff]
  %v48 = vld [vmem:[%s0 + $0x108] sm:$0xff]
  %v49 = vld [vmem:[%s0 + $0x110] sm:$0xff]
  %v50 = vld [vmem:[%s0 + $0x118] sm:$0xff]
  %v51 = vld [vmem:[%s0 + $0x120] sm:$0xff]
  %v52 = vld [vmem:[%s0 + $0x128] sm:$0xff]
  %v53 = vld [vmem:[%s0 + $0x130] sm:$0xff]
  %v54 = vld [vmem:[%s0 + $0x138] sm:$0xff]
  %v55 = vld [vmem:[%s0 + $0x140] sm:$0xff]
  %v56 = vld [vmem:[%s0 + $0x148] sm:$0xff]
  %v57 = vld [vmem:[%s0 + $0x150] sm:$0xff]
  %v58 = vld [vmem:[%s0 + $0x158] sm:$0xff]
  %v59 = vld [vmem:[%s0 + $0x160] sm:$0xff]
  %v60 = vld [vmem:[%s0 + $0x168] sm:$0xff]
  %v61 = vld [vmem:[%s0 + $0x170] sm:$0xff]
  %v62 = vld [vmem:[%s0 + $0x178] sm:$0xff]
  %v63 = vld [vmem:[%s0 + $0x180] sm:$0xff]
  %v64 = vld [vmem:[%s0 + $0x188] sm:$0xff]
  %v65 = vld [vmem:[%s0 + $0x190] sm:$0xff]
  %v66 = vld [vmem:[%s0 + $0x198] sm:$0xff]
  %v67 = vld [vmem:[%s0 + $0x1a0] sm:$0xff]
  %v68 = vld [vmem:[%s0 + $0x1a8] sm:$0xff]
  %v69 = vld [vmem:[%s0 + $0x1b0] sm:$0xff]
  %v70 = vld [vmem:[%s0 + $0x1b8] sm:$0xff]
  %v71 = vld [vmem:[%s0 + $0x1c0] sm:$0xff]
  %v72 = vld [vmem:[%s0 + $0x1c8] sm:$0xff]
  %v73 = vld [vmem:[%s0 + $0x1d0] sm:$0xff]
  %v74 = vld [vmem:[%s0 + $0x1d8] sm:$0xff]
  %v75 = vld [vmem:[%s0 + $0x1e0] sm:$0xff]
  %v76 = vld [vmem:[%s0 + $0x1e8] sm:$0xff]
  %v77 = vld [vmem:[%s0 + $0x1f0] sm:$0xff]
  %v78 = vld [vmem:[%s0 + $0x1f8] sm:$0xff]
  %v79 = vld [vmem:[%s0 + $0x200] sm:$0xff]
  %v80 = vld [vmem:[%s0 + $0x208] sm:$0xff]
  %v81 = vld [vmem:[%s0 + $0x210] sm:$0xff]
  %v82 = vld [vmem:[%s0 + $0x218] sm:$0xff]
  %v83 = vld [vmem:[%s0 + $0x220] sm:$0xff]
  %v84 = vld [vmem:[%s0 + $0x228] sm:$0xff]
  %v85 = vld [vmem:[%s0 + $0x230] sm:$0xff]
  %v86 = vld [vmem:[%s0 + $0x238] sm:$0xff]
  %v87 = vld [vmem:[%s0 + $0x240] sm:$0xff]
  %v88 = vld [vmem:[%s0 + $0x248] sm:$0xff]
  %v89 = vld [vmem:[%s0 + $0x250] sm:$0xff]
  %v90 = vld [vmem:[%s0 + $0x258] sm:$0xff]
  %v91 = vld [vmem:[%s0 + $0x260] sm:$0xff]
  %v92 = vld [vmem:[%s0 + $0x268] sm:$0xff]
  %v93 = vld [vmem:[%s0 + $0x270] sm:$0xff]
  %v94 = vld [vmem:[%s0 + $0x278] sm:$0xff]
  %v95 = vld [vmem:[%s0 + $0x280] sm:$0xff]
  %v96 = vld [vmem:[%s0 + $0x288] sm:$0xff]
  %v97 = vld [vmem:[%s0 + $0x290] sm:$0xff]
  %v98 = vld [vmem:[%s0 + $0x298] sm:$0xff]
  %v99 = vld [vmem:[%s0 + $0x2a0] sm:$0xff]
  %v100 = vld [vmem:[%s0 + $0x2a8] sm:$0xff]
  %v101 = vld [vmem:[%s0 + $0x2b0] sm:$0xff]
  %v102 = vld [vmem:[%s0 + $0x2b8] sm:$0xff]
  %v103 = vld [vmem:[%s0 + $0x2c0] sm:$0xff]
  %v104 = vld [vmem:[%s0 + $0x2c8] sm:$0xff]
  %v105 = vld [vmem:[%s0 + $0x2d0] sm:$0xff]
  %v106 = vld [vmem:[%s0 + $0x2d8] sm:$0xff]
  %v107 = vld [vmem:[%s0 + $0x2e0] sm:$0xff]
  %v108 = vld [vmem:[%s0 + $0x2e8] sm:$0xff]
  %v109 = vld [vmem:[%s0 + $0x2f0] sm:$0xff]
  %v110 = vld [vmem:[%s0 + $0x2f8] sm:$0xff]
  %v111 = vld [vmem:[%s0 + $0x300] sm:$0xff]
  %v112 = vld [vmem:[%s0 + $0x308] sm:$0xff]
  %v113 = vld [vmem:[%s0 + $0x310] sm:$0xff]
  %v114 = vld [vmem:[%s0 + $0x318] sm:$0xff]
  %v115 = vld [vmem:[%s0 + $0x320] sm:$0xff]
  %v116 = vld [vmem:[%s0 + $0x328] sm:$0xff]
  %v117 = vld [vmem:[%s0 + $0x330] sm:$0xff]
  %v118 = vld [vmem:[%s0 + $0x338] sm:$0xff]
  %v119 = vld [vmem:[%s0 + $0x340] sm:$0xff]
  %v120 = vld [vmem:[%s0 + $0x348] sm:$0xff]
  %v121 = vld [vmem:[%s0 + $0x350] sm:$0xff]
  %v122 = vld [vmem:[%s0 + $0x358] sm:$0xff]
  %v123 = vld [vmem:[%s0 + $0x360] sm:$0xff]
  %v124 = vld [vmem:[%s0 + $0x368] sm:$0xff]
  %v125 = vld [vmem:[%s0 + $0x370] sm:$0xff]
  %v126 = vld [vmem:[%s0 + $0x378] sm:$0xff]
  %v127 = vld [vmem:[%s0 + $0x380] sm:$0xff]
  %v128 = vld [vmem:[%s0 + $0x388] sm:$0xff]
  %v129 = vld [vmem:[%s0 + $0x390] sm:$0xff]
  %v130 = vld [vmem:[%s0 + $0x398] sm:$0xff]
  %v131 = vld [vmem:[%s0 + $0x3a0] sm:$0xff]
  %v132 = vld [vmem:[%s0 + $0x3a8] sm:$0xff]
  %v133 = vld [vmem:[%s0 + $0x3b0] sm:$0xff]
  %v134 = vld [vmem:[%s0 + $0x3b8] sm:$0xff]
  %v135 = vld [vmem:[%s0 + $0x3c0] sm:$0xff]
  %v136 = vld [vmem:[%s0 + $0x3c8] sm:$0xff]
  %v137 = vld [vmem:[%s0 + $0x3d0] sm:$0xff]
  %v138 = vld [vmem:[%s0 + $0x3d8] sm:$0xff]
  %v139 = vld [vmem:[%s0 + $0x3e0] sm:$0xff]
  %v140 = vld [vmem:[%s0 + $0x3e8] sm:$0xff]
  %v141 = vld [vmem:[%s0 + $0x3f0] sm:$0xff]
  %v142 = vld [vmem:[%s0 + $0x3f8] sm:$0xff]
  %v143 = vld [vmem:[%s0 + $0x400] sm:$0xff]
  %v144 = vld [vmem:[%s0 + $0x408] sm:$0xff]
  %v145 = vld [vmem:[%s0 + $0x410] sm:$0xff]
  %v146 = vld [vmem:[%s0 + $0x418] sm:$0xff]
  %v147 = vld [vmem:[%s0 + $0x420] sm:$0xff]
  %v148 = vld [vmem:[%s0 + $0x428] sm:$0xff]
  %v149 = vld [vmem:[%s0 + $0x430] sm:$0xff]
  %v150 = vld [vmem:[%s0 + $0x438] sm:$0xff]
  %v151 = vld [vmem:[%s0 + $0x440] sm:$0xff]
  %v152 = vld [vmem:[%s0 + $0x448] sm:$0xff]
  %v153 = vld [vmem:[%s0 + $0x450] sm:$0xff]
  %v154 = vld [vmem:[%s0 + $0x458] sm:$0xff]
  %v155 = vld [vmem:[%s0 + $0x460] sm:$0xff]
  %v156 = vld [vmem:[%s0 + $0x468] sm:$0xff]
  %v157 = vld [vmem:[%s0 + $0x470] sm:$0xff]
  %v158 = vld [vmem:[%s0 + $0x478] sm:$0xff]
  %v159 = vld [vmem:[%s0 + $0x480] sm:$0xff]
  %v160 = vld [vmem:[%s0 + $0x488] sm:$0xff]
  %v161 = vld [vmem:[%s0 + $0x490] sm:$0xff]
  %v162 = vld [vmem:[%s0 + $0x498] sm:$0xff]
  %v163 = vld [vmem:[%s0 + $0x4a0] sm:$0xff]
  %v164 = vld [vmem:[%s0 + $0x4a8] sm:$0xff]
  %v165 = vld [vmem:[%s0 + $0x4b0] sm:$0xff]
  %v166 = vld [vmem:[%s0 + $0x4b8] sm:$0xff]
  %v167 = vld [vmem:[%s0 + $0x4c0] sm:$0xff]
  %v168 = vld [vmem:[%s0 + $0x4c8] sm:$0xff]
  %v169 = vld [vmem:[%s0 + $0x4d0] sm:$0xff]
  %v170 = vld [vmem:[%s0 + $0x4d8] sm:$0xff]
  %v171 = vld [vmem:[%s0 + $0x4e0] sm:$0xff]
  %v172 = vld [vmem:[%s0 + $0x4e8] sm:$0xff]
  %v173 = vld [vmem:[%s0 + $0x4f0] sm:$0xff]
  %v174 = vld [vmem:[%s0 + $0x4f8] sm:$0xff]
  %v175 = vld [vmem:[%s0 + $0x500] sm:$0xff]
  %v176 = vld [vmem:[%s0 + $0x508] sm:$0xff]
  %v177 = vld [vmem:[%s0 + $0x510] sm:$0xff]
  %v178 = vld [vmem:[%s0 + $0x518] sm:$0xff]
  %v179 = vld [vmem:[%s0 + $0x520] sm:$0xff]
  %v180 = vld [vmem:[%s0 + $0x528] sm:$0xff]
  %v181 = vld [vmem:[%s0 + $0x530] sm:$0xff]
  %v182 = vld [vmem:[%s0 + $0x538] sm:$0xff]
  %v183 = vld [vmem:[%s0 + $0x540] sm:$0xff]
  %v184 = vld [vmem:[%s0 + $0x548] sm:$0xff]
  %v185 = vld [vmem:[%s0 + $0x550] sm:$0xff]
  %v186 = vld [vmem:[%s0 + $0x558] sm:$0xff]
  %v187 = vld [vmem:[%s0 + $0x560] sm:$0xff]
  %v188 = vld [vmem:[%s0 + $0x568] sm:$0xff]
  %v189 = vld [vmem:[%s0 + $0x570] sm:$0xff]
  %v190 = vld [vmem:[%s0 + $0x578] sm:$0xff]
  %v191 = vld [vmem:[%s0 + $0x580] sm:$0xff]
  %v192 = vld [vmem:[%s0 + $0x588] sm:$0xff]
  %v193 = vld [vmem:[%s0 + $0x590] sm:$0xff]
  %v194 = vld [vmem:[%s0 + $0x598] sm:$0xff]
  %v195 = vld [vmem:[%s0 + $0x5a0] sm:$0xff]
  %v196 = vld [vmem:[%s0 + $0x5a8] sm:$0xff]
  %v197 = vld [vmem:[%s0 + $0x5b0] sm:$0xff]
  %v198 = vld [vmem:[%s0 + $0x5b8] sm:$0xff]
  %v199 = vld [vmem:[%s0 + $0x5c0] sm:$0xff]
  %v200 = vld [vmem:[%s0 + $0x5c8] sm:$0xff]
  %v201 = vld [vmem:[%s0 + $0x5d0] sm:$0xff]
  %v202 = vld [vmem:[%s0 + $0x5d8] sm:$0xff]
  %v203 = vld [vmem:[%s0 + $0x5e0] sm:$0xff]
  %v204 = vld [vmem:[%s0 + $0x5e8] sm:$0xff]
  %v205 = vld [vmem:[%s0 + $0x5f0] sm:$0xff]
  %v206 = vld [vmem:[%s0 + $0x5f8] sm:$0xff]
  %v207 = vld [vmem:[%s0 + $0x600] sm:$0xff]
  %v208 = vld [vmem:[%s0 + $0x608] sm:$0xff]
  %v209 = vld [vmem:[%s0 + $0x610] sm:$0xff]
  %v210 = vld [vmem:[%s0 + $0x618] sm:$0xff]
  %v211 = vld [vmem:[%s1] sm:$0xf]
  %v212 = vld [vmem:[%s1 + $0x4] sm:$0xf]
  %v213 = vld [vmem:[%s1 + $0x8] sm:$0xf]
  %v214 = vld [vmem:[%s1 + $0xc] sm:$0xf]
  %v215 = vld [vmem:[%s1 + $0x10] sm:$0xf]
  %v216 = vld [vmem:[%s1 + $0x14] sm:$0xf]
  %v217 = vld [vmem:[%s1 + $0x18] sm:$0xf]
  %v218 = vld [vmem:[%s1 + $0x1c] sm:$0xf]
  %v219 = vld [vmem:[%s1 + $0x20] sm:$0xf]
  %v220 = vld [vmem:[%s1 + $0x24] sm:$0xf]
  %v221 = vld [vmem:[%s1 + $0x28] sm:$0xf]
  %v222 = vld [vmem:[%s1 + $0x2c] sm:$0xf]
  %v223 = vld [vmem:[%s1 + $0x30] sm:$0xf]
  %v224 = vld [vmem:[%s1 + $0x34] sm:$0xf]
  %v225 = vld [vmem:[%s1 + $0x38] sm:$0xf]
  %v226 = vld [vmem:[%s1 + $0x3c] sm:$0xf]
  %v227 = vld [vmem:[%s1 + $0x40] sm:$0xf]
  %v228 = vld [vmem:[%s1 + $0x44] sm:$0xf]
  %v229 = vld [vmem:[%s1 + $0x48] sm:$0xf]
  %v230 = vld [vmem:[%s1 + $0x4c] sm:$0xf]
  %v231 = vld [vmem:[%s1 + $0x50] sm:$0xf]
  %v232 = vld [vmem:[%s1 + $0x54] sm:$0xf]
  %v233 = vld [vmem:[%s1 + $0x58] sm:$0xf]
  %v234 = vld [vmem:[%s1 + $0x5c] sm:$0xf]
  %v235 = vld [vmem:[%s1 + $0x60] sm:$0xf]
  %v236 = vld [vmem:[%s1 + $0x64] sm:$0xf]
  %v237 = vld [vmem:[%s1 + $0x68] sm:$0xf]
  %v238 = vld [vmem:[%s1 + $0x6c] sm:$0xf]
  %v239 = vld [vmem:[%s1 + $0x70] sm:$0xf]
  %v240 = vld [vmem:[%s1 + $0x74] sm:$0xf]
  %v241 = vld [vmem:[%s1 + $0x78] sm:$0xf]
  %v242 = vld [vmem:[%s1 + $0x7c] sm:$0xf]
  %v243 = vld [vmem:[%s1 + $0x80] sm:$0xf]
  %v244 = vld [vmem:[%s1 + $0x84] sm:$0xf]
  %v245 = vld [vmem:[%s1 + $0x88] sm:$0xf]
  %v246 = vld [vmem:[%s1 + $0x8c] sm:$0xf]
  %v247 = vld [vmem:[%s1 + $0x90] sm:$0xf]
  %v248 = vld [vmem:[%s1 + $0x94] sm:$0xf]
  %v249 = vld [vmem:[%s1 + $0x98] sm:$0xf]
  %v250 = vld [vmem:[%s1 + $0x9c] sm:$0xf]
  %v251 = vld [vmem:[%s1 + $0xa0] sm:$0xf]
  %v252 = vld [vmem:[%s1 + $0xa4] sm:$0xf]
  %v253 = vld [vmem:[%s1 + $0xa8] sm:$0xf]
  %v254 = vld [vmem:[%s1 + $0xac] sm:$0xf]
  %v255 = vld [vmem:[%s1 + $0xb0] sm:$0xf]
  %v256 = vld [vmem:[%s1 + $0xb4] sm:$0xf]
  %v257 = vld [vmem:[%s1 + $0xb8] sm:$0xf]
  %v258 = vld [vmem:[%s1 + $0xbc] sm:$0xf]
  %v259 = vld [vmem:[%s1 + $0xc0] sm:$0xf]
  %v260 = vld [vmem:[%s1 + $0xc4] sm:$0xf]
  %v261 = vld [vmem:[%s1 + $0xc8] sm:$0xf]
  %v262 = vld [vmem:[%s1 + $0xcc] sm:$0xf]
  %v263 = vld [vmem:[%s1 + $0xd0] sm:$0xf]
  %v264 = vld [vmem:[%s1 + $0xd4] sm:$0xf]
  %v265 = vld [vmem:[%s1 + $0xd8] sm:$0xf]
  %v266 = vld [vmem:[%s1 + $0xdc] sm:$0xf]
  %v267 = vld [vmem:[%s1 + $0xe0] sm:$0xf]
  %v268 = vld [vmem:[%s1 + $0xe4] sm:$0xf]
  %v269 = vld [vmem:[%s1 + $0xe8] sm:$0xf]
  %v270 = vld [vmem:[%s1 + $0xec] sm:$0xf]
  %v271 = vld [vmem:[%s1 + $0xf0] sm:$0xf]
  %v272 = vld [vmem:[%s1 + $0xf4] sm:$0xf]
  %v273 = vld [vmem:[%s1 + $0xf8] sm:$0xf]
  %v274 = vld [vmem:[%s1 + $0xfc] sm:$0xf]
  %v275 = vld [vmem:[%s1 + $0x100] sm:$0xf]
  %v276 = vld [vmem:[%s1 + $0x104] sm:$0xf]
  %v277 = vld [vmem:[%s1 + $0x108] sm:$0xf]
  %v278 = vld [vmem:[%s1 + $0x10c] sm:$0xf]
  %v279 = vld [vmem:[%s1 + $0x110] sm:$0xf]
  %v280 = vld [vmem:[%s1 + $0x114] sm:$0xf]
  %v281 = vld [vmem:[%s1 + $0x118] sm:$0xf]
  %v282 = vld [vmem:[%s1 + $0x11c] sm:$0xf]
  %v283 = vld [vmem:[%s1 + $0x120] sm:$0xf]
  %v284 = vld [vmem:[%s1 + $0x124] sm:$0xf]
  %v285 = vld [vmem:[%s1 + $0x128] sm:$0xf]
  %v286 = vld [vmem:[%s1 + $0x12c] sm:$0xf]
  %v287 = vld [vmem:[%s1 + $0x130] sm:$0xf]
  %v288 = vld [vmem:[%s1 + $0x134] sm:$0xf]
  %v289 = vld [vmem:[%s1 + $0x138] sm:$0xf]
  %v290 = vld [vmem:[%s1 + $0x13c] sm:$0xf]
  %v291 = vld [vmem:[%s1 + $0x140] sm:$0xf]
  %v292 = vld [vmem:[%s1 + $0x144] sm:$0xf]
  %v293 = vld [vmem:[%s1 + $0x148] sm:$0xf]
  %v294 = vld [vmem:[%s1 + $0x14c] sm:$0xf]
  %v295 = vld [vmem:[%s1 + $0x150] sm:$0xf]
  %v296 = vld [vmem:[%s1 + $0x154] sm:$0xf]
  %v297 = vld [vmem:[%s1 + $0x158] sm:$0xf]
  %v298 = vld [vmem:[%s1 + $0x15c] sm:$0xf]
  %v299 = vld [vmem:[%s1 + $0x160] sm:$0xf]
  %v300 = vld [vmem:[%s1 + $0x164] sm:$0xf]
  %v301 = vld [vmem:[%s1 + $0x168] sm:$0xf]
  %v302 = vld [vmem:[%s1 + $0x16c] sm:$0xf]
  %v303 = vld [vmem:[%s1 + $0x170] sm:$0xf]
  %v304 = vld [vmem:[%s1 + $0x174] sm:$0xf]
  %v305 = vld [vmem:[%s1 + $0x178] sm:$0xf]
  %v306 = vld [vmem:[%s1 + $0x17c] sm:$0xf]
  %v307 = vld [vmem:[%s1 + $0x180] sm:$0xf]
  %v308 = vld [vmem:[%s1 + $0x184] sm:$0xf]
  %v309 = vld [vmem:[%s1 + $0x188] sm:$0xf]
  %v310 = vld [vmem:[%s1 + $0x18c] sm:$0xf]
  %v311 = vld [vmem:[%s1 + $0x190] sm:$0xf]
  %v312 = vld [vmem:[%s1 + $0x194] sm:$0xf]
  %v313 = vld [vmem:[%s1 + $0x198] sm:$0xf]
  %v314 = vld [vmem:[%s1 + $0x19c] sm:$0xf]
  %v315 = vld [vmem:[%s1 + $0x1a0] sm:$0xf]
  %v316 = vld [vmem:[%s1 + $0x1a4] sm:$0xf]
  %v317 = vld [vmem:[%s1 + $0x1a8] sm:$0xf]
  %v318 = vld [vmem:[%s1 + $0x1ac] sm:$0xf]
  %v319 = vld [vmem:[%s1 + $0x1b0] sm:$0xf]
  %v320 = vld [vmem:[%s1 + $0x1b4] sm:$0xf]
  %v321 = vld [vmem:[%s1 + $0x1b8] sm:$0xf]
  %v322 = vld [vmem:[%s1 + $0x1bc] sm:$0xf]
  %v323 = vld [vmem:[%s1 + $0x1c0] sm:$0xf]
  %v324 = vld [vmem:[%s1 + $0x1c4] sm:$0xf]
  %v325 = vld [vmem:[%s1 + $0x1c8] sm:$0xf]
  %v326 = vld [vmem:[%s1 + $0x1cc] sm:$0xf]
  %v327 = vld [vmem:[%s1 + $0x1d0] sm:$0xf]
  %v328 = vld [vmem:[%s1 + $0x1d4] sm:$0xf]
  %v329 = vld [vmem:[%s1 + $0x1d8] sm:$0xf]
  %v330 = vld [vmem:[%s1 + $0x1dc] sm:$0xf]
  %v331 = vld [vmem:[%s1 + $0x1e0] sm:$0xf]
  %v332 = vld [vmem:[%s1 + $0x1e4] sm:$0xf]
  %v333 = vld [vmem:[%s1 + $0x1e8] sm:$0xf]
  %v334 = vld [vmem:[%s1 + $0x1ec] sm:$0xf]
  %v335 = vld [vmem:[%s1 + $0x1f0] sm:$0xf]
  %v336 = vld [vmem:[%s1 + $0x1f4] sm:$0xf]
  %v337 = vld [vmem:[%s1 + $0x1f8] sm:$0xf]
  %v338 = vld [vmem:[%s1 + $0x1fc] sm:$0xf]
  %v535 = vunpack.c.l.b16 %v15
  %v536 = vunpack.c.h.b16 %v15
  %v537 = vunpack.c.l.b16 %v16
  %v538 = vunpack.c.h.b16 %v16
  %v539 = vunpack.c.l.b16 %v17
  %v540 = vunpack.c.h.b16 %v17
  %v541 = vunpack.c.l.b16 %v18
  %v542 = vunpack.c.h.b16 %v18
  %v543 = vunpack.c.l.b16 %v19
  %v544 = vunpack.c.h.b16 %v19
  %v545 = vunpack.c.l.b16 %v20
  %v546 = vunpack.c.h.b16 %v20
  %v547 = vunpack.c.l.b16 %v21
  %v548 = vunpack.c.h.b16 %v21
  %v549 = vunpack.c.l.b16 %v22
  %v550 = vunpack.c.h.b16 %v22
  %v551 = vunpack.c.l.b16 %v23
  %v552 = vunpack.c.h.b16 %v23
  %v553 = vunpack.c.l.b16 %v24
  %v554 = vunpack.c.h.b16 %v24
  %v555 = vunpack.c.l.b16 %v25
  %v556 = vunpack.c.h.b16 %v25
  %v557 = vunpack.c.l.b16 %v26
  %v558 = vunpack.c.h.b16 %v26
  %v559 = vunpack.c.l.b16 %v27
  %v560 = vunpack.c.h.b16 %v27
  %v561 = vunpack.c.l.b16 %v28
  %v562 = vunpack.c.h.b16 %v28
  %v563 = vunpack.c.l.b16 %v29
  %v564 = vunpack.c.h.b16 %v29
  %v565 = vunpack.c.l.b16 %v30
  %v566 = vunpack.c.h.b16 %v30
  %v567 = vunpack.c.l.b16 %v31
  %v568 = vunpack.c.h.b16 %v31
  %v569 = vunpack.c.l.b16 %v32
  %v570 = vunpack.c.h.b16 %v32
  %v571 = vunpack.c.l.b16 %v33
  %v572 = vunpack.c.h.b16 %v33
  %v573 = vunpack.c.l.b16 %v34
  %v574 = vunpack.c.h.b16 %v34
  %v575 = vunpack.c.l.b16 %v35
  %v576 = vunpack.c.h.b16 %v35
  %v577 = vunpack.c.l.b16 %v36
  %v578 = vunpack.c.h.b16 %v36
  %v579 = vunpack.c.l.b16 %v37
  %v580 = vunpack.c.h.b16 %v37
  %v581 = vunpack.c.l.b16 %v38
  %v582 = vunpack.c.h.b16 %v38
  %v583 = vunpack.c.l.b16 %v39
  %v584 = vunpack.c.h.b16 %v39
  %v585 = vunpack.c.l.b16 %v40
  %v586 = vunpack.c.h.b16 %v40
  %v587 = vunpack.c.l.b16 %v41
  %v588 = vunpack.c.h.b16 %v41
  %v589 = vunpack.c.l.b16 %v42
  %v590 = vunpack.c.h.b16 %v42
  %v591 = vunpack.c.l.b16 %v43
  %v592 = vunpack.c.h.b16 %v43
  %v593 = vunpack.c.l.b16 %v44
  %v594 = vunpack.c.h.b16 %v44
  %v595 = vunpack.c.l.b16 %v45
  %v596 = vunpack.c.h.b16 %v45
  %v597 = vunpack.c.l.b16 %v46
  %v598 = vunpack.c.h.b16 %v46
  %v599 = vunpack.c.l.b16 %v47
  %v600 = vunpack.c.h.b16 %v47
  %v601 = vunpack.c.l.b16 %v48
  %v602 = vunpack.c.h.b16 %v48
  %v603 = vunpack.c.l.b16 %v49
  %v604 = vunpack.c.h.b16 %v49
  %v605 = vunpack.c.l.b16 %v50
  %v606 = vunpack.c.h.b16 %v50
  %v607 = vunpack.c.l.b16 %v51
  %v608 = vunpack.c.h.b16 %v51
  %v609 = vunpack.c.l.b16 %v52
  %v610 = vunpack.c.h.b16 %v52
  %v611 = vunpack.c.l.b16 %v53
  %v612 = vunpack.c.h.b16 %v53
  %v613 = vunpack.c.l.b16 %v54
  %v614 = vunpack.c.h.b16 %v54
  %v615 = vunpack.c.l.b16 %v55
  %v616 = vunpack.c.h.b16 %v55
  %v617 = vunpack.c.l.b16 %v56
  %v618 = vunpack.c.h.b16 %v56
  %v619 = vunpack.c.l.b16 %v57
  %v620 = vunpack.c.h.b16 %v57
  %v621 = vunpack.c.l.b16 %v58
  %v622 = vunpack.c.h.b16 %v58
  %v623 = vunpack.c.l.b16 %v59
  %v624 = vunpack.c.h.b16 %v59
  %v625 = vunpack.c.l.b16 %v60
  %v626 = vunpack.c.h.b16 %v60
  %v627 = vunpack.c.l.b16 %v61
  %v628 = vunpack.c.h.b16 %v61
  %v629 = vunpack.c.l.b16 %v62
  %v630 = vunpack.c.h.b16 %v62
  %v631 = vunpack.c.l.b16 %v63
  %v632 = vunpack.c.h.b16 %v63
  %v633 = vunpack.c.l.b16 %v64
  %v634 = vunpack.c.h.b16 %v64
  %v635 = vunpack.c.l.b16 %v65
  %v636 = vunpack.c.h.b16 %v65
  %v637 = vunpack.c.l.b16 %v66
  %v638 = vunpack.c.h.b16 %v66
  %v639 = vunpack.c.l.b16 %v67
  %v640 = vunpack.c.h.b16 %v67
  %v641 = vunpack.c.l.b16 %v68
  %v642 = vunpack.c.h.b16 %v68
  %v643 = vunpack.c.l.b16 %v69
  %v644 = vunpack.c.h.b16 %v69
  %v645 = vunpack.c.l.b16 %v70
  %v646 = vunpack.c.h.b16 %v70
  %v647 = vunpack.c.l.b16 %v71
  %v648 = vunpack.c.h.b16 %v71
  %v649 = vunpack.c.l.b16 %v72
  %v650 = vunpack.c.h.b16 %v72
  %v651 = vunpack.c.l.b16 %v73
  %v652 = vunpack.c.h.b16 %v73
  %v653 = vunpack.c.l.b16 %v74
  %v654 = vunpack.c.h.b16 %v74
  %v655 = vunpack.c.l.b16 %v75
  %v656 = vunpack.c.h.b16 %v75
  %v657 = vunpack.c.l.b16 %v76
  %v658 = vunpack.c.h.b16 %v76
  %v659 = vunpack.c.l.b16 %v77
  %v660 = vunpack.c.h.b16 %v77
  %v661 = vunpack.c.l.b16 %v78
  %v662 = vunpack.c.h.b16 %v78
  %v663 = vunpack.c.l.b16 %v79
  %v664 = vunpack.c.h.b16 %v79
  %v665 = vunpack.c.l.b16 %v80
  %v666 = vunpack.c.h.b16 %v80
  %v667 = vunpack.c.l.b16 %v81
  %v668 = vunpack.c.h.b16 %v81
  %v669 = vunpack.c.l.b16 %v82
  %v670 = vunpack.c.h.b16 %v82
  %v671 = vunpack.c.l.b16 %v83
  %v672 = vunpack.c.h.b16 %v83
  %v673 = vunpack.c.l.b16 %v84
  %v674 = vunpack.c.h.b16 %v84
  %v675 = vunpack.c.l.b16 %v85
  %v676 = vunpack.c.h.b16 %v85
  %v677 = vunpack.c.l.b16 %v86
  %v678 = vunpack.c.h.b16 %v86
  %v679 = vunpack.c.l.b16 %v87
  %v680 = vunpack.c.h.b16 %v87
  %v681 = vunpack.c.l.b16 %v88
  %v682 = vunpack.c.h.b16 %v88
  %v683 = vunpack.c.l.b16 %v89
  %v684 = vunpack.c.h.b16 %v89
  %v685 = vunpack.c.l.b16 %v90
  %v686 = vunpack.c.h.b16 %v90
  %v687 = vunpack.c.l.b16 %v91
  %v688 = vunpack.c.h.b16 %v91
  %v689 = vunpack.c.l.b16 %v92
  %v690 = vunpack.c.h.b16 %v92
  %v691 = vunpack.c.l.b16 %v93
  %v692 = vunpack.c.h.b16 %v93
  %v693 = vunpack.c.l.b16 %v94
  %v694 = vunpack.c.h.b16 %v94
  %v695 = vunpack.c.l.b16 %v95
  %v696 = vunpack.c.h.b16 %v95
  %v697 = vunpack.c.l.b16 %v96
  %v698 = vunpack.c.h.b16 %v96
  %v699 = vunpack.c.l.b16 %v97
  %v700 = vunpack.c.h.b16 %v97
  %v701 = vunpack.c.l.b16 %v98
  %v702 = vunpack.c.h.b16 %v98
  %v703 = vunpack.c.l.b16 %v99
  %v704 = vunpack.c.h.b16 %v99
  %v705 = vunpack.c.l.b16 %v100
  %v706 = vunpack.c.h.b16 %v100
  %v707 = vunpack.c.l.b16 %v101
  %v708 = vunpack.c.h.b16 %v101
  %v709 = vunpack.c.l.b16 %v102
  %v710 = vunpack.c.h.b16 %v102
  %v711 = vunpack.c.l.b16 %v103
  %v712 = vunpack.c.h.b16 %v103
  %v713 = vunpack.c.l.b16 %v104
  %v714 = vunpack.c.h.b16 %v104
  %v715 = vunpack.c.l.b16 %v105
  %v716 = vunpack.c.h.b16 %v105
  %v717 = vunpack.c.l.b16 %v106
  %v718 = vunpack.c.h.b16 %v106
  %v719 = vunpack.c.l.b16 %v107
  %v720 = vunpack.c.h.b16 %v107
  %v721 = vunpack.c.l.b16 %v108
  %v722 = vunpack.c.h.b16 %v108
  %v723 = vunpack.c.l.b16 %v109
  %v724 = vunpack.c.h.b16 %v109
  %v725 = vunpack.c.l.b16 %v110
  %v726 = vunpack.c.h.b16 %v110
  %v727 = vunpack.c.l.b16 %v111
  %v728 = vunpack.c.h.b16 %v111
  %v729 = vunpack.c.l.b16 %v112
  %v730 = vunpack.c.h.b16 %v112
  %v731 = vunpack.c.l.b16 %v113
  %v732 = vunpack.c.h.b16 %v113
  %v733 = vunpack.c.l.b16 %v114
  %v734 = vunpack.c.h.b16 %v114
  %v735 = vunpack.c.l.b16 %v115
  %v736 = vunpack.c.h.b16 %v115
  %v737 = vunpack.c.l.b16 %v116
  %v738 = vunpack.c.h.b16 %v116
  %v739 = vunpack.c.l.b16 %v117
  %v740 = vunpack.c.h.b16 %v117
  %v741 = vunpack.c.l.b16 %v118
  %v742 = vunpack.c.h.b16 %v118
  %v743 = vunpack.c.l.b16 %v119
  %v744 = vunpack.c.h.b16 %v119
  %v745 = vunpack.c.l.b16 %v120
  %v746 = vunpack.c.h.b16 %v120
  %v747 = vunpack.c.l.b16 %v121
  %v748 = vunpack.c.h.b16 %v121
  %v749 = vunpack.c.l.b16 %v122
  %v750 = vunpack.c.h.b16 %v122
  %v751 = vunpack.c.l.b16 %v123
  %v752 = vunpack.c.h.b16 %v123
  %v753 = vunpack.c.l.b16 %v124
  %v754 = vunpack.c.h.b16 %v124
  %v755 = vunpack.c.l.b16 %v125
  %v756 = vunpack.c.h.b16 %v125
  %v757 = vunpack.c.l.b16 %v126
  %v758 = vunpack.c.h.b16 %v126
  %v759 = vunpack.c.l.b16 %v127
  %v760 = vunpack.c.h.b16 %v127
  %v761 = vunpack.c.l.b16 %v128
  %v762 = vunpack.c.h.b16 %v128
  %v763 = vunpack.c.l.b16 %v129
  %v764 = vunpack.c.h.b16 %v129
  %v765 = vunpack.c.l.b16 %v130
  %v766 = vunpack.c.h.b16 %v130
  %v767 = vunpack.c.l.b16 %v131
  %v768 = vunpack.c.h.b16 %v131
  %v769 = vunpack.c.l.b16 %v132
  %v770 = vunpack.c.h.b16 %v132
  %v771 = vunpack.c.l.b16 %v133
  %v772 = vunpack.c.h.b16 %v133
  %v773 = vunpack.c.l.b16 %v134
  %v774 = vunpack.c.h.b16 %v134
  %v775 = vunpack.c.l.b16 %v135
  %v776 = vunpack.c.h.b16 %v135
  %v777 = vunpack.c.l.b16 %v136
  %v778 = vunpack.c.h.b16 %v136
  %v779 = vunpack.c.l.b16 %v137
  %v780 = vunpack.c.h.b16 %v137
  %v781 = vunpack.c.l.b16 %v138
  %v782 = vunpack.c.h.b16 %v138
  %v783 = vunpack.c.l.b16 %v139
  %v784 = vunpack.c.h.b16 %v139
  %v785 = vunpack.c.l.b16 %v140
  %v786 = vunpack.c.h.b16 %v140
  %v787 = vunpack.c.l.b16 %v141
  %v788 = vunpack.c.h.b16 %v141
  %v789 = vunpack.c.l.b16 %v142
  %v790 = vunpack.c.h.b16 %v142
  %v791 = vunpack.c.l.b16 %v143
  %v792 = vunpack.c.h.b16 %v143
  %v793 = vunpack.c.l.b16 %v144
  %v794 = vunpack.c.h.b16 %v144
  %v795 = vunpack.c.l.b16 %v145
  %v796 = vunpack.c.h.b16 %v145
  %v797 = vunpack.c.l.b16 %v146
  %v798 = vunpack.c.h.b16 %v146
  %v799 = vunpack.c.l.b16 %v147
  %v800 = vunpack.c.h.b16 %v147
  %v801 = vunpack.c.l.b16 %v148
  %v802 = vunpack.c.h.b16 %v148
  %v803 = vunpack.c.l.b16 %v149
  %v804 = vunpack.c.h.b16 %v149
  %v805 = vunpack.c.l.b16 %v150
  %v806 = vunpack.c.h.b16 %v150
  %v807 = vunpack.c.l.b16 %v151
  %v808 = vunpack.c.h.b16 %v151
  %v809 = vunpack.c.l.b16 %v152
  %v810 = vunpack.c.h.b16 %v152
  %v811 = vunpack.c.l.b16 %v153
  %v812 = vunpack.c.h.b16 %v153
  %v813 = vunpack.c.l.b16 %v154
  %v814 = vunpack.c.h.b16 %v154
  %v815 = vunpack.c.l.b16 %v155
  %v816 = vunpack.c.h.b16 %v155
  %v817 = vunpack.c.l.b16 %v156
  %v818 = vunpack.c.h.b16 %v156
  %v819 = vunpack.c.l.b16 %v157
  %v820 = vunpack.c.h.b16 %v157
  %v821 = vunpack.c.l.b16 %v158
  %v822 = vunpack.c.h.b16 %v158
  %v823 = vunpack.c.l.b16 %v159
  %v824 = vunpack.c.h.b16 %v159
  %v825 = vunpack.c.l.b16 %v160
  %v826 = vunpack.c.h.b16 %v160
  %v827 = vunpack.c.l.b16 %v161
  %v828 = vunpack.c.h.b16 %v161
  %v829 = vunpack.c.l.b16 %v162
  %v830 = vunpack.c.h.b16 %v162
  %v831 = vunpack.c.l.b16 %v163
  %v832 = vunpack.c.h.b16 %v163
  %v833 = vunpack.c.l.b16 %v164
  %v834 = vunpack.c.h.b16 %v164
  %v835 = vunpack.c.l.b16 %v165
  %v836 = vunpack.c.h.b16 %v165
  %v837 = vunpack.c.l.b16 %v166
  %v838 = vunpack.c.h.b16 %v166
  %v839 = vunpack.c.l.b16 %v167
  %v840 = vunpack.c.h.b16 %v167
  %v841 = vunpack.c.l.b16 %v168
  %v842 = vunpack.c.h.b16 %v168
  %v843 = vunpack.c.l.b16 %v169
  %v844 = vunpack.c.h.b16 %v169
  %v845 = vunpack.c.l.b16 %v170
  %v846 = vunpack.c.h.b16 %v170
  %v847 = vunpack.c.l.b16 %v171
  %v848 = vunpack.c.h.b16 %v171
  %v849 = vunpack.c.l.b16 %v172
  %v850 = vunpack.c.h.b16 %v172
  %v851 = vunpack.c.l.b16 %v173
  %v852 = vunpack.c.h.b16 %v173
  %v853 = vunpack.c.l.b16 %v174
  %v854 = vunpack.c.h.b16 %v174
  %v855 = vunpack.c.l.b16 %v175
  %v856 = vunpack.c.h.b16 %v175
  %v857 = vunpack.c.l.b16 %v176
  %v858 = vunpack.c.h.b16 %v176
  %v859 = vunpack.c.l.b16 %v177
  %v860 = vunpack.c.h.b16 %v177
  %v861 = vunpack.c.l.b16 %v178
  %v862 = vunpack.c.h.b16 %v178
  %v863 = vunpack.c.l.b16 %v179
  %v864 = vunpack.c.h.b16 %v179
  %v865 = vunpack.c.l.b16 %v180
  %v866 = vunpack.c.h.b16 %v180
  %v867 = vunpack.c.l.b16 %v181
  %v868 = vunpack.c.h.b16 %v181
  %v869 = vunpack.c.l.b16 %v182
  %v870 = vunpack.c.h.b16 %v182
  %v871 = vunpack.c.l.b16 %v183
  %v872 = vunpack.c.h.b16 %v183
  %v873 = vunpack.c.l.b16 %v184
  %v874 = vunpack.c.h.b16 %v184
  %v875 = vunpack.c.l.b16 %v185
  %v876 = vunpack.c.h.b16 %v185
  %v877 = vunpack.c.l.b16 %v186
  %v878 = vunpack.c.h.b16 %v186
  %v879 = vunpack.c.l.b16 %v187
  %v880 = vunpack.c.h.b16 %v187
  %v881 = vunpack.c.l.b16 %v188
  %v882 = vunpack.c.h.b16 %v188
  %v883 = vunpack.c.l.b16 %v189
  %v884 = vunpack.c.h.b16 %v189
  %v885 = vunpack.c.l.b16 %v190
  %v886 = vunpack.c.h.b16 %v190
  %v887 = vunpack.c.l.b16 %v191
  %v888 = vunpack.c.h.b16 %v191
  %v889 = vunpack.c.l.b16 %v192
  %v890 = vunpack.c.h.b16 %v192
  %v891 = vunpack.c.l.b16 %v193
  %v892 = vunpack.c.h.b16 %v193
  %v893 = vunpack.c.l.b16 %v194
  %v894 = vunpack.c.h.b16 %v194
  %v895 = vunpack.c.l.b16 %v195
  %v896 = vunpack.c.h.b16 %v195
  %v897 = vunpack.c.l.b16 %v196
  %v898 = vunpack.c.h.b16 %v196
  %v899 = vunpack.c.l.b16 %v197
  %v900 = vunpack.c.h.b16 %v197
  %v901 = vunpack.c.l.b16 %v198
  %v902 = vunpack.c.h.b16 %v198
  %v903 = vunpack.c.l.b16 %v199
  %v904 = vunpack.c.h.b16 %v199
  %v905 = vunpack.c.l.b16 %v200
  %v906 = vunpack.c.h.b16 %v200
  %v907 = vunpack.c.l.b16 %v201
  %v908 = vunpack.c.h.b16 %v201
  %v909 = vunpack.c.l.b16 %v202
  %v910 = vunpack.c.h.b16 %v202
  %v911 = vunpack.c.l.b16 %v203
  %v912 = vunpack.c.h.b16 %v203
  %v913 = vunpack.c.l.b16 %v204
  %v914 = vunpack.c.h.b16 %v204
  %v915 = vunpack.c.l.b16 %v205
  %v916 = vunpack.c.h.b16 %v205
  %v917 = vunpack.c.l.b16 %v206
  %v918 = vunpack.c.h.b16 %v206
  %v919 = vunpack.c.l.b16 %v207
  %v920 = vunpack.c.h.b16 %v207
  %v921 = vunpack.c.l.b16 %v208
  %v922 = vunpack.c.h.b16 %v208
  %v923 = vunpack.c.l.b16 %v209
  %v924 = vunpack.c.h.b16 %v209
  %v925 = vunpack.c.l.b16 %v210
  %v926 = vunpack.c.h.b16 %v210
  %v927 = vpack.c.b16 %v543, %v535
  %v928 = vpack.c.b16 %v544, %v536
  %v929 = vpack.c.b16 %v545, %v537
  %v930 = vpack.c.b16 %v546, %v538
  %v931 = vpack.c.b16 %v547, %v539
  %v932 = vpack.c.b16 %v548, %v540
  %v933 = vpack.c.b16 %v549, %v541
  %v934 = vpack.c.b16 %v550, %v542
  %v935 = vpack.c.b16 %v559, %v551
  %v936 = vpack.c.b16 %v560, %v552
  %v937 = vpack.c.b16 %v561, %v553
  %v938 = vpack.c.b16 %v562, %v554
  %v939 = vpack.c.b16 %v563, %v555
  %v940 = vpack.c.b16 %v564, %v556
  %v941 = vpack.c.b16 %v565, %v557
  %v942 = vpack.c.b16 %v566, %v558
  %v943 = vpack.c.b16 %v575, %v567
  %v944 = vpack.c.b16 %v576, %v568
  %v945 = vpack.c.b16 %v577, %v569
  %v946 = vpack.c.b16 %v578, %v570
  %v947 = vpack.c.b16 %v579, %v571
  %v948 = vpack.c.b16 %v580, %v572
  %v949 = vpack.c.b16 %v581, %v573
  %v950 = vpack.c.b16 %v582, %v574
  %v951 = vpack.c.b16 %v591, %v583
  %v952 = vpack.c.b16 %v592, %v584
  %v953 = vpack.c.b16 %v593, %v585
  %v954 = vpack.c.b16 %v594, %v586
  %v955 = vpack.c.b16 %v595, %v587
  %v956 = vpack.c.b16 %v596, %v588
  %v957 = vpack.c.b16 %v597, %v589
  %v958 = vpack.c.b16 %v598, %v590
  %v959 = vpack.c.b16 %v607, %v599
  %v960 = vpack.c.b16 %v608, %v600
  %v961 = vpack.c.b16 %v609, %v601
  %v962 = vpack.c.b16 %v610, %v602
  %v963 = vpack.c.b16 %v611, %v603
  %v964 = vpack.c.b16 %v612, %v604
  %v965 = vpack.c.b16 %v613, %v605
  %v966 = vpack.c.b16 %v614, %v606
  %v967 = vpack.c.b16 %v623, %v615
  %v968 = vpack.c.b16 %v624, %v616
  %v969 = vpack.c.b16 %v625, %v617
  %v970 = vpack.c.b16 %v626, %v618
  %v971 = vpack.c.b16 %v627, %v619
  %v972 = vpack.c.b16 %v628, %v620
  %v973 = vpack.c.b16 %v629, %v621
  %v974 = vpack.c.b16 %v630, %v622
  %v975 = vpack.c.b16 %v639, %v631
  %v976 = vpack.c.b16 %v640, %v632
  %v977 = vpack.c.b16 %v641, %v633
  %v978 = vpack.c.b16 %v642, %v634
  %v979 = vpack.c.b16 %v643, %v635
  %v980 = vpack.c.b16 %v644, %v636
  %v981 = vpack.c.b16 %v645, %v637
  %v982 = vpack.c.b16 %v646, %v638
  %v983 = vpack.c.b16 %v655, %v647
  %v984 = vpack.c.b16 %v656, %v648
  %v985 = vpack.c.b16 %v657, %v649
  %v986 = vpack.c.b16 %v658, %v650
  %v987 = vpack.c.b16 %v659, %v651
  %v988 = vpack.c.b16 %v660, %v652
  %v989 = vpack.c.b16 %v661, %v653
  %v990 = vpack.c.b16 %v662, %v654
  %v991 = vpack.c.b16 %v671, %v663
  %v992 = vpack.c.b16 %v672, %v664
  %v993 = vpack.c.b16 %v673, %v665
  %v994 = vpack.c.b16 %v674, %v666
  %v995 = vpack.c.b16 %v675, %v667
  %v996 = vpack.c.b16 %v676, %v668
  %v997 = vpack.c.b16 %v677, %v669
  %v998 = vpack.c.b16 %v678, %v670
  %v999 = vpack.c.b16 %v687, %v679
  %v1000 = vpack.c.b16 %v688, %v680
  %v1001 = vpack.c.b16 %v689, %v681
  %v1002 = vpack.c.b16 %v690, %v682
  %v1003 = vpack.c.b16 %v691, %v683
  %v1004 = vpack.c.b16 %v692, %v684
  %v1005 = vpack.c.b16 %v693, %v685
  %v1006 = vpack.c.b16 %v694, %v686
  %v1007 = vpack.c.b16 %v703, %v695
  %v1008 = vpack.c.b16 %v704, %v696
  %v1009 = vpack.c.b16 %v705, %v697
  %v1010 = vpack.c.b16 %v706, %v698
  %v1011 = vpack.c.b16 %v707, %v699
  %v1012 = vpack.c.b16 %v708, %v700
  %v1013 = vpack.c.b16 %v709, %v701
  %v1014 = vpack.c.b16 %v710, %v702
  %v1015 = vpack.c.b16 %v719, %v711
  %v1016 = vpack.c.b16 %v720, %v712
  %v1017 = vpack.c.b16 %v721, %v713
  %v1018 = vpack.c.b16 %v722, %v714
  %v1019 = vpack.c.b16 %v723, %v715
  %v1020 = vpack.c.b16 %v724, %v716
  %v1021 = vpack.c.b16 %v725, %v717
  %v1022 = vpack.c.b16 %v726, %v718
  %v1023 = vpack.c.b16 %v735, %v727
  %v1024 = vpack.c.b16 %v736, %v728
  %v1025 = vpack.c.b16 %v737, %v729
  %v1026 = vpack.c.b16 %v738, %v730
  %v1027 = vpack.c.b16 %v739, %v731
  %v1028 = vpack.c.b16 %v740, %v732
  %v1029 = vpack.c.b16 %v741, %v733
  %v1030 = vpack.c.b16 %v742, %v734
  %v1031 = vpack.c.b16 %v751, %v743
  %v1032 = vpack.c.b16 %v752, %v744
  %v1033 = vpack.c.b16 %v753, %v745
  %v1034 = vpack.c.b16 %v754, %v746
  %v1035 = vpack.c.b16 %v755, %v747
  %v1036 = vpack.c.b16 %v756, %v748
  %v1037 = vpack.c.b16 %v757, %v749
  %v1038 = vpack.c.b16 %v758, %v750
  %v1039 = vpack.c.b16 %v767, %v759
  %v1040 = vpack.c.b16 %v768, %v760
  %v1041 = vpack.c.b16 %v769, %v761
  %v1042 = vpack.c.b16 %v770, %v762
  %v1043 = vpack.c.b16 %v771, %v763
  %v1044 = vpack.c.b16 %v772, %v764
  %v1045 = vpack.c.b16 %v773, %v765
  %v1046 = vpack.c.b16 %v774, %v766
  %v1047 = vpack.c.b16 %v783, %v775
  %v1048 = vpack.c.b16 %v784, %v776
  %v1049 = vpack.c.b16 %v785, %v777
  %v1050 = vpack.c.b16 %v786, %v778
  %v1051 = vpack.c.b16 %v787, %v779
  %v1052 = vpack.c.b16 %v788, %v780
  %v1053 = vpack.c.b16 %v789, %v781
  %v1054 = vpack.c.b16 %v790, %v782
  %v1055 = vpack.c.b16 %v799, %v791
  %v1056 = vpack.c.b16 %v800, %v792
  %v1057 = vpack.c.b16 %v801, %v793
  %v1058 = vpack.c.b16 %v802, %v794
  %v1059 = vpack.c.b16 %v803, %v795
  %v1060 = vpack.c.b16 %v804, %v796
  %v1061 = vpack.c.b16 %v805, %v797
  %v1062 = vpack.c.b16 %v806, %v798
  %v1063 = vpack.c.b16 %v815, %v807
  %v1064 = vpack.c.b16 %v816, %v808
  %v1065 = vpack.c.b16 %v817, %v809
  %v1066 = vpack.c.b16 %v818, %v810
  %v1067 = vpack.c.b16 %v819, %v811
  %v1068 = vpack.c.b16 %v820, %v812
  %v1069 = vpack.c.b16 %v821, %v813
  %v1070 = vpack.c.b16 %v822, %v814
  %v1071 = vpack.c.b16 %v831, %v823
  %v1072 = vpack.c.b16 %v832, %v824
  %v1073 = vpack.c.b16 %v833, %v825
  %v1074 = vpack.c.b16 %v834, %v826
  %v1075 = vpack.c.b16 %v835, %v827
  %v1076 = vpack.c.b16 %v836, %v828
  %v1077 = vpack.c.b16 %v837, %v829
  %v1078 = vpack.c.b16 %v838, %v830
  %v1079 = vpack.c.b16 %v847, %v839
  %v1080 = vpack.c.b16 %v848, %v840
  %v1081 = vpack.c.b16 %v849, %v841
  %v1082 = vpack.c.b16 %v850, %v842
  %v1083 = vpack.c.b16 %v851, %v843
  %v1084 = vpack.c.b16 %v852, %v844
  %v1085 = vpack.c.b16 %v853, %v845
  %v1086 = vpack.c.b16 %v854, %v846
  %v1087 = vpack.c.b16 %v863, %v855
  %v1088 = vpack.c.b16 %v864, %v856
  %v1089 = vpack.c.b16 %v865, %v857
  %v1090 = vpack.c.b16 %v866, %v858
  %v1091 = vpack.c.b16 %v867, %v859
  %v1092 = vpack.c.b16 %v868, %v860
  %v1093 = vpack.c.b16 %v869, %v861
  %v1094 = vpack.c.b16 %v870, %v862
  %v1095 = vpack.c.b16 %v879, %v871
  %v1096 = vpack.c.b16 %v880, %v872
  %v1097 = vpack.c.b16 %v881, %v873
  %v1098 = vpack.c.b16 %v882, %v874
  %v1099 = vpack.c.b16 %v883, %v875
  %v1100 = vpack.c.b16 %v884, %v876
  %v1101 = vpack.c.b16 %v885, %v877
  %v1102 = vpack.c.b16 %v886, %v878
  %v1103 = vpack.c.b16 %v895, %v887
  %v1104 = vpack.c.b16 %v896, %v888
  %v1105 = vpack.c.b16 %v897, %v889
  %v1106 = vpack.c.b16 %v898, %v890
  %v1107 = vpack.c.b16 %v899, %v891
  %v1108 = vpack.c.b16 %v900, %v892
  %v1109 = vpack.c.b16 %v901, %v893
  %v1110 = vpack.c.b16 %v902, %v894
  %v1111 = vpack.c.b16 %v911, %v903
  %v1112 = vpack.c.b16 %v912, %v904
  %v1113 = vpack.c.b16 %v913, %v905
  %v1114 = vpack.c.b16 %v914, %v906
  %v1115 = vpack.c.b16 %v915, %v907
  %v1116 = vpack.c.b16 %v916, %v908
  %v1117 = vpack.c.b16 %v917, %v909
  %v1118 = vpack.c.b16 %v918, %v910
  %v1119 = vpack.c.b16 %v919, %v919
  %v1120 = vpack.c.b16 %v920, %v920
  %v1121 = vpack.c.b16 %v921, %v921
  %v1122 = vpack.c.b16 %v922, %v922
  %v1123 = vpack.c.b16 %v923, %v923
  %v1124 = vpack.c.b16 %v924, %v924
  %v1125 = vpack.c.b16 %v925, %v925
  %v1126 = vpack.c.b16 %v926, %v926
  %v1455 = vunpack.c.l.b16 %v211
  %v1456 = vunpack.c.l.b16 %v212
  %v1457 = vunpack.c.l.b16 %v213
  %v1458 = vunpack.c.l.b16 %v214
  %v1459 = vunpack.c.l.b16 %v215
  %v1460 = vunpack.c.l.b16 %v216
  %v1461 = vunpack.c.l.b16 %v217
  %v1462 = vunpack.c.l.b16 %v218
  %v1463 = vunpack.c.l.b16 %v219
  %v1464 = vunpack.c.l.b16 %v220
  %v1465 = vunpack.c.l.b16 %v221
  %v1466 = vunpack.c.l.b16 %v222
  %v1467 = vunpack.c.l.b16 %v223
  %v1468 = vunpack.c.l.b16 %v224
  %v1469 = vunpack.c.l.b16 %v225
  %v1470 = vunpack.c.l.b16 %v226
  %v1471 = vunpack.c.l.b16 %v227
  %v1472 = vunpack.c.l.b16 %v228
  %v1473 = vunpack.c.l.b16 %v229
  %v1474 = vunpack.c.l.b16 %v230
  %v1475 = vunpack.c.l.b16 %v231
  %v1476 = vunpack.c.l.b16 %v232
  %v1477 = vunpack.c.l.b16 %v233
  %v1478 = vunpack.c.l.b16 %v234
  %v1479 = vunpack.c.l.b16 %v235
  %v1480 = vunpack.c.l.b16 %v236
  %v1481 = vunpack.c.l.b16 %v237
  %v1482 = vunpack.c.l.b16 %v238
  %v1483 = vunpack.c.l.b16 %v239
  %v1484 = vunpack.c.l.b16 %v240
  %v1485 = vunpack.c.l.b16 %v241
  %v1486 = vunpack.c.l.b16 %v242
  %v1487 = vunpack.c.l.b16 %v243
  %v1488 = vunpack.c.l.b16 %v244
  %v1489 = vunpack.c.l.b16 %v245
  %v1490 = vunpack.c.l.b16 %v246
  %v1491 = vunpack.c.l.b16 %v247
  %v1492 = vunpack.c.l.b16 %v248
  %v1493 = vunpack.c.l.b16 %v249
  %v1494 = vunpack.c.l.b16 %v250
  %v1495 = vunpack.c.l.b16 %v251
  %v1496 = vunpack.c.l.b16 %v252
  %v1497 = vunpack.c.l.b16 %v253
  %v1498 = vunpack.c.l.b16 %v254
  %v1499 = vunpack.c.l.b16 %v255
  %v1500 = vunpack.c.l.b16 %v256
  %v1501 = vunpack.c.l.b16 %v257
  %v1502 = vunpack.c.l.b16 %v258
  %v1503 = vunpack.c.l.b16 %v259
  %v1504 = vunpack.c.l.b16 %v260
  %v1505 = vunpack.c.l.b16 %v261
  %v1506 = vunpack.c.l.b16 %v262
  %v1507 = vunpack.c.l.b16 %v263
  %v1508 = vunpack.c.l.b16 %v264
  %v1509 = vunpack.c.l.b16 %v265
  %v1510 = vunpack.c.l.b16 %v266
  %v1511 = vunpack.c.l.b16 %v267
  %v1512 = vunpack.c.l.b16 %v268
  %v1513 = vunpack.c.l.b16 %v269
  %v1514 = vunpack.c.l.b16 %v270
  %v1515 = vunpack.c.l.b16 %v271
  %v1516 = vunpack.c.l.b16 %v272
  %v1517 = vunpack.c.l.b16 %v273
  %v1518 = vunpack.c.l.b16 %v274
  %v1519 = vunpack.c.l.b16 %v275
  %v1520 = vunpack.c.l.b16 %v276
  %v1521 = vunpack.c.l.b16 %v277
  %v1522 = vunpack.c.l.b16 %v278
  %v1523 = vunpack.c.l.b16 %v279
  %v1524 = vunpack.c.l.b16 %v280
  %v1525 = vunpack.c.l.b16 %v281
  %v1526 = vunpack.c.l.b16 %v282
  %v1527 = vunpack.c.l.b16 %v283
  %v1528 = vunpack.c.l.b16 %v284
  %v1529 = vunpack.c.l.b16 %v285
  %v1530 = vunpack.c.l.b16 %v286
  %v1531 = vunpack.c.l.b16 %v287
  %v1532 = vunpack.c.l.b16 %v288
  %v1533 = vunpack.c.l.b16 %v289
  %v1534 = vunpack.c.l.b16 %v290
  %v1535 = vunpack.c.l.b16 %v291
  %v1536 = vunpack.c.l.b16 %v292
  %v1537 = vunpack.c.l.b16 %v293
  %v1538 = vunpack.c.l.b16 %v294
  %v1539 = vunpack.c.l.b16 %v295
  %v1540 = vunpack.c.l.b16 %v296
  %v1541 = vunpack.c.l.b16 %v297
  %v1542 = vunpack.c.l.b16 %v298
  %v1543 = vunpack.c.l.b16 %v299
  %v1544 = vunpack.c.l.b16 %v300
  %v1545 = vunpack.c.l.b16 %v301
  %v1546 = vunpack.c.l.b16 %v302
  %v1547 = vunpack.c.l.b16 %v303
  %v1548 = vunpack.c.l.b16 %v304
  %v1549 = vunpack.c.l.b16 %v305
  %v1550 = vunpack.c.l.b16 %v306
  %v1551 = vunpack.c.l.b16 %v307
  %v1552 = vunpack.c.l.b16 %v308
  %v1553 = vunpack.c.l.b16 %v309
  %v1554 = vunpack.c.l.b16 %v310
  %v1555 = vunpack.c.l.b16 %v311
  %v1556 = vunpack.c.l.b16 %v312
  %v1557 = vunpack.c.l.b16 %v313
  %v1558 = vunpack.c.l.b16 %v314
  %v1559 = vunpack.c.l.b16 %v315
  %v1560 = vunpack.c.l.b16 %v316
  %v1561 = vunpack.c.l.b16 %v317
  %v1562 = vunpack.c.l.b16 %v318
  %v1563 = vunpack.c.l.b16 %v319
  %v1564 = vunpack.c.l.b16 %v320
  %v1565 = vunpack.c.l.b16 %v321
  %v1566 = vunpack.c.l.b16 %v322
  %v1567 = vunpack.c.l.b16 %v323
  %v1568 = vunpack.c.l.b16 %v324
  %v1569 = vunpack.c.l.b16 %v325
  %v1570 = vunpack.c.l.b16 %v326
  %v1571 = vunpack.c.l.b16 %v327
  %v1572 = vunpack.c.l.b16 %v328
  %v1573 = vunpack.c.l.b16 %v329
  %v1574 = vunpack.c.l.b16 %v330
  %v1575 = vunpack.c.l.b16 %v331
  %v1576 = vunpack.c.l.b16 %v332
  %v1577 = vunpack.c.l.b16 %v333
  %v1578 = vunpack.c.l.b16 %v334
  %v1579 = vunpack.c.l.b16 %v335
  %v1580 = vunpack.c.l.b16 %v336
  %v1581 = vunpack.c.l.b16 %v337
  %v1582 = vunpack.c.l.b16 %v338
  %v1583 = vpack.c.b16 %v1456, %v1455
  %v1584 = vpack.c.b16 %v1458, %v1457
  %v1585 = vpack.c.b16 %v1460, %v1459
  %v1586 = vpack.c.b16 %v1462, %v1461
  %v1587 = vpack.c.b16 %v1464, %v1463
  %v1588 = vpack.c.b16 %v1466, %v1465
  %v1589 = vpack.c.b16 %v1468, %v1467
  %v1590 = vpack.c.b16 %v1470, %v1469
  %v1591 = vpack.c.b16 %v1472, %v1471
  %v1592 = vpack.c.b16 %v1474, %v1473
  %v1593 = vpack.c.b16 %v1476, %v1475
  %v1594 = vpack.c.b16 %v1478, %v1477
  %v1595 = vpack.c.b16 %v1480, %v1479
  %v1596 = vpack.c.b16 %v1482, %v1481
  %v1597 = vpack.c.b16 %v1484, %v1483
  %v1598 = vpack.c.b16 %v1486, %v1485
  %v1599 = vpack.c.b16 %v1488, %v1487
  %v1600 = vpack.c.b16 %v1490, %v1489
  %v1601 = vpack.c.b16 %v1492, %v1491
  %v1602 = vpack.c.b16 %v1494, %v1493
  %v1603 = vpack.c.b16 %v1496, %v1495
  %v1604 = vpack.c.b16 %v1498, %v1497
  %v1605 = vpack.c.b16 %v1500, %v1499
  %v1606 = vpack.c.b16 %v1502, %v1501
  %v1607 = vpack.c.b16 %v1504, %v1503
  %v1608 = vpack.c.b16 %v1506, %v1505
  %v1609 = vpack.c.b16 %v1508, %v1507
  %v1610 = vpack.c.b16 %v1510, %v1509
  %v1611 = vpack.c.b16 %v1512, %v1511
  %v1612 = vpack.c.b16 %v1514, %v1513
  %v1613 = vpack.c.b16 %v1516, %v1515
  %v1614 = vpack.c.b16 %v1518, %v1517
  %v1615 = vpack.c.b16 %v1520, %v1519
  %v1616 = vpack.c.b16 %v1522, %v1521
  %v1617 = vpack.c.b16 %v1524, %v1523
  %v1618 = vpack.c.b16 %v1526, %v1525
  %v1619 = vpack.c.b16 %v1528, %v1527
  %v1620 = vpack.c.b16 %v1530, %v1529
  %v1621 = vpack.c.b16 %v1532, %v1531
  %v1622 = vpack.c.b16 %v1534, %v1533
  %v1623 = vpack.c.b16 %v1536, %v1535
  %v1624 = vpack.c.b16 %v1538, %v1537
  %v1625 = vpack.c.b16 %v1540, %v1539
  %v1626 = vpack.c.b16 %v1542, %v1541
  %v1627 = vpack.c.b16 %v1544, %v1543
  %v1628 = vpack.c.b16 %v1546, %v1545
  %v1629 = vpack.c.b16 %v1548, %v1547
  %v1630 = vpack.c.b16 %v1550, %v1549
  %v1631 = vpack.c.b16 %v1552, %v1551
  %v1632 = vpack.c.b16 %v1554, %v1553
  %v1633 = vpack.c.b16 %v1556, %v1555
  %v1634 = vpack.c.b16 %v1558, %v1557
  %v1635 = vpack.c.b16 %v1560, %v1559
  %v1636 = vpack.c.b16 %v1562, %v1561
  %v1637 = vpack.c.b16 %v1564, %v1563
  %v1638 = vpack.c.b16 %v1566, %v1565
  %v1639 = vpack.c.b16 %v1568, %v1567
  %v1640 = vpack.c.b16 %v1570, %v1569
  %v1641 = vpack.c.b16 %v1572, %v1571
  %v1642 = vpack.c.b16 %v1574, %v1573
  %v1643 = vpack.c.b16 %v1576, %v1575
  %v1644 = vpack.c.b16 %v1578, %v1577
  %v1645 = vpack.c.b16 %v1580, %v1579
  %v1646 = vpack.c.b16 %v1582, %v1581
  %1711 = vmatprep.subr.bf16.mxu0 0
  %1712 = vmatpush1.bf16.msra.mxu0 %v1590
  %1713 = vmatprep.subr.bf16.mxu0 0
  %1714 = vmatpush1.bf16.msra.mxu0 %v1589
  %1715 = vmatprep.subr.bf16.mxu0 0
  %1716 = vmatpush1.bf16.msra.mxu0 %v1588
  %1717 = vmatprep.subr.bf16.mxu0 0
  %1718 = vmatpush1.bf16.msra.mxu0 %v1587
  %1719 = vmatprep.subr.bf16.mxu0 0
  %1720 = vmatpush1.bf16.msra.mxu0 %v1586
  %1721 = vmatprep.subr.bf16.mxu0 0
  %1722 = vmatpush1.bf16.msra.mxu0 %v1585
  %1723 = vmatprep.subr.bf16.mxu0 0
  %1724 = vmatpush1.bf16.msra.mxu0 %v1584
  %1725 = vmatprep.subr.bf16.mxu0 0
  %1726 = vmatpush1.bf16.msra.mxu0 %v1583
  %1727 = vmatprep.subr.bf16.mxu0 0
  %1728 = vmatpush2.bf16.msra.mxu0 %v1598
  %1729 = vmatprep.subr.bf16.mxu0 0
  %1730 = vmatpush2.bf16.msra.mxu0 %v1597
  %1731 = vmatprep.subr.bf16.mxu0 0
  %1732 = vmatpush2.bf16.msra.mxu0 %v1596
  %1733 = vmatprep.subr.bf16.mxu0 0
  %1734 = vmatpush2.bf16.msra.mxu0 %v1595
  %1735 = vmatprep.subr.bf16.mxu0 0
  %1736 = vmatpush2.bf16.msra.mxu0 %v1594
  %1737 = vmatprep.subr.bf16.mxu0 0
  %1738 = vmatpush2.bf16.msra.mxu0 %v1593
  %1739 = vmatprep.subr.bf16.mxu0 0
  %1740 = vmatpush2.bf16.msra.mxu0 %v1592
  %1741 = vmatprep.subr.bf16.mxu0 0
  %1742 = vmatpush2.bf16.msra.mxu0 %v1591
  %1743 = vmatprep.mubr.bf16.mxu0 %v928
  %1744 = vmatmul.mubr.bf16.gmra.mxu0 %v927
  %v1745 = vpop.f32.mrf.mxu0
  %v1746 = vadd.f32 0.0, %v1745
  %v1747 = vpop.f32.mrf.mxu0
  %v1748 = vpop.f32.mrf.mxu0
  %v1749 = vadd.f32 0.0, %v1748
  %v1750 = vpop.f32.mrf.mxu0
  %1751 = vmatprep.mubr.bf16.mxu0 %v936
  %1752 = vmatmul.mubr.bf16.gmra.mxu0 %v935
  %v1753 = vpop.f32.mrf.mxu0
  %v1754 = vadd.f32 0.0, %v1753
  %v1755 = vpop.f32.mrf.mxu0
  %v1756 = vpop.f32.mrf.mxu0
  %v1757 = vadd.f32 0.0, %v1756
  %v1758 = vpop.f32.mrf.mxu0
  %1759 = vmatprep.mubr.bf16.mxu0 %v944
  %1760 = vmatmul.mubr.bf16.gmra.mxu0 %v943
  %v1761 = vpop.f32.mrf.mxu0
  %v1762 = vadd.f32 0.0, %v1761
  %v1763 = vpop.f32.mrf.mxu0
  %v1764 = vpop.f32.mrf.mxu0
  %v1765 = vadd.f32 0.0, %v1764
  %v1766 = vpop.f32.mrf.mxu0
  %1767 = vmatprep.mubr.bf16.mxu0 %v952
  %1768 = vmatmul.mubr.bf16.gmra.mxu0 %v951
  %v1769 = vpop.f32.mrf.mxu0
  %v1770 = vadd.f32 0.0, %v1769
  %v1771 = vpop.f32.mrf.mxu0
  %v1772 = vpop.f32.mrf.mxu0
  %v1773 = vadd.f32 0.0, %v1772
  %v1774 = vpop.f32.mrf.mxu0
  %1775 = vmatprep.mubr.bf16.mxu0 %v960
  %1776 = vmatmul.mubr.bf16.gmra.mxu0 %v959
  %v1777 = vpop.f32.mrf.mxu0
  %v1778 = vadd.f32 0.0, %v1777
  %v1779 = vpop.f32.mrf.mxu0
  %v1780 = vpop.f32.mrf.mxu0
  %v1781 = vadd.f32 0.0, %v1780
  %v1782 = vpop.f32.mrf.mxu0
  %1783 = vmatprep.mubr.bf16.mxu0 %v968
  %1784 = vmatmul.mubr.bf16.gmra.mxu0 %v967
  %v1785 = vpop.f32.mrf.mxu0
  %v1786 = vadd.f32 0.0, %v1785
  %v1787 = vpop.f32.mrf.mxu0
  %v1788 = vpop.f32.mrf.mxu0
  %v1789 = vadd.f32 0.0, %v1788
  %v1790 = vpop.f32.mrf.mxu0
  %1791 = vmatprep.mubr.bf16.mxu0 %v976
  %1792 = vmatmul.mubr.bf16.gmra.mxu0 %v975
  %v1793 = vpop.f32.mrf.mxu0
  %v1794 = vadd.f32 0.0, %v1793
  %v1795 = vpop.f32.mrf.mxu0
  %v1796 = vpop.f32.mrf.mxu0
  %v1797 = vadd.f32 0.0, %v1796
  %v1798 = vpop.f32.mrf.mxu0
  %1799 = vmatprep.mubr.bf16.mxu0 %v984
  %1800 = vmatmul.mubr.bf16.gmra.mxu0 %v983
  %v1801 = vpop.f32.mrf.mxu0
  %v1802 = vadd.f32 0.0, %v1801
  %v1803 = vpop.f32.mrf.mxu0
  %v1804 = vpop.f32.mrf.mxu0
  %v1805 = vadd.f32 0.0, %v1804
  %v1806 = vpop.f32.mrf.mxu0
  %1807 = vmatprep.mubr.bf16.mxu0 %v992
  %1808 = vmatmul.mubr.bf16.gmra.mxu0 %v991
  %v1809 = vpop.f32.mrf.mxu0
  %v1810 = vadd.f32 0.0, %v1809
  %v1811 = vpop.f32.mrf.mxu0
  %v1812 = vpop.f32.mrf.mxu0
  %v1813 = vadd.f32 0.0, %v1812
  %v1814 = vpop.f32.mrf.mxu0
  %1815 = vmatprep.mubr.bf16.mxu0 %v1000
  %1816 = vmatmul.mubr.bf16.gmra.mxu0 %v999
  %v1817 = vpop.f32.mrf.mxu0
  %v1818 = vadd.f32 0.0, %v1817
  %v1819 = vpop.f32.mrf.mxu0
  %v1820 = vpop.f32.mrf.mxu0
  %v1821 = vadd.f32 0.0, %v1820
  %v1822 = vpop.f32.mrf.mxu0
  %1823 = vmatprep.mubr.bf16.mxu0 %v1008
  %1824 = vmatmul.mubr.bf16.gmra.mxu0 %v1007
  %v1825 = vpop.f32.mrf.mxu0
  %v1826 = vadd.f32 0.0, %v1825
  %v1827 = vpop.f32.mrf.mxu0
  %v1828 = vpop.f32.mrf.mxu0
  %v1829 = vadd.f32 0.0, %v1828
  %v1830 = vpop.f32.mrf.mxu0
  %1831 = vmatprep.mubr.bf16.mxu0 %v1016
  %1832 = vmatmul.mubr.bf16.gmra.mxu0 %v1015
  %v1833 = vpop.f32.mrf.mxu0
  %v1834 = vadd.f32 0.0, %v1833
  %v1835 = vpop.f32.mrf.mxu0
  %v1836 = vpop.f32.mrf.mxu0
  %v1837 = vadd.f32 0.0, %v1836
  %v1838 = vpop.f32.mrf.mxu0
  %1839 = vmatprep.mubr.bf16.mxu0 %v1024
  %1840 = vmatmul.mubr.bf16.gmra.mxu0 %v1023
  %v1841 = vpop.f32.mrf.mxu0
  %v1842 = vadd.f32 0.0, %v1841
  %v1843 = vpop.f32.mrf.mxu0
  %v1844 = vpop.f32.mrf.mxu0
  %v1845 = vadd.f32 0.0, %v1844
  %v1846 = vpop.f32.mrf.mxu0
  %1847 = vmatprep.mubr.bf16.mxu0 %v1032
  %1848 = vmatmul.mubr.bf16.gmra.mxu0 %v1031
  %v1849 = vpop.f32.mrf.mxu0
  %v1850 = vadd.f32 0.0, %v1849
  %v1851 = vpop.f32.mrf.mxu0
  %v1852 = vpop.f32.mrf.mxu0
  %v1853 = vadd.f32 0.0, %v1852
  %v1854 = vpop.f32.mrf.mxu0
  %1855 = vmatprep.mubr.bf16.mxu0 %v1040
  %1856 = vmatmul.mubr.bf16.gmra.mxu0 %v1039
  %v1857 = vpop.f32.mrf.mxu0
  %v1858 = vadd.f32 0.0, %v1857
  %v1859 = vpop.f32.mrf.mxu0
  %v1860 = vpop.f32.mrf.mxu0
  %v1861 = vadd.f32 0.0, %v1860
  %v1862 = vpop.f32.mrf.mxu0
  %1863 = vmatprep.mubr.bf16.mxu0 %v1048
  %1864 = vmatmul.mubr.bf16.gmra.mxu0 %v1047
  %v1865 = vpop.f32.mrf.mxu0
  %v1866 = vadd.f32 0.0, %v1865
  %v1867 = vpop.f32.mrf.mxu0
  %v1868 = vpop.f32.mrf.mxu0
  %v1869 = vadd.f32 0.0, %v1868
  %v1870 = vpop.f32.mrf.mxu0
  %1871 = vmatprep.mubr.bf16.mxu0 %v1056
  %1872 = vmatmul.mubr.bf16.gmra.mxu0 %v1055
  %v1873 = vpop.f32.mrf.mxu0
  %v1874 = vadd.f32 0.0, %v1873
  %v1875 = vpop.f32.mrf.mxu0
  %v1876 = vpop.f32.mrf.mxu0
  %v1877 = vadd.f32 0.0, %v1876
  %v1878 = vpop.f32.mrf.mxu0
  %1879 = vmatprep.mubr.bf16.mxu0 %v1064
  %1880 = vmatmul.mubr.bf16.gmra.mxu0 %v1063
  %v1881 = vpop.f32.mrf.mxu0
  %v1882 = vadd.f32 0.0, %v1881
  %v1883 = vpop.f32.mrf.mxu0
  %v1884 = vpop.f32.mrf.mxu0
  %v1885 = vadd.f32 0.0, %v1884
  %v1886 = vpop.f32.mrf.mxu0
  %1887 = vmatprep.mubr.bf16.mxu0 %v1072
  %1888 = vmatmul.mubr.bf16.gmra.mxu0 %v1071
  %v1889 = vpop.f32.mrf.mxu0
  %v1890 = vadd.f32 0.0, %v1889
  %v1891 = vpop.f32.mrf.mxu0
  %v1892 = vpop.f32.mrf.mxu0
  %v1893 = vadd.f32 0.0, %v1892
  %v1894 = vpop.f32.mrf.mxu0
  %1895 = vmatprep.mubr.bf16.mxu0 %v1080
  %1896 = vmatmul.mubr.bf16.gmra.mxu0 %v1079
  %v1897 = vpop.f32.mrf.mxu0
  %v1898 = vadd.f32 0.0, %v1897
  %v1899 = vpop.f32.mrf.mxu0
  %v1900 = vpop.f32.mrf.mxu0
  %v1901 = vadd.f32 0.0, %v1900
  %v1902 = vpop.f32.mrf.mxu0
  %1903 = vmatprep.mubr.bf16.mxu0 %v1088
  %1904 = vmatmul.mubr.bf16.gmra.mxu0 %v1087
  %v1905 = vpop.f32.mrf.mxu0
  %v1906 = vadd.f32 0.0, %v1905
  %v1907 = vpop.f32.mrf.mxu0
  %v1908 = vpop.f32.mrf.mxu0
  %v1909 = vadd.f32 0.0, %v1908
  %v1910 = vpop.f32.mrf.mxu0
  %1911 = vmatprep.mubr.bf16.mxu0 %v1096
  %1912 = vmatmul.mubr.bf16.gmra.mxu0 %v1095
  %v1913 = vpop.f32.mrf.mxu0
  %v1914 = vadd.f32 0.0, %v1913
  %v1915 = vpop.f32.mrf.mxu0
  %v1916 = vpop.f32.mrf.mxu0
  %v1917 = vadd.f32 0.0, %v1916
  %v1918 = vpop.f32.mrf.mxu0
  %1919 = vmatprep.mubr.bf16.mxu0 %v1104
  %1920 = vmatmul.mubr.bf16.gmra.mxu0 %v1103
  %v1921 = vpop.f32.mrf.mxu0
  %v1922 = vadd.f32 0.0, %v1921
  %v1923 = vpop.f32.mrf.mxu0
  %v1924 = vpop.f32.mrf.mxu0
  %v1925 = vadd.f32 0.0, %v1924
  %v1926 = vpop.f32.mrf.mxu0
  %1927 = vmatprep.mubr.bf16.mxu0 %v1112
  %1928 = vmatmul.mubr.bf16.gmra.mxu0 %v1111
  %v1929 = vpop.f32.mrf.mxu0
  %v1930 = vadd.f32 0.0, %v1929
  %v1931 = vpop.f32.mrf.mxu0
  %v1932 = vpop.f32.mrf.mxu0
  %v1933 = vadd.f32 0.0, %v1932
  %v1934 = vpop.f32.mrf.mxu0
  %1935 = vmatprep.mubr.bf16.mxu0 %v1120
  %1936 = vmatmul.mubr.bf16.gmra.mxu0 %v1119
  %v1937 = vpop.f32.mrf.mxu0
  %v1938 = vadd.f32 0.0, %v1937
  %v1939 = vpop.f32.mrf.mxu0
  %v1940 = vpop.f32.mrf.mxu0
  %v1941 = vpop.f32.mrf.mxu0
  %1942 = vdwg.mxu0
  %1943 = vmatprep.subr.bf16.mxu0 0
  %1944 = vmatpush1.bf16.msra.mxu0 %v1606
  %1945 = vmatprep.subr.bf16.mxu0 0
  %1946 = vmatpush1.bf16.msra.mxu0 %v1605
  %1947 = vmatprep.subr.bf16.mxu0 0
  %1948 = vmatpush1.bf16.msra.mxu0 %v1604
  %1949 = vmatprep.subr.bf16.mxu0 0
  %1950 = vmatpush1.bf16.msra.mxu0 %v1603
  %1951 = vmatprep.subr.bf16.mxu0 0
  %1952 = vmatpush1.bf16.msra.mxu0 %v1602
  %1953 = vmatprep.subr.bf16.mxu0 0
  %1954 = vmatpush1.bf16.msra.mxu0 %v1601
  %1955 = vmatprep.subr.bf16.mxu0 0
  %1956 = vmatpush1.bf16.msra.mxu0 %v1600
  %1957 = vmatprep.subr.bf16.mxu0 0
  %1958 = vmatpush1.bf16.msra.mxu0 %v1599
  %1959 = vmatprep.subr.bf16.mxu0 0
  %1960 = vmatpush2.bf16.msra.mxu0 %v1614
  %1961 = vmatprep.subr.bf16.mxu0 0
  %1962 = vmatpush2.bf16.msra.mxu0 %v1613
  %1963 = vmatprep.subr.bf16.mxu0 0
  %1964 = vmatpush2.bf16.msra.mxu0 %v1612
  %1965 = vmatprep.subr.bf16.mxu0 0
  %1966 = vmatpush2.bf16.msra.mxu0 %v1611
  %1967 = vmatprep.subr.bf16.mxu0 0
  %1968 = vmatpush2.bf16.msra.mxu0 %v1610
  %1969 = vmatprep.subr.bf16.mxu0 0
  %1970 = vmatpush2.bf16.msra.mxu0 %v1609
  %1971 = vmatprep.subr.bf16.mxu0 0
  %1972 = vmatpush2.bf16.msra.mxu0 %v1608
  %1973 = vmatprep.subr.bf16.mxu0 0
  %1974 = vmatpush2.bf16.msra.mxu0 %v1607
  %1975 = vmatprep.mubr.bf16.mxu0 %v930
  %1976 = vmatmul.mubr.bf16.gmra.mxu0 %v929
  %v1977 = vpop.f32.mrf.mxu0
  %v1978 = vadd.f32 %v1746, %v1977
  %v1979 = vpop.f32.mrf.mxu0
  %v1980 = vpop.f32.mrf.mxu0
  %v1981 = vadd.f32 %v1749, %v1980
  %v1982 = vpop.f32.mrf.mxu0
  %1983 = vmatprep.mubr.bf16.mxu0 %v938
  %1984 = vmatmul.mubr.bf16.gmra.mxu0 %v937
  %v1985 = vpop.f32.mrf.mxu0
  %v1986 = vadd.f32 %v1754, %v1985
  %v1987 = vpop.f32.mrf.mxu0
  %v1988 = vpop.f32.mrf.mxu0
  %v1989 = vadd.f32 %v1757, %v1988
  %v1990 = vpop.f32.mrf.mxu0
  %1991 = vmatprep.mubr.bf16.mxu0 %v946
  %1992 = vmatmul.mubr.bf16.gmra.mxu0 %v945
  %v1993 = vpop.f32.mrf.mxu0
  %v1994 = vadd.f32 %v1762, %v1993
  %v1995 = vpop.f32.mrf.mxu0
  %v1996 = vpop.f32.mrf.mxu0
  %v1997 = vadd.f32 %v1765, %v1996
  %v1998 = vpop.f32.mrf.mxu0
  %1999 = vmatprep.mubr.bf16.mxu0 %v954
  %2000 = vmatmul.mubr.bf16.gmra.mxu0 %v953
  %v2001 = vpop.f32.mrf.mxu0
  %v2002 = vadd.f32 %v1770, %v2001
  %v2003 = vpop.f32.mrf.mxu0
  %v2004 = vpop.f32.mrf.mxu0
  %v2005 = vadd.f32 %v1773, %v2004
  %v2006 = vpop.f32.mrf.mxu0
  %2007 = vmatprep.mubr.bf16.mxu0 %v962
  %2008 = vmatmul.mubr.bf16.gmra.mxu0 %v961
  %v2009 = vpop.f32.mrf.mxu0
  %v2010 = vadd.f32 %v1778, %v2009
  %v2011 = vpop.f32.mrf.mxu0
  %v2012 = vpop.f32.mrf.mxu0
  %v2013 = vadd.f32 %v1781, %v2012
  %v2014 = vpop.f32.mrf.mxu0
  %2015 = vmatprep.mubr.bf16.mxu0 %v970
  %2016 = vmatmul.mubr.bf16.gmra.mxu0 %v969
  %v2017 = vpop.f32.mrf.mxu0
  %v2018 = vadd.f32 %v1786, %v2017
  %v2019 = vpop.f32.mrf.mxu0
  %v2020 = vpop.f32.mrf.mxu0
  %v2021 = vadd.f32 %v1789, %v2020
  %v2022 = vpop.f32.mrf.mxu0
  %2023 = vmatprep.mubr.bf16.mxu0 %v978
  %2024 = vmatmul.mubr.bf16.gmra.mxu0 %v977
  %v2025 = vpop.f32.mrf.mxu0
  %v2026 = vadd.f32 %v1794, %v2025
  %v2027 = vpop.f32.mrf.mxu0
  %v2028 = vpop.f32.mrf.mxu0
  %v2029 = vadd.f32 %v1797, %v2028
  %v2030 = vpop.f32.mrf.mxu0
  %2031 = vmatprep.mubr.bf16.mxu0 %v986
  %2032 = vmatmul.mubr.bf16.gmra.mxu0 %v985
  %v2033 = vpop.f32.mrf.mxu0
  %v2034 = vadd.f32 %v1802, %v2033
  %v2035 = vpop.f32.mrf.mxu0
  %v2036 = vpop.f32.mrf.mxu0
  %v2037 = vadd.f32 %v1805, %v2036
  %v2038 = vpop.f32.mrf.mxu0
  %2039 = vmatprep.mubr.bf16.mxu0 %v994
  %2040 = vmatmul.mubr.bf16.gmra.mxu0 %v993
  %v2041 = vpop.f32.mrf.mxu0
  %v2042 = vadd.f32 %v1810, %v2041
  %v2043 = vpop.f32.mrf.mxu0
  %v2044 = vpop.f32.mrf.mxu0
  %v2045 = vadd.f32 %v1813, %v2044
  %v2046 = vpop.f32.mrf.mxu0
  %2047 = vmatprep.mubr.bf16.mxu0 %v1002
  %2048 = vmatmul.mubr.bf16.gmra.mxu0 %v1001
  %v2049 = vpop.f32.mrf.mxu0
  %v2050 = vadd.f32 %v1818, %v2049
  %v2051 = vpop.f32.mrf.mxu0
  %v2052 = vpop.f32.mrf.mxu0
  %v2053 = vadd.f32 %v1821, %v2052
  %v2054 = vpop.f32.mrf.mxu0
  %2055 = vmatprep.mubr.bf16.mxu0 %v1010
  %2056 = vmatmul.mubr.bf16.gmra.mxu0 %v1009
  %v2057 = vpop.f32.mrf.mxu0
  %v2058 = vadd.f32 %v1826, %v2057
  %v2059 = vpop.f32.mrf.mxu0
  %v2060 = vpop.f32.mrf.mxu0
  %v2061 = vadd.f32 %v1829, %v2060
  %v2062 = vpop.f32.mrf.mxu0
  %2063 = vmatprep.mubr.bf16.mxu0 %v1018
  %2064 = vmatmul.mubr.bf16.gmra.mxu0 %v1017
  %v2065 = vpop.f32.mrf.mxu0
  %v2066 = vadd.f32 %v1834, %v2065
  %v2067 = vpop.f32.mrf.mxu0
  %v2068 = vpop.f32.mrf.mxu0
  %v2069 = vadd.f32 %v1837, %v2068
  %v2070 = vpop.f32.mrf.mxu0
  %2071 = vmatprep.mubr.bf16.mxu0 %v1026
  %2072 = vmatmul.mubr.bf16.gmra.mxu0 %v1025
  %v2073 = vpop.f32.mrf.mxu0
  %v2074 = vadd.f32 %v1842, %v2073
  %v2075 = vpop.f32.mrf.mxu0
  %v2076 = vpop.f32.mrf.mxu0
  %v2077 = vadd.f32 %v1845, %v2076
  %v2078 = vpop.f32.mrf.mxu0
  %2079 = vmatprep.mubr.bf16.mxu0 %v1034
  %2080 = vmatmul.mubr.bf16.gmra.mxu0 %v1033
  %v2081 = vpop.f32.mrf.mxu0
  %v2082 = vadd.f32 %v1850, %v2081
  %v2083 = vpop.f32.mrf.mxu0
  %v2084 = vpop.f32.mrf.mxu0
  %v2085 = vadd.f32 %v1853, %v2084
  %v2086 = vpop.f32.mrf.mxu0
  %2087 = vmatprep.mubr.bf16.mxu0 %v1042
  %2088 = vmatmul.mubr.bf16.gmra.mxu0 %v1041
  %v2089 = vpop.f32.mrf.mxu0
  %v2090 = vadd.f32 %v1858, %v2089
  %v2091 = vpop.f32.mrf.mxu0
  %v2092 = vpop.f32.mrf.mxu0
  %v2093 = vadd.f32 %v1861, %v2092
  %v2094 = vpop.f32.mrf.mxu0
  %2095 = vmatprep.mubr.bf16.mxu0 %v1050
  %2096 = vmatmul.mubr.bf16.gmra.mxu0 %v1049
  %v2097 = vpop.f32.mrf.mxu0
  %v2098 = vadd.f32 %v1866, %v2097
  %v2099 = vpop.f32.mrf.mxu0
  %v2100 = vpop.f32.mrf.mxu0
  %v2101 = vadd.f32 %v1869, %v2100
  %v2102 = vpop.f32.mrf.mxu0
  %2103 = vmatprep.mubr.bf16.mxu0 %v1058
  %2104 = vmatmul.mubr.bf16.gmra.mxu0 %v1057
  %v2105 = vpop.f32.mrf.mxu0
  %v2106 = vadd.f32 %v1874, %v2105
  %v2107 = vpop.f32.mrf.mxu0
  %v2108 = vpop.f32.mrf.mxu0
  %v2109 = vadd.f32 %v1877, %v2108
  %v2110 = vpop.f32.mrf.mxu0
  %2111 = vmatprep.mubr.bf16.mxu0 %v1066
  %2112 = vmatmul.mubr.bf16.gmra.mxu0 %v1065
  %v2113 = vpop.f32.mrf.mxu0
  %v2114 = vadd.f32 %v1882, %v2113
  %v2115 = vpop.f32.mrf.mxu0
  %v2116 = vpop.f32.mrf.mxu0
  %v2117 = vadd.f32 %v1885, %v2116
  %v2118 = vpop.f32.mrf.mxu0
  %2119 = vmatprep.mubr.bf16.mxu0 %v1074
  %2120 = vmatmul.mubr.bf16.gmra.mxu0 %v1073
  %v2121 = vpop.f32.mrf.mxu0
  %v2122 = vadd.f32 %v1890, %v2121
  %v2123 = vpop.f32.mrf.mxu0
  %v2124 = vpop.f32.mrf.mxu0
  %v2125 = vadd.f32 %v1893, %v2124
  %v2126 = vpop.f32.mrf.mxu0
  %2127 = vmatprep.mubr.bf16.mxu0 %v1082
  %2128 = vmatmul.mubr.bf16.gmra.mxu0 %v1081
  %v2129 = vpop.f32.mrf.mxu0
  %v2130 = vadd.f32 %v1898, %v2129
  %v2131 = vpop.f32.mrf.mxu0
  %v2132 = vpop.f32.mrf.mxu0
  %v2133 = vadd.f32 %v1901, %v2132
  %v2134 = vpop.f32.mrf.mxu0
  %2135 = vmatprep.mubr.bf16.mxu0 %v1090
  %2136 = vmatmul.mubr.bf16.gmra.mxu0 %v1089
  %v2137 = vpop.f32.mrf.mxu0
  %v2138 = vadd.f32 %v1906, %v2137
  %v2139 = vpop.f32.mrf.mxu0
  %v2140 = vpop.f32.mrf.mxu0
  %v2141 = vadd.f32 %v1909, %v2140
  %v2142 = vpop.f32.mrf.mxu0
  %2143 = vmatprep.mubr.bf16.mxu0 %v1098
  %2144 = vmatmul.mubr.bf16.gmra.mxu0 %v1097
  %v2145 = vpop.f32.mrf.mxu0
  %v2146 = vadd.f32 %v1914, %v2145
  %v2147 = vpop.f32.mrf.mxu0
  %v2148 = vpop.f32.mrf.mxu0
  %v2149 = vadd.f32 %v1917, %v2148
  %v2150 = vpop.f32.mrf.mxu0
  %2151 = vmatprep.mubr.bf16.mxu0 %v1106
  %2152 = vmatmul.mubr.bf16.gmra.mxu0 %v1105
  %v2153 = vpop.f32.mrf.mxu0
  %v2154 = vadd.f32 %v1922, %v2153
  %v2155 = vpop.f32.mrf.mxu0
  %v2156 = vpop.f32.mrf.mxu0
  %v2157 = vadd.f32 %v1925, %v2156
  %v2158 = vpop.f32.mrf.mxu0
  %2159 = vmatprep.mubr.bf16.mxu0 %v1114
  %2160 = vmatmul.mubr.bf16.gmra.mxu0 %v1113
  %v2161 = vpop.f32.mrf.mxu0
  %v2162 = vadd.f32 %v1930, %v2161
  %v2163 = vpop.f32.mrf.mxu0
  %v2164 = vpop.f32.mrf.mxu0
  %v2165 = vadd.f32 %v1933, %v2164
  %v2166 = vpop.f32.mrf.mxu0
  %2167 = vmatprep.mubr.bf16.mxu0 %v1122
  %2168 = vmatmul.mubr.bf16.gmra.mxu0 %v1121
  %v2169 = vpop.f32.mrf.mxu0
  %v2170 = vadd.f32 %v1938, %v2169
  %v2171 = vpop.f32.mrf.mxu0
  %v2172 = vpop.f32.mrf.mxu0
  %v2173 = vpop.f32.mrf.mxu0
  %2174 = vdwg.mxu0
  %2175 = vmatprep.subr.bf16.mxu0 0
  %2176 = vmatpush1.bf16.msra.mxu0 %v1622
  %2177 = vmatprep.subr.bf16.mxu0 0
  %2178 = vmatpush1.bf16.msra.mxu0 %v1621
  %2179 = vmatprep.subr.bf16.mxu0 0
  %2180 = vmatpush1.bf16.msra.mxu0 %v1620
  %2181 = vmatprep.subr.bf16.mxu0 0
  %2182 = vmatpush1.bf16.msra.mxu0 %v1619
  %2183 = vmatprep.subr.bf16.mxu0 0
  %2184 = vmatpush1.bf16.msra.mxu0 %v1618
  %2185 = vmatprep.subr.bf16.mxu0 0
  %2186 = vmatpush1.bf16.msra.mxu0 %v1617
  %2187 = vmatprep.subr.bf16.mxu0 0
  %2188 = vmatpush1.bf16.msra.mxu0 %v1616
  %2189 = vmatprep.subr.bf16.mxu0 0
  %2190 = vmatpush1.bf16.msra.mxu0 %v1615
  %2191 = vmatprep.subr.bf16.mxu0 0
  %2192 = vmatpush2.bf16.msra.mxu0 %v1630
  %2193 = vmatprep.subr.bf16.mxu0 0
  %2194 = vmatpush2.bf16.msra.mxu0 %v1629
  %2195 = vmatprep.subr.bf16.mxu0 0
  %2196 = vmatpush2.bf16.msra.mxu0 %v1628
  %2197 = vmatprep.subr.bf16.mxu0 0
  %2198 = vmatpush2.bf16.msra.mxu0 %v1627
  %2199 = vmatprep.subr.bf16.mxu0 0
  %2200 = vmatpush2.bf16.msra.mxu0 %v1626
  %2201 = vmatprep.subr.bf16.mxu0 0
  %2202 = vmatpush2.bf16.msra.mxu0 %v1625
  %2203 = vmatprep.subr.bf16.mxu0 0
  %2204 = vmatpush2.bf16.msra.mxu0 %v1624
  %2205 = vmatprep.subr.bf16.mxu0 0
  %2206 = vmatpush2.bf16.msra.mxu0 %v1623
  %2207 = vmatprep.mubr.bf16.mxu0 %v932
  %2208 = vmatmul.mubr.bf16.gmra.mxu0 %v931
  %v2209 = vpop.f32.mrf.mxu0
  %v2210 = vadd.f32 %v1978, %v2209
  %v2211 = vpop.f32.mrf.mxu0
  %v2212 = vpop.f32.mrf.mxu0
  %v2213 = vadd.f32 %v1981, %v2212
  %v2214 = vpop.f32.mrf.mxu0
  %2215 = vmatprep.mubr.bf16.mxu0 %v940
  %2216 = vmatmul.mubr.bf16.gmra.mxu0 %v939
  %v2217 = vpop.f32.mrf.mxu0
  %v2218 = vadd.f32 %v1986, %v2217
  %v2219 = vpop.f32.mrf.mxu0
  %v2220 = vpop.f32.mrf.mxu0
  %v2221 = vadd.f32 %v1989, %v2220
  %v2222 = vpop.f32.mrf.mxu0
  %2223 = vmatprep.mubr.bf16.mxu0 %v948
  %2224 = vmatmul.mubr.bf16.gmra.mxu0 %v947
  %v2225 = vpop.f32.mrf.mxu0
  %v2226 = vadd.f32 %v1994, %v2225
  %v2227 = vpop.f32.mrf.mxu0
  %v2228 = vpop.f32.mrf.mxu0
  %v2229 = vadd.f32 %v1997, %v2228
  %v2230 = vpop.f32.mrf.mxu0
  %2231 = vmatprep.mubr.bf16.mxu0 %v956
  %2232 = vmatmul.mubr.bf16.gmra.mxu0 %v955
  %v2233 = vpop.f32.mrf.mxu0
  %v2234 = vadd.f32 %v2002, %v2233
  %v2235 = vpop.f32.mrf.mxu0
  %v2236 = vpop.f32.mrf.mxu0
  %v2237 = vadd.f32 %v2005, %v2236
  %v2238 = vpop.f32.mrf.mxu0
  %2239 = vmatprep.mubr.bf16.mxu0 %v964
  %2240 = vmatmul.mubr.bf16.gmra.mxu0 %v963
  %v2241 = vpop.f32.mrf.mxu0
  %v2242 = vadd.f32 %v2010, %v2241
  %v2243 = vpop.f32.mrf.mxu0
  %v2244 = vpop.f32.mrf.mxu0
  %v2245 = vadd.f32 %v2013, %v2244
  %v2246 = vpop.f32.mrf.mxu0
  %2247 = vmatprep.mubr.bf16.mxu0 %v972
  %2248 = vmatmul.mubr.bf16.gmra.mxu0 %v971
  %v2249 = vpop.f32.mrf.mxu0
  %v2250 = vadd.f32 %v2018, %v2249
  %v2251 = vpop.f32.mrf.mxu0
  %v2252 = vpop.f32.mrf.mxu0
  %v2253 = vadd.f32 %v2021, %v2252
  %v2254 = vpop.f32.mrf.mxu0
  %2255 = vmatprep.mubr.bf16.mxu0 %v980
  %2256 = vmatmul.mubr.bf16.gmra.mxu0 %v979
  %v2257 = vpop.f32.mrf.mxu0
  %v2258 = vadd.f32 %v2026, %v2257
  %v2259 = vpop.f32.mrf.mxu0
  %v2260 = vpop.f32.mrf.mxu0
  %v2261 = vadd.f32 %v2029, %v2260
  %v2262 = vpop.f32.mrf.mxu0
  %2263 = vmatprep.mubr.bf16.mxu0 %v988
  %2264 = vmatmul.mubr.bf16.gmra.mxu0 %v987
  %v2265 = vpop.f32.mrf.mxu0
  %v2266 = vadd.f32 %v2034, %v2265
  %v2267 = vpop.f32.mrf.mxu0
  %v2268 = vpop.f32.mrf.mxu0
  %v2269 = vadd.f32 %v2037, %v2268
  %v2270 = vpop.f32.mrf.mxu0
  %2271 = vmatprep.mubr.bf16.mxu0 %v996
  %2272 = vmatmul.mubr.bf16.gmra.mxu0 %v995
  %v2273 = vpop.f32.mrf.mxu0
  %v2274 = vadd.f32 %v2042, %v2273
  %v2275 = vpop.f32.mrf.mxu0
  %v2276 = vpop.f32.mrf.mxu0
  %v2277 = vadd.f32 %v2045, %v2276
  %v2278 = vpop.f32.mrf.mxu0
  %2279 = vmatprep.mubr.bf16.mxu0 %v1004
  %2280 = vmatmul.mubr.bf16.gmra.mxu0 %v1003
  %v2281 = vpop.f32.mrf.mxu0
  %v2282 = vadd.f32 %v2050, %v2281
  %v2283 = vpop.f32.mrf.mxu0
  %v2284 = vpop.f32.mrf.mxu0
  %v2285 = vadd.f32 %v2053, %v2284
  %v2286 = vpop.f32.mrf.mxu0
  %2287 = vmatprep.mubr.bf16.mxu0 %v1012
  %2288 = vmatmul.mubr.bf16.gmra.mxu0 %v1011
  %v2289 = vpop.f32.mrf.mxu0
  %v2290 = vadd.f32 %v2058, %v2289
  %v2291 = vpop.f32.mrf.mxu0
  %v2292 = vpop.f32.mrf.mxu0
  %v2293 = vadd.f32 %v2061, %v2292
  %v2294 = vpop.f32.mrf.mxu0
  %2295 = vmatprep.mubr.bf16.mxu0 %v1020
  %2296 = vmatmul.mubr.bf16.gmra.mxu0 %v1019
  %v2297 = vpop.f32.mrf.mxu0
  %v2298 = vadd.f32 %v2066, %v2297
  %v2299 = vpop.f32.mrf.mxu0
  %v2300 = vpop.f32.mrf.mxu0
  %v2301 = vadd.f32 %v2069, %v2300
  %v2302 = vpop.f32.mrf.mxu0
  %2303 = vmatprep.mubr.bf16.mxu0 %v1028
  %2304 = vmatmul.mubr.bf16.gmra.mxu0 %v1027
  %v2305 = vpop.f32.mrf.mxu0
  %v2306 = vadd.f32 %v2074, %v2305
  %v2307 = vpop.f32.mrf.mxu0
  %v2308 = vpop.f32.mrf.mxu0
  %v2309 = vadd.f32 %v2077, %v2308
  %v2310 = vpop.f32.mrf.mxu0
  %2311 = vmatprep.mubr.bf16.mxu0 %v1036
  %2312 = vmatmul.mubr.bf16.gmra.mxu0 %v1035
  %v2313 = vpop.f32.mrf.mxu0
  %v2314 = vadd.f32 %v2082, %v2313
  %v2315 = vpop.f32.mrf.mxu0
  %v2316 = vpop.f32.mrf.mxu0
  %v2317 = vadd.f32 %v2085, %v2316
  %v2318 = vpop.f32.mrf.mxu0
  %2319 = vmatprep.mubr.bf16.mxu0 %v1044
  %2320 = vmatmul.mubr.bf16.gmra.mxu0 %v1043
  %v2321 = vpop.f32.mrf.mxu0
  %v2322 = vadd.f32 %v2090, %v2321
  %v2323 = vpop.f32.mrf.mxu0
  %v2324 = vpop.f32.mrf.mxu0
  %v2325 = vadd.f32 %v2093, %v2324
  %v2326 = vpop.f32.mrf.mxu0
  %2327 = vmatprep.mubr.bf16.mxu0 %v1052
  %2328 = vmatmul.mubr.bf16.gmra.mxu0 %v1051
  %v2329 = vpop.f32.mrf.mxu0
  %v2330 = vadd.f32 %v2098, %v2329
  %v2331 = vpop.f32.mrf.mxu0
  %v2332 = vpop.f32.mrf.mxu0
  %v2333 = vadd.f32 %v2101, %v2332
  %v2334 = vpop.f32.mrf.mxu0
  %2335 = vmatprep.mubr.bf16.mxu0 %v1060
  %2336 = vmatmul.mubr.bf16.gmra.mxu0 %v1059
  %v2337 = vpop.f32.mrf.mxu0
  %v2338 = vadd.f32 %v2106, %v2337
  %v2339 = vpop.f32.mrf.mxu0
  %v2340 = vpop.f32.mrf.mxu0
  %v2341 = vadd.f32 %v2109, %v2340
  %v2342 = vpop.f32.mrf.mxu0
  %2343 = vmatprep.mubr.bf16.mxu0 %v1068
  %2344 = vmatmul.mubr.bf16.gmra.mxu0 %v1067
  %v2345 = vpop.f32.mrf.mxu0
  %v2346 = vadd.f32 %v2114, %v2345
  %v2347 = vpop.f32.mrf.mxu0
  %v2348 = vpop.f32.mrf.mxu0
  %v2349 = vadd.f32 %v2117, %v2348
  %v2350 = vpop.f32.mrf.mxu0
  %2351 = vmatprep.mubr.bf16.mxu0 %v1076
  %2352 = vmatmul.mubr.bf16.gmra.mxu0 %v1075
  %v2353 = vpop.f32.mrf.mxu0
  %v2354 = vadd.f32 %v2122, %v2353
  %v2355 = vpop.f32.mrf.mxu0
  %v2356 = vpop.f32.mrf.mxu0
  %v2357 = vadd.f32 %v2125, %v2356
  %v2358 = vpop.f32.mrf.mxu0
  %2359 = vmatprep.mubr.bf16.mxu0 %v1084
  %2360 = vmatmul.mubr.bf16.gmra.mxu0 %v1083
  %v2361 = vpop.f32.mrf.mxu0
  %v2362 = vadd.f32 %v2130, %v2361
  %v2363 = vpop.f32.mrf.mxu0
  %v2364 = vpop.f32.mrf.mxu0
  %v2365 = vadd.f32 %v2133, %v2364
  %v2366 = vpop.f32.mrf.mxu0
  %2367 = vmatprep.mubr.bf16.mxu0 %v1092
  %2368 = vmatmul.mubr.bf16.gmra.mxu0 %v1091
  %v2369 = vpop.f32.mrf.mxu0
  %v2370 = vadd.f32 %v2138, %v2369
  %v2371 = vpop.f32.mrf.mxu0
  %v2372 = vpop.f32.mrf.mxu0
  %v2373 = vadd.f32 %v2141, %v2372
  %v2374 = vpop.f32.mrf.mxu0
  %2375 = vmatprep.mubr.bf16.mxu0 %v1100
  %2376 = vmatmul.mubr.bf16.gmra.mxu0 %v1099
  %v2377 = vpop.f32.mrf.mxu0
  %v2378 = vadd.f32 %v2146, %v2377
  %v2379 = vpop.f32.mrf.mxu0
  %v2380 = vpop.f32.mrf.mxu0
  %v2381 = vadd.f32 %v2149, %v2380
  %v2382 = vpop.f32.mrf.mxu0
  %2383 = vmatprep.mubr.bf16.mxu0 %v1108
  %2384 = vmatmul.mubr.bf16.gmra.mxu0 %v1107
  %v2385 = vpop.f32.mrf.mxu0
  %v2386 = vadd.f32 %v2154, %v2385
  %v2387 = vpop.f32.mrf.mxu0
  %v2388 = vpop.f32.mrf.mxu0
  %v2389 = vadd.f32 %v2157, %v2388
  %v2390 = vpop.f32.mrf.mxu0
  %2391 = vmatprep.mubr.bf16.mxu0 %v1116
  %2392 = vmatmul.mubr.bf16.gmra.mxu0 %v1115
  %v2393 = vpop.f32.mrf.mxu0
  %v2394 = vadd.f32 %v2162, %v2393
  %v2395 = vpop.f32.mrf.mxu0
  %v2396 = vpop.f32.mrf.mxu0
  %v2397 = vadd.f32 %v2165, %v2396
  %v2398 = vpop.f32.mrf.mxu0
  %2399 = vmatprep.mubr.bf16.mxu0 %v1124
  %2400 = vmatmul.mubr.bf16.gmra.mxu0 %v1123
  %v2401 = vpop.f32.mrf.mxu0
  %v2402 = vadd.f32 %v2170, %v2401
  %v2403 = vpop.f32.mrf.mxu0
  %v2404 = vpop.f32.mrf.mxu0
  %v2405 = vpop.f32.mrf.mxu0
  %2406 = vdwg.mxu0
  %2407 = vmatprep.subr.bf16.mxu0 0
  %2408 = vmatpush1.bf16.msra.mxu0 %v1638
  %2409 = vmatprep.subr.bf16.mxu0 0
  %2410 = vmatpush1.bf16.msra.mxu0 %v1637
  %2411 = vmatprep.subr.bf16.mxu0 0
  %2412 = vmatpush1.bf16.msra.mxu0 %v1636
  %2413 = vmatprep.subr.bf16.mxu0 0
  %2414 = vmatpush1.bf16.msra.mxu0 %v1635
  %2415 = vmatprep.subr.bf16.mxu0 0
  %2416 = vmatpush1.bf16.msra.mxu0 %v1634
  %2417 = vmatprep.subr.bf16.mxu0 0
  %2418 = vmatpush1.bf16.msra.mxu0 %v1633
  %2419 = vmatprep.subr.bf16.mxu0 0
  %2420 = vmatpush1.bf16.msra.mxu0 %v1632
  %2421 = vmatprep.subr.bf16.mxu0 0
  %2422 = vmatpush1.bf16.msra.mxu0 %v1631
  %2423 = vmatprep.subr.bf16.mxu0 0
  %2424 = vmatpush2.bf16.msra.mxu0 %v1646
  %2425 = vmatprep.subr.bf16.mxu0 0
  %2426 = vmatpush2.bf16.msra.mxu0 %v1645
  %2427 = vmatprep.subr.bf16.mxu0 0
  %2428 = vmatpush2.bf16.msra.mxu0 %v1644
  %2429 = vmatprep.subr.bf16.mxu0 0
  %2430 = vmatpush2.bf16.msra.mxu0 %v1643
  %2431 = vmatprep.subr.bf16.mxu0 0
  %2432 = vmatpush2.bf16.msra.mxu0 %v1642
  %2433 = vmatprep.subr.bf16.mxu0 0
  %2434 = vmatpush2.bf16.msra.mxu0 %v1641
  %2435 = vmatprep.subr.bf16.mxu0 0
  %2436 = vmatpush2.bf16.msra.mxu0 %v1640
  %2437 = vmatprep.subr.bf16.mxu0 0
  %2438 = vmatpush2.bf16.msra.mxu0 %v1639
  %2439 = vmatprep.mubr.bf16.mxu0 %v934
  %2440 = vmatmul.mubr.bf16.gmra.mxu0 %v933
  %v2441 = vpop.f32.mrf.mxu0
  %v2442 = vadd.f32 %v2210, %v2441
  %v2443 = vpop.f32.mrf.mxu0
  %v2444 = vpop.f32.mrf.mxu0
  %v2445 = vadd.f32 %v2213, %v2444
  %v2446 = vpop.f32.mrf.mxu0
  %2447 = vmatprep.mubr.bf16.mxu0 %v942
  %2448 = vmatmul.mubr.bf16.gmra.mxu0 %v941
  %v2449 = vpop.f32.mrf.mxu0
  %v2450 = vadd.f32 %v2218, %v2449
  %v2451 = vpop.f32.mrf.mxu0
  %v2452 = vpop.f32.mrf.mxu0
  %v2453 = vadd.f32 %v2221, %v2452
  %v2454 = vpop.f32.mrf.mxu0
  %2455 = vmatprep.mubr.bf16.mxu0 %v950
  %2456 = vmatmul.mubr.bf16.gmra.mxu0 %v949
  %v2457 = vpop.f32.mrf.mxu0
  %v2458 = vadd.f32 %v2226, %v2457
  %v2459 = vpop.f32.mrf.mxu0
  %v2460 = vpop.f32.mrf.mxu0
  %v2461 = vadd.f32 %v2229, %v2460
  %v2462 = vpop.f32.mrf.mxu0
  %2463 = vmatprep.mubr.bf16.mxu0 %v958
  %2464 = vmatmul.mubr.bf16.gmra.mxu0 %v957
  %v2465 = vpop.f32.mrf.mxu0
  %v2466 = vadd.f32 %v2234, %v2465
  %v2467 = vpop.f32.mrf.mxu0
  %v2468 = vpop.f32.mrf.mxu0
  %v2469 = vadd.f32 %v2237, %v2468
  %v2470 = vpop.f32.mrf.mxu0
  %2471 = vmatprep.mubr.bf16.mxu0 %v966
  %2472 = vmatmul.mubr.bf16.gmra.mxu0 %v965
  %v2473 = vpop.f32.mrf.mxu0
  %v2474 = vadd.f32 %v2242, %v2473
  %v2475 = vpop.f32.mrf.mxu0
  %v2476 = vpop.f32.mrf.mxu0
  %v2477 = vadd.f32 %v2245, %v2476
  %v2478 = vpop.f32.mrf.mxu0
  %2479 = vmatprep.mubr.bf16.mxu0 %v974
  %2480 = vmatmul.mubr.bf16.gmra.mxu0 %v973
  %v2481 = vpop.f32.mrf.mxu0
  %v2482 = vadd.f32 %v2250, %v2481
  %v2483 = vpop.f32.mrf.mxu0
  %v2484 = vpop.f32.mrf.mxu0
  %v2485 = vadd.f32 %v2253, %v2484
  %v2486 = vpop.f32.mrf.mxu0
  %2487 = vmatprep.mubr.bf16.mxu0 %v982
  %2488 = vmatmul.mubr.bf16.gmra.mxu0 %v981
  %v2489 = vpop.f32.mrf.mxu0
  %v2490 = vadd.f32 %v2258, %v2489
  %v2491 = vpop.f32.mrf.mxu0
  %v2492 = vpop.f32.mrf.mxu0
  %v2493 = vadd.f32 %v2261, %v2492
  %v2494 = vpop.f32.mrf.mxu0
  %2495 = vmatprep.mubr.bf16.mxu0 %v990
  %2496 = vmatmul.mubr.bf16.gmra.mxu0 %v989
  %v2497 = vpop.f32.mrf.mxu0
  %v2498 = vadd.f32 %v2266, %v2497
  %v2499 = vpop.f32.mrf.mxu0
  %v2500 = vpop.f32.mrf.mxu0
  %v2501 = vadd.f32 %v2269, %v2500
  %v2502 = vpop.f32.mrf.mxu0
  %2503 = vmatprep.mubr.bf16.mxu0 %v998
  %2504 = vmatmul.mubr.bf16.gmra.mxu0 %v997
  %v2505 = vpop.f32.mrf.mxu0
  %v2506 = vadd.f32 %v2274, %v2505
  %v2507 = vpop.f32.mrf.mxu0
  %v2508 = vpop.f32.mrf.mxu0
  %v2509 = vadd.f32 %v2277, %v2508
  %v2510 = vpop.f32.mrf.mxu0
  %2511 = vmatprep.mubr.bf16.mxu0 %v1006
  %2512 = vmatmul.mubr.bf16.gmra.mxu0 %v1005
  %v2513 = vpop.f32.mrf.mxu0
  %v2514 = vadd.f32 %v2282, %v2513
  %v2515 = vpop.f32.mrf.mxu0
  %v2516 = vpop.f32.mrf.mxu0
  %v2517 = vadd.f32 %v2285, %v2516
  %v2518 = vpop.f32.mrf.mxu0
  %2519 = vmatprep.mubr.bf16.mxu0 %v1014
  %2520 = vmatmul.mubr.bf16.gmra.mxu0 %v1013
  %v2521 = vpop.f32.mrf.mxu0
  %v2522 = vadd.f32 %v2290, %v2521
  %v2523 = vpop.f32.mrf.mxu0
  %v2524 = vpop.f32.mrf.mxu0
  %v2525 = vadd.f32 %v2293, %v2524
  %v2526 = vpop.f32.mrf.mxu0
  %2527 = vmatprep.mubr.bf16.mxu0 %v1022
  %2528 = vmatmul.mubr.bf16.gmra.mxu0 %v1021
  %v2529 = vpop.f32.mrf.mxu0
  %v2530 = vadd.f32 %v2298, %v2529
  %v2531 = vpop.f32.mrf.mxu0
  %v2532 = vpop.f32.mrf.mxu0
  %v2533 = vadd.f32 %v2301, %v2532
  %v2534 = vpop.f32.mrf.mxu0
  %2535 = vmatprep.mubr.bf16.mxu0 %v1030
  %2536 = vmatmul.mubr.bf16.gmra.mxu0 %v1029
  %v2537 = vpop.f32.mrf.mxu0
  %v2538 = vadd.f32 %v2306, %v2537
  %v2539 = vpop.f32.mrf.mxu0
  %v2540 = vpop.f32.mrf.mxu0
  %v2541 = vadd.f32 %v2309, %v2540
  %v2542 = vpop.f32.mrf.mxu0
  %2543 = vmatprep.mubr.bf16.mxu0 %v1038
  %2544 = vmatmul.mubr.bf16.gmra.mxu0 %v1037
  %v2545 = vpop.f32.mrf.mxu0
  %v2546 = vadd.f32 %v2314, %v2545
  %v2547 = vpop.f32.mrf.mxu0
  %v2548 = vpop.f32.mrf.mxu0
  %v2549 = vadd.f32 %v2317, %v2548
  %v2550 = vpop.f32.mrf.mxu0
  %2551 = vmatprep.mubr.bf16.mxu0 %v1046
  %2552 = vmatmul.mubr.bf16.gmra.mxu0 %v1045
  %v2553 = vpop.f32.mrf.mxu0
  %v2554 = vadd.f32 %v2322, %v2553
  %v2555 = vpop.f32.mrf.mxu0
  %v2556 = vpop.f32.mrf.mxu0
  %v2557 = vadd.f32 %v2325, %v2556
  %v2558 = vpop.f32.mrf.mxu0
  %2559 = vmatprep.mubr.bf16.mxu0 %v1054
  %2560 = vmatmul.mubr.bf16.gmra.mxu0 %v1053
  %v2561 = vpop.f32.mrf.mxu0
  %v2562 = vadd.f32 %v2330, %v2561
  %v2563 = vpop.f32.mrf.mxu0
  %v2564 = vpop.f32.mrf.mxu0
  %v2565 = vadd.f32 %v2333, %v2564
  %v2566 = vpop.f32.mrf.mxu0
  %2567 = vmatprep.mubr.bf16.mxu0 %v1062
  %2568 = vmatmul.mubr.bf16.gmra.mxu0 %v1061
  %v2569 = vpop.f32.mrf.mxu0
  %v2570 = vadd.f32 %v2338, %v2569
  %v2571 = vpop.f32.mrf.mxu0
  %v2572 = vpop.f32.mrf.mxu0
  %v2573 = vadd.f32 %v2341, %v2572
  %v2574 = vpop.f32.mrf.mxu0
  %2575 = vmatprep.mubr.bf16.mxu0 %v1070
  %2576 = vmatmul.mubr.bf16.gmra.mxu0 %v1069
  %v2577 = vpop.f32.mrf.mxu0
  %v2578 = vadd.f32 %v2346, %v2577
  %v2579 = vpop.f32.mrf.mxu0
  %v2580 = vpop.f32.mrf.mxu0
  %v2581 = vadd.f32 %v2349, %v2580
  %v2582 = vpop.f32.mrf.mxu0
  %2583 = vmatprep.mubr.bf16.mxu0 %v1078
  %2584 = vmatmul.mubr.bf16.gmra.mxu0 %v1077
  %v2585 = vpop.f32.mrf.mxu0
  %v2586 = vadd.f32 %v2354, %v2585
  %v2587 = vpop.f32.mrf.mxu0
  %v2588 = vpop.f32.mrf.mxu0
  %v2589 = vadd.f32 %v2357, %v2588
  %v2590 = vpop.f32.mrf.mxu0
  %2591 = vmatprep.mubr.bf16.mxu0 %v1086
  %2592 = vmatmul.mubr.bf16.gmra.mxu0 %v1085
  %v2593 = vpop.f32.mrf.mxu0
  %v2594 = vadd.f32 %v2362, %v2593
  %v2595 = vpop.f32.mrf.mxu0
  %v2596 = vpop.f32.mrf.mxu0
  %v2597 = vadd.f32 %v2365, %v2596
  %v2598 = vpop.f32.mrf.mxu0
  %2599 = vmatprep.mubr.bf16.mxu0 %v1094
  %2600 = vmatmul.mubr.bf16.gmra.mxu0 %v1093
  %v2601 = vpop.f32.mrf.mxu0
  %v2602 = vadd.f32 %v2370, %v2601
  %v2603 = vpop.f32.mrf.mxu0
  %v2604 = vpop.f32.mrf.mxu0
  %v2605 = vadd.f32 %v2373, %v2604
  %v2606 = vpop.f32.mrf.mxu0
  %2607 = vmatprep.mubr.bf16.mxu0 %v1102
  %2608 = vmatmul.mubr.bf16.gmra.mxu0 %v1101
  %v2609 = vpop.f32.mrf.mxu0
  %v2610 = vadd.f32 %v2378, %v2609
  %v2611 = vpop.f32.mrf.mxu0
  %v2612 = vpop.f32.mrf.mxu0
  %v2613 = vadd.f32 %v2381, %v2612
  %v2614 = vpop.f32.mrf.mxu0
  %2615 = vmatprep.mubr.bf16.mxu0 %v1110
  %2616 = vmatmul.mubr.bf16.gmra.mxu0 %v1109
  %v2617 = vpop.f32.mrf.mxu0
  %v2618 = vadd.f32 %v2386, %v2617
  %v2619 = vpop.f32.mrf.mxu0
  %v2620 = vpop.f32.mrf.mxu0
  %v2621 = vadd.f32 %v2389, %v2620
  %v2622 = vpop.f32.mrf.mxu0
  %2623 = vmatprep.mubr.bf16.mxu0 %v1118
  %2624 = vmatmul.mubr.bf16.gmra.mxu0 %v1117
  %v2625 = vpop.f32.mrf.mxu0
  %v2626 = vadd.f32 %v2394, %v2625
  %v2627 = vpop.f32.mrf.mxu0
  %v2628 = vpop.f32.mrf.mxu0
  %v2629 = vadd.f32 %v2397, %v2628
  %v2630 = vpop.f32.mrf.mxu0
  %2631 = vmatprep.mubr.bf16.mxu0 %v1126
  %2632 = vmatmul.mubr.bf16.gmra.mxu0 %v1125
  %v2633 = vpop.f32.mrf.mxu0
  %v2634 = vadd.f32 %v2402, %v2633
  %v2635 = vpop.f32.mrf.mxu0
  %v2636 = vpop.f32.mrf.mxu0
  %v2637 = vpop.f32.mrf.mxu0
  %2638 = vdwg.mxu0
  %2639 = vst [vmem:[%s2] sm:$0xff] %v2442
  %2640 = vst [vmem:[%s2 + $0x8] sm:$0xff] %v2445
  %2641 = vst [vmem:[%s2 + $0x10] sm:$0xff] %v2450
  %2642 = vst [vmem:[%s2 + $0x18] sm:$0xff] %v2453
  %2643 = vst [vmem:[%s2 + $0x20] sm:$0xff] %v2458
  %2644 = vst [vmem:[%s2 + $0x28] sm:$0xff] %v2461
  %2645 = vst [vmem:[%s2 + $0x30] sm:$0xff] %v2466
  %2646 = vst [vmem:[%s2 + $0x38] sm:$0xff] %v2469
  %2647 = vst [vmem:[%s2 + $0x40] sm:$0xff] %v2474
  %2648 = vst [vmem:[%s2 + $0x48] sm:$0xff] %v2477
  %2649 = vst [vmem:[%s2 + $0x50] sm:$0xff] %v2482
  %2650 = vst [vmem:[%s2 + $0x58] sm:$0xff] %v2485
  %2651 = vst [vmem:[%s2 + $0x60] sm:$0xff] %v2490
  %2652 = vst [vmem:[%s2 + $0x68] sm:$0xff] %v2493
  %2653 = vst [vmem:[%s2 + $0x70] sm:$0xff] %v2498
  %2654 = vst [vmem:[%s2 + $0x78] sm:$0xff] %v2501
  %2655 = vst [vmem:[%s2 + $0x80] sm:$0xff] %v2506
  %2656 = vst [vmem:[%s2 + $0x88] sm:$0xff] %v2509
  %2657 = vst [vmem:[%s2 + $0x90] sm:$0xff] %v2514
  %2658 = vst [vmem:[%s2 + $0x98] sm:$0xff] %v2517
  %2659 = vst [vmem:[%s2 + $0xa0] sm:$0xff] %v2522
  %2660 = vst [vmem:[%s2 + $0xa8] sm:$0xff] %v2525
  %2661 = vst [vmem:[%s2 + $0xb0] sm:$0xff] %v2530
  %2662 = vst [vmem:[%s2 + $0xb8] sm:$0xff] %v2533
  %2663 = vst [vmem:[%s2 + $0xc0] sm:$0xff] %v2538
  %2664 = vst [vmem:[%s2 + $0xc8] sm:$0xff] %v2541
  %2665 = vst [vmem:[%s2 + $0xd0] sm:$0xff] %v2546
  %2666 = vst [vmem:[%s2 + $0xd8] sm:$0xff] %v2549
  %2667 = vst [vmem:[%s2 + $0xe0] sm:$0xff] %v2554
  %2668 = vst [vmem:[%s2 + $0xe8] sm:$0xff] %v2557
  %2669 = vst [vmem:[%s2 + $0xf0] sm:$0xff] %v2562
  %2670 = vst [vmem:[%s2 + $0xf8] sm:$0xff] %v2565
  %2671 = vst [vmem:[%s2 + $0x100] sm:$0xff] %v2570
  %2672 = vst [vmem:[%s2 + $0x108] sm:$0xff] %v2573
  %2673 = vst [vmem:[%s2 + $0x110] sm:$0xff] %v2578
  %2674 = vst [vmem:[%s2 + $0x118] sm:$0xff] %v2581
  %2675 = vst [vmem:[%s2 + $0x120] sm:$0xff] %v2586
  %2676 = vst [vmem:[%s2 + $0x128] sm:$0xff] %v2589
  %2677 = vst [vmem:[%s2 + $0x130] sm:$0xff] %v2594
  %2678 = vst [vmem:[%s2 + $0x138] sm:$0xff] %v2597
  %2679 = vst [vmem:[%s2 + $0x140] sm:$0xff] %v2602
  %2680 = vst [vmem:[%s2 + $0x148] sm:$0xff] %v2605
  %2681 = vst [vmem:[%s2 + $0x150] sm:$0xff] %v2610
  %2682 = vst [vmem:[%s2 + $0x158] sm:$0xff] %v2613
  %2683 = vst [vmem:[%s2 + $0x160] sm:$0xff] %v2618
  %2684 = vst [vmem:[%s2 + $0x168] sm:$0xff] %v2621
  %2685 = vst [vmem:[%s2 + $0x170] sm:$0xff] %v2626
  %2686 = vst [vmem:[%s2 + $0x178] sm:$0xff] %v2629
  %2687 = vst [vmem:[%s2 + $0x180] sm:$0xff] %v2634
  %p2688 = scmp.eq.s32.totalorder 0, 0
  // Predicated region
  $region10: #{patch_discriminator_forward.9} parent=0 // pred_check
    %p2689 = pneg %p2688
  $region11: #{patch_discriminator_forward.9} parent=0 // pred_check_branch
    %2691 = sbr.rel (%p2689) target = $region13
  $region12: #{patch_discriminator_forward.9} parent=0 // pred_region
    %2692 = vst [vmem:[%s3] sm:$0x1] 0.0
    %2693 = vst [vmem:[%s4] sm:$0x1] 0.0
  $region13: #{patch_discriminator_forward.9} parent=0 // pred_fallthru
    _
  %v2694 = vld [vmem:[%s3] sm:$0x1]
  %v2695 = vadd.f32 %v2442, %v2445
  %v2696 = vadd.f32 %v2695, %v2450
  %v2697 = vadd.f32 %v2696, %v2453
  %v2698 = vadd.f32 %v2697, %v2458
  %v2699 = vadd.f32 %v2698, %v2461
  %v2700 = vadd.f32 %v2699, %v2466
  %v2701 = vadd.f32 %v2700, %v2469
  %v2702 = vadd.f32 %v2701, %v2474
  %v2703 = vadd.f32 %v2702, %v2477
  %v2704 = vadd.f32 %v2703, %v2482
  %v2705 = vadd.f32 %v2704, %v2485
  %v2706 = vadd.f32 %v2705, %v2490
  %v2707 = vadd.f32 %v2706, %v2493
  %v2708 = vadd.f32 %v2707, %v2498
  %v2709 = vadd.f32 %v2708, %v2501
  %v2710 = vadd.f32 %v2709, %v2506
  %v2711 = vadd.f32 %v2710, %v2509
  %v2712 = vadd.f32 %v2711, %v2514
  %v2713 = vadd.f32 %v2712, %v2517
  %v2714 = vadd.f32 %v2713, %v2522
  %v2715 = vadd.f32 %v2714, %v2525
  %v2716 = vadd.f32 %v2715, %v2530
  %v2717 = vadd.f32 %v2716, %v2533
  %v2718 = vadd.f32 %v2717, %v2538
  %v2719 = vadd.f32 %v2718, %v2541
  %v2720 = vadd.f32 %v2719, %v2546
  %v2721 = vadd.f32 %v2720, %v2549
  %v2722 = vadd.f32 %v2721, %v2554
  %v2723 = vadd.f32 %v2722, %v2557
  %v2724 = vadd.f32 %v2723, %v2562
  %v2725 = vadd.f32 %v2724, %v2565
  %v2726 = vadd.f32 %v2725, %v2570
  %v2727 = vadd.f32 %v2726, %v2573
  %v2728 = vadd.f32 %v2727, %v2578
  %v2729 = vadd.f32 %v2728, %v2581
  %v2730 = vadd.f32 %v2729, %v2586
  %v2731 = vadd.f32 %v2730, %v2589
  %v2732 = vadd.f32 %v2731, %v2594
  %v2733 = vadd.f32 %v2732, %v2597
  %v2734 = vadd.f32 %v2733, %v2602
  %v2735 = vadd.f32 %v2734, %v2605
  %v2736 = vadd.f32 %v2735, %v2610
  %v2737 = vadd.f32 %v2736, %v2613
  %v2738 = vadd.f32 %v2737, %v2618
  %v2739 = vadd.f32 %v2738, %v2621
  %v2740 = vadd.f32 %v2739, %v2626
  %v2741 = vadd.f32 %v2740, %v2629
  %v2742 = vadd.f32 %v2741, %v2634
  %v2743 = vrot.slane %v2742, 4
  %v2744 = vadd.f32 %v2742, %v2743
  %v2745 = vrot.slane %v2744, 2
  %v2746 = vadd.f32 %v2744, %v2745
  %v2747 = vrot.slane %v2746, 1
  %v2748 = vadd.f32 %v2746, %v2747
  %v2749 = vadd.f32 %v2694, %v2748
  %2750 = vst [vmem:[%s3] sm:$0x1] %v2749
  %v2751 = vld [vmem:[%s4] sm:$0x1]
  %v2752 = vmul.f32 %v2442, %v2442
  %v2753 = vmul.f32 %v2445, %v2445
  %v2754 = vmul.f32 %v2450, %v2450
  %v2755 = vmul.f32 %v2453, %v2453
  %v2756 = vmul.f32 %v2458, %v2458
  %v2757 = vmul.f32 %v2461, %v2461
  %v2758 = vmul.f32 %v2466, %v2466
  %v2759 = vmul.f32 %v2469, %v2469
  %v2760 = vmul.f32 %v2474, %v2474
  %v2761 = vmul.f32 %v2477, %v2477
  %v2762 = vmul.f32 %v2482, %v2482
  %v2763 = vmul.f32 %v2485, %v2485
  %v2764 = vmul.f32 %v2490, %v2490
  %v2765 = vmul.f32 %v2493, %v2493
  %v2766 = vmul.f32 %v2498, %v2498
  %v2767 = vmul.f32 %v2501, %v2501
  %v2768 = vmul.f32 %v2506, %v2506
  %v2769 = vmul.f32 %v2509, %v2509
  %v2770 = vmul.f32 %v2514, %v2514
  %v2771 = vmul.f32 %v2517, %v2517
  %v2772 = vmul.f32 %v2522, %v2522
  %v2773 = vmul.f32 %v2525, %v2525
  %v2774 = vmul.f32 %v2530, %v2530
  %v2775 = vmul.f32 %v2533, %v2533
  %v2776 = vmul.f32 %v2538, %v2538
  %v2777 = vmul.f32 %v2541, %v2541
  %v2778 = vmul.f32 %v2546, %v2546
  %v2779 = vmul.f32 %v2549, %v2549
  %v2780 = vmul.f32 %v2554, %v2554
  %v2781 = vmul.f32 %v2557, %v2557
  %v2782 = vmul.f32 %v2562, %v2562
  %v2783 = vmul.f32 %v2565, %v2565
  %v2784 = vmul.f32 %v2570, %v2570
  %v2785 = vmul.f32 %v2573, %v2573
  %v2786 = vmul.f32 %v2578, %v2578
  %v2787 = vmul.f32 %v2581, %v2581
  %v2788 = vmul.f32 %v2586, %v2586
  %v2789 = vmul.f32 %v2589, %v2589
  %v2790 = vmul.f32 %v2594, %v2594
  %v2791 = vmul.f32 %v2597, %v2597
  %v2792 = vmul.f32 %v2602, %v2602
  %v2793 = vmul.f32 %v2605, %v2605
  %v2794 = vmul.f32 %v2610, %v2610
  %v2795 = vmul.f32 %v2613, %v2613
  %v2796 = vmul.f32 %v2618, %v2618
  %v2797 = vmul.f32 %v2621, %v2621
  %v2798 = vmul.f32 %v2626, %v2626
  %v2799 = vmul.f32 %v2629, %v2629
  %v2800 = vmul.f32 %v2634, %v2634
  %v2801 = vadd.f32 %v2752, %v2753
  %v2802 = vadd.f32 %v2801, %v2754
  %v2803 = vadd.f32 %v2802, %v2755
  %v2804 = vadd.f32 %v2803, %v2756
  %v2805 = vadd.f32 %v2804, %v2757
  %v2806 = vadd.f32 %v2805, %v2758
  %v2807 = vadd.f32 %v2806, %v2759
  %v2808 = vadd.f32 %v2807, %v2760
  %v2809 = vadd.f32 %v2808, %v2761
  %v2810 = vadd.f32 %v2809, %v2762
  %v2811 = vadd.f32 %v2810, %v2763
  %v2812 = vadd.f32 %v2811, %v2764
  %v2813 = vadd.f32 %v2812, %v2765
  %v2814 = vadd.f32 %v2813, %v2766
  %v2815 = vadd.f32 %v2814, %v2767
  %v2816 = vadd.f32 %v2815, %v2768
  %v2817 = vadd.f32 %v2816, %v2769
  %v2818 = vadd.f32 %v2817, %v2770
  %v2819 = vadd.f32 %v2818, %v2771
  %v2820 = vadd.f32 %v2819, %v2772
  %v2821 = vadd.f32 %v2820, %v2773
  %v2822 = vadd.f32 %v2821, %v2774
  %v2823 = vadd.f32 %v2822, %v2775
  %v2824 = vadd.f32 %v2823, %v2776
  %v2825 = vadd.f32 %v2824, %v2777
  %v2826 = vadd.f32 %v2825, %v2778
  %v2827 = vadd.f32 %v2826, %v2779
  %v2828 = vadd.f32 %v2827, %v2780
  %v2829 = vadd.f32 %v2828, %v2781
  %v2830 = vadd.f32 %v2829, %v2782
  %v2831 = vadd.f32 %v2830, %v2783
  %v2832 = vadd.f32 %v2831, %v2784
  %v2833 = vadd.f32 %v2832, %v2785
  %v2834 = vadd.f32 %v2833, %v2786
  %v2835 = vadd.f32 %v2834, %v2787
  %v2836 = vadd.f32 %v2835, %v2788
  %v2837 = vadd.f32 %v2836, %v2789
  %v2838 = vadd.f32 %v2837, %v2790
  %v2839 = vadd.f32 %v2838, %v2791
  %v2840 = vadd.f32 %v2839, %v2792
  %v2841 = vadd.f32 %v2840, %v2793
  %v2842 = vadd.f32 %v2841, %v2794
  %v2843 = vadd.f32 %v2842, %v2795
  %v2844 = vadd.f32 %v2843, %v2796
  %v2845 = vadd.f32 %v2844, %v2797
  %v2846 = vadd.f32 %v2845, %v2798
  %v2847 = vadd.f32 %v2846, %v2799
  %v2848 = vadd.f32 %v2847, %v2800
  %v2849 = vrot.slane %v2848, 4
  %v2850 = vadd.f32 %v2848, %v2849
  %v2851 = vrot.slane %v2850, 2
  %v2852 = vadd.f32 %v2850, %v2851
  %v2853 = vrot.slane %v2852, 1
  %v2854 = vadd.f32 %v2852, %v2853
  %v2855 = vadd.f32 %v2751, %v2854
  %2856 = vst [vmem:[%s4] sm:$0x1] %v2855
  // Predicated region
  $region14: #{patch_discriminator_forward.9} parent=0 // pred_check
    _
  $region15: #{patch_discriminator_forward.9} parent=0 // pred_check_branch
    %2858 = sbr.rel (0) target = $region17
  $region16: #{patch_discriminator_forward.9} parent=0 // pred_region
    _
  $region17: #{patch_discriminator_forward.9} parent=0 // pred_fallthru
    _
  // Predicated region
  $region18: #{patch_discriminator_forward.9} parent=0 // pred_check
    _
  $region19: #{patch_discriminator_forward.9} parent=0 // pred_check_branch
    %2860 = sbr.rel (0) target = $region21
  $region20: #{patch_discriminator_forward.9} parent=0 // pred_region
    _
  $region21: #{patch_discriminator_forward.9} parent=0 // pred_fallthru
    _
  // Predicated region
  $region22: #{patch_discriminator_forward.9} parent=0 // pred_check
    _
  $region23: #{patch_discriminator_forward.9} parent=0 // pred_check_branch
    %2862 = sbr.rel (0) target = $region25
  $region24: #{patch_discriminator_forward.9} parent=0 // pred_region
    _
  $region25: #{patch_discriminator_forward.9} parent=0 // pred_fallthru
    _
  // Predicated region
  $region26: #{patch_discriminator_forward.9} parent=0 // pred_check
    _
  $region27: #{patch_discriminator_forward.9} parent=0 // pred_check_branch
    %2864 = sbr.rel (0) target = $region29
  $region28: #{patch_discriminator_forward.9} parent=0 // pred_region
    _
  $region29: #{patch_discriminator_forward.9} parent=0 // pred_fallthru
    _
  // Predicated region
  $region30: #{patch_discriminator_forward.9} parent=0 // pred_check
    _
  $region31: #{patch_discriminator_forward.9} parent=0 // pred_check_branch
    %2866 = sbr.rel (0) target = $region33
  $region32: #{patch_discriminator_forward.9} parent=0 // pred_region
    _
  $region33: #{patch_discriminator_forward.9} parent=0 // pred_fallthru
    _
  // Predicated region
  $region34: #{patch_discriminator_forward.9} parent=0 // pred_check
    _
  $region35: #{patch_discriminator_forward.9} parent=0 // pred_check_branch
    %2868 = sbr.rel (0) target = $region37
  $region36: #{patch_discriminator_forward.9} parent=0 // pred_region
    _
  $region37: #{patch_discriminator_forward.9} parent=0 // pred_fallthru
    _

// kernel: patch_discriminator_forward.10
$region0: #{patch_discriminator_forward.10}
  #allocation0 [shape = 'u32[]', space=smem, size = 0x4, offset = 0x4, fixed_abs, tag = 'smem constant byte address 0x4 - core index']
  #allocation1 [shape = 'u32[144,128]{1,0:T(1,128)}', space=vmem, size = 0x12000, scoped, tag = 'internal scratch']
  %s0 = inlined_call_operand.vmem [shape: f32[8,5,5,128], index: 0, kind: input, shape index: {}]
  %s1 = inlined_call_operand.vmem [shape: f32[8,5,4,128], index: 1, kind: input, shape index: {}]
  %s2 = inlined_call_operand.vmem [shape: f32[8,4,5,128], index: 2, kind: input, shape index: {}]
  %s3 = inlined_call_operand.vmem [shape: f32[8,4,4,128], index: 3, kind: input, shape index: {}]
  %s4 = inlined_call_operand.vmem [shape: f32[1,1,1,128], index: 4, kind: input, shape index: {}]
  %s5 = inlined_call_operand.vmem [shape: f32[1,1,1,128], index: 5, kind: input, shape index: {}]
  %s6 = inlined_call_operand.vmem [shape: f32[8,4,4,128], index: 6, kind: output, shape index: {}]
  %s7 = sld [smem:[#allocation0]]
  $region34: #{patch_discriminator_forward.10} parent=0
    _
  %s9 = ssub.s32 1, %s7
  %s10 = scalar_select 0, %s9, %s7
  // Predicated region
  $region2: #{patch_discriminator_forward.10} parent=0 // pred_check
    _
  $region3: #{patch_discriminator_forward.10} parent=0 // pred_check_branch
    %12 = sbr.rel (0) target = $region5
  $region4: #{patch_discriminator_forward.10} parent=0 // pred_region
    _
  $region5: #{patch_discriminator_forward.10} parent=0 // pred_fallthru
    _
  // Predicated region
  $region6: #{patch_discriminator_forward.10} parent=0 // pred_check
    _
  $region7: #{patch_discriminator_forward.10} parent=0 // pred_check_branch
    %14 = sbr.rel (0) target = $region9
  $region8: #{patch_discriminator_forward.10} parent=0 // pred_region
    _
  $region9: #{patch_discriminator_forward.10} parent=0 // pred_fallthru
    _
  // Predicated region
  $region10: #{patch_discriminator_forward.10} parent=0 // pred_check
    _
  $region11: #{patch_discriminator_forward.10} parent=0 // pred_check_branch
    %16 = sbr.rel (0) target = $region13
  $region12: #{patch_discriminator_forward.10} parent=0 // pred_region
    _
  $region13: #{patch_discriminator_forward.10} parent=0 // pred_fallthru
    _
  // Predicated region
  $region14: #{patch_discriminator_forward.10} parent=0 // pred_check
    _
  $region15: #{patch_discriminator_forward.10} parent=0 // pred_check_branch
    %18 = sbr.rel (0) target = $region17
  $region16: #{patch_discriminator_forward.10} parent=0 // pred_region
    _
  $region17: #{patch_discriminator_forward.10} parent=0 // pred_fallthru
    _
  // Predicated region
  $region18: #{patch_discriminator_forward.10} parent=0 // pred_check
    _
  $region19: #{patch_discriminator_forward.10} parent=0 // pred_check_branch
    %20 = sbr.rel (0) target = $region21
  $region20: #{patch_discriminator_forward.10} parent=0 // pred_region
    _
  $region21: #{patch_discriminator_forward.10} parent=0 // pred_fallthru
    _
  // Predicated region
  $region22: #{patch_discriminator_forward.10} parent=0 // pred_check
    _
  $region23: #{patch_discriminator_forward.10} parent=0 // pred_check_branch
    %22 = sbr.rel (0) target = $region25
  $region24: #{patch_discriminator_forward.10} parent=0 // pred_region
    _
  $region25: #{patch_discriminator_forward.10} parent=0 // pred_fallthru
    _
  %v23 = vld [vmem:[%s0] sm:$0x1f]
  %v24 = vld [vmem:[%s0 + $0x8] sm:$0x1f]
  %v25 = vld [vmem:[%s0 + $0x10] sm:$0x1f]
  %v26 = vld [vmem:[%s0 + $0x18] sm:$0x1f]
  %v27 = vld [vmem:[%s0 + $0x20] sm:$0x1f]
  %v28 = vld [vmem:[%s0 + $0x28] sm:$0x1f]
  %v29 = vld [vmem:[%s0 + $0x30] sm:$0x1f]
  %v30 = vld [vmem:[%s0 + $0x38] sm:$0x1f]
  %v31 = vld [vmem:[%s0 + $0x40] sm:$0x1f]
  %v32 = vld [vmem:[%s0 + $0x48] sm:$0x1f]
  %v33 = vld [vmem:[%s0 + $0x50] sm:$0x1f]
  %v34 = vld [vmem:[%s0 + $0x58] sm:$0x1f]
  %v35 = vld [vmem:[%s0 + $0x60] sm:$0x1f]
  %v36 = vld [vmem:[%s0 + $0x68] sm:$0x1f]
  %v37 = vld [vmem:[%s0 + $0x70] sm:$0x1f]
  %v38 = vld [vmem:[%s0 + $0x78] sm:$0x1f]
  %v39 = vld [vmem:[%s0 + $0x80] sm:$0x1f]
  %v40 = vld [vmem:[%s0 + $0x88] sm:$0x1f]
  %v41 = vld [vmem:[%s0 + $0x90] sm:$0x1f]
  %v42 = vld [vmem:[%s0 + $0x98] sm:$0x1f]
  %v43 = vld [vmem:[%s0 + $0xa0] sm:$0x1f]
  %v44 = vld [vmem:[%s0 + $0xa8] sm:$0x1f]
  %v45 = vld [vmem:[%s0 + $0xb0] sm:$0x1f]
  %v46 = vld [vmem:[%s0 + $0xb8] sm:$0x1f]
  %v47 = vld [vmem:[%s0 + $0xc0] sm:$0x1f]
  %v48 = vld [vmem:[%s0 + $0xc8] sm:$0x1f]
  %v49 = vld [vmem:[%s0 + $0xd0] sm:$0x1f]
  %v50 = vld [vmem:[%s0 + $0xd8] sm:$0x1f]
  %v51 = vld [vmem:[%s0 + $0xe0] sm:$0x1f]
  %v52 = vld [vmem:[%s0 + $0xe8] sm:$0x1f]
  %v53 = vld [vmem:[%s0 + $0xf0] sm:$0x1f]
  %v54 = vld [vmem:[%s0 + $0xf8] sm:$0x1f]
  %v55 = vld [vmem:[%s0 + $0x100] sm:$0x1f]
  %v56 = vld [vmem:[%s0 + $0x108] sm:$0x1f]
  %v57 = vld [vmem:[%s0 + $0x110] sm:$0x1f]
  %v58 = vld [vmem:[%s0 + $0x118] sm:$0x1f]
  %v59 = vld [vmem:[%s0 + $0x120] sm:$0x1f]
  %v60 = vld [vmem:[%s0 + $0x128] sm:$0x1f]
  %v61 = vld [vmem:[%s0 + $0x130] sm:$0x1f]
  %v62 = vld [vmem:[%s0 + $0x138] sm:$0x1f]
  %v63 = vld [vmem:[%s4] sm:$0x1]
  %v65 = vlaneseq
  %v66 = vshrl.u32 %v65, 7
  %v67 = vsub.s32 0, %v66
  %v68 = vrot.slane %v63, %v67
  %v70 = vmul.f32 %v23, %v68
  %v71 = vmul.f32 %v24, %v68
  %v72 = vmul.f32 %v25, %v68
  %v73 = vmul.f32 %v26, %v68
  %v74 = vmul.f32 %v27, %v68
  %v75 = vmul.f32 %v28, %v68
  %v76 = vmul.f32 %v29, %v68
  %v77 = vmul.f32 %v30, %v68
  %v78 = vmul.f32 %v31, %v68
  %v79 = vmul.f32 %v32, %v68
  %v80 = vmul.f32 %v33, %v68
  %v81 = vmul.f32 %v34, %v68
  %v82 = vmul.f32 %v35, %v68
  %v83 = vmul.f32 %v36, %v68
  %v84 = vmul.f32 %v37, %v68
  %v85 = vmul.f32 %v38, %v68
  %v86 = vmul.f32 %v39, %v68
  %v87 = vmul.f32 %v40, %v68
  %v88 = vmul.f32 %v41, %v68
  %v89 = vmul.f32 %v42, %v68
  %v90 = vmul.f32 %v43, %v68
  %v91 = vmul.f32 %v44, %v68
  %v92 = vmul.f32 %v45, %v68
  %v93 = vmul.f32 %v46, %v68
  %v94 = vmul.f32 %v47, %v68
  %v95 = vmul.f32 %v48, %v68
  %v96 = vmul.f32 %v49, %v68
  %v97 = vmul.f32 %v50, %v68
  %v98 = vmul.f32 %v51, %v68
  %v99 = vmul.f32 %v52, %v68
  %v100 = vmul.f32 %v53, %v68
  %v101 = vmul.f32 %v54, %v68
  %v102 = vmul.f32 %v55, %v68
  %v103 = vmul.f32 %v56, %v68
  %v104 = vmul.f32 %v57, %v68
  %v105 = vmul.f32 %v58, %v68
  %v106 = vmul.f32 %v59, %v68
  %v107 = vmul.f32 %v60, %v68
  %v108 = vmul.f32 %v61, %v68
  %v109 = vmul.f32 %v62, %v68
  %v110 = vld [vmem:[%s5] sm:$0x1]
  %v112 = vlaneseq
  %v113 = vshrl.u32 %v112, 7
  %v114 = vsub.s32 0, %v113
  %v115 = vrot.slane %v110, %v114
  %v117 = vadd.f32 %v70, %v115
  %v118 = vadd.f32 %v71, %v115
  %v119 = vadd.f32 %v72, %v115
  %v120 = vadd.f32 %v73, %v115
  %v121 = vadd.f32 %v74, %v115
  %v122 = vadd.f32 %v75, %v115
  %v123 = vadd.f32 %v76, %v115
  %v124 = vadd.f32 %v77, %v115
  %v125 = vadd.f32 %v78, %v115
  %v126 = vadd.f32 %v79, %v115
  %v127 = vadd.f32 %v80, %v115
  %v128 = vadd.f32 %v81, %v115
  %v129 = vadd.f32 %v82, %v115
  %v130 = vadd.f32 %v83, %v115
  %v131 = vadd.f32 %v84, %v115
  %v132 = vadd.f32 %v85, %v115
  %v133 = vadd.f32 %v86, %v115
  %v134 = vadd.f32 %v87, %v115
  %v135 = vadd.f32 %v88, %v115
  %v136 = vadd.f32 %v89, %v115
  %v137 = vadd.f32 %v90, %v115
  %v138 = vadd.f32 %v91, %v115
  %v139 = vadd.f32 %v92, %v115
  %v140 = vadd.f32 %v93, %v115
  %v141 = vadd.f32 %v94, %v115
  %v142 = vadd.f32 %v95, %v115
  %v143 = vadd.f32 %v96, %v115
  %v144 = vadd.f32 %v97, %v115
  %v145 = vadd.f32 %v98, %v115
  %v146 = vadd.f32 %v99, %v115
  %v147 = vadd.f32 %v100, %v115
  %v148 = vadd.f32 %v101, %v115
  %v149 = vadd.f32 %v102, %v115
  %v150 = vadd.f32 %v103, %v115
  %v151 = vadd.f32 %v104, %v115
  %v152 = vadd.f32 %v105, %v115
  %v153 = vadd.f32 %v106, %v115
  %v154 = vadd.f32 %v107, %v115
  %v155 = vadd.f32 %v108, %v115
  %v156 = vadd.f32 %v109, %v115
  %vm157 = vcmp.ge.f32.partialorder %v117, 0.0
  %vm158 = vcmp.ge.f32.partialorder %v118, 0.0
  %vm159 = vcmp.ge.f32.partialorder %v119, 0.0
  %vm160 = vcmp.ge.f32.partialorder %v120, 0.0
  %vm161 = vcmp.ge.f32.partialorder %v121, 0.0
  %vm162 = vcmp.ge.f32.partialorder %v122, 0.0
  %vm163 = vcmp.ge.f32.partialorder %v123, 0.0
  %vm164 = vcmp.ge.f32.partialorder %v124, 0.0
  %vm165 = vcmp.ge.f32.partialorder %v125, 0.0
  %vm166 = vcmp.ge.f32.partialorder %v126, 0.0
  %vm167 = vcmp.ge.f32.partialorder %v127, 0.0
  %vm168 = vcmp.ge.f32.partialorder %v128, 0.0
  %vm169 = vcmp.ge.f32.partialorder %v129, 0.0
  %vm170 = vcmp.ge.f32.partialorder %v130, 0.0
  %vm171 = vcmp.ge.f32.partialorder %v131, 0.0
  %vm172 = vcmp.ge.f32.partialorder %v132, 0.0
  %vm173 = vcmp.ge.f32.partialorder %v133, 0.0
  %vm174 = vcmp.ge.f32.partialorder %v134, 0.0
  %vm175 = vcmp.ge.f32.partialorder %v135, 0.0
  %vm176 = vcmp.ge.f32.partialorder %v136, 0.0
  %vm177 = vcmp.ge.f32.partialorder %v137, 0.0
  %vm178 = vcmp.ge.f32.partialorder %v138, 0.0
  %vm179 = vcmp.ge.f32.partialorder %v139, 0.0
  %vm180 = vcmp.ge.f32.partialorder %v140, 0.0
  %vm181 = vcmp.ge.f32.partialorder %v141, 0.0
  %vm182 = vcmp.ge.f32.partialorder %v142, 0.0
  %vm183 = vcmp.ge.f32.partialorder %v143, 0.0
  %vm184 = vcmp.ge.f32.partialorder %v144, 0.0
  %vm185 = vcmp.ge.f32.partialorder %v145, 0.0
  %vm186 = vcmp.ge.f32.partialorder %v146, 0.0
  %vm187 = vcmp.ge.f32.partialorder %v147, 0.0
  %vm188 = vcmp.ge.f32.partialorder %v148, 0.0
  %vm189 = vcmp.ge.f32.partialorder %v149, 0.0
  %vm190 = vcmp.ge.f32.partialorder %v150, 0.0
  %vm191 = vcmp.ge.f32.partialorder %v151, 0.0
  %vm192 = vcmp.ge.f32.partialorder %v152, 0.0
  %vm193 = vcmp.ge.f32.partialorder %v153, 0.0
  %vm194 = vcmp.ge.f32.partialorder %v154, 0.0
  %vm195 = vcmp.ge.f32.partialorder %v155, 0.0
  %vm196 = vcmp.ge.f32.partialorder %v156, 0.0
  %v197 = vmul.f32 %v117, 0.2
  %v198 = vmul.f32 %v118, 0.2
  %v199 = vmul.f32 %v119, 0.2
  %v200 = vmul.f32 %v120, 0.2
  %v201 = vmul.f32 %v121, 0.2
  %v202 = vmul.f32 %v122, 0.2
  %v203 = vmul.f32 %v123, 0.2
  %v204 = vmul.f32 %v124, 0.2
  %v205 = vmul.f32 %v125, 0.2
  %v206 = vmul.f32 %v126, 0.2
  %v207 = vmul.f32 %v127, 0.2
  %v208 = vmul.f32 %v128, 0.2
  %v209 = vmul.f32 %v129, 0.2
  %v210 = vmul.f32 %v130, 0.2
  %v211 = vmul.f32 %v131, 0.2
  %v212 = vmul.f32 %v132, 0.2
  %v213 = vmul.f32 %v133, 0.2
  %v214 = vmul.f32 %v134, 0.2
  %v215 = vmul.f32 %v135, 0.2
  %v216 = vmul.f32 %v136, 0.2
  %v217 = vmul.f32 %v137, 0.2
  %v218 = vmul.f32 %v138, 0.2
  %v219 = vmul.f32 %v139, 0.2
  %v220 = vmul.f32 %v140, 0.2
  %v221 = vmul.f32 %v141, 0.2
  %v222 = vmul.f32 %v142, 0.2
  %v223 = vmul.f32 %v143, 0.2
  %v224 = vmul.f32 %v144, 0.2
  %v225 = vmul.f32 %v145, 0.2
  %v226 = vmul.f32 %v146, 0.2
  %v227 = vmul.f32 %v147, 0.2
  %v228 = vmul.f32 %v148, 0.2
  %v229 = vmul.f32 %v149, 0.2
  %v230 = vmul.f32 %v150, 0.2
  %v231 = vmul.f32 %v151, 0.2
  %v232 = vmul.f32 %v152, 0.2
  %v233 = vmul.f32 %v153, 0.2
  %v234 = vmul.f32 %v154, 0.2
  %v235 = vmul.f32 %v155, 0.2
  %v236 = vmul.f32 %v156, 0.2
  %v237 = vsel %vm157, %v117, %v197
  %v238 = vsel %vm158, %v118, %v198
  %v239 = vsel %vm159, %v119, %v199
  %v240 = vsel %vm160, %v120, %v200
  %v241 = vsel %vm161, %v121, %v201
  %v242 = vsel %vm162, %v122, %v202
  %v243 = vsel %vm163, %v123, %v203
  %v244 = vsel %vm164, %v124, %v204
  %v245 = vsel %vm165, %v125, %v205
  %v246 = vsel %vm166, %v126, %v206
  %v247 = vsel %vm167, %v127, %v207
  %v248 = vsel %vm168, %v128, %v208
  %v249 = vsel %vm169, %v129, %v209
  %v250 = vsel %vm170, %v130, %v210
  %v251 = vsel %vm171, %v131, %v211
  %v252 = vsel %vm172, %v132, %v212
  %v253 = vsel %vm173, %v133, %v213
  %v254 = vsel %vm174, %v134, %v214
  %v255 = vsel %vm175, %v135, %v215
  %v256 = vsel %vm176, %v136, %v216
  %v257 = vsel %vm177, %v137, %v217
  %v258 = vsel %vm178, %v138, %v218
  %v259 = vsel %vm179, %v139, %v219
  %v260 = vsel %vm180, %v140, %v220
  %v261 = vsel %vm181, %v141, %v221
  %v262 = vsel %vm182, %v142, %v222
  %v263 = vsel %vm183, %v143, %v223
  %v264 = vsel %vm184, %v144, %v224
  %v265 = vsel %vm185, %v145, %v225
  %v266 = vsel %vm186, %v146, %v226
  %v267 = vsel %vm187, %v147, %v227
  %v268 = vsel %vm188, %v148, %v228
  %v269 = vsel %vm189, %v149, %v229
  %v270 = vsel %vm190, %v150, %v230
  %v271 = vsel %vm191, %v151, %v231
  %v272 = vsel %vm192, %v152, %v232
  %v273 = vsel %vm193, %v153, %v233
  %v274 = vsel %vm194, %v154, %v234
  %v275 = vsel %vm195, %v155, %v235
  %v276 = vsel %vm196, %v156, %v236
  %v277 = vld [vmem:[%s1] sm:$0xf]
  %v278 = vld [vmem:[%s1 + $0x4] sm:$0xf]
  %v279 = vld [vmem:[%s1 + $0x8] sm:$0xf]
  %v280 = vld [vmem:[%s1 + $0xc] sm:$0xf]
  %v281 = vld [vmem:[%s1 + $0x10] sm:$0xf]
  %v282 = vld [vmem:[%s1 + $0x14] sm:$0xf]
  %v283 = vld [vmem:[%s1 + $0x18] sm:$0xf]
  %v284 = vld [vmem:[%s1 + $0x1c] sm:$0xf]
  %v285 = vld [vmem:[%s1 + $0x20] sm:$0xf]
  %v286 = vld [vmem:[%s1 + $0x24] sm:$0xf]
  %v287 = vld [vmem:[%s1 + $0x28] sm:$0xf]
  %v288 = vld [vmem:[%s1 + $0x2c] sm:$0xf]
  %v289 = vld [vmem:[%s1 + $0x30] sm:$0xf]
  %v290 = vld [vmem:[%s1 + $0x34] sm:$0xf]
  %v291 = vld [vmem:[%s1 + $0x38] sm:$0xf]
  %v292 = vld [vmem:[%s1 + $0x3c] sm:$0xf]
  %v293 = vld [vmem:[%s1 + $0x40] sm:$0xf]
  %v294 = vld [vmem:[%s1 + $0x44] sm:$0xf]
  %v295 = vld [vmem:[%s1 + $0x48] sm:$0xf]
  %v296 = vld [vmem:[%s1 + $0x4c] sm:$0xf]
  %v297 = vld [vmem:[%s1 + $0x50] sm:$0xf]
  %v298 = vld [vmem:[%s1 + $0x54] sm:$0xf]
  %v299 = vld [vmem:[%s1 + $0x58] sm:$0xf]
  %v300 = vld [vmem:[%s1 + $0x5c] sm:$0xf]
  %v301 = vld [vmem:[%s1 + $0x60] sm:$0xf]
  %v302 = vld [vmem:[%s1 + $0x64] sm:$0xf]
  %v303 = vld [vmem:[%s1 + $0x68] sm:$0xf]
  %v304 = vld [vmem:[%s1 + $0x6c] sm:$0xf]
  %v305 = vld [vmem:[%s1 + $0x70] sm:$0xf]
  %v306 = vld [vmem:[%s1 + $0x74] sm:$0xf]
  %v307 = vld [vmem:[%s1 + $0x78] sm:$0xf]
  %v308 = vld [vmem:[%s1 + $0x7c] sm:$0xf]
  %v309 = vld [vmem:[%s1 + $0x80] sm:$0xf]
  %v310 = vld [vmem:[%s1 + $0x84] sm:$0xf]
  %v311 = vld [vmem:[%s1 + $0x88] sm:$0xf]
  %v312 = vld [vmem:[%s1 + $0x8c] sm:$0xf]
  %v313 = vld [vmem:[%s1 + $0x90] sm:$0xf]
  %v314 = vld [vmem:[%s1 + $0x94] sm:$0xf]
  %v315 = vld [vmem:[%s1 + $0x98] sm:$0xf]
  %v316 = vld [vmem:[%s1 + $0x9c] sm:$0xf]
  %v317 = vmul.f32 %v277, %v68
  %v318 = vmul.f32 %v278, %v68
  %v319 = vmul.f32 %v279, %v68
  %v320 = vmul.f32 %v280, %v68
  %v321 = vmul.f32 %v281, %v68
  %v322 = vmul.f32 %v282, %v68
  %v323 = vmul.f32 %v283, %v68
  %v324 = vmul.f32 %v284, %v68
  %v325 = vmul.f32 %v285, %v68
  %v326 = vmul.f32 %v286, %v68
  %v327 = vmul.f32 %v287, %v68
  %v328 = vmul.f32 %v288, %v68
  %v329 = vmul.f32 %v289, %v68
  %v330 = vmul.f32 %v290, %v68
  %v331 = vmul.f32 %v291, %v68
  %v332 = vmul.f32 %v292, %v68
  %v333 = vmul.f32 %v293, %v68
  %v334 = vmul.f32 %v294, %v68
  %v335 = vmul.f32 %v295, %v68
  %v336 = vmul.f32 %v296, %v68
  %v337 = vmul.f32 %v297, %v68
  %v338 = vmul.f32 %v298, %v68
  %v339 = vmul.f32 %v299, %v68
  %v340 = vmul.f32 %v300, %v68
  %v341 = vmul.f32 %v301, %v68
  %v342 = vmul.f32 %v302, %v68
  %v343 = vmul.f32 %v303, %v68
  %v344 = vmul.f32 %v304, %v68
  %v345 = vmul.f32 %v305, %v68
  %v346 = vmul.f32 %v306, %v68
  %v347 = vmul.f32 %v307, %v68
  %v348 = vmul.f32 %v308, %v68
  %v349 = vmul.f32 %v309, %v68
  %v350 = vmul.f32 %v310, %v68
  %v351 = vmul.f32 %v311, %v68
  %v352 = vmul.f32 %v312, %v68
  %v353 = vmul.f32 %v313, %v68
  %v354 = vmul.f32 %v314, %v68
  %v355 = vmul.f32 %v315, %v68
  %v356 = vmul.f32 %v316, %v68
  %v357 = vadd.f32 %v317, %v115
  %v358 = vadd.f32 %v318, %v115
  %v359 = vadd.f32 %v319, %v115
  %v360 = vadd.f32 %v320, %v115
  %v361 = vadd.f32 %v321, %v115
  %v362 = vadd.f32 %v322, %v115
  %v363 = vadd.f32 %v323, %v115
  %v364 = vadd.f32 %v324, %v115
  %v365 = vadd.f32 %v325, %v115
  %v366 = vadd.f32 %v326, %v115
  %v367 = vadd.f32 %v327, %v115
  %v368 = vadd.f32 %v328, %v115
  %v369 = vadd.f32 %v329, %v115
  %v370 = vadd.f32 %v330, %v115
  %v371 = vadd.f32 %v331, %v115
  %v372 = vadd.f32 %v332, %v115
  %v373 = vadd.f32 %v333, %v115
  %v374 = vadd.f32 %v334, %v115
  %v375 = vadd.f32 %v335, %v115
  %v376 = vadd.f32 %v336, %v115
  %v377 = vadd.f32 %v337, %v115
  %v378 = vadd.f32 %v338, %v115
  %v379 = vadd.f32 %v339, %v115
  %v380 = vadd.f32 %v340, %v115
  %v381 = vadd.f32 %v341, %v115
  %v382 = vadd.f32 %v342, %v115
  %v383 = vadd.f32 %v343, %v115
  %v384 = vadd.f32 %v344, %v115
  %v385 = vadd.f32 %v345, %v115
  %v386 = vadd.f32 %v346, %v115
  %v387 = vadd.f32 %v347, %v115
  %v388 = vadd.f32 %v348, %v115
  %v389 = vadd.f32 %v349, %v115
  %v390 = vadd.f32 %v350, %v115
  %v391 = vadd.f32 %v351, %v115
  %v392 = vadd.f32 %v352, %v115
  %v393 = vadd.f32 %v353, %v115
  %v394 = vadd.f32 %v354, %v115
  %v395 = vadd.f32 %v355, %v115
  %v396 = vadd.f32 %v356, %v115
  %vm397 = vcmp.ge.f32.partialorder %v357, 0.0
  %vm398 = vcmp.ge.f32.partialorder %v358, 0.0
  %vm399 = vcmp.ge.f32.partialorder %v359, 0.0
  %vm400 = vcmp.ge.f32.partialorder %v360, 0.0
  %vm401 = vcmp.ge.f32.partialorder %v361, 0.0
  %vm402 = vcmp.ge.f32.partialorder %v362, 0.0
  %vm403 = vcmp.ge.f32.partialorder %v363, 0.0
  %vm404 = vcmp.ge.f32.partialorder %v364, 0.0
  %vm405 = vcmp.ge.f32.partialorder %v365, 0.0
  %vm406 = vcmp.ge.f32.partialorder %v366, 0.0
  %vm407 = vcmp.ge.f32.partialorder %v367, 0.0
  %vm408 = vcmp.ge.f32.partialorder %v368, 0.0
  %vm409 = vcmp.ge.f32.partialorder %v369, 0.0
  %vm410 = vcmp.ge.f32.partialorder %v370, 0.0
  %vm411 = vcmp.ge.f32.partialorder %v371, 0.0
  %vm412 = vcmp.ge.f32.partialorder %v372, 0.0
  %vm413 = vcmp.ge.f32.partialorder %v373, 0.0
  %vm414 = vcmp.ge.f32.partialorder %v374, 0.0
  %vm415 = vcmp.ge.f32.partialorder %v375, 0.0
  %vm416 = vcmp.ge.f32.partialorder %v376, 0.0
  %vm417 = vcmp.ge.f32.partialorder %v377, 0.0
  %vm418 = vcmp.ge.f32.partialorder %v378, 0.0
  %vm419 = vcmp.ge.f32.partialorder %v379, 0.0
  %vm420 = vcmp.ge.f32.partialorder %v380, 0.0
  %vm421 = vcmp.ge.f32.partialorder %v381, 0.0
  %vm422 = vcmp.ge.f32.partialorder %v382, 0.0
  %vm423 = vcmp.ge.f32.partialorder %v383, 0.0
  %vm424 = vcmp.ge.f32.partialorder %v384, 0.0
  %vm425 = vcmp.ge.f32.partialorder %v385, 0.0
  %vm426 = vcmp.ge.f32.partialorder %v386, 0.0
  %vm427 = vcmp.ge.f32.partialorder %v387, 0.0
  %vm428 = vcmp.ge.f32.partialorder %v388, 0.0
  %vm429 = vcmp.ge.f32.partialorder %v389, 0.0
  %vm430 = vcmp.ge.f32.partialorder %v390, 0.0
  %vm431 = vcmp.ge.f32.partialorder %v391, 0.0
  %vm432 = vcmp.ge.f32.partialorder %v392, 0.0
  %vm433 = vcmp.ge.f32.partialorder %v393, 0.0
  %vm434 = vcmp.ge.f32.partialorder %v394, 0.0
  %vm435 = vcmp.ge.f32.partialorder %v395, 0.0
  %vm436 = vcmp.ge.f32.partialorder %v396, 0.0
  %v437 = vmul.f32 %v357, 0.2
  %v438 = vmul.f32 %v358, 0.2
  %v439 = vmul.f32 %v359, 0.2
  %v440 = vmul.f32 %v360, 0.2
  %v441 = vmul.f32 %v361, 0.2
  %v442 = vmul.f32 %v362, 0.2
  %v443 = vmul.f32 %v363, 0.2
  %v444 = vmul.f32 %v364, 0.2
  %v445 = vmul.f32 %v365, 0.2
  %v446 = vmul.f32 %v366, 0.2
  %v447 = vmul.f32 %v367, 0.2
  %v448 = vmul.f32 %v368, 0.2
  %v449 = vmul.f32 %v369, 0.2
  %v450 = vmul.f32 %v370, 0.2
  %v451 = vmul.f32 %v371, 0.2
  %v452 = vmul.f32 %v372, 0.2
  %v453 = vmul.f32 %v373, 0.2
  %v454 = vmul.f32 %v374, 0.2
  %v455 = vmul.f32 %v375, 0.2
  %v456 = vmul.f32 %v376, 0.2
  %v457 = vmul.f32 %v377, 0.2
  %v458 = vmul.f32 %v378, 0.2
  %v459 = vmul.f32 %v379, 0.2
  %v460 = vmul.f32 %v380, 0.2
  %v461 = vmul.f32 %v381, 0.2
  %v462 = vmul.f32 %v382, 0.2
  %v463 = vmul.f32 %v383, 0.2
  %v464 = vmul.f32 %v384, 0.2
  %v465 = vmul.f32 %v385, 0.2
  %v466 = vmul.f32 %v386, 0.2
  %v467 = vmul.f32 %v387, 0.2
  %v468 = vmul.f32 %v388, 0.2
  %v469 = vmul.f32 %v389, 0.2
  %v470 = vmul.f32 %v390, 0.2
  %v471 = vmul.f32 %v391, 0.2
  %v472 = vmul.f32 %v392, 0.2
  %v473 = vmul.f32 %v393, 0.2
  %v474 = vmul.f32 %v394, 0.2
  %v475 = vmul.f32 %v395, 0.2
  %v476 = vmul.f32 %v396, 0.2
  %v477 = vsel %vm397, %v357, %v437
  %v478 = vsel %vm398, %v358, %v438
  %v479 = vsel %vm399, %v359, %v439
  %v480 = vsel %vm400, %v360, %v440
  %v481 = vsel %vm401, %v361, %v441
  %v482 = vsel %vm402, %v362, %v442
  %v483 = vsel %vm403, %v363, %v443
  %v484 = vsel %vm404, %v364, %v444
  %v485 = vsel %vm405, %v365, %v445
  %v486 = vsel %vm406, %v366, %v446
  %v487 = vsel %vm407, %v367, %v447
  %v488 = vsel %vm408, %v368, %v448
  %v489 = vsel %vm409, %v369, %v449
  %v490 = vsel %vm410, %v370, %v450
  %v491 = vsel %vm411, %v371, %v451
  %v492 = vsel %vm412, %v372, %v452
  %v493 = vsel %vm413, %v373, %v453
  %v494 = vsel %vm414, %v374, %v454
  %v495 = vsel %vm415, %v375, %v455
  %v496 = vsel %vm416, %v376, %v456
  %v497 = vsel %vm417, %v377, %v457
  %v498 = vsel %vm418, %v378, %v458
  %v499 = vsel %vm419, %v379, %v459
  %v500 = vsel %vm420, %v380, %v460
  %v501 = vsel %vm421, %v381, %v461
  %v502 = vsel %vm422, %v382, %v462
  %v503 = vsel %vm423, %v383, %v463
  %v504 = vsel %vm424, %v384, %v464
  %v505 = vsel %vm425, %v385, %v465
  %v506 = vsel %vm426, %v386, %v466
  %v507 = vsel %vm427, %v387, %v467
  %v508 = vsel %vm428, %v388, %v468
  %v509 = vsel %vm429, %v389, %v469
  %v510 = vsel %vm430, %v390, %v470
  %v511 = vsel %vm431, %v391, %v471
  %v512 = vsel %vm432, %v392, %v472
  %v513 = vsel %vm433, %v393, %v473
  %v514 = vsel %vm434, %v394, %v474
  %v515 = vsel %vm435, %v395, %v475
  %v516 = vsel %vm436, %v396, %v476
  %v517 = vld [vmem:[%s2] sm:$0x1f]
  %v518 = vld [vmem:[%s2 + $0x8] sm:$0x1f]
  %v519 = vld [vmem:[%s2 + $0x10] sm:$0x1f]
  %v520 = vld [vmem:[%s2 + $0x18] sm:$0x1f]
  %v521 = vld [vmem:[%s2 + $0x20] sm:$0x1f]
  %v522 = vld [vmem:[%s2 + $0x28] sm:$0x1f]
  %v523 = vld [vmem:[%s2 + $0x30] sm:$0x1f]
  %v524 = vld [vmem:[%s2 + $0x38] sm:$0x1f]
  %v525 = vld [vmem:[%s2 + $0x40] sm:$0x1f]
  %v526 = vld [vmem:[%s2 + $0x48] sm:$0x1f]
  %v527 = vld [vmem:[%s2 + $0x50] sm:$0x1f]
  %v528 = vld [vmem:[%s2 + $0x58] sm:$0x1f]
  %v529 = vld [vmem:[%s2 + $0x60] sm:$0x1f]
  %v530 = vld [vmem:[%s2 + $0x68] sm:$0x1f]
  %v531 = vld [vmem:[%s2 + $0x70] sm:$0x1f]
  %v532 = vld [vmem:[%s2 + $0x78] sm:$0x1f]
  %v533 = vld [vmem:[%s2 + $0x80] sm:$0x1f]
  %v534 = vld [vmem:[%s2 + $0x88] sm:$0x1f]
  %v535 = vld [vmem:[%s2 + $0x90] sm:$0x1f]
  %v536 = vld [vmem:[%s2 + $0x98] sm:$0x1f]
  %v537 = vld [vmem:[%s2 + $0xa0] sm:$0x1f]
  %v538 = vld [vmem:[%s2 + $0xa8] sm:$0x1f]
  %v539 = vld [vmem:[%s2 + $0xb0] sm:$0x1f]
  %v540 = vld [vmem:[%s2 + $0xb8] sm:$0x1f]
  %v541 = vld [vmem:[%s2 + $0xc0] sm:$0x1f]
  %v542 = vld [vmem:[%s2 + $0xc8] sm:$0x1f]
  %v543 = vld [vmem:[%s2 + $0xd0] sm:$0x1f]
  %v544 = vld [vmem:[%s2 + $0xd8] sm:$0x1f]
  %v545 = vld [vmem:[%s2 + $0xe0] sm:$0x1f]
  %v546 = vld [vmem:[%s2 + $0xe8] sm:$0x1f]
  %v547 = vld [vmem:[%s2 + $0xf0] sm:$0x1f]
  %v548 = vld [vmem:[%s2 + $0xf8] sm:$0x1f]
  %v549 = vmul.f32 %v517, %v68
  %v550 = vmul.f32 %v518, %v68
  %v551 = vmul.f32 %v519, %v68
  %v552 = vmul.f32 %v520, %v68
  %v553 = vmul.f32 %v521, %v68
  %v554 = vmul.f32 %v522, %v68
  %v555 = vmul.f32 %v523, %v68
  %v556 = vmul.f32 %v524, %v68
  %v557 = vmul.f32 %v525, %v68
  %v558 = vmul.f32 %v526, %v68
  %v559 = vmul.f32 %v527, %v68
  %v560 = vmul.f32 %v528, %v68
  %v561 = vmul.f32 %v529, %v68
  %v562 = vmul.f32 %v530, %v68
  %v563 = vmul.f32 %v531, %v68
  %v564 = vmul.f32 %v532, %v68
  %v565 = vmul.f32 %v533, %v68
  %v566 = vmul.f32 %v534, %v68
  %v567 = vmul.f32 %v535, %v68
  %v568 = vmul.f32 %v536, %v68
  %v569 = vmul.f32 %v537, %v68
  %v570 = vmul.f32 %v538, %v68
  %v571 = vmul.f32 %v539, %v68
  %v572 = vmul.f32 %v540, %v68
  %v573 = vmul.f32 %v541, %v68
  %v574 = vmul.f32 %v542, %v68
  %v575 = vmul.f32 %v543, %v68
  %v576 = vmul.f32 %v544, %v68
  %v577 = vmul.f32 %v545, %v68
  %v578 = vmul.f32 %v546, %v68
  %v579 = vmul.f32 %v547, %v68
  %v580 = vmul.f32 %v548, %v68
  %v581 = vadd.f32 %v549, %v115
  %v582 = vadd.f32 %v550, %v115
  %v583 = vadd.f32 %v551, %v115
  %v584 = vadd.f32 %v552, %v115
  %v585 = vadd.f32 %v553, %v115
  %v586 = vadd.f32 %v554, %v115
  %v587 = vadd.f32 %v555, %v115
  %v588 = vadd.f32 %v556, %v115
  %v589 = vadd.f32 %v557, %v115
  %v590 = vadd.f32 %v558, %v115
  %v591 = vadd.f32 %v559, %v115
  %v592 = vadd.f32 %v560, %v115
  %v593 = vadd.f32 %v561, %v115
  %v594 = vadd.f32 %v562, %v115
  %v595 = vadd.f32 %v563, %v115
  %v596 = vadd.f32 %v564, %v115
  %v597 = vadd.f32 %v565, %v115
  %v598 = vadd.f32 %v566, %v115
  %v599 = vadd.f32 %v567, %v115
  %v600 = vadd.f32 %v568, %v115
  %v601 = vadd.f32 %v569, %v115
  %v602 = vadd.f32 %v570, %v115
  %v603 = vadd.f32 %v571, %v115
  %v604 = vadd.f32 %v572, %v115
  %v605 = vadd.f32 %v573, %v115
  %v606 = vadd.f32 %v574, %v115
  %v607 = vadd.f32 %v575, %v115
  %v608 = vadd.f32 %v576, %v115
  %v609 = vadd.f32 %v577, %v115
  %v610 = vadd.f32 %v578, %v115
  %v611 = vadd.f32 %v579, %v115
  %v612 = vadd.f32 %v580, %v115
  %vm613 = vcmp.ge.f32.partialorder %v581, 0.0
  %vm614 = vcmp.ge.f32.partialorder %v582, 0.0
  %vm615 = vcmp.ge.f32.partialorder %v583, 0.0
  %vm616 = vcmp.ge.f32.partialorder %v584, 0.0
  %vm617 = vcmp.ge.f32.partialorder %v585, 0.0
  %vm618 = vcmp.ge.f32.partialorder %v586, 0.0
  %vm619 = vcmp.ge.f32.partialorder %v587, 0.0
  %vm620 = vcmp.ge.f32.partialorder %v588, 0.0
  %vm621 = vcmp.ge.f32.partialorder %v589, 0.0
  %vm622 = vcmp.ge.f32.partialorder %v590, 0.0
  %vm623 = vcmp.ge.f32.partialorder %v591, 0.0
  %vm624 = vcmp.ge.f32.partialorder %v592, 0.0
  %vm625 = vcmp.ge.f32.partialorder %v593, 0.0
  %vm626 = vcmp.ge.f32.partialorder %v594, 0.0
  %vm627 = vcmp.ge.f32.partialorder %v595, 0.0
  %vm628 = vcmp.ge.f32.partialorder %v596, 0.0
  %vm629 = vcmp.ge.f32.partialorder %v597, 0.0
  %vm630 = vcmp.ge.f32.partialorder %v598, 0.0
  %vm631 = vcmp.ge.f32.partialorder %v599, 0.0
  %vm632 = vcmp.ge.f32.partialorder %v600, 0.0
  %vm633 = vcmp.ge.f32.partialorder %v601, 0.0
  %vm634 = vcmp.ge.f32.partialorder %v602, 0.0
  %vm635 = vcmp.ge.f32.partialorder %v603, 0.0
  %vm636 = vcmp.ge.f32.partialorder %v604, 0.0
  %vm637 = vcmp.ge.f32.partialorder %v605, 0.0
  %vm638 = vcmp.ge.f32.partialorder %v606, 0.0
  %vm639 = vcmp.ge.f32.partialorder %v607, 0.0
  %vm640 = vcmp.ge.f32.partialorder %v608, 0.0
  %vm641 = vcmp.ge.f32.partialorder %v609, 0.0
  %vm642 = vcmp.ge.f32.partialorder %v610, 0.0
  %vm643 = vcmp.ge.f32.partialorder %v611, 0.0
  %vm644 = vcmp.ge.f32.partialorder %v612, 0.0
  %v645 = vmul.f32 %v581, 0.2
  %v646 = vmul.f32 %v582, 0.2
  %v647 = vmul.f32 %v583, 0.2
  %v648 = vmul.f32 %v584, 0.2
  %v649 = vmul.f32 %v585, 0.2
  %v650 = vmul.f32 %v586, 0.2
  %v651 = vmul.f32 %v587, 0.2
  %v652 = vmul.f32 %v588, 0.2
  %v653 = vmul.f32 %v589, 0.2
  %v654 = vmul.f32 %v590, 0.2
  %v655 = vmul.f32 %v591, 0.2
  %v656 = vmul.f32 %v592, 0.2
  %v657 = vmul.f32 %v593, 0.2
  %v658 = vmul.f32 %v594, 0.2
  %v659 = vmul.f32 %v595, 0.2
  %v660 = vmul.f32 %v596, 0.2
  %v661 = vmul.f32 %v597, 0.2
  %v662 = vmul.f32 %v598, 0.2
  %v663 = vmul.f32 %v599, 0.2
  %v664 = vmul.f32 %v600, 0.2
  %v665 = vmul.f32 %v601, 0.2
  %v666 = vmul.f32 %v602, 0.2
  %v667 = vmul.f32 %v603, 0.2
  %v668 = vmul.f32 %v604, 0.2
  %v669 = vmul.f32 %v605, 0.2
  %v670 = vmul.f32 %v606, 0.2
  %v671 = vmul.f32 %v607, 0.2
  %v672 = vmul.f32 %v608, 0.2
  %v673 = vmul.f32 %v609, 0.2
  %v674 = vmul.f32 %v610, 0.2
  %v675 = vmul.f32 %v611, 0.2
  %v676 = vmul.f32 %v612, 0.2
  %v677 = vsel %vm613, %v581, %v645
  %v678 = vsel %vm614, %v582, %v646
  %v679 = vsel %vm615, %v583, %v647
  %v680 = vsel %vm616, %v584, %v648
  %v681 = vsel %vm617, %v585, %v649
  %v682 = vsel %vm618, %v586, %v650
  %v683 = vsel %vm619, %v587, %v651
  %v684 = vsel %vm620, %v588, %v652
  %v685 = vsel %vm621, %v589, %v653
  %v686 = vsel %vm622, %v590, %v654
  %v687 = vsel %vm623, %v591, %v655
  %v688 = vsel %vm624, %v592, %v656
  %v689 = vsel %vm625, %v593, %v657
  %v690 = vsel %vm626, %v594, %v658
  %v691 = vsel %vm627, %v595, %v659
  %v692 = vsel %vm628, %v596, %v660
  %v693 = vsel %vm629, %v597, %v661
  %v694 = vsel %vm630, %v598, %v662
  %v695 = vsel %vm631, %v599, %v663
  %v696 = vsel %vm632, %v600, %v664
  %v697 = vsel %vm633, %v601, %v665
  %v698 = vsel %vm634, %v602, %v666
  %v699 = vsel %vm635, %v603, %v667
  %v700 = vsel %vm636, %v604, %v668
  %v701 = vsel %vm637, %v605, %v669
  %v702 = vsel %vm638, %v606, %v670
  %v703 = vsel %vm639, %v607, %v671
  %v704 = vsel %vm640, %v608, %v672
  %v705 = vsel %vm641, %v609, %v673
  %v706 = vsel %vm642, %v610, %v674
  %v707 = vsel %vm643, %v611, %v675
  %v708 = vsel %vm644, %v612, %v676
  %v709 = vld [vmem:[%s3] sm:$0xf]
  %v710 = vld [vmem:[%s3 + $0x4] sm:$0xf]
  %v711 = vld [vmem:[%s3 + $0x8] sm:$0xf]
  %v712 = vld [vmem:[%s3 + $0xc] sm:$0xf]
  %v713 = vld [vmem:[%s3 + $0x10] sm:$0xf]
  %v714 = vld [vmem:[%s3 + $0x14] sm:$0xf]
  %v715 = vld [vmem:[%s3 + $0x18] sm:$0xf]
  %v716 = vld [vmem:[%s3 + $0x1c] sm:$0xf]
  %v717 = vld [vmem:[%s3 + $0x20] sm:$0xf]
  %v718 = vld [vmem:[%s3 + $0x24] sm:$0xf]
  %v719 = vld [vmem:[%s3 + $0x28] sm:$0xf]
  %v720 = vld [vmem:[%s3 + $0x2c] sm:$0xf]
  %v721 = vld [vmem:[%s3 + $0x30] sm:$0xf]
  %v722 = vld [vmem:[%s3 + $0x34] sm:$0xf]
  %v723 = vld [vmem:[%s3 + $0x38] sm:$0xf]
  %v724 = vld [vmem:[%s3 + $0x3c] sm:$0xf]
  %v725 = vld [vmem:[%s3 + $0x40] sm:$0xf]
  %v726 = vld [vmem:[%s3 + $0x44] sm:$0xf]
  %v727 = vld [vmem:[%s3 + $0x48] sm:$0xf]
  %v728 = vld [vmem:[%s3 + $0x4c] sm:$0xf]
  %v729 = vld [vmem:[%s3 + $0x50] sm:$0xf]
  %v730 = vld [vmem:[%s3 + $0x54] sm:$0xf]
  %v731 = vld [vmem:[%s3 + $0x58] sm:$0xf]
  %v732 = vld [vmem:[%s3 + $0x5c] sm:$0xf]
  %v733 = vld [vmem:[%s3 + $0x60] sm:$0xf]
  %v734 = vld [vmem:[%s3 + $0x64] sm:$0xf]
  %v735 = vld [vmem:[%s3 + $0x68] sm:$0xf]
  %v736 = vld [vmem:[%s3 + $0x6c] sm:$0xf]
  %v737 = vld [vmem:[%s3 + $0x70] sm:$0xf]
  %v738 = vld [vmem:[%s3 + $0x74] sm:$0xf]
  %v739 = vld [vmem:[%s3 + $0x78] sm:$0xf]
  %v740 = vld [vmem:[%s3 + $0x7c] sm:$0xf]
  %v741 = vmul.f32 %v709, %v68
  %v742 = vmul.f32 %v710, %v68
  %v743 = vmul.f32 %v711, %v68
  %v744 = vmul.f32 %v712, %v68
  %v745 = vmul.f32 %v713, %v68
  %v746 = vmul.f32 %v714, %v68
  %v747 = vmul.f32 %v715, %v68
  %v748 = vmul.f32 %v716, %v68
  %v749 = vmul.f32 %v717, %v68
  %v750 = vmul.f32 %v718, %v68
  %v751 = vmul.f32 %v719, %v68
  %v752 = vmul.f32 %v720, %v68
  %v753 = vmul.f32 %v721, %v68
  %v754 = vmul.f32 %v722, %v68
  %v755 = vmul.f32 %v723, %v68
  %v756 = vmul.f32 %v724, %v68
  %v757 = vmul.f32 %v725, %v68
  %v758 = vmul.f32 %v726, %v68
  %v759 = vmul.f32 %v727, %v68
  %v760 = vmul.f32 %v728, %v68
  %v761 = vmul.f32 %v729, %v68
  %v762 = vmul.f32 %v730, %v68
  %v763 = vmul.f32 %v731, %v68
  %v764 = vmul.f32 %v732, %v68
  %v765 = vmul.f32 %v733, %v68
  %v766 = vmul.f32 %v734, %v68
  %v767 = vmul.f32 %v735, %v68
  %v768 = vmul.f32 %v736, %v68
  %v769 = vmul.f32 %v737, %v68
  %v770 = vmul.f32 %v738, %v68
  %v771 = vmul.f32 %v739, %v68
  %v772 = vmul.f32 %v740, %v68
  %v773 = vadd.f32 %v741, %v115
  %v774 = vadd.f32 %v742, %v115
  %v775 = vadd.f32 %v743, %v115
  %v776 = vadd.f32 %v744, %v115
  %v777 = vadd.f32 %v745, %v115
  %v778 = vadd.f32 %v746, %v115
  %v779 = vadd.f32 %v747, %v115
  %v780 = vadd.f32 %v748, %v115
  %v781 = vadd.f32 %v749, %v115
  %v782 = vadd.f32 %v750, %v115
  %v783 = vadd.f32 %v751, %v115
  %v784 = vadd.f32 %v752, %v115
  %v785 = vadd.f32 %v753, %v115
  %v786 = vadd.f32 %v754, %v115
  %v787 = vadd.f32 %v755, %v115
  %v788 = vadd.f32 %v756, %v115
  %v789 = vadd.f32 %v757, %v115
  %v790 = vadd.f32 %v758, %v115
  %v791 = vadd.f32 %v759, %v115
  %v792 = vadd.f32 %v760, %v115
  %v793 = vadd.f32 %v761, %v115
  %v794 = vadd.f32 %v762, %v115
  %v795 = vadd.f32 %v763, %v115
  %v796 = vadd.f32 %v764, %v115
  %v797 = vadd.f32 %v765, %v115
  %v798 = vadd.f32 %v766, %v115
  %v799 = vadd.f32 %v767, %v115
  %v800 = vadd.f32 %v768, %v115
  %v801 = vadd.f32 %v769, %v115
  %v802 = vadd.f32 %v770, %v115
  %v803 = vadd.f32 %v771, %v115
  %v804 = vadd.f32 %v772, %v115
  %vm805 = vcmp.ge.f32.partialorder %v773, 0.0
  %vm806 = vcmp.ge.f32.partialorder %v774, 0.0
  %vm807 = vcmp.ge.f32.partialorder %v775, 0.0
  %vm808 = vcmp.ge.f32.partialorder %v776, 0.0
  %vm809 = vcmp.ge.f32.partialorder %v777, 0.0
  %vm810 = vcmp.ge.f32.partialorder %v778, 0.0
  %vm811 = vcmp.ge.f32.partialorder %v779, 0.0
  %vm812 = vcmp.ge.f32.partialorder %v780, 0.0
  %vm813 = vcmp.ge.f32.partialorder %v781, 0.0
  %vm814 = vcmp.ge.f32.partialorder %v782, 0.0
  %vm815 = vcmp.ge.f32.partialorder %v783, 0.0
  %vm816 = vcmp.ge.f32.partialorder %v784, 0.0
  %vm817 = vcmp.ge.f32.partialorder %v785, 0.0
  %vm818 = vcmp.ge.f32.partialorder %v786, 0.0
  %vm819 = vcmp.ge.f32.partialorder %v787, 0.0
  %vm820 = vcmp.ge.f32.partialorder %v788, 0.0
  %vm821 = vcmp.ge.f32.partialorder %v789, 0.0
  %vm822 = vcmp.ge.f32.partialorder %v790, 0.0
  %vm823 = vcmp.ge.f32.partialorder %v791, 0.0
  %vm824 = vcmp.ge.f32.partialorder %v792, 0.0
  %vm825 = vcmp.ge.f32.partialorder %v793, 0.0
  %vm826 = vcmp.ge.f32.partialorder %v794, 0.0
  %vm827 = vcmp.ge.f32.partialorder %v795, 0.0
  %vm828 = vcmp.ge.f32.partialorder %v796, 0.0
  %vm829 = vcmp.ge.f32.partialorder %v797, 0.0
  %vm830 = vcmp.ge.f32.partialorder %v798, 0.0
  %vm831 = vcmp.ge.f32.partialorder %v799, 0.0
  %vm832 = vcmp.ge.f32.partialorder %v800, 0.0
  %vm833 = vcmp.ge.f32.partialorder %v801, 0.0
  %vm834 = vcmp.ge.f32.partialorder %v802, 0.0
  %vm835 = vcmp.ge.f32.partialorder %v803, 0.0
  %vm836 = vcmp.ge.f32.partialorder %v804, 0.0
  %v837 = vmul.f32 %v773, 0.2
  %v838 = vmul.f32 %v774, 0.2
  %v839 = vmul.f32 %v775, 0.2
  %v840 = vmul.f32 %v776, 0.2
  %v841 = vmul.f32 %v777, 0.2
  %v842 = vmul.f32 %v778, 0.2
  %v843 = vmul.f32 %v779, 0.2
  %v844 = vmul.f32 %v780, 0.2
  %v845 = vmul.f32 %v781, 0.2
  %v846 = vmul.f32 %v782, 0.2
  %v847 = vmul.f32 %v783, 0.2
  %v848 = vmul.f32 %v784, 0.2
  %v849 = vmul.f32 %v785, 0.2
  %v850 = vmul.f32 %v786, 0.2
  %v851 = vmul.f32 %v787, 0.2
  %v852 = vmul.f32 %v788, 0.2
  %v853 = vmul.f32 %v789, 0.2
  %v854 = vmul.f32 %v790, 0.2
  %v855 = vmul.f32 %v791, 0.2
  %v856 = vmul.f32 %v792, 0.2
  %v857 = vmul.f32 %v793, 0.2
  %v858 = vmul.f32 %v794, 0.2
  %v859 = vmul.f32 %v795, 0.2
  %v860 = vmul.f32 %v796, 0.2
  %v861 = vmul.f32 %v797, 0.2
  %v862 = vmul.f32 %v798, 0.2
  %v863 = vmul.f32 %v799, 0.2
  %v864 = vmul.f32 %v800, 0.2
  %v865 = vmul.f32 %v801, 0.2
  %v866 = vmul.f32 %v802, 0.2
  %v867 = vmul.f32 %v803, 0.2
  %v868 = vmul.f32 %v804, 0.2
  %v869 = vsel %vm805, %v773, %v837
  %v870 = vsel %vm806, %v774, %v838
  %v871 = vsel %vm807, %v775, %v839
  %v872 = vsel %vm808, %v776, %v840
  %v873 = vsel %vm809, %v777, %v841
  %v874 = vsel %vm810, %v778, %v842
  %v875 = vsel %vm811, %v779, %v843
  %v876 = vsel %vm812, %v780, %v844
  %v877 = vsel %vm813, %v781, %v845
  %v878 = vsel %vm814, %v782, %v846
  %v879 = vsel %vm815, %v783, %v847
  %v880 = vsel %vm816, %v784, %v848
  %v881 = vsel %vm817, %v785, %v849
  %v882 = vsel %vm818, %v786, %v850
  %v883 = vsel %vm819, %v787, %v851
  %v884 = vsel %vm820, %v788, %v852
  %v885 = vsel %vm821, %v789, %v853
  %v886 = vsel %vm822, %v790, %v854
  %v887 = vsel %vm823, %v791, %v855
  %v888 = vsel %vm824, %v792, %v856
  %v889 = vsel %vm825, %v793, %v857
  %v890 = vsel %vm826, %v794, %v858
  %v891 = vsel %vm827, %v795, %v859
  %v892 = vsel %vm828, %v796, %v860
  %v893 = vsel %vm829, %v797, %v861
  %v894 = vsel %vm830, %v798, %v862
  %v895 = vsel %vm831, %v799, %v863
  %v896 = vsel %vm832, %v800, %v864
  %v897 = vsel %vm833, %v801, %v865
  %v898 = vsel %vm834, %v802, %v866
  %v899 = vsel %vm835, %v803, %v867
  %v900 = vsel %vm836, %v804, %v868
  %v933 = vrot.slane %v237, 1
  %v934 = vrot.slane %v238, 1
  %v935 = vrot.slane %v239, 1
  %v936 = vrot.slane %v240, 1
  %v937 = vrot.slane %v242, 1
  %v938 = vrot.slane %v243, 1
  %v939 = vrot.slane %v244, 1
  %v940 = vrot.slane %v245, 1
  %v941 = vrot.slane %v247, 1
  %v942 = vrot.slane %v248, 1
  %v943 = vrot.slane %v249, 1
  %v944 = vrot.slane %v250, 1
  %v945 = vrot.slane %v252, 1
  %v946 = vrot.slane %v253, 1
  %v947 = vrot.slane %v254, 1
  %v948 = vrot.slane %v255, 1
  %v949 = vrot.slane %v257, 1
  %v950 = vrot.slane %v258, 1
  %v951 = vrot.slane %v259, 1
  %v952 = vrot.slane %v260, 1
  %v953 = vrot.slane %v262, 1
  %v954 = vrot.slane %v263, 1
  %v955 = vrot.slane %v264, 1
  %v956 = vrot.slane %v265, 1
  %v957 = vrot.slane %v267, 1
  %v958 = vrot.slane %v268, 1
  %v959 = vrot.slane %v269, 1
  %v960 = vrot.slane %v270, 1
  %v961 = vrot.slane %v272, 1
  %v962 = vrot.slane %v273, 1
  %v963 = vrot.slane %v274, 1
  %v964 = vrot.slane %v275, 1
  %v997 = vadd.f32 %v237, %v933
  %v998 = vadd.f32 %v238, %v934
  %v999 = vadd.f32 %v239, %v935
  %v1000 = vadd.f32 %v240, %v936
  %v1001 = vadd.f32 %v242, %v937
  %v1002 = vadd.f32 %v243, %v938
  %v1003 = vadd.f32 %v244, %v939
  %v1004 = vadd.f32 %v245, %v940
  %v1005 = vadd.f32 %v247, %v941
  %v1006 = vadd.f32 %v248, %v942
  %v1007 = vadd.f32 %v249, %v943
  %v1008 = vadd.f32 %v250, %v944
  %v1009 = vadd.f32 %v252, %v945
  %v1010 = vadd.f32 %v253, %v946
  %v1011 = vadd.f32 %v254, %v947
  %v1012 = vadd.f32 %v255, %v948
  %v1013 = vadd.f32 %v257, %v949
  %v1014 = vadd.f32 %v258, %v950
  %v1015 = vadd.f32 %v259, %v951
  %v1016 = vadd.f32 %v260, %v952
  %v1017 = vadd.f32 %v262, %v953
  %v1018 = vadd.f32 %v263, %v954
  %v1019 = vadd.f32 %v264, %v955
  %v1020 = vadd.f32 %v265, %v956
  %v1021 = vadd.f32 %v267, %v957
  %v1022 = vadd.f32 %v268, %v958
  %v1023 = vadd.f32 %v269, %v959
  %v1024 = vadd.f32 %v270, %v960
  %v1025 = vadd.f32 %v272, %v961
  %v1026 = vadd.f32 %v273, %v962
  %v1027 = vadd.f32 %v274, %v963
  %v1028 = vadd.f32 %v275, %v964
  %v1029 = vadd.f32 %v997, %v238
  %v1030 = vadd.f32 %v998, %v239
  %v1031 = vadd.f32 %v999, %v240
  %v1032 = vadd.f32 %v1000, %v241
  %v1033 = vadd.f32 %v1001, %v243
  %v1034 = vadd.f32 %v1002, %v244
  %v1035 = vadd.f32 %v1003, %v245
  %v1036 = vadd.f32 %v1004, %v246
  %v1037 = vadd.f32 %v1005, %v248
  %v1038 = vadd.f32 %v1006, %v249
  %v1039 = vadd.f32 %v1007, %v250
  %v1040 = vadd.f32 %v1008, %v251
  %v1041 = vadd.f32 %v1009, %v253
  %v1042 = vadd.f32 %v1010, %v254
  %v1043 = vadd.f32 %v1011, %v255
  %v1044 = vadd.f32 %v1012, %v256
  %v1045 = vadd.f32 %v1013, %v258
  %v1046 = vadd.f32 %v1014, %v259
  %v1047 = vadd.f32 %v1015, %v260
  %v1048 = vadd.f32 %v1016, %v261
  %v1049 = vadd.f32 %v1017, %v263
  %v1050 = vadd.f32 %v1018, %v264
  %v1051 = vadd.f32 %v1019, %v265
  %v1052 = vadd.f32 %v1020, %v266
  %v1053 = vadd.f32 %v1021, %v268
  %v1054 = vadd.f32 %v1022, %v269
  %v1055 = vadd.f32 %v1023, %v270
  %v1056 = vadd.f32 %v1024, %v271
  %v1057 = vadd.f32 %v1025, %v273
  %v1058 = vadd.f32 %v1026, %v274
  %v1059 = vadd.f32 %v1027, %v275
  %v1060 = vadd.f32 %v1028, %v276
  %v1069 = vrot.slane %v241, 1
  %v1070 = vrot.slane %v246, 1
  %v1071 = vrot.slane %v251, 1
  %v1072 = vrot.slane %v256, 1
  %v1073 = vrot.slane %v261, 1
  %v1074 = vrot.slane %v266, 1
  %v1075 = vrot.slane %v271, 1
  %v1076 = vrot.slane %v276, 1
  %v1085 = vadd.f32 %v1029, %v934
  %v1086 = vadd.f32 %v1030, %v935
  %v1087 = vadd.f32 %v1031, %v936
  %v1088 = vadd.f32 %v1032, %v1069
  %v1089 = vadd.f32 %v1033, %v938
  %v1090 = vadd.f32 %v1034, %v939
  %v1091 = vadd.f32 %v1035, %v940
  %v1092 = vadd.f32 %v1036, %v1070
  %v1093 = vadd.f32 %v1037, %v942
  %v1094 = vadd.f32 %v1038, %v943
  %v1095 = vadd.f32 %v1039, %v944
  %v1096 = vadd.f32 %v1040, %v1071
  %v1097 = vadd.f32 %v1041, %v946
  %v1098 = vadd.f32 %v1042, %v947
  %v1099 = vadd.f32 %v1043, %v948
  %v1100 = vadd.f32 %v1044, %v1072
  %v1101 = vadd.f32 %v1045, %v950
  %v1102 = vadd.f32 %v1046, %v951
  %v1103 = vadd.f32 %v1047, %v952
  %v1104 = vadd.f32 %v1048, %v1073
  %v1105 = vadd.f32 %v1049, %v954
  %v1106 = vadd.f32 %v1050, %v955
  %v1107 = vadd.f32 %v1051, %v956
  %v1108 = vadd.f32 %v1052, %v1074
  %v1109 = vadd.f32 %v1053, %v958
  %v1110 = vadd.f32 %v1054, %v959
  %v1111 = vadd.f32 %v1055, %v960
  %v1112 = vadd.f32 %v1056, %v1075
  %v1113 = vadd.f32 %v1057, %v962
  %v1114 = vadd.f32 %v1058, %v963
  %v1115 = vadd.f32 %v1059, %v964
  %v1116 = vadd.f32 %v1060, %v1076
  %v1117 = vadd.f32 %v477, %v478
  %v1118 = vadd.f32 %v478, %v479
  %v1119 = vadd.f32 %v479, %v480
  %v1120 = vadd.f32 %v480, %v481
  %v1121 = vadd.f32 %v482, %v483
  %v1122 = vadd.f32 %v483, %v484
  %v1123 = vadd.f32 %v484, %v485
  %v1124 = vadd.f32 %v485, %v486
  %v1125 = vadd.f32 %v487, %v488
  %v1126 = vadd.f32 %v488, %v489
  %v1127 = vadd.f32 %v489, %v490
  %v1128 = vadd.f32 %v490, %v491
  %v1129 = vadd.f32 %v492, %v493
  %v1130 = vadd.f32 %v493, %v494
  %v1131 = vadd.f32 %v494, %v495
  %v1132 = vadd.f32 %v495, %v496
  %v1133 = vadd.f32 %v497, %v498
  %v1134 = vadd.f32 %v498, %v499
  %v1135 = vadd.f32 %v499, %v500
  %v1136 = vadd.f32 %v500, %v501
  %v1137 = vadd.f32 %v502, %v503
  %v1138 = vadd.f32 %v503, %v504
  %v1139 = vadd.f32 %v504, %v505
  %v1140 = vadd.f32 %v505, %v506
  %v1141 = vadd.f32 %v507, %v508
  %v1142 = vadd.f32 %v508, %v509
  %v1143 = vadd.f32 %v509, %v510
  %v1144 = vadd.f32 %v510, %v511
  %v1145 = vadd.f32 %v512, %v513
  %v1146 = vadd.f32 %v513, %v514
  %v1147 = vadd.f32 %v514, %v515
  %v1148 = vadd.f32 %v515, %v516
  %v1149 = vmul.f32 %v1117, 2.0
  %v1150 = vmul.f32 %v1118, 2.0
  %v1151 = vmul.f32 %v1119, 2.0
  %v1152 = vmul.f32 %v1120, 2.0
  %v1153 = vmul.f32 %v1121, 2.0
  %v1154 = vmul.f32 %v1122, 2.0
  %v1155 = vmul.f32 %v1123, 2.0
  %v1156 = vmul.f32 %v1124, 2.0
  %v1157 = vmul.f32 %v1125, 2.0
  %v1158 = vmul.f32 %v1126, 2.0
  %v1159 = vmul.f32 %v1127, 2.0
  %v1160 = vmul.f32 %v1128, 2.0
  %v1161 = vmul.f32 %v1129, 2.0
  %v1162 = vmul.f32 %v1130, 2.0
  %v1163 = vmul.f32 %v1131, 2.0
  %v1164 = vmul.f32 %v1132, 2.0
  %v1165 = vmul.f32 %v1133, 2.0
  %v1166 = vmul.f32 %v1134, 2.0
  %v1167 = vmul.f32 %v1135, 2.0
  %v1168 = vmul.f32 %v1136, 2.0
  %v1169 = vmul.f32 %v1137, 2.0
  %v1170 = vmul.f32 %v1138, 2.0
  %v1171 = vmul.f32 %v1139, 2.0
  %v1172 = vmul.f32 %v1140, 2.0
  %v1173 = vmul.f32 %v1141, 2.0
  %v1174 = vmul.f32 %v1142, 2.0
  %v1175 = vmul.f32 %v1143, 2.0
  %v1176 = vmul.f32 %v1144, 2.0
  %v1177 = vmul.f32 %v1145, 2.0
  %v1178 = vmul.f32 %v1146, 2.0
  %v1179 = vmul.f32 %v1147, 2.0
  %v1180 = vmul.f32 %v1148, 2.0
  %v1181 = vadd.f32 %v1085, %v1149
  %v1182 = vadd.f32 %v1086, %v1150
  %v1183 = vadd.f32 %v1087, %v1151
  %v1184 = vadd.f32 %v1088, %v1152
  %v1185 = vadd.f32 %v1089, %v1153
  %v1186 = vadd.f32 %v1090, %v1154
  %v1187 = vadd.f32 %v1091, %v1155
  %v1188 = vadd.f32 %v1092, %v1156
  %v1189 = vadd.f32 %v1093, %v1157
  %v1190 = vadd.f32 %v1094, %v1158
  %v1191 = vadd.f32 %v1095, %v1159
  %v1192 = vadd.f32 %v1096, %v1160
  %v1193 = vadd.f32 %v1097, %v1161
  %v1194 = vadd.f32 %v1098, %v1162
  %v1195 = vadd.f32 %v1099, %v1163
  %v1196 = vadd.f32 %v1100, %v1164
  %v1197 = vadd.f32 %v1101, %v1165
  %v1198 = vadd.f32 %v1102, %v1166
  %v1199 = vadd.f32 %v1103, %v1167
  %v1200 = vadd.f32 %v1104, %v1168
  %v1201 = vadd.f32 %v1105, %v1169
  %v1202 = vadd.f32 %v1106, %v1170
  %v1203 = vadd.f32 %v1107, %v1171
  %v1204 = vadd.f32 %v1108, %v1172
  %v1205 = vadd.f32 %v1109, %v1173
  %v1206 = vadd.f32 %v1110, %v1174
  %v1207 = vadd.f32 %v1111, %v1175
  %v1208 = vadd.f32 %v1112, %v1176
  %v1209 = vadd.f32 %v1113, %v1177
  %v1210 = vadd.f32 %v1114, %v1178
  %v1211 = vadd.f32 %v1115, %v1179
  %v1212 = vadd.f32 %v1116, %v1180
  %v1245 = vrot.slane %v677, 1
  %v1246 = vrot.slane %v678, 1
  %v1247 = vrot.slane %v679, 1
  %v1248 = vrot.slane %v680, 1
  %v1249 = vrot.slane %v681, 1
  %v1250 = vrot.slane %v682, 1
  %v1251 = vrot.slane %v683, 1
  %v1252 = vrot.slane %v684, 1
  %v1253 = vrot.slane %v685, 1
  %v1254 = vrot.slane %v686, 1
  %v1255 = vrot.slane %v687, 1
  %v1256 = vrot.slane %v688, 1
  %v1257 = vrot.slane %v689, 1
  %v1258 = vrot.slane %v690, 1
  %v1259 = vrot.slane %v691, 1
  %v1260 = vrot.slane %v692, 1
  %v1261 = vrot.slane %v693, 1
  %v1262 = vrot.slane %v694, 1
  %v1263 = vrot.slane %v695, 1
  %v1264 = vrot.slane %v696, 1
  %v1265 = vrot.slane %v697, 1
  %v1266 = vrot.slane %v698, 1
  %v1267 = vrot.slane %v699, 1
  %v1268 = vrot.slane %v700, 1
  %v1269 = vrot.slane %v701, 1
  %v1270 = vrot.slane %v702, 1
  %v1271 = vrot.slane %v703, 1
  %v1272 = vrot.slane %v704, 1
  %v1273 = vrot.slane %v705, 1
  %v1274 = vrot.slane %v706, 1
  %v1275 = vrot.slane %v707, 1
  %v1276 = vrot.slane %v708, 1
  %v1309 = vadd.f32 %v677, %v1245
  %v1310 = vadd.f32 %v678, %v1246
  %v1311 = vadd.f32 %v679, %v1247
  %v1312 = vadd.f32 %v680, %v1248
  %v1313 = vadd.f32 %v681, %v1249
  %v1314 = vadd.f32 %v682, %v1250
  %v1315 = vadd.f32 %v683, %v1251
  %v1316 = vadd.f32 %v684, %v1252
  %v1317 = vadd.f32 %v685, %v1253
  %v1318 = vadd.f32 %v686, %v1254
  %v1319 = vadd.f32 %v687, %v1255
  %v1320 = vadd.f32 %v688, %v1256
  %v1321 = vadd.f32 %v689, %v1257
  %v1322 = vadd.f32 %v690, %v1258
  %v1323 = vadd.f32 %v691, %v1259
  %v1324 = vadd.f32 %v692, %v1260
  %v1325 = vadd.f32 %v693, %v1261
  %v1326 = vadd.f32 %v694, %v1262
  %v1327 = vadd.f32 %v695, %v1263
  %v1328 = vadd.f32 %v696, %v1264
  %v1329 = vadd.f32 %v697, %v1265
  %v1330 = vadd.f32 %v698, %v1266
  %v1331 = vadd.f32 %v699, %v1267
  %v1332 = vadd.f32 %v700, %v1268
  %v1333 = vadd.f32 %v701, %v1269
  %v1334 = vadd.f32 %v702, %v1270
  %v1335 = vadd.f32 %v703, %v1271
  %v1336 = vadd.f32 %v704, %v1272
  %v1337 = vadd.f32 %v705, %v1273
  %v1338 = vadd.f32 %v706, %v1274
  %v1339 = vadd.f32 %v707, %v1275
  %v1340 = vadd.f32 %v708, %v1276
  %v1341 = vmul.f32 %v1309, 2.0
  %v1342 = vmul.f32 %v1310, 2.0
  %v1343 = vmul.f32 %v1311, 2.0
  %v1344 = vmul.f32 %v1312, 2.0
  %v1345 = vmul.f32 %v1313, 2.0
  %v1346 = vmul.f32 %v1314, 2.0
  %v1347 = vmul.f32 %v1315, 2.0
  %v1348 = vmul.f32 %v1316, 2.0
  %v1349 = vmul.f32 %v1317, 2.0
  %v1350 = vmul.f32 %v1318, 2.0
  %v1351 = vmul.f32 %v1319, 2.0
  %v1352 = vmul.f32 %v1320, 2.0
  %v1353 = vmul.f32 %v1321, 2.0
  %v1354 = vmul.f32 %v1322, 2.0
  %v1355 = vmul.f32 %v1323, 2.0
  %v1356 = vmul.f32 %v1324, 2.0
  %v1357 = vmul.f32 %v1325, 2.0
  %v1358 = vmul.f32 %v1326, 2.0
  %v1359 = vmul.f32 %v1327, 2.0
  %v1360 = vmul.f32 %v1328, 2.0
  %v1361 = vmul.f32 %v1329, 2.0
  %v1362 = vmul.f32 %v1330, 2.0
  %v1363 = vmul.f32 %v1331, 2.0
  %v1364 = vmul.f32 %v1332, 2.0
  %v1365 = vmul.f32 %v1333, 2.0
  %v1366 = vmul.f32 %v1334, 2.0
  %v1367 = vmul.f32 %v1335, 2.0
  %v1368 = vmul.f32 %v1336, 2.0
  %v1369 = vmul.f32 %v1337, 2.0
  %v1370 = vmul.f32 %v1338, 2.0
  %v1371 = vmul.f32 %v1339, 2.0
  %v1372 = vmul.f32 %v1340, 2.0
  %v1373 = vadd.f32 %v1181, %v1341
  %v1374 = vadd.f32 %v1182, %v1342
  %v1375 = vadd.f32 %v1183, %v1343
  %v1376 = vadd.f32 %v1184, %v1344
  %v1377 = vadd.f32 %v1185, %v1345
  %v1378 = vadd.f32 %v1186, %v1346
  %v1379 = vadd.f32 %v1187, %v1347
  %v1380 = vadd.f32 %v1188, %v1348
  %v1381 = vadd.f32 %v1189, %v1349
  %v1382 = vadd.f32 %v1190, %v1350
  %v1383 = vadd.f32 %v1191, %v1351
  %v1384 = vadd.f32 %v1192, %v1352
  %v1385 = vadd.f32 %v1193, %v1353
  %v1386 = vadd.f32 %v1194, %v1354
  %v1387 = vadd.f32 %v1195, %v1355
  %v1388 = vadd.f32 %v1196, %v1356
  %v1389 = vadd.f32 %v1197, %v1357
  %v1390 = vadd.f32 %v1198, %v1358
  %v1391 = vadd.f32 %v1199, %v1359
  %v1392 = vadd.f32 %v1200, %v1360
  %v1393 = vadd.f32 %v1201, %v1361
  %v1394 = vadd.f32 %v1202, %v1362
  %v1395 = vadd.f32 %v1203, %v1363
  %v1396 = vadd.f32 %v1204, %v1364
  %v1397 = vadd.f32 %v1205, %v1365
  %v1398 = vadd.f32 %v1206, %v1366
  %v1399 = vadd.f32 %v1207, %v1367
  %v1400 = vadd.f32 %v1208, %v1368
  %v1401 = vadd.f32 %v1209, %v1369
  %v1402 = vadd.f32 %v1210, %v1370
  %v1403 = vadd.f32 %v1211, %v1371
  %v1404 = vadd.f32 %v1212, %v1372
  %v1405 = vmul.f32 %v869, 4.0
  %v1406 = vmul.f32 %v870, 4.0
  %v1407 = vmul.f32 %v871, 4.0
  %v1408 = vmul.f32 %v872, 4.0
  %v1409 = vmul.f32 %v873, 4.0
  %v1410 = vmul.f32 %v874, 4.0
  %v1411 = vmul.f32 %v875, 4.0
  %v1412 = vmul.f32 %v876, 4.0
  %v1413 = vmul.f32 %v877, 4.0
  %v1414 = vmul.f32 %v878, 4.0
  %v1415 = vmul.f32 %v879, 4.0
  %v1416 = vmul.f32 %v880, 4.0
  %v1417 = vmul.f32 %v881, 4.0
  %v1418 = vmul.f32 %v882, 4.0
  %v1419 = vmul.f32 %v883, 4.0
  %v1420 = vmul.f32 %v884, 4.0
  %v1421 = vmul.f32 %v885, 4.0
  %v1422 = vmul.f32 %v886, 4.0
  %v1423 = vmul.f32 %v887, 4.0
  %v1424 = vmul.f32 %v888, 4.0
  %v1425 = vmul.f32 %v889, 4.0
  %v1426 = vmul.f32 %v890, 4.0
  %v1427 = vmul.f32 %v891, 4.0
  %v1428 = vmul.f32 %v892, 4.0
  %v1429 = vmul.f32 %v893, 4.0
  %v1430 = vmul.f32 %v894, 4.0
  %v1431 = vmul.f32 %v895, 4.0
  %v1432 = vmul.f32 %v896, 4.0
  %v1433 = vmul.f32 %v897, 4.0
  %v1434 = vmul.f32 %v898, 4.0
  %v1435 = vmul.f32 %v899, 4.0
  %v1436 = vmul.f32 %v900, 4.0
  %v1437 = vadd.f32 %v1373, %v1405
  %v1438 = vadd.f32 %v1374, %v1406
  %v1439 = vadd.f32 %v1375, %v1407
  %v1440 = vadd.f32 %v1376, %v1408
  %v1441 = vadd.f32 %v1377, %v1409
  %v1442 = vadd.f32 %v1378, %v1410
  %v1443 = vadd.f32 %v1379, %v1411
  %v1444 = vadd.f32 %v1380, %v1412
  %v1445 = vadd.f32 %v1381, %v1413
  %v1446 = vadd.f32 %v1382, %v1414
  %v1447 = vadd.f32 %v1383, %v1415
  %v1448 = vadd.f32 %v1384, %v1416
  %v1449 = vadd.f32 %v1385, %v1417
  %v1450 = vadd.f32 %v1386, %v1418
  %v1451 = vadd.f32 %v1387, %v1419
  %v1452 = vadd.f32 %v1388, %v1420
  %v1453 = vadd.f32 %v1389, %v1421
  %v1454 = vadd.f32 %v1390, %v1422
  %v1455 = vadd.f32 %v1391, %v1423
  %v1456 = vadd.f32 %v1392, %v1424
  %v1457 = vadd.f32 %v1393, %v1425
  %v1458 = vadd.f32 %v1394, %v1426
  %v1459 = vadd.f32 %v1395, %v1427
  %v1460 = vadd.f32 %v1396, %v1428
  %v1461 = vadd.f32 %v1397, %v1429
  %v1462 = vadd.f32 %v1398, %v1430
  %v1463 = vadd.f32 %v1399, %v1431
  %v1464 = vadd.f32 %v1400, %v1432
  %v1465 = vadd.f32 %v1401, %v1433
  %v1466 = vadd.f32 %v1402, %v1434
  %v1467 = vadd.f32 %v1403, %v1435
  %v1468 = vadd.f32 %v1404, %v1436
  %v1469 = vmul.f32 %v1437, 0.0625
  %v1470 = vmul.f32 %v1438, 0.0625
  %v1471 = vmul.f32 %v1439, 0.0625
  %v1472 = vmul.f32 %v1440, 0.0625
  %v1473 = vmul.f32 %v1441, 0.0625
  %v1474 = vmul.f32 %v1442, 0.0625
  %v1475 = vmul.f32 %v1443, 0.0625
  %v1476 = vmul.f32 %v1444, 0.0625
  %v1477 = vmul.f32 %v1445, 0.0625
  %v1478 = vmul.f32 %v1446, 0.0625
  %v1479 = vmul.f32 %v1447, 0.0625
  %v1480 = vmul.f32 %v1448, 0.0625
  %v1481 = vmul.f32 %v1449, 0.0625
  %v1482 = vmul.f32 %v1450, 0.0625
  %v1483 = vmul.f32 %v1451, 0.0625
  %v1484 = vmul.f32 %v1452, 0.0625
  %v1485 = vmul.f32 %v1453, 0.0625
  %v1486 = vmul.f32 %v1454, 0.0625
  %v1487 = vmul.f32 %v1455, 0.0625
  %v1488 = vmul.f32 %v1456, 0.0625
  %v1489 = vmul.f32 %v1457, 0.0625
  %v1490 = vmul.f32 %v1458, 0.0625
  %v1491 = vmul.f32 %v1459, 0.0625
  %v1492 = vmul.f32 %v1460, 0.0625
  %v1493 = vmul.f32 %v1461, 0.0625
  %v1494 = vmul.f32 %v1462, 0.0625
  %v1495 = vmul.f32 %v1463, 0.0625
  %v1496 = vmul.f32 %v1464, 0.0625
  %v1497 = vmul.f32 %v1465, 0.0625
  %v1498 = vmul.f32 %v1466, 0.0625
  %v1499 = vmul.f32 %v1467, 0.0625
  %v1500 = vmul.f32 %v1468, 0.0625
  %1501 = vst [vmem:[%s6] sm:$0xf] %v1469
  %1502 = vst [vmem:[%s6 + $0x4] sm:$0xf] %v1470
  %1503 = vst [vmem:[%s6 + $0x8] sm:$0xf] %v1471
  %1504 = vst [vmem:[%s6 + $0xc] sm:$0xf] %v1472
  %1505 = vst [vmem:[%s6 + $0x10] sm:$0xf] %v1473
  %1506 = vst [vmem:[%s6 + $0x14] sm:$0xf] %v1474
  %1507 = vst [vmem:[%s6 + $0x18] sm:$0xf] %v1475
  %1508 = vst [vmem:[%s6 + $0x1c] sm:$0xf] %v1476
  %1509 = vst [vmem:[%s6 + $0x20] sm:$0xf] %v1477
  %1510 = vst [vmem:[%s6 + $0x24] sm:$0xf] %v1478
  %1511 = vst [vmem:[%s6 + $0x28] sm:$0xf] %v1479
  %1512 = vst [vmem:[%s6 + $0x2c] sm:$0xf] %v1480
  %1513 = vst [vmem:[%s6 + $0x30] sm:$0xf] %v1481
  %1514 = vst [vmem:[%s6 + $0x34] sm:$0xf] %v1482
  %1515 = vst [vmem:[%s6 + $0x38] sm:$0xf] %v1483
  %1516 = vst [vmem:[%s6 + $0x3c] sm:$0xf] %v1484
  %1517 = vst [vmem:[%s6 + $0x40] sm:$0xf] %v1485
  %1518 = vst [vmem:[%s6 + $0x44] sm:$0xf] %v1486
  %1519 = vst [vmem:[%s6 + $0x48] sm:$0xf] %v1487
  %1520 = vst [vmem:[%s6 + $0x4c] sm:$0xf] %v1488
  %1521 = vst [vmem:[%s6 + $0x50] sm:$0xf] %v1489
  %1522 = vst [vmem:[%s6 + $0x54] sm:$0xf] %v1490
  %1523 = vst [vmem:[%s6 + $0x58] sm:$0xf] %v1491
  %1524 = vst [vmem:[%s6 + $0x5c] sm:$0xf] %v1492
  %1525 = vst [vmem:[%s6 + $0x60] sm:$0xf] %v1493
  %1526 = vst [vmem:[%s6 + $0x64] sm:$0xf] %v1494
  %1527 = vst [vmem:[%s6 + $0x68] sm:$0xf] %v1495
  %1528 = vst [vmem:[%s6 + $0x6c] sm:$0xf] %v1496
  %1529 = vst [vmem:[%s6 + $0x70] sm:$0xf] %v1497
  %1530 = vst [vmem:[%s6 + $0x74] sm:$0xf] %v1498
  %1531 = vst [vmem:[%s6 + $0x78] sm:$0xf] %v1499
  %1532 = vst [vmem:[%s6 + $0x7c] sm:$0xf] %v1500
  // Predicated region
  $region26: #{patch_discriminator_forward.10} parent=0 // pred_check
    _
  $region27: #{patch_discriminator_forward.10} parent=0 // pred_check_branch
    %1534 = sbr.rel (0) target = $region29
  $region28: #{patch_discriminator_forward.10} parent=0 // pred_region
    _
  $region29: #{patch_discriminator_forward.10} parent=0 // pred_fallthru
    _
  // Predicated region
  $region30: #{patch_discriminator_forward.10} parent=0 // pred_check
    _
  $region31: #{patch_discriminator_forward.10} parent=0 // pred_check_branch
    %1536 = sbr.rel (0) target = $region33
  $region32: #{patch_discriminator_forward.10} parent=0 // pred_region
    _
  $region33: #{patch_discriminator_forward.10} parent=0 // pred_fallthru
    _

// kernel: patch_discriminator_forward.11
$region0: #{patch_discriminator_forward.11}
  #allocation0 [shape = 'u32[]', space=smem, size = 0x4, offset = 0x4, fixed_abs, tag = 'smem constant byte address 0x4 - core index']
  #allocation1 [shape = 'u32[144,128]{1,0:T(1,128)}', space=vmem, size = 0x12000, scoped, tag = 'internal scratch']
  %s0 = inlined_call_operand.vmem [shape: bf16[72,2048], index: 0, kind: input, shape index: {}]
  %s1 = inlined_call_operand.vmem [shape: bf16[2048,256], index: 1, kind: input, shape index: {}]
  %s2 = inlined_call_operand.vmem [shape: f32[72,256], index: 2, kind: output, shape index: {0}]
  %s3 = inlined_call_operand.vmem [shape: f32[1,256], index: 3, kind: output, shape index: {1}]
  %s4 = inlined_call_operand.vmem [shape: f32[1,256], index: 4, kind: output, shape index: {2}]
  %5 = xla_tuple %s2, %s3, %s4
  %s6 = sld [smem:[#allocation0]]
  $region38: #{patch_discriminator_forward.11} parent=0
    _
  %s8 = ssub.s32 1, %s6
  %s9 = scalar_select 0, %s8, %s6
  // Predicated region
  $region2: #{patch_discriminator_forward.11} parent=0 // pred_check
    _
  $region3: #{patch_discriminator_forward.11} parent=0 // pred_check_branch
    %11 = sbr.rel (0) target = $region5
  $region4: #{patch_discriminator_forward.11} parent=0 // pred_region
    _
  $region5: #{patch_discriminator_forward.11} parent=0 // pred_fallthru
    _
  // Predicated region
  $region6: #{patch_discriminator_forward.11} parent=0 // pred_check
    _
  $region7: #{patch_discriminator_forward.11} parent=0 // pred_check_branch
    %13 = sbr.rel (0) target = $region9
  $region8: #{patch_discriminator_forward.11} parent=0 // pred_region
    _
  $region9: #{patch_discriminator_forward.11} parent=0 // pred_fallthru
    _
  %v14 = vld [vmem:[%s0] sm:$0xff]
  %v15 = vld [vmem:[%s0 + $0x8] sm:$0xff]
  %v16 = vld [vmem:[%s0 + $0x10] sm:$0xff]
  %v17 = vld [vmem:[%s0 + $0x18] sm:$0xff]
  %v18 = vld [vmem:[%s0 + $0x20] sm:$0xff]
  %v19 = vld [vmem:[%s0 + $0x28] sm:$0xff]
  %v20 = vld [vmem:[%s0 + $0x30] sm:$0xff]
  %v21 = vld [vmem:[%s0 + $0x38] sm:$0xff]
  %v22 = vld [vmem:[%s0 + $0x40] sm:$0xff]
  %v23 = vld [vmem:[%s0 + $0x48] sm:$0xff]
  %v24 = vld [vmem:[%s0 + $0x50] sm:$0xff]
  %v25 = vld [vmem:[%s0 + $0x58] sm:$0xff]
  %v26 = vld [vmem:[%s0 + $0x60] sm:$0xff]
  %v27 = vld [vmem:[%s0 + $0x68] sm:$0xff]
  %v28 = vld [vmem:[%s0 + $0x70] sm:$0xff]
  %v29 = vld [vmem:[%s0 + $0x78] sm:$0xff]
  %v30 = vld [vmem:[%s0 + $0x80] sm:$0xff]
  %v31 = vld [vmem:[%s0 + $0x88] sm:$0xff]
  %v32 = vld [vmem:[%s0 + $0x90] sm:$0xff]
  %v33 = vld [vmem:[%s0 + $0x98] sm:$0xff]
  %v34 = vld [vmem:[%s0 + $0xa0] sm:$0xff]
  %v35 = vld [vmem:[%s0 + $0xa8] sm:$0xff]
  %v36 = vld [vmem:[%s0 + $0xb0] sm:$0xff]
  %v37 = vld [vmem:[%s0 + $0xb8] sm:$0xff]
  %v38 = vld [vmem:[%s0 + $0xc0] sm:$0xff]
  %v39 = vld [vmem:[%s0 + $0xc8] sm:$0xff]
  %v40 = vld [vmem:[%s0 + $0xd0] sm:$0xff]
  %v41 = vld [vmem:[%s0 + $0xd8] sm:$0xff]
  %v42 = vld [vmem:[%s0 + $0xe0] sm:$0xff]
  %v43 = vld [vmem:[%s0 + $0xe8] sm:$0xff]
  %v44 = vld [vmem:[%s0 + $0xf0] sm:$0xff]
  %v45 = vld [vmem:[%s0 + $0xf8] sm:$0xff]
  %v46 = vld [vmem:[%s0 + $0x100] sm:$0xff]
  %v47 = vld [vmem:[%s0 + $0x108] sm:$0xff]
  %v48 = vld [vmem:[%s0 + $0x110] sm:$0xff]
  %v49 = vld [vmem:[%s0 + $0x118] sm:$0xff]
  %v50 = vld [vmem:[%s0 + $0x120] sm:$0xff]
  %v51 = vld [vmem:[%s0 + $0x128] sm:$0xff]
  %v52 = vld [vmem:[%s0 + $0x130] sm:$0xff]
  %v53 = vld [vmem:[%s0 + $0x138] sm:$0xff]
  %v54 = vld [vmem:[%s0 + $0x140] sm:$0xff]
  %v55 = vld [vmem:[%s0 + $0x148] sm:$0xff]
  %v56 = vld [vmem:[%s0 + $0x150] sm:$0xff]
  %v57 = vld [vmem:[%s0 + $0x158] sm:$0xff]
  %v58 = vld [vmem:[%s0 + $0x160] sm:$0xff]
  %v59 = vld [vmem:[%s0 + $0x168] sm:$0xff]
  %v60 = vld [vmem:[%s0 + $0x170] sm:$0xff]
  %v61 = vld [vmem:[%s0 + $0x178] sm:$0xff]
  %v62 = vld [vmem:[%s0 + $0x180] sm:$0xff]
  %v63 = vld [vmem:[%s0 + $0x188] sm:$0xff]
  %v64 = vld [vmem:[%s0 + $0x190] sm:$0xff]
  %v65 = vld [vmem:[%s0 + $0x198] sm:$0xff]
  %v66 = vld [vmem:[%s0 + $0x1a0] sm:$0xff]
  %v67 = vld [vmem:[%s0 + $0x1a8] sm:$0xff]
  %v68 = vld [vmem:[%s0 + $0x1b0] sm:$0xff]
  %v69 = vld [vmem:[%s0 + $0x1b8] sm:$0xff]
  %v70 = vld [vmem:[%s0 + $0x1c0] sm:$0xff]
  %v71 = vld [vmem:[%s0 + $0x1c8] sm:$0xff]
  %v72 = vld [vmem:[%s0 + $0x1d0] sm:$0xff]
  %v73 = vld [vmem:[%s0 + $0x1d8] sm:$0xff]
  %v74 = vld [vmem:[%s0 + $0x1e0] sm:$0xff]
  %v75 = vld [vmem:[%s0 + $0x1e8] sm:$0xff]
  %v76 = vld [vmem:[%s0 + $0x1f0] sm:$0xff]
  %v77 = vld [vmem:[%s0 + $0x1f8] sm:$0xff]
  %v78 = vld [vmem:[%s0 + $0x200] sm:$0xff]
  %v79 = vld [vmem:[%s0 + $0x208] sm:$0xff]
  %v80 = vld [vmem:[%s0 + $0x210] sm:$0xff]
  %v81 = vld [vmem:[%s0 + $0x218] sm:$0xff]
  %v82 = vld [vmem:[%s0 + $0x220] sm:$0xff]
  %v83 = vld [vmem:[%s0 + $0x228] sm:$0xff]
  %v84 = vld [vmem:[%s0 + $0x230] sm:$0xff]
  %v85 = vld [vmem:[%s0 + $0x238] sm:$0xff]
  %v86 = vld [vmem:[%s1] sm:$0xff]
  %v87 = vld [vmem:[%s1 + $0x8] sm:$0xff]
  %v88 = vld [vmem:[%s1 + $0x10] sm:$0xff]
  %v89 = vld [vmem:[%s1 + $0x18] sm:$0xff]
  %v90 = vld [vmem:[%s1 + $0x20] sm:$0xff]
  %v91 = vld [vmem:[%s1 + $0x28] sm:$0xff]
  %v92 = vld [vmem:[%s1 + $0x30] sm:$0xff]
  %v93 = vld [vmem:[%s1 + $0x38] sm:$0xff]
  %v94 = vld [vmem:[%s1 + $0x40] sm:$0xff]
  %v95 = vld [vmem:[%s1 + $0x48] sm:$0xff]
  %v96 = vld [vmem:[%s1 + $0x50] sm:$0xff]
  %v97 = vld [vmem:[%s1 + $0x58] sm:$0xff]
  %v98 = vld [vmem:[%s1 + $0x60] sm:$0xff]
  %v99 = vld [vmem:[%s1 + $0x68] sm:$0xff]
  %v100 = vld [vmem:[%s1 + $0x70] sm:$0xff]
  %v101 = vld [vmem:[%s1 + $0x78] sm:$0xff]
  %v102 = vld [vmem:[%s1 + $0x80] sm:$0xff]
  %v103 = vld [vmem:[%s1 + $0x88] sm:$0xff]
  %v104 = vld [vmem:[%s1 + $0x90] sm:$0xff]
  %v105 = vld [vmem:[%s1 + $0x98] sm:$0xff]
  %v106 = vld [vmem:[%s1 + $0xa0] sm:$0xff]
  %v107 = vld [vmem:[%s1 + $0xa8] sm:$0xff]
  %v108 = vld [vmem:[%s1 + $0xb0] sm:$0xff]
  %v109 = vld [vmem:[%s1 + $0xb8] sm:$0xff]
  %v110 = vld [vmem:[%s1 + $0xc0] sm:$0xff]
  %v111 = vld [vmem:[%s1 + $0xc8] sm:$0xff]
  %v112 = vld [vmem:[%s1 + $0xd0] sm:$0xff]
  %v113 = vld [vmem:[%s1 + $0xd8] sm:$0xff]
  %v114 = vld [vmem:[%s1 + $0xe0] sm:$0xff]
  %v115 = vld [vmem:[%s1 + $0xe8] sm:$0xff]
  %v116 = vld [vmem:[%s1 + $0xf0] sm:$0xff]
  %v117 = vld [vmem:[%s1 + $0xf8] sm:$0xff]
  %v118 = vld [vmem:[%s1 + $0x100] sm:$0xff]
  %v119 = vld [vmem:[%s1 + $0x108] sm:$0xff]
  %v120 = vld [vmem:[%s1 + $0x110] sm:$0xff]
  %v121 = vld [vmem:[%s1 + $0x118] sm:$0xff]
  %v122 = vld [vmem:[%s1 + $0x120] sm:$0xff]
  %v123 = vld [vmem:[%s1 + $0x128] sm:$0xff]
  %v124 = vld [vmem:[%s1 + $0x130] sm:$0xff]
  %v125 = vld [vmem:[%s1 + $0x138] sm:$0xff]
  %v126 = vld [vmem:[%s1 + $0x140] sm:$0xff]
  %v127 = vld [vmem:[%s1 + $0x148] sm:$0xff]
  %v128 = vld [vmem:[%s1 + $0x150] sm:$0xff]
  %v129 = vld [vmem:[%s1 + $0x158] sm:$0xff]
  %v130 = vld [vmem:[%s1 + $0x160] sm:$0xff]
  %v131 = vld [vmem:[%s1 + $0x168] sm:$0xff]
  %v132 = vld [vmem:[%s1 + $0x170] sm:$0xff]
  %v133 = vld [vmem:[%s1 + $0x178] sm:$0xff]
  %v134 = vld [vmem:[%s1 + $0x180] sm:$0xff]
  %v135 = vld [vmem:[%s1 + $0x188] sm:$0xff]
  %v136 = vld [vmem:[%s1 + $0x190] sm:$0xff]
  %v137 = vld [vmem:[%s1 + $0x198] sm:$0xff]
  %v138 = vld [vmem:[%s1 + $0x1a0] sm:$0xff]
  %v139 = vld [vmem:[%s1 + $0x1a8] sm:$0xff]
  %v140 = vld [vmem:[%s1 + $0x1b0] sm:$0xff]
  %v141 = vld [vmem:[%s1 + $0x1b8] sm:$0xff]
  %v142 = vld [vmem:[%s1 + $0x1c0] sm:$0xff]
  %v143 = vld [vmem:[%s1 + $0x1c8] sm:$0xff]
  %v144 = vld [vmem:[%s1 + $0x1d0] sm:$0xff]
  %v145 = vld [vmem:[%s1 + $0x1d8] sm:$0xff]
  %v146 = vld [vmem:[%s1 + $0x1e0] sm:$0xff]
  %v147 = vld [vmem:[%s1 + $0x1e8] sm:$0xff]
  %v148 = vld [vmem:[%s1 + $0x1f0] sm:$0xff]
  %v149 = vld [vmem:[%s1 + $0x1f8] sm:$0xff]
  %v150 = vld [vmem:[%s1 + $0x200] sm:$0xff]
  %v151 = vld [vmem:[%s1 + $0x208] sm:$0xff]
  %v152 = vld [vmem:[%s1 + $0x210] sm:$0xff]
  %v153 = vld [vmem:[%s1 + $0x218] sm:$0xff]
  %v154 = vld [vmem:[%s1 + $0x220] sm:$0xff]
  %v155 = vld [vmem:[%s1 + $0x228] sm:$0xff]
  %v156 = vld [vmem:[%s1 + $0x230] sm:$0xff]
  %v157 = vld [vmem:[%s1 + $0x238] sm:$0xff]
  %v158 = vld [vmem:[%s1 + $0x240] sm:$0xff]
  %v159 = vld [vmem:[%s1 + $0x248] sm:$0xff]
  %v160 = vld [vmem:[%s1 + $0x250] sm:$0xff]
  %v161 = vld [vmem:[%s1 + $0x258] sm:$0xff]
  %v162 = vld [vmem:[%s1 + $0x260] sm:$0xff]
  %v163 = vld [vmem:[%s1 + $0x268] sm:$0xff]
  %v164 = vld [vmem:[%s1 + $0x270] sm:$0xff]
  %v165 = vld [vmem:[%s1 + $0x278] sm:$0xff]
  %v166 = vld [vmem:[%s1 + $0x280] sm:$0xff]
  %v167 = vld [vmem:[%s1 + $0x288] sm:$0xff]
  %v168 = vld [vmem:[%s1 + $0x290] sm:$0xff]
  %v169 = vld [vmem:[%s1 + $0x298] sm:$0xff]
  %v170 = vld [vmem:[%s1 + $0x2a0] sm:$0xff]
  %v171 = vld [vmem:[%s1 + $0x2a8] sm:$0xff]
  %v172 = vld [vmem:[%s1 + $0x2b0] sm:$0xff]
  %v173 = vld [vmem:[%s1 + $0x2b8] sm:$0xff]
  %v174 = vld [vmem:[%s1 + $0x2c0] sm:$0xff]
  %v175 = vld [vmem:[%s1 + $0x2c8] sm:$0xff]
  %v176 = vld [vmem:[%s1 + $0x2d0] sm:$0xff]
  %v177 = vld [vmem:[%s1 + $0x2d8] sm:$0xff]
  %v178 = vld [vmem:[%s1 + $0x2e0] sm:$0xff]
  %v179 = vld [vmem:[%s1 + $0x2e8] sm:$0xff]
  %v180 = vld [vmem:[%s1 + $0x2f0] sm:$0xff]
  %v181 = vld [vmem:[%s1 + $0x2f8] sm:$0xff]
  %v182 = vld [vmem:[%s1 + $0x300] sm:$0xff]
  %v183 = vld [vmem:[%s1 + $0x308] sm:$0xff]
  %v184 = vld [vmem:[%s1 + $0x310] sm:$0xff]
  %v185 = vld [vmem:[%s1 + $0x318] sm:$0xff]
  %v186 = vld [vmem:[%s1 + $0x320] sm:$0xff]
  %v187 = vld [vmem:[%s1 + $0x328] sm:$0xff]
  %v188 = vld [vmem:[%s1 + $0x330] sm:$0xff]
  %v189 = vld [vmem:[%s1 + $0x338] sm:$0xff]
  %v190 = vld [vmem:[%s1 + $0x340] sm:$0xff]
  %v191 = vld [vmem:[%s1 + $0x348] sm:$0xff]
  %v192 = vld [vmem:[%s1 + $0x350] sm:$0xff]
  %v193 = vld [vmem:[%s1 + $0x358] sm:$0xff]
  %v194 = vld [vmem:[%s1 + $0x360] sm:$0xff]
  %v195 = vld [vmem:[%s1 + $0x368] sm:$0xff]
  %v196 = vld [vmem:[%s1 + $0x370] sm:$0xff]
  %v197 = vld [vmem:[%s1 + $0x378] sm:$0xff]
  %v198 = vld [vmem:[%s1 + $0x380] sm:$0xff]
  %v199 = vld [vmem:[%s1 + $0x388] sm:$0xff]
  %v200 = vld [vmem:[%s1 + $0x390] sm:$0xff]
  %v201 = vld [vmem:[%s1 + $0x398] sm:$0xff]
  %v202 = vld [vmem:[%s1 + $0x3a0] sm:$0xff]
  %v203 = vld [vmem:[%s1 + $0x3a8] sm:$0xff]
  %v204 = vld [vmem:[%s1 + $0x3b0] sm:$0xff]
  %v205 = vld [vmem:[%s1 + $0x3b8] sm:$0xff]
  %v206 = vld [vmem:[%s1 + $0x3c0] sm:$0xff]
  %v207 = vld [vmem:[%s1 + $0x3c8] sm:$0xff]
  %v208 = vld [vmem:[%s1 + $0x3d0] sm:$0xff]
  %v209 = vld [vmem:[%s1 + $0x3d8] sm:$0xff]
  %v210 = vld [vmem:[%s1 + $0x3e0] sm:$0xff]
  %v211 = vld [vmem:[%s1 + $0x3e8] sm:$0xff]
  %v212 = vld [vmem:[%s1 + $0x3f0] sm:$0xff]
  %v213 = vld [vmem:[%s1 + $0x3f8] sm:$0xff]
  %v214 = vld [vmem:[%s1 + $0x400] sm:$0xff]
  %v215 = vld [vmem:[%s1 + $0x408] sm:$0xff]
  %v216 = vld [vmem:[%s1 + $0x410] sm:$0xff]
  %v217 = vld [vmem:[%s1 + $0x418] sm:$0xff]
  %v218 = vld [vmem:[%s1 + $0x420] sm:$0xff]
  %v219 = vld [vmem:[%s1 + $0x428] sm:$0xff]
  %v220 = vld [vmem:[%s1 + $0x430] sm:$0xff]
  %v221 = vld [vmem:[%s1 + $0x438] sm:$0xff]
  %v222 = vld [vmem:[%s1 + $0x440] sm:$0xff]
  %v223 = vld [vmem:[%s1 + $0x448] sm:$0xff]
  %v224 = vld [vmem:[%s1 + $0x450] sm:$0xff]
  %v225 = vld [vmem:[%s1 + $0x458] sm:$0xff]
  %v226 = vld [vmem:[%s1 + $0x460] sm:$0xff]
  %v227 = vld [vmem:[%s1 + $0x468] sm:$0xff]
  %v228 = vld [vmem:[%s1 + $0x470] sm:$0xff]
  %v229 = vld [vmem:[%s1 + $0x478] sm:$0xff]
  %v230 = vld [vmem:[%s1 + $0x480] sm:$0xff]
  %v231 = vld [vmem:[%s1 + $0x488] sm:$0xff]
  %v232 = vld [vmem:[%s1 + $0x490] sm:$0xff]
  %v233 = vld [vmem:[%s1 + $0x498] sm:$0xff]
  %v234 = vld [vmem:[%s1 + $0x4a0] sm:$0xff]
  %v235 = vld [vmem:[%s1 + $0x4a8] sm:$0xff]
  %v236 = vld [vmem:[%s1 + $0x4b0] sm:$0xff]
  %v237 = vld [vmem:[%s1 + $0x4b8] sm:$0xff]
  %v238 = vld [vmem:[%s1 + $0x4c0] sm:$0xff]
  %v239 = vld [vmem:[%s1 + $0x4c8] sm:$0xff]
  %v240 = vld [vmem:[%s1 + $0x4d0] sm:$0xff]
  %v241 = vld [vmem:[%s1 + $0x4d8] sm:$0xff]
  %v242 = vld [vmem:[%s1 + $0x4e0] sm:$0xff]
  %v243 = vld [vmem:[%s1 + $0x4e8] sm:$0xff]
  %v244 = vld [vmem:[%s1 + $0x4f0] sm:$0xff]
  %v245 = vld [vmem:[%s1 + $0x4f8] sm:$0xff]
  %v246 = vld [vmem:[%s1 + $0x500] sm:$0xff]
  %v247 = vld [vmem:[%s1 + $0x508] sm:$0xff]
  %v248 = vld [vmem:[%s1 + $0x510] sm:$0xff]
  %v249 = vld [vmem:[%s1 + $0x518] sm:$0xff]
  %v250 = vld [vmem:[%s1 + $0x520] sm:$0xff]
  %v251 = vld [vmem:[%s1 + $0x528] sm:$0xff]
  %v252 = vld [vmem:[%s1 + $0x530] sm:$0xff]
  %v253 = vld [vmem:[%s1 + $0x538] sm:$0xff]
  %v254 = vld [vmem:[%s1 + $0x540] sm:$0xff]
  %v255 = vld [vmem:[%s1 + $0x548] sm:$0xff]
  %v256 = vld [vmem:[%s1 + $0x550] sm:$0xff]
  %v257 = vld [vmem:[%s1 + $0x558] sm:$0xff]
  %v258 = vld [vmem:[%s1 + $0x560] sm:$0xff]
  %v259 = vld [vmem:[%s1 + $0x568] sm:$0xff]
  %v260 = vld [vmem:[%s1 + $0x570] sm:$0xff]
  %v261 = vld [vmem:[%s1 + $0x578] sm:$0xff]
  %v262 = vld [vmem:[%s1 + $0x580] sm:$0xff]
  %v263 = vld [vmem:[%s1 + $0x588] sm:$0xff]
  %v264 = vld [vmem:[%s1 + $0x590] sm:$0xff]
  %v265 = vld [vmem:[%s1 + $0x598] sm:$0xff]
  %v266 = vld [vmem:[%s1 + $0x5a0] sm:$0xff]
  %v267 = vld [vmem:[%s1 + $0x5a8] sm:$0xff]
  %v268 = vld [vmem:[%s1 + $0x5b0] sm:$0xff]
  %v269 = vld [vmem:[%s1 + $0x5b8] sm:$0xff]
  %v270 = vld [vmem:[%s1 + $0x5c0] sm:$0xff]
  %v271 = vld [vmem:[%s1 + $0x5c8] sm:$0xff]
  %v272 = vld [vmem:[%s1 + $0x5d0] sm:$0xff]
  %v273 = vld [vmem:[%s1 + $0x5d8] sm:$0xff]
  %v274 = vld [vmem:[%s1 + $0x5e0] sm:$0xff]
  %v275 = vld [vmem:[%s1 + $0x5e8] sm:$0xff]
  %v276 = vld [vmem:[%s1 + $0x5f0] sm:$0xff]
  %v277 = vld [vmem:[%s1 + $0x5f8] sm:$0xff]
  %v278 = vld [vmem:[%s1 + $0x600] sm:$0xff]
  %v279 = vld [vmem:[%s1 + $0x608] sm:$0xff]
  %v280 = vld [vmem:[%s1 + $0x610] sm:$0xff]
  %v281 = vld [vmem:[%s1 + $0x618] sm:$0xff]
  %v282 = vld [vmem:[%s1 + $0x620] sm:$0xff]
  %v283 = vld [vmem:[%s1 + $0x628] sm:$0xff]
  %v284 = vld [vmem:[%s1 + $0x630] sm:$0xff]
  %v285 = vld [vmem:[%s1 + $0x638] sm:$0xff]
  %v286 = vld [vmem:[%s1 + $0x640] sm:$0xff]
  %v287 = vld [vmem:[%s1 + $0x648] sm:$0xff]
  %v288 = vld [vmem:[%s1 + $0x650] sm:$0xff]
  %v289 = vld [vmem:[%s1 + $0x658] sm:$0xff]
  %v290 = vld [vmem:[%s1 + $0x660] sm:$0xff]
  %v291 = vld [vmem:[%s1 + $0x668] sm:$0xff]
  %v292 = vld [vmem:[%s1 + $0x670] sm:$0xff]
  %v293 = vld [vmem:[%s1 + $0x678] sm:$0xff]
  %v294 = vld [vmem:[%s1 + $0x680] sm:$0xff]
  %v295 = vld [vmem:[%s1 + $0x688] sm:$0xff]
  %v296 = vld [vmem:[%s1 + $0x690] sm:$0xff]
  %v297 = vld [vmem:[%s1 + $0x698] sm:$0xff]
  %v298 = vld [vmem:[%s1 + $0x6a0] sm:$0xff]
  %v299 = vld [vmem:[%s1 + $0x6a8] sm:$0xff]
  %v300 = vld [vmem:[%s1 + $0x6b0] sm:$0xff]
  %v301 = vld [vmem:[%s1 + $0x6b8] sm:$0xff]
  %v302 = vld [vmem:[%s1 + $0x6c0] sm:$0xff]
  %v303 = vld [vmem:[%s1 + $0x6c8] sm:$0xff]
  %v304 = vld [vmem:[%s1 + $0x6d0] sm:$0xff]
  %v305 = vld [vmem:[%s1 + $0x6d8] sm:$0xff]
  %v306 = vld [vmem:[%s1 + $0x6e0] sm:$0xff]
  %v307 = vld [vmem:[%s1 + $0x6e8] sm:$0xff]
  %v308 = vld [vmem:[%s1 + $0x6f0] sm:$0xff]
  %v309 = vld [vmem:[%s1 + $0x6f8] sm:$0xff]
  %v310 = vld [vmem:[%s1 + $0x700] sm:$0xff]
  %v311 = vld [vmem:[%s1 + $0x708] sm:$0xff]
  %v312 = vld [vmem:[%s1 + $0x710] sm:$0xff]
  %v313 = vld [vmem:[%s1 + $0x718] sm:$0xff]
  %v314 = vld [vmem:[%s1 + $0x720] sm:$0xff]
  %v315 = vld [vmem:[%s1 + $0x728] sm:$0xff]
  %v316 = vld [vmem:[%s1 + $0x730] sm:$0xff]
  %v317 = vld [vmem:[%s1 + $0x738] sm:$0xff]
  %v318 = vld [vmem:[%s1 + $0x740] sm:$0xff]
  %v319 = vld [vmem:[%s1 + $0x748] sm:$0xff]
  %v320 = vld [vmem:[%s1 + $0x750] sm:$0xff]
  %v321 = vld [vmem:[%s1 + $0x758] sm:$0xff]
  %v322 = vld [vmem:[%s1 + $0x760] sm:$0xff]
  %v323 = vld [vmem:[%s1 + $0x768] sm:$0xff]
  %v324 = vld [vmem:[%s1 + $0x770] sm:$0xff]
  %v325 = vld [vmem:[%s1 + $0x778] sm:$0xff]
  %v326 = vld [vmem:[%s1 + $0x780] sm:$0xff]
  %v327 = vld [vmem:[%s1 + $0x788] sm:$0xff]
  %v328 = vld [vmem:[%s1 + $0x790] sm:$0xff]
  %v329 = vld [vmem:[%s1 + $0x798] sm:$0xff]
  %v330 = vld [vmem:[%s1 + $0x7a0] sm:$0xff]
  %v331 = vld [vmem:[%s1 + $0x7a8] sm:$0xff]
  %v332 = vld [vmem:[%s1 + $0x7b0] sm:$0xff]
  %v333 = vld [vmem:[%s1 + $0x7b8] sm:$0xff]
  %v334 = vld [vmem:[%s1 + $0x7c0] sm:$0xff]
  %v335 = vld [vmem:[%s1 + $0x7c8] sm:$0xff]
  %v336 = vld [vmem:[%s1 + $0x7d0] sm:$0xff]
  %v337 = vld [vmem:[%s1 + $0x7d8] sm:$0xff]
  %v338 = vld [vmem:[%s1 + $0x7e0] sm:$0xff]
  %v339 = vld [vmem:[%s1 + $0x7e8] sm:$0xff]
  %v340 = vld [vmem:[%s1 + $0x7f0] sm:$0xff]
  %v341 = vld [vmem:[%s1 + $0x7f8] sm:$0xff]
  %v414 = vunpack.c.l.b16 %v14
  %v415 = vunpack.c.h.b16 %v14
  %v416 = vunpack.c.l.b16 %v15
  %v417 = vunpack.c.h.b16 %v15
  %v418 = vunpack.c.l.b16 %v16
  %v419 = vunpack.c.h.b16 %v16
  %v420 = vunpack.c.l.b16 %v17
  %v421 = vunpack.c.h.b16 %v17
  %v422 = vunpack.c.l.b16 %v18
  %v423 = vunpack.c.h.b16 %v18
  %v424 = vunpack.c.l.b16 %v19
  %v425 = vunpack.c.h.b16 %v19
  %v426 = vunpack.c.l.b16 %v20
  %v427 = vunpack.c.h.b16 %v20
  %v428 = vunpack.c.l.b16 %v21
  %v429 = vunpack.c.h.b16 %v21
  %v430 = vunpack.c.l.b16 %v22
  %v431 = vunpack.c.h.b16 %v22
  %v432 = vunpack.c.l.b16 %v23
  %v433 = vunpack.c.h.b16 %v23
  %v434 = vunpack.c.l.b16 %v24
  %v435 = vunpack.c.h.b16 %v24
  %v436 = vunpack.c.l.b16 %v25
  %v437 = vunpack.c.h.b16 %v25
  %v438 = vunpack.c.l.b16 %v26
  %v439 = vunpack.c.h.b16 %v26
  %v440 = vunpack.c.l.b16 %v27
  %v441 = vunpack.c.h.b16 %v27
  %v442 = vunpack.c.l.b16 %v28
  %v443 = vunpack.c.h.b16 %v28
  %v444 = vunpack.c.l.b16 %v29
  %v445 = vunpack.c.h.b16 %v29
  %v446 = vunpack.c.l.b16 %v30
  %v447 = vunpack.c.h.b16 %v30
  %v448 = vunpack.c.l.b16 %v31
  %v449 = vunpack.c.h.b16 %v31
  %v450 = vunpack.c.l.b16 %v32
  %v451 = vunpack.c.h.b16 %v32
  %v452 = vunpack.c.l.b16 %v33
  %v453 = vunpack.c.h.b16 %v33
  %v454 = vunpack.c.l.b16 %v34
  %v455 = vunpack.c.h.b16 %v34
  %v456 = vunpack.c.l.b16 %v35
  %v457 = vunpack.c.h.b16 %v35
  %v458 = vunpack.c.l.b16 %v36
  %v459 = vunpack.c.h.b16 %v36
  %v460 = vunpack.c.l.b16 %v37
  %v461 = vunpack.c.h.b16 %v37
  %v462 = vunpack.c.l.b16 %v38
  %v463 = vunpack.c.h.b16 %v38
  %v464 = vunpack.c.l.b16 %v39
  %v465 = vunpack.c.h.b16 %v39
  %v466 = vunpack.c.l.b16 %v40
  %v467 = vunpack.c.h.b16 %v40
  %v468 = vunpack.c.l.b16 %v41
  %v469 = vunpack.c.h.b16 %v41
  %v470 = vunpack.c.l.b16 %v42
  %v471 = vunpack.c.h.b16 %v42
  %v472 = vunpack.c.l.b16 %v43
  %v473 = vunpack.c.h.b16 %v43
  %v474 = vunpack.c.l.b16 %v44
  %v475 = vunpack.c.h.b16 %v44
  %v476 = vunpack.c.l.b16 %v45
  %v477 = vunpack.c.h.b16 %v45
  %v478 = vunpack.c.l.b16 %v46
  %v479 = vunpack.c.h.b16 %v46
  %v480 = vunpack.c.l.b16 %v47
  %v481 = vunpack.c.h.b16 %v47
  %v482 = vunpack.c.l.b16 %v48
  %v483 = vunpack.c.h.b16 %v48
  %v484 = vunpack.c.l.b16 %v49
  %v485 = vunpack.c.h.b16 %v49
  %v486 = vunpack.c.l.b16 %v50
  %v487 = vunpack.c.h.b16 %v50
  %v488 = vunpack.c.l.b16 %v51
  %v489 = vunpack.c.h.b16 %v51
  %v490 = vunpack.c.l.b16 %v52
  %v491 = vunpack.c.h.b16 %v52
  %v492 = vunpack.c.l.b16 %v53
  %v493 = vunpack.c.h.b16 %v53
  %v494 = vunpack.c.l.b16 %v54
  %v495 = vunpack.c.h.b16 %v54
  %v496 = vunpack.c.l.b16 %v55
  %v497 = vunpack.c.h.b16 %v55
  %v498 = vunpack.c.l.b16 %v56
  %v499 = vunpack.c.h.b16 %v56
  %v500 = vunpack.c.l.b16 %v57
  %v501 = vunpack.c.h.b16 %v57
  %v502 = vunpack.c.l.b16 %v58
  %v503 = vunpack.c.h.b16 %v58
  %v504 = vunpack.c.l.b16 %v59
  %v505 = vunpack.c.h.b16 %v59
  %v506 = vunpack.c.l.b16 %v60
  %v507 = vunpack.c.h.b16 %v60
  %v508 = vunpack.c.l.b16 %v61
  %v509 = vunpack.c.h.b16 %v61
  %v510 = vunpack.c.l.b16 %v62
  %v511 = vunpack.c.h.b16 %v62
  %v512 = vunpack.c.l.b16 %v63
  %v513 = vunpack.c.h.b16 %v63
  %v514 = vunpack.c.l.b16 %v64
  %v515 = vunpack.c.h.b16 %v64
  %v516 = vunpack.c.l.b16 %v65
  %v517 = vunpack.c.h.b16 %v65
  %v518 = vunpack.c.l.b16 %v66
  %v519 = vunpack.c.h.b16 %v66
  %v520 = vunpack.c.l.b16 %v67
  %v521 = vunpack.c.h.b16 %v67
  %v522 = vunpack.c.l.b16 %v68
  %v523 = vunpack.c.h.b16 %v68
  %v524 = vunpack.c.l.b16 %v69
  %v525 = vunpack.c.h.b16 %v69
  %v526 = vunpack.c.l.b16 %v70
  %v527 = vunpack.c.h.b16 %v70
  %v528 = vunpack.c.l.b16 %v71
  %v529 = vunpack.c.h.b16 %v71
  %v530 = vunpack.c.l.b16 %v72
  %v531 = vunpack.c.h.b16 %v72
  %v532 = vunpack.c.l.b16 %v73
  %v533 = vunpack.c.h.b16 %v73
  %v534 = vunpack.c.l.b16 %v74
  %v535 = vunpack.c.h.b16 %v74
  %v536 = vunpack.c.l.b16 %v75
  %v537 = vunpack.c.h.b16 %v75
  %v538 = vunpack.c.l.b16 %v76
  %v539 = vunpack.c.h.b16 %v76
  %v540 = vunpack.c.l.b16 %v77
  %v541 = vunpack.c.h.b16 %v77
  %v542 = vunpack.c.l.b16 %v78
  %v543 = vunpack.c.h.b16 %v78
  %v544 = vunpack.c.l.b16 %v79
  %v545 = vunpack.c.h.b16 %v79
  %v546 = vunpack.c.l.b16 %v80
  %v547 = vunpack.c.h.b16 %v80
  %v548 = vunpack.c.l.b16 %v81
  %v549 = vunpack.c.h.b16 %v81
  %v550 = vunpack.c.l.b16 %v82
  %v551 = vunpack.c.h.b16 %v82
  %v552 = vunpack.c.l.b16 %v83
  %v553 = vunpack.c.h.b16 %v83
  %v554 = vunpack.c.l.b16 %v84
  %v555 = vunpack.c.h.b16 %v84
  %v556 = vunpack.c.l.b16 %v85
  %v557 = vunpack.c.h.b16 %v85
  %v558 = vpack.c.b16 %v430, %v414
  %v559 = vpack.c.b16 %v431, %v415
  %v560 = vpack.c.b16 %v432, %v416
  %v561 = vpack.c.b16 %v433, %v417
  %v562 = vpack.c.b16 %v434, %v418
  %v563 = vpack.c.b16 %v435, %v419
  %v564 = vpack.c.b16 %v436, %v420
  %v565 = vpack.c.b16 %v437, %v421
  %v566 = vpack.c.b16 %v438, %v422
  %v567 = vpack.c.b16 %v439, %v423
  %v568 = vpack.c.b16 %v440, %v424
  %v569 = vpack.c.b16 %v441, %v425
  %v570 = vpack.c.b16 %v442, %v426
  %v571 = vpack.c.b16 %v443, %v427
  %v572 = vpack.c.b16 %v444, %v428
  %v573 = vpack.c.b16 %v445, %v429
  %v574 = vpack.c.b16 %v462, %v446
  %v575 = vpack.c.b16 %v463, %v447
  %v576 = vpack.c.b16 %v464, %v448
  %v577 = vpack.c.b16 %v465, %v449
  %v578 = vpack.c.b16 %v466, %v450
  %v579 = vpack.c.b16 %v467, %v451
  %v580 = vpack.c.b16 %v468, %v452
  %v581 = vpack.c.b16 %v469, %v453
  %v582 = vpack.c.b16 %v470, %v454
  %v583 = vpack.c.b16 %v471, %v455
  %v584 = vpack.c.b16 %v472, %v456
  %v585 = vpack.c.b16 %v473, %v457
  %v586 = vpack.c.b16 %v474, %v458
  %v587 = vpack.c.b16 %v475, %v459
  %v588 = vpack.c.b16 %v476, %v460
  %v589 = vpack.c.b16 %v477, %v461
  %v590 = vpack.c.b16 %v494, %v478
  %v591 = vpack.c.b16 %v495, %v479
  %v592 = vpack.c.b16 %v496, %v480
  %v593 = vpack.c.b16 %v497, %v481
  %v594 = vpack.c.b16 %v498, %v482
  %v595 = vpack.c.b16 %v499, %v483
  %v596 = vpack.c.b16 %v500, %v484
  %v597 = vpack.c.b16 %v501, %v485
  %v598 = vpack.c.b16 %v502, %v486
  %v599 = vpack.c.b16 %v503, %v487
  %v600 = vpack.c.b16 %v504, %v488
  %v601 = vpack.c.b16 %v505, %v489
  %v602 = vpack.c.b16 %v506, %v490
  %v603 = vpack.c.b16 %v507, %v491
  %v604 = vpack.c.b16 %v508, %v492
  %v605 = vpack.c.b16 %v509, %v493
  %v606 = vpack.c.b16 %v526, %v510
  %v607 = vpack.c.b16 %v527, %v511
  %v608 = vpack.c.b16 %v528, %v512
  %v609 = vpack.c.b16 %v529, %v513
  %v610 = vpack.c.b16 %v530, %v514
  %v611 = vpack.c.b16 %v531, %v515
  %v612 = vpack.c.b16 %v532, %v516
  %v613 = vpack.c.b16 %v533, %v517
  %v614 = vpack.c.b16 %v534, %v518
  %v615 = vpack.c.b16 %v535, %v519
  %v616 = vpack.c.b16 %v536, %v520
  %v617 = vpack.c.b16 %v537, %v521
  %v618 = vpack.c.b16 %v538, %v522
  %v619 = vpack.c.b16 %v539, %v523
  %v620 = vpack.c.b16 %v540, %v524
  %v621 = vpack.c.b16 %v541, %v525
  %v622 = vpack.c.b16 %v542, %v542
  %v623 = vpack.c.b16 %v543, %v543
  %v624 = vpack.c.b16 %v544, %v544
  %v625 = vpack.c.b16 %v545, %v545
  %v626 = vpack.c.b16 %v546, %v546
  %v627 = vpack.c.b16 %v547, %v547
  %v628 = vpack.c.b16 %v548, %v548
  %v629 = vpack.c.b16 %v549, %v549
  %v630 = vpack.c.b16 %v550, %v550
  %v631 = vpack.c.b16 %v551, %v551
  %v632 = vpack.c.b16 %v552, %v552
  %v633 = vpack.c.b16 %v553, %v553
  %v634 = vpack.c.b16 %v554, %v554
  %v635 = vpack.c.b16 %v555, %v555
  %v636 = vpack.c.b16 %v556, %v556
  %v637 = vpack.c.b16 %v557, %v557
  %v974 = vunpack.c.l.b16 %v86
  %v975 = vunpack.c.h.b16 %v86
  %v976 = vunpack.c.l.b16 %v87
  %v977 = vunpack.c.h.b16 %v87
  %v978 = vunpack.c.l.b16 %v88
  %v979 = vunpack.c.h.b16 %v88
  %v980 = vunpack.c.l.b16 %v89
  %v981 = vunpack.c.h.b16 %v89
  %v982 = vunpack.c.l.b16 %v90
  %v983 = vunpack.c.h.b16 %v90
  %v984 = vunpack.c.l.b16 %v91
  %v985 = vunpack.c.h.b16 %v91
  %v986 = vunpack.c.l.b16 %v92
  %v987 = vunpack.c.h.b16 %v92
  %v988 = vunpack.c.l.b16 %v93
  %v989 = vunpack.c.h.b16 %v93
  %v990 = vunpack.c.l.b16 %v94
  %v991 = vunpack.c.h.b16 %v94
  %v992 = vunpack.c.l.b16 %v95
  %v993 = vunpack.c.h.b16 %v95
  %v994 = vunpack.c.l.b16 %v96
  %v995 = vunpack.c.h.b16 %v96
  %v996 = vunpack.c.l.b16 %v97
  %v997 = vunpack.c.h.b16 %v97
  %v998 = vunpack.c.l.b16 %v98
  %v999 = vunpack.c.h.b16 %v98
  %v1000 = vunpack.c.l.b16 %v99
  %v1001 = vunpack.c.h.b16 %v99
  %v1002 = vunpack.c.l.b16 %v100
  %v1003 = vunpack.c.h.b16 %v100
  %v1004 = vunpack.c.l.b16 %v101
  %v1005 = vunpack.c.h.b16 %v101
  %v1006 = vunpack.c.l.b16 %v102
  %v1007 = vunpack.c.h.b16 %v102
  %v1008 = vunpack.c.l.b16 %v103
  %v1009 = vunpack.c.h.b16 %v103
  %v1010 = vunpack.c.l.b16 %v104
  %v1011 = vunpack.c.h.b16 %v104
  %v1012 = vunpack.c.l.b16 %v105
  %v1013 = vunpack.c.h.b16 %v105
  %v1014 = vunpack.c.l.b16 %v106
  %v1015 = vunpack.c.h.b16 %v106
  %v1016 = vunpack.c.l.b16 %v107
  %v1017 = vunpack.c.h.b16 %v107
  %v1018 = vunpack.c.l.b16 %v108
  %v1019 = vunpack.c.h.b16 %v108
  %v1020 = vunpack.c.l.b16 %v109
  %v1021 = vunpack.c.h.b16 %v109
  %v1022 = vunpack.c.l.b16 %v110
  %v1023 = vunpack.c.h.b16 %v110
  %v1024 = vunpack.c.l.b16 %v111
  %v1025 = vunpack.c.h.b16 %v111
  %v1026 = vunpack.c.l.b16 %v112
  %v1027 = vunpack.c.h.b16 %v112
  %v1028 = vunpack.c.l.b16 %v113
  %v1029 = vunpack.c.h.b16 %v113
  %v1030 = vunpack.c.l.b16 %v114
  %v1031 = vunpack.c.h.b16 %v114
  %v1032 = vunpack.c.l.b16 %v115
  %v1033 = vunpack.c.h.b16 %v115
  %v1034 = vunpack.c.l.b16 %v116
  %v1035 = vunpack.c.h.b16 %v116
  %v1036 = vunpack.c.l.b16 %v117
  %v1037 = vunpack.c.h.b16 %v117
  %v1038 = vunpack.c.l.b16 %v118
  %v1039 = vunpack.c.h.b16 %v118
  %v1040 = vunpack.c.l.b16 %v119
  %v1041 = vunpack.c.h.b16 %v119
  %v1042 = vunpack.c.l.b16 %v120
  %v1043 = vunpack.c.h.b16 %v120
  %v1044 = vunpack.c.l.b16 %v121
  %v1045 = vunpack.c.h.b16 %v121
  %v1046 = vunpack.c.l.b16 %v122
  %v1047 = vunpack.c.h.b16 %v122
  %v1048 = vunpack.c.l.b16 %v123
  %v1049 = vunpack.c.h.b16 %v123
  %v1050 = vunpack.c.l.b16 %v124
  %v1051 = vunpack.c.h.b16 %v124
  %v1052 = vunpack.c.l.b16 %v125
  %v1053 = vunpack.c.h.b16 %v125
  %v1054 = vunpack.c.l.b16 %v126
  %v1055 = vunpack.c.h.b16 %v126
  %v1056 = vunpack.c.l.b16 %v127
  %v1057 = vunpack.c.h.b16 %v127
  %v1058 = vunpack.c.l.b16 %v128
  %v1059 = vunpack.c.h.b16 %v128
  %v1060 = vunpack.c.l.b16 %v129
  %v1061 = vunpack.c.h.b16 %v129
  %v1062 = vunpack.c.l.b16 %v130
  %v1063 = vunpack.c.h.b16 %v130
  %v1064 = vunpack.c.l.b16 %v131
  %v1065 = vunpack.c.h.b16 %v131
  %v1066 = vunpack.c.l.b16 %v132
  %v1067 = vunpack.c.h.b16 %v132
  %v1068 = vunpack.c.l.b16 %v133
  %v1069 = vunpack.c.h.b16 %v133
  %v1070 = vunpack.c.l.b16 %v134
  %v1071 = vunpack.c.h.b16 %v134
  %v1072 = vunpack.c.l.b16 %v135
  %v1073 = vunpack.c.h.b16 %v135
  %v1074 = vunpack.c.l.b16 %v136
  %v1075 = vunpack.c.h.b16 %v136
  %v1076 = vunpack.c.l.b16 %v137
  %v1077 = vunpack.c.h.b16 %v137
  %v1078 = vunpack.c.l.b16 %v138
  %v1079 = vunpack.c.h.b16 %v138
  %v1080 = vunpack.c.l.b16 %v139
  %v1081 = vunpack.c.h.b16 %v139
  %v1082 = vunpack.c.l.b16 %v140
  %v1083 = vunpack.c.h.b16 %v140
  %v1084 = vunpack.c.l.b16 %v141
  %v1085 = vunpack.c.h.b16 %v141
  %v1086 = vunpack.c.l.b16 %v142
  %v1087 = vunpack.c.h.b16 %v142
  %v1088 = vunpack.c.l.b16 %v143
  %v1089 = vunpack.c.h.b16 %v143
  %v1090 = vunpack.c.l.b16 %v144
  %v1091 = vunpack.c.h.b16 %v144
  %v1092 = vunpack.c.l.b16 %v145
  %v1093 = vunpack.c.h.b16 %v145
  %v1094 = vunpack.c.l.b16 %v146
  %v1095 = vunpack.c.h.b16 %v146
  %v1096 = vunpack.c.l.b16 %v147
  %v1097 = vunpack.c.h.b16 %v147
  %v1098 = vunpack.c.l.b16 %v148
  %v1099 = vunpack.c.h.b16 %v148
  %v1100 = vunpack.c.l.b16 %v149
  %v1101 = vunpack.c.h.b16 %v149
  %v1102 = vunpack.c.l.b16 %v150
  %v1103 = vunpack.c.h.b16 %v150
  %v1104 = vunpack.c.l.b16 %v151
  %v1105 = vunpack.c.h.b16 %v151
  %v1106 = vunpack.c.l.b16 %v152
  %v1107 = vunpack.c.h.b16 %v152
  %v1108 = vunpack.c.l.b16 %v153
  %v1109 = vunpack.c.h.b16 %v153
  %v1110 = vunpack.c.l.b16 %v154
  %v1111 = vunpack.c.h.b16 %v154
  %v1112 = vunpack.c.l.b16 %v155
  %v1113 = vunpack.c.h.b16 %v155
  %v1114 = vunpack.c.l.b16 %v156
  %v1115 = vunpack.c.h.b16 %v156
  %v1116 = vunpack.c.l.b16 %v157
  %v1117 = vunpack.c.h.b16 %v157
  %v1118 = vunpack.c.l.b16 %v158
  %v1119 = vunpack.c.h.b16 %v158
  %v1120 = vunpack.c.l.b16 %v159
  %v1121 = vunpack.c.h.b16 %v159
  %v1122 = vunpack.c.l.b16 %v160
  %v1123 = vunpack.c.h.b16 %v160
  %v1124 = vunpack.c.l.b16 %v161
  %v1125 = vunpack.c.h.b16 %v161
  %v1126 = vunpack.c.l.b16 %v162
  %v1127 = vunpack.c.h.b16 %v162
  %v1128 = vunpack.c.l.b16 %v163
  %v1129 = vunpack.c.h.b16 %v163
  %v1130 = vunpack.c.l.b16 %v164
  %v1131 = vunpack.c.h.b16 %v164
  %v1132 = vunpack.c.l.b16 %v165
  %v1133 = vunpack.c.h.b16 %v165
  %v1134 = vunpack.c.l.b16 %v166
  %v1135 = vunpack.c.h.b16 %v166
  %v1136 = vunpack.c.l.b16 %v167
  %v1137 = vunpack.c.h.b16 %v167
  %v1138 = vunpack.c.l.b16 %v168
  %v1139 = vunpack.c.h.b16 %v168
  %v1140 = vunpack.c.l.b16 %v169
  %v1141 = vunpack.c.h.b16 %v169
  %v1142 = vunpack.c.l.b16 %v170
  %v1143 = vunpack.c.h.b16 %v170
  %v1144 = vunpack.c.l.b16 %v171
  %v1145 = vunpack.c.h.b16 %v171
  %v1146 = vunpack.c.l.b16 %v172
  %v1147 = vunpack.c.h.b16 %v172
  %v1148 = vunpack.c.l.b16 %v173
  %v1149 = vunpack.c.h.b16 %v173
  %v1150 = vunpack.c.l.b16 %v174
  %v1151 = vunpack.c.h.b16 %v174
  %v1152 = vunpack.c.l.b16 %v175
  %v1153 = vunpack.c.h.b16 %v175
  %v1154 = vunpack.c.l.b16 %v176
  %v1155 = vunpack.c.h.b16 %v176
  %v1156 = vunpack.c.l.b16 %v177
  %v1157 = vunpack.c.h.b16 %v177
  %v1158 = vunpack.c.l.b16 %v178
  %v1159 = vunpack.c.h.b16 %v178
  %v1160 = vunpack.c.l.b16 %v179
  %v1161 = vunpack.c.h.b16 %v179
  %v1162 = vunpack.c.l.b16 %v180
  %v1163 = vunpack.c.h.b16 %v180
  %v1164 = vunpack.c.l.b16 %v181
  %v1165 = vunpack.c.h.b16 %v181
  %v1166 = vunpack.c.l.b16 %v182
  %v1167 = vunpack.c.h.b16 %v182
  %v1168 = vunpack.c.l.b16 %v183
  %v1169 = vunpack.c.h.b16 %v183
  %v1170 = vunpack.c.l.b16 %v184
  %v1171 = vunpack.c.h.b16 %v184
  %v1172 = vunpack.c.l.b16 %v185
  %v1173 = vunpack.c.h.b16 %v185
  %v1174 = vunpack.c.l.b16 %v186
  %v1175 = vunpack.c.h.b16 %v186
  %v1176 = vunpack.c.l.b16 %v187
  %v1177 = vunpack.c.h.b16 %v187
  %v1178 = vunpack.c.l.b16 %v188
  %v1179 = vunpack.c.h.b16 %v188
  %v1180 = vunpack.c.l.b16 %v189
  %v1181 = vunpack.c.h.b16 %v189
  %v1182 = vunpack.c.l.b16 %v190
  %v1183 = vunpack.c.h.b16 %v190
  %v1184 = vunpack.c.l.b16 %v191
  %v1185 = vunpack.c.h.b16 %v191
  %v1186 = vunpack.c.l.b16 %v192
  %v1187 = vunpack.c.h.b16 %v192
  %v1188 = vunpack.c.l.b16 %v193
  %v1189 = vunpack.c.h.b16 %v193
  %v1190 = vunpack.c.l.b16 %v194
  %v1191 = vunpack.c.h.b16 %v194
  %v1192 = vunpack.c.l.b16 %v195
  %v1193 = vunpack.c.h.b16 %v195
  %v1194 = vunpack.c.l.b16 %v196
  %v1195 = vunpack.c.h.b16 %v196
  %v1196 = vunpack.c.l.b16 %v197
  %v1197 = vunpack.c.h.b16 %v197
  %v1198 = vunpack.c.l.b16 %v198
  %v1199 = vunpack.c.h.b16 %v198
  %v1200 = vunpack.c.l.b16 %v199
  %v1201 = vunpack.c.h.b16 %v199
  %v1202 = vunpack.c.l.b16 %v200
  %v1203 = vunpack.c.h.b16 %v200
  %v1204 = vunpack.c.l.b16 %v201
  %v1205 = vunpack.c.h.b16 %v201
  %v1206 = vunpack.c.l.b16 %v202
  %v1207 = vunpack.c.h.b16 %v202
  %v1208 = vunpack.c.l.b16 %v203
  %v1209 = vunpack.c.h.b16 %v203
  %v1210 = vunpack.c.l.b16 %v204
  %v1211 = vunpack.c.h.b16 %v204
  %v1212 = vunpack.c.l.b16 %v205
  %v1213 = vunpack.c.h.b16 %v205
  %v1214 = vunpack.c.l.b16 %v206
  %v1215 = vunpack.c.h.b16 %v206
  %v1216 = vunpack.c.l.b16 %v207
  %v1217 = vunpack.c.h.b16 %v207
  %v1218 = vunpack.c.l.b16 %v208
  %v1219 = vunpack.c.h.b16 %v208
  %v1220 = vunpack.c.l.b16 %v209
  %v1221 = vunpack.c.h.b16 %v209
  %v1222 = vunpack.c.l.b16 %v210
  %v1223 = vunpack.c.h.b16 %v210
  %v1224 = vunpack.c.l.b16 %v211
  %v1225 = vunpack.c.h.b16 %v211
  %v1226 = vunpack.c.l.b16 %v212
  %v1227 = vunpack.c.h.b16 %v212
  %v1228 = vunpack.c.l.b16 %v213
  %v1229 = vunpack.c.h.b16 %v213
  %v1230 = vunpack.c.l.b16 %v214
  %v1231 = vunpack.c.h.b16 %v214
  %v1232 = vunpack.c.l.b16 %v215
  %v1233 = vunpack.c.h.b16 %v215
  %v1234 = vunpack.c.l.b16 %v216
  %v1235 = vunpack.c.h.b16 %v216
  %v1236 = vunpack.c.l.b16 %v217
  %v1237 = vunpack.c.h.b16 %v217
  %v1238 = vunpack.c.l.b16 %v218
  %v1239 = vunpack.c.h.b16 %v218
  %v1240 = vunpack.c.l.b16 %v219
  %v1241 = vunpack.c.h.b16 %v219
  %v1242 = vunpack.c.l.b16 %v220
  %v1243 = vunpack.c.h.b16 %v220
  %v1244 = vunpack.c.l.b16 %v221
  %v1245 = vunpack.c.h.b16 %v221
  %v1246 = vunpack.c.l.b16 %v222
  %v1247 = vunpack.c.h.b16 %v222
  %v1248 = vunpack.c.l.b16 %v223
  %v1249 = vunpack.c.h.b16 %v223
  %v1250 = vunpack.c.l.b16 %v224
  %v1251 = vunpack.c.h.b16 %v224
  %v1252 = vunpack.c.l.b16 %v225
  %v1253 = vunpack.c.h.b16 %v225
  %v1254 = vunpack.c.l.b16 %v226
  %v1255 = vunpack.c.h.b16 %v226
  %v1256 = vunpack.c.l.b16 %v227
  %v1257 = vunpack.c.h.b16 %v227
  %v1258 = vunpack.c.l.b16 %v228
  %v1259 = vunpack.c.h.b16 %v228
  %v1260 = vunpack.c.l.b16 %v229
  %v1261 = vunpack.c.h.b16 %v229
  %v1262 = vunpack.c.l.b16 %v230
  %v1263 = vunpack.c.h.b16 %v230
  %v1264 = vunpack.c.l.b16 %v231
  %v1265 = vunpack.c.h.b16 %v231
  %v1266 = vunpack.c.l.b16 %v232
  %v1267 = vunpack.c.h.b16 %v232
  %v1268 = vunpack.c.l.b16 %v233
  %v1269 = vunpack.c.h.b16 %v233
  %v1270 = vunpack.c.l.b16 %v234
  %v1271 = vunpack.c.h.b16 %v234
  %v1272 = vunpack.c.l.b16 %v235
  %v1273 = vunpack.c.h.b16 %v235
  %v1274 = vunpack.c.l.b16 %v236
  %v1275 = vunpack.c.h.b16 %v236
  %v1276 = vunpack.c.l.b16 %v237
  %v1277 = vunpack.c.h.b16 %v237
  %v1278 = vunpack.c.l.b16 %v238
  %v1279 = vunpack.c.h.b16 %v238
  %v1280 = vunpack.c.l.b16 %v239
  %v1281 = vunpack.c.h.b16 %v239
  %v1282 = vunpack.c.l.b16 %v240
  %v1283 = vunpack.c.h.b16 %v240
  %v1284 = vunpack.c.l.b16 %v241
  %v1285 = vunpack.c.h.b16 %v241
  %v1286 = vunpack.c.l.b16 %v242
  %v1287 = vunpack.c.h.b16 %v242
  %v1288 = vunpack.c.l.b16 %v243
  %v1289 = vunpack.c.h.b16 %v243
  %v1290 = vunpack.c.l.b16 %v244
  %v1291 = vunpack.c.h.b16 %v244
  %v1292 = vunpack.c.l.b16 %v245
  %v1293 = vunpack.c.h.b16 %v245
  %v1294 = vunpack.c.l.b16 %v246
  %v1295 = vunpack.c.h.b16 %v246
  %v1296 = vunpack.c.l.b16 %v247
  %v1297 = vunpack.c.h.b16 %v247
  %v1298 = vunpack.c.l.b16 %v248
  %v1299 = vunpack.c.h.b16 %v248
  %v1300 = vunpack.c.l.b16 %v249
  %v1301 = vunpack.c.h.b16 %v249
  %v1302 = vunpack.c.l.b16 %v250
  %v1303 = vunpack.c.h.b16 %v250
  %v1304 = vunpack.c.l.b16 %v251
  %v1305 = vunpack.c.h.b16 %v251
  %v1306 = vunpack.c.l.b16 %v252
  %v1307 = vunpack.c.h.b16 %v252
  %v1308 = vunpack.c.l.b16 %v253
  %v1309 = vunpack.c.h.b16 %v253
  %v1310 = vunpack.c.l.b16 %v254
  %v1311 = vunpack.c.h.b16 %v254
  %v1312 = vunpack.c.l.b16 %v255
  %v1313 = vunpack.c.h.b16 %v255
  %v1314 = vunpack.c.l.b16 %v256
  %v1315 = vunpack.c.h.b16 %v256
  %v1316 = vunpack.c.l.b16 %v257
  %v1317 = vunpack.c.h.b16 %v257
  %v1318 = vunpack.c.l.b16 %v258
  %v1319 = vunpack.c.h.b16 %v258
  %v1320 = vunpack.c.l.b16 %v259
  %v1321 = vunpack.c.h.b16 %v259
  %v1322 = vunpack.c.l.b16 %v260
  %v1323 = vunpack.c.h.b16 %v260
  %v1324 = vunpack.c.l.b16 %v261
  %v1325 = vunpack.c.h.b16 %v261
  %v1326 = vunpack.c.l.b16 %v262
  %v1327 = vunpack.c.h.b16 %v262
  %v1328 = vunpack.c.l.b16 %v263
  %v1329 = vunpack.c.h.b16 %v263
  %v1330 = vunpack.c.l.b16 %v264
  %v1331 = vunpack.c.h.b16 %v264
  %v1332 = vunpack.c.l.b16 %v265
  %v1333 = vunpack.c.h.b16 %v265
  %v1334 = vunpack.c.l.b16 %v266
  %v1335 = vunpack.c.h.b16 %v266
  %v1336 = vunpack.c.l.b16 %v267
  %v1337 = vunpack.c.h.b16 %v267
  %v1338 = vunpack.c.l.b16 %v268
  %v1339 = vunpack.c.h.b16 %v268
  %v1340 = vunpack.c.l.b16 %v269
  %v1341 = vunpack.c.h.b16 %v269
  %v1342 = vunpack.c.l.b16 %v270
  %v1343 = vunpack.c.h.b16 %v270
  %v1344 = vunpack.c.l.b16 %v271
  %v1345 = vunpack.c.h.b16 %v271
  %v1346 = vunpack.c.l.b16 %v272
  %v1347 = vunpack.c.h.b16 %v272
  %v1348 = vunpack.c.l.b16 %v273
  %v1349 = vunpack.c.h.b16 %v273
  %v1350 = vunpack.c.l.b16 %v274
  %v1351 = vunpack.c.h.b16 %v274
  %v1352 = vunpack.c.l.b16 %v275
  %v1353 = vunpack.c.h.b16 %v275
  %v1354 = vunpack.c.l.b16 %v276
  %v1355 = vunpack.c.h.b16 %v276
  %v1356 = vunpack.c.l.b16 %v277
  %v1357 = vunpack.c.h.b16 %v277
  %v1358 = vunpack.c.l.b16 %v278
  %v1359 = vunpack.c.h.b16 %v278
  %v1360 = vunpack.c.l.b16 %v279
  %v1361 = vunpack.c.h.b16 %v279
  %v1362 = vunpack.c.l.b16 %v280
  %v1363 = vunpack.c.h.b16 %v280
  %v1364 = vunpack.c.l.b16 %v281
  %v1365 = vunpack.c.h.b16 %v281
  %v1366 = vunpack.c.l.b16 %v282
  %v1367 = vunpack.c.h.b16 %v282
  %v1368 = vunpack.c.l.b16 %v283
  %v1369 = vunpack.c.h.b16 %v283
  %v1370 = vunpack.c.l.b16 %v284
  %v1371 = vunpack.c.h.b16 %v284
  %v1372 = vunpack.c.l.b16 %v285
  %v1373 = vunpack.c.h.b16 %v285
  %v1374 = vunpack.c.l.b16 %v286
  %v1375 = vunpack.c.h.b16 %v286
  %v1376 = vunpack.c.l.b16 %v287
  %v1377 = vunpack.c.h.b16 %v287
  %v1378 = vunpack.c.l.b16 %v288
  %v1379 = vunpack.c.h.b16 %v288
  %v1380 = vunpack.c.l.b16 %v289
  %v1381 = vunpack.c.h.b16 %v289
  %v1382 = vunpack.c.l.b16 %v290
  %v1383 = vunpack.c.h.b16 %v290
  %v1384 = vunpack.c.l.b16 %v291
  %v1385 = vunpack.c.h.b16 %v291
  %v1386 = vunpack.c.l.b16 %v292
  %v1387 = vunpack.c.h.b16 %v292
  %v1388 = vunpack.c.l.b16 %v293
  %v1389 = vunpack.c.h.b16 %v293
  %v1390 = vunpack.c.l.b16 %v294
  %v1391 = vunpack.c.h.b16 %v294
  %v1392 = vunpack.c.l.b16 %v295
  %v1393 = vunpack.c.h.b16 %v295
  %v1394 = vunpack.c.l.b16 %v296
  %v1395 = vunpack.c.h.b16 %v296
  %v1396 = vunpack.c.l.b16 %v297
  %v1397 = vunpack.c.h.b16 %v297
  %v1398 = vunpack.c.l.b16 %v298
  %v1399 = vunpack.c.h.b16 %v298
  %v1400 = vunpack.c.l.b16 %v299
  %v1401 = vunpack.c.h.b16 %v299
  %v1402 = vunpack.c.l.b16 %v300
  %v1403 = vunpack.c.h.b16 %v300
  %v1404 = vunpack.c.l.b16 %v301
  %v1405 = vunpack.c.h.b16 %v301
  %v1406 = vunpack.c.l.b16 %v302
  %v1407 = vunpack.c.h.b16 %v302
  %v1408 = vunpack.c.l.b16 %v303
  %v1409 = vunpack.c.h.b16 %v303
  %v1410 = vunpack.c.l.b16 %v304
  %v1411 = vunpack.c.h.b16 %v304
  %v1412 = vunpack.c.l.b16 %v305
  %v1413 = vunpack.c.h.b16 %v305
  %v1414 = vunpack.c.l.b16 %v306
  %v1415 = vunpack.c.h.b16 %v306
  %v1416 = vunpack.c.l.b16 %v307
  %v1417 = vunpack.c.h.b16 %v307
  %v1418 = vunpack.c.l.b16 %v308
  %v1419 = vunpack.c.h.b16 %v308
  %v1420 = vunpack.c.l.b16 %v309
  %v1421 = vunpack.c.h.b16 %v309
  %v1422 = vunpack.c.l.b16 %v310
  %v1423 = vunpack.c.h.b16 %v310
  %v1424 = vunpack.c.l.b16 %v311
  %v1425 = vunpack.c.h.b16 %v311
  %v1426 = vunpack.c.l.b16 %v312
  %v1427 = vunpack.c.h.b16 %v312
  %v1428 = vunpack.c.l.b16 %v313
  %v1429 = vunpack.c.h.b16 %v313
  %v1430 = vunpack.c.l.b16 %v314
  %v1431 = vunpack.c.h.b16 %v314
  %v1432 = vunpack.c.l.b16 %v315
  %v1433 = vunpack.c.h.b16 %v315
  %v1434 = vunpack.c.l.b16 %v316
  %v1435 = vunpack.c.h.b16 %v316
  %v1436 = vunpack.c.l.b16 %v317
  %v1437 = vunpack.c.h.b16 %v317
  %v1438 = vunpack.c.l.b16 %v318
  %v1439 = vunpack.c.h.b16 %v318
  %v1440 = vunpack.c.l.b16 %v319
  %v1441 = vunpack.c.h.b16 %v319
  %v1442 = vunpack.c.l.b16 %v320
  %v1443 = vunpack.c.h.b16 %v320
  %v1444 = vunpack.c.l.b16 %v321
  %v1445 = vunpack.c.h.b16 %v321
  %v1446 = vunpack.c.l.b16 %v322
  %v1447 = vunpack.c.h.b16 %v322
  %v1448 = vunpack.c.l.b16 %v323
  %v1449 = vunpack.c.h.b16 %v323
  %v1450 = vunpack.c.l.b16 %v324
  %v1451 = vunpack.c.h.b16 %v324
  %v1452 = vunpack.c.l.b16 %v325
  %v1453 = vunpack.c.h.b16 %v325
  %v1454 = vunpack.c.l.b16 %v326
  %v1455 = vunpack.c.h.b16 %v326
  %v1456 = vunpack.c.l.b16 %v327
  %v1457 = vunpack.c.h.b16 %v327
  %v1458 = vunpack.c.l.b16 %v328
  %v1459 = vunpack.c.h.b16 %v328
  %v1460 = vunpack.c.l.b16 %v329
  %v1461 = vunpack.c.h.b16 %v329
  %v1462 = vunpack.c.l.b16 %v330
  %v1463 = vunpack.c.h.b16 %v330
  %v1464 = vunpack.c.l.b16 %v331
  %v1465 = vunpack.c.h.b16 %v331
  %v1466 = vunpack.c.l.b16 %v332
  %v1467 = vunpack.c.h.b16 %v332
  %v1468 = vunpack.c.l.b16 %v333
  %v1469 = vunpack.c.h.b16 %v333
  %v1470 = vunpack.c.l.b16 %v334
  %v1471 = vunpack.c.h.b16 %v334
  %v1472 = vunpack.c.l.b16 %v335
  %v1473 = vunpack.c.h.b16 %v335
  %v1474 = vunpack.c.l.b16 %v336
  %v1475 = vunpack.c.h.b16 %v336
  %v1476 = vunpack.c.l.b16 %v337
  %v1477 = vunpack.c.h.b16 %v337
  %v1478 = vunpack.c.l.b16 %v338
  %v1479 = vunpack.c.h.b16 %v338
  %v1480 = vunpack.c.l.b16 %v339
  %v1481 = vunpack.c.h.b16 %v339
  %v1482 = vunpack.c.l.b16 %v340
  %v1483 = vunpack.c.h.b16 %v340
  %v1484 = vunpack.c.l.b16 %v341
  %v1485 = vunpack.c.h.b16 %v341
  %v1486 = vpack.c.b16 %v976, %v974
  %v1487 = vpack.c.b16 %v977, %v975
  %v1488 = vpack.c.b16 %v980, %v978
  %v1489 = vpack.c.b16 %v981, %v979
  %v1490 = vpack.c.b16 %v984, %v982
  %v1491 = vpack.c.b16 %v985, %v983
  %v1492 = vpack.c.b16 %v988, %v986
  %v1493 = vpack.c.b16 %v989, %v987
  %v1494 = vpack.c.b16 %v992, %v990
  %v1495 = vpack.c.b16 %v993, %v991
  %v1496 = vpack.c.b16 %v996, %v994
  %v1497 = vpack.c.b16 %v997, %v995
  %v1498 = vpack.c.b16 %v1000, %v998
  %v1499 = vpack.c.b16 %v1001, %v999
  %v1500 = vpack.c.b16 %v1004, %v1002
  %v1501 = vpack.c.b16 %v1005, %v1003
  %v1502 = vpack.c.b16 %v1008, %v1006
  %v1503 = vpack.c.b16 %v1009, %v1007
  %v1504 = vpack.c.b16 %v1012, %v1010
  %v1505 = vpack.c.b16 %v1013, %v1011
  %v1506 = vpack.c.b16 %v1016, %v1014
  %v1507 = vpack.c.b16 %v1017, %v1015
  %v1508 = vpack.c.b16 %v1020, %v1018
  %v1509 = vpack.c.b16 %v1021, %v1019
  %v1510 = vpack.c.b16 %v1024, %v1022
  %v1511 = vpack.c.b16 %v1025, %v1023
  %v1512 = vpack.c.b16 %v1028, %v1026
  %v1513 = vpack.c.b16 %v1029, %v1027
  %v1514 = vpack.c.b16 %v1032, %v1030
  %v1515 = vpack.c.b16 %v1033, %v1031
  %v1516 = vpack.c.b16 %v1036, %v1034
  %v1517 = vpack.c.b16 %v1037, %v1035
  %v1518 = vpack.c.b16 %v1040, %v1038
  %v1519 = vpack.c.b16 %v1041, %v1039
  %v1520 = vpack.c.b16 %v1044, %v1042
  %v1521 = vpack.c.b16 %v1045, %v1043
  %v1522 = vpack.c.b16 %v1048, %v1046
  %v1523 = vpack.c.b16 %v1049, %v1047
  %v1524 = vpack.c.b16 %v1052, %v1050
  %v1525 = vpack.c.b16 %v1053, %v1051
  %v1526 = vpack.c.b16 %v1056, %v1054
  %v1527 = vpack.c.b16 %v1057, %v1055
  %v1528 = vpack.c.b16 %v1060, %v1058
  %v1529 = vpack.c.b16 %v1061, %v1059
  %v1530 = vpack.c.b16 %v1064, %v1062
  %v1531 = vpack.c.b16 %v1065, %v1063
  %v1532 = vpack.c.b16 %v1068, %v1066
  %v1533 = vpack.c.b16 %v1069, %v1067
  %v1534 = vpack.c.b16 %v1072, %v1070
  %v1535 = vpack.c.b16 %v1073, %v1071
  %v1536 = vpack.c.b16 %v1076, %v1074
  %v1537 = vpack.c.b16 %v1077, %v1075
  %v1538 = vpack.c.b16 %v1080, %v1078
  %v1539 = vpack.c.b16 %v1081, %v1079
  %v1540 = vpack.c.b16 %v1084, %v1082
  %v1541 = vpack.c.b16 %v1085, %v1083
  %v1542 = vpack.c.b16 %v1088, %v1086
  %v1543 = vpack.c.b16 %v1089, %v1087
  %v1544 = vpack.c.b16 %v1092, %v1090
  %v1545 = vpack.c.b16 %v1093, %v1091
  %v1546 = vpack.c.b16 %v1096, %v1094
  %v1547 = vpack.c.b16 %v1097, %v1095
  %v1548 = vpack.c.b16 %v1100, %v1098
  %v1549 = vpack.c.b16 %v1101, %v1099
  %v1550 = vpack.c.b16 %v1104, %v1102
  %v1551 = vpack.c.b16 %v1105, %v1103
  %v1552 = vpack.c.b16 %v1108, %v1106
  %v1553 = vpack.c.b16 %v1109, %v1107
  %v1554 = vpack.c.b16 %v1112, %v1110
  %v1555 = vpack.c.b16 %v1113, %v1111
  %v1556 = vpack.c.b16 %v1116, %v1114
  %v1557 = vpack.c.b16 %v1117, %v1115
  %v1558 = vpack.c.b16 %v1120, %v1118
  %v1559 = vpack.c.b16 %v1121, %v1119
  %v1560 = vpack.c.b16 %v1124, %v1122
  %v1561 = vpack.c.b16 %v1125, %v1123
  %v1562 = vpack.c.b16 %v1128, %v1126
  %v1563 = vpack.c.b16 %v1129, %v1127
  %v1564 = vpack.c.b16 %v1132, %v1130
  %v1565 = vpack.c.b16 %v1133, %v1131
  %v1566 = vpack.c.b16 %v1136, %v1134
  %v1567 = vpack.c.b16 %v1137, %v1135
  %v1568 = vpack.c.b16 %v1140, %v1138
  %v1569 = vpack.c.b16 %v1141, %v1139
  %v1570 = vpack.c.b16 %v1144, %v1142
  %v1571 = vpack.c.b16 %v1145, %v1143
  %v1572 = vpack.c.b16 %v1148, %v1146
  %v1573 = vpack.c.b16 %v1149, %v1147
  %v1574 = vpack.c.b16 %v1152, %v1150
  %v1575 = vpack.c.b16 %v1153, %v1151
  %v1576 = vpack.c.b16 %v1156, %v1154
  %v1577 = vpack.c.b16 %v1157, %v1155
  %v1578 = vpack.c.b16 %v1160, %v1158
  %v1579 = vpack.c.b16 %v1161, %v1159
  %v1580 = vpack.c.b16 %v1164, %v1162
  %v1581 = vpack.c.b16 %v1165, %v1163
  %v1582 = vpack.c.b16 %v1168, %v1166
  %v1583 = vpack.c.b16 %v1169, %v1167
  %v1584 = vpack.c.b16 %v1172, %v1170
  %v1585 = vpack.c.b16 %v1173, %v1171
  %v1586 = vpack.c.b16 %v1176, %v1174
  %v1587 = vpack.c.b16 %v1177, %v1175
  %v1588 = vpack.c.b16 %v1180, %v1178
  %v1589 = vpack.c.b16 %v1181, %v1179
  %v1590 = vpack.c.b16 %v1184, %v1182
  %v1591 = vpack.c.b16 %v1185, %v1183
  %v1592 = vpack.c.b16 %v1188, %v1186
  %v1593 = vpack.c.b16 %v1189, %v1187
  %v1594 = vpack.c.b16 %v1192, %v1190
  %v1595 = vpack.c.b16 %v1193, %v1191
  %v1596 = vpack.c.b16 %v1196, %v1194
  %v1597 = vpack.c.b16 %v1197, %v1195
  %v1598 = vpack.c.b16 %v1200, %v1198
  %v1599 = vpack.c.b16 %v1201, %v1199
  %v1600 = vpack.c.b16 %v1204, %v1202
  %v1601 = vpack.c.b16 %v1205, %v1203
  %v1602 = vpack.c.b16 %v1208, %v1206
  %v1603 = vpack.c.b16 %v1209, %v1207
  %v1604 = vpack.c.b16 %v1212, %v1210
  %v1605 = vpack.c.b16 %v1213, %v1211
  %v1606 = vpack.c.b16 %v1216, %v1214
  %v1607 = vpack.c.b16 %v1217, %v1215
  %v1608 = vpack.c.b16 %v1220, %v1218
  %v1609 = vpack.c.b16 %v1221, %v1219
  %v1610 = vpack.c.b16 %v1224, %v1222
  %v1611 = vpack.c.b16 %v1225, %v1223
  %v1612 = vpack.c.b16 %v1228, %v1226
  %v1613 = vpack.c.b16 %v1229, %v1227
  %v1614 = vpack.c.b16 %v1232, %v1230
  %v1615 = vpack.c.b16 %v1233, %v1231
  %v1616 = vpack.c.b16 %v1236, %v1234
  %v1617 = vpack.c.b16 %v1237, %v1235
  %v1618 = vpack.c.b16 %v1240, %v1238
  %v1619 = vpack.c.b16 %v1241, %v1239
  %v1620 = vpack.c.b16 %v1244, %v1242
  %v1621 = vpack.c.b16 %v1245, %v1243
  %v1622 = vpack.c.b16 %v1248, %v1246
  %v1623 = vpack.c.b16 %v1249, %v1247
  %v1624 = vpack.c.b16 %v1252, %v1250
  %v1625 = vpack.c.b16 %v1253, %v1251
  %v1626 = vpack.c.b16 %v1256, %v1254
  %v1627 = vpack.c.b16 %v1257, %v1255
  %v1628 = vpack.c.b16 %v1260, %v1258
  %v1629 = vpack.c.b16 %v1261, %v1259
  %v1630 = vpack.c.b16 %v1264, %v1262
  %v1631 = vpack.c.b16 %v1265, %v1263
  %v1632 = vpack.c.b16 %v1268, %v1266
  %v1633 = vpack.c.b16 %v1269, %v1267
  %v1634 = vpack.c.b16 %v1272, %v1270
  %v1635 = vpack.c.b16 %v1273, %v1271
  %v1636 = vpack.c.b16 %v1276, %v1274
  %v1637 = vpack.c.b16 %v1277, %v1275
  %v1638 = vpack.c.b16 %v1280, %v1278
  %v1639 = vpack.c.b16 %v1281, %v1279
  %v1640 = vpack.c.b16 %v1284, %v1282
  %v1641 = vpack.c.b16 %v1285, %v1283
  %v1642 = vpack.c.b16 %v1288, %v1286
  %v1643 = vpack.c.b16 %v1289, %v1287
  %v1644 = vpack.c.b16 %v1292, %v1290
  %v1645 = vpack.c.b16 %v1293, %v1291
  %v1646 = vpack.c.b16 %v1296, %v1294
  %v1647 = vpack.c.b16 %v1297, %v1295
  %v1648 = vpack.c.b16 %v1300, %v1298
  %v1649 = vpack.c.b16 %v1301, %v1299
  %v1650 = vpack.c.b16 %v1304, %v1302
  %v1651 = vpack.c.b16 %v1305, %v1303
  %v1652 = vpack.c.b16 %v1308, %v1306
  %v1653 = vpack.c.b16 %v1309, %v1307
  %v1654 = vpack.c.b16 %v1312, %v1310
  %v1655 = vpack.c.b16 %v1313, %v1311
  %v1656 = vpack.c.b16 %v1316, %v1314
  %v1657 = vpack.c.b16 %v1317, %v1315
  %v1658 = vpack.c.b16 %v1320, %v1318
  %v1659 = vpack.c.b16 %v1321, %v1319
  %v1660 = vpack.c.b16 %v1324, %v1322
  %v1661 = vpack.c.b16 %v1325, %v1323
  %v1662 = vpack.c.b16 %v1328, %v1326
  %v1663 = vpack.c.b16 %v1329, %v1327
  %v1664 = vpack.c.b16 %v1332, %v1330
  %v1665 = vpack.c.b16 %v1333, %v1331
  %v1666 = vpack.c.b16 %v1336, %v1334
  %v1667 = vpack.c.b16 %v1337, %v1335
  %v1668 = vpack.c.b16 %v1340, %v1338
  %v1669 = vpack.c.b16 %v1341, %v1339
  %v1670 = vpack.c.b16 %v1344, %v1342
  %v1671 = vpack.c.b16 %v1345, %v1343
  %v1672 = vpack.c.b16 %v1348, %v1346
  %v1673 = vpack.c.b16 %v1349, %v1347
  %v1674 = vpack.c.b16 %v1352, %v1350
  %v1675 = vpack.c.b16 %v1353, %v1351
  %v1676 = vpack.c.b16 %v1356, %v1354
  %v1677 = vpack.c.b16 %v1357, %v1355
  %v1678 = vpack.c.b16 %v1360, %v1358
  %v1679 = vpack.c.b16 %v1361, %v1359
  %v1680 = vpack.c.b16 %v1364, %v1362
  %v1681 = vpack.c.b16 %v1365, %v1363
  %v1682 = vpack.c.b16 %v1368, %v1366
  %v1683 = vpack.c.b16 %v1369, %v1367
  %v1684 = vpack.c.b16 %v1372, %v1370
  %v1685 = vpack.c.b16 %v1373, %v1371
  %v1686 = vpack.c.b16 %v1376, %v1374
  %v1687 = vpack.c.b16 %v1377, %v1375
  %v1688 = vpack.c.b16 %v1380, %v1378
  %v1689 = vpack.c.b16 %v1381, %v1379
  %v1690 = vpack.c.b16 %v1384, %v1382
  %v1691 = vpack.c.b16 %v1385, %v1383
  %v1692 = vpack.c.b16 %v1388, %v1386
  %v1693 = vpack.c.b16 %v1389, %v1387
  %v1694 = vpack.c.b16 %v1392, %v1390
  %v1695 = vpack.c.b16 %v1393, %v1391
  %v1696 = vpack.c.b16 %v1396, %v1394
  %v1697 = vpack.c.b16 %v1397, %v1395
  %v1698 = vpack.c.b16 %v1400, %v1398
  %v1699 = vpack.c.b16 %v1401, %v1399
  %v1700 = vpack.c.b16 %v1404, %v1402
  %v1701 = vpack.c.b16 %v1405, %v1403
  %v1702 = vpack.c.b16 %v1408, %v1406
  %v1703 = vpack.c.b16 %v1409, %v1407
  %v1704 = vpack.c.b16 %v1412, %v1410
  %v1705 = vpack.c.b16 %v1413, %v1411
  %v1706 = vpack.c.b16 %v1416, %v1414
  %v1707 = vpack.c.b16 %v1417, %v1415
  %v1708 = vpack.c.b16 %v1420, %v1418
  %v1709 = vpack.c.b16 %v1421, %v1419
  %v1710 = vpack.c.b16 %v1424, %v1422
  %v1711 = vpack.c.b16 %v1425, %v1423
  %v1712 = vpack.c.b16 %v1428, %v1426
  %v1713 = vpack.c.b16 %v1429, %v1427
  %v1714 = vpack.c.b16 %v1432, %v1430
  %v1715 = vpack.c.b16 %v1433, %v1431
  %v1716 = vpack.c.b16 %v1436, %v1434
  %v1717 = vpack.c.b16 %v1437, %v1435
  %v1718 = vpack.c.b16 %v1440, %v1438
  %v1719 = vpack.c.b16 %v1441, %v1439
  %v1720 = vpack.c.b16 %v1444, %v1442
  %v1721 = vpack.c.b16 %v1445, %v1443
  %v1722 = vpack.c.b16 %v1448, %v1446
  %v1723 = vpack.c.b16 %v1449, %v1447
  %v1724 = vpack.c.b16 %v1452, %v1450
  %v1725 = vpack.c.b16 %v1453, %v1451
  %v1726 = vpack.c.b16 %v1456, %v1454
  %v1727 = vpack.c.b16 %v1457, %v1455
  %v1728 = vpack.c.b16 %v1460, %v1458
  %v1729 = vpack.c.b16 %v1461, %v1459
  %v1730 = vpack.c.b16 %v1464, %v1462
  %v1731 = vpack.c.b16 %v1465, %v1463
  %v1732 = vpack.c.b16 %v1468, %v1466
  %v1733 = vpack.c.b16 %v1469, %v1467
  %v1734 = vpack.c.b16 %v1472, %v1470
  %v1735 = vpack.c.b16 %v1473, %v1471
  %v1736 = vpack.c.b16 %v1476, %v1474
  %v1737 = vpack.c.b16 %v1477, %v1475
  %v1738 = vpack.c.b16 %v1480, %v1478
  %v1739 = vpack.c.b16 %v1481, %v1479
  %v1740 = vpack.c.b16 %v1484, %v1482
  %v1741 = vpack.c.b16 %v1485, %v1483
  %1998 = vmatprep.subr.bf16.mxu0 %v1501
  %1999 = vmatpush1.bf16.msra.mxu0 %v1500
  %2000 = vmatprep.subr.bf16.mxu0 %v1499
  %2001 = vmatpush1.bf16.msra.mxu0 %v1498
  %2002 = vmatprep.subr.bf16.mxu0 %v1497
  %2003 = vmatpush1.bf16.msra.mxu0 %v1496
  %2004 = vmatprep.subr.bf16.mxu0 %v1495
  %2005 = vmatpush1.bf16.msra.mxu0 %v1494
  %2006 = vmatprep.subr.bf16.mxu0 %v1493
  %2007 = vmatpush1.bf16.msra.mxu0 %v1492
  %2008 = vmatprep.subr.bf16.mxu0 %v1491
  %2009 = vmatpush1.bf16.msra.mxu0 %v1490
  %2010 = vmatprep.subr.bf16.mxu0 %v1489
  %2011 = vmatpush1.bf16.msra.mxu0 %v1488
  %2012 = vmatprep.subr.bf16.mxu0 %v1487
  %2013 = vmatpush1.bf16.msra.mxu0 %v1486
  %2014 = vmatprep.subr.bf16.mxu0 %v1517
  %2015 = vmatpush2.bf16.msra.mxu0 %v1516
  %2016 = vmatprep.subr.bf16.mxu0 %v1515
  %2017 = vmatpush2.bf16.msra.mxu0 %v1514
  %2018 = vmatprep.subr.bf16.mxu0 %v1513
  %2019 = vmatpush2.bf16.msra.mxu0 %v1512
  %2020 = vmatprep.subr.bf16.mxu0 %v1511
  %2021 = vmatpush2.bf16.msra.mxu0 %v1510
  %2022 = vmatprep.subr.bf16.mxu0 %v1509
  %2023 = vmatpush2.bf16.msra.mxu0 %v1508
  %2024 = vmatprep.subr.bf16.mxu0 %v1507
  %2025 = vmatpush2.bf16.msra.mxu0 %v1506
  %2026 = vmatprep.subr.bf16.mxu0 %v1505
  %2027 = vmatpush2.bf16.msra.mxu0 %v1504
  %2028 = vmatprep.subr.bf16.mxu0 %v1503
  %2029 = vmatpush2.bf16.msra.mxu0 %v1502
  %2030 = vmatprep.mubr.bf16.mxu0 %v559
  %2031 = vmatmul.mubr.bf16.gmra.mxu0 %v558
  %v2032 = vpop.f32.mrf.mxu0
  %v2033 = vadd.f32 0.0, %v2032
  %v2034 = vpop.f32.mrf.mxu0
  %v2035 = vadd.f32 0.0, %v2034
  %v2036 = vpop.f32.mrf.mxu0
  %v2037 = vadd.f32 0.0, %v2036
  %v2038 = vpop.f32.mrf.mxu0
  %v2039 = vadd.f32 0.0, %v2038
  %2040 = vmatprep.mubr.bf16.mxu0 %v575
  %2041 = vmatmul.mubr.bf16.gmra.mxu0 %v574
  %v2042 = vpop.f32.mrf.mxu0
  %v2043 = vadd.f32 0.0, %v2042
  %v2044 = vpop.f32.mrf.mxu0
  %v2045 = vadd.f32 0.0, %v2044
  %v2046 = vpop.f32.mrf.mxu0
  %v2047 = vadd.f32 0.0, %v2046
  %v2048 = vpop.f32.mrf.mxu0
  %v2049 = vadd.f32 0.0, %v2048
  %2050 = vmatprep.mubr.bf16.mxu0 %v591
  %2051 = vmatmul.mubr.bf16.gmra.mxu0 %v590
  %v2052 = vpop.f32.mrf.mxu0
  %v2053 = vadd.f32 0.0, %v2052
  %v2054 = vpop.f32.mrf.mxu0
  %v2055 = vadd.f32 0.0, %v2054
  %v2056 = vpop.f32.mrf.mxu0
  %v2057 = vadd.f32 0.0, %v2056
  %v2058 = vpop.f32.mrf.mxu0
  %v2059 = vadd.f32 0.0, %v2058
  %2060 = vmatprep.mubr.bf16.mxu0 %v607
  %2061 = vmatmul.mubr.bf16.gmra.mxu0 %v606
  %v2062 = vpop.f32.mrf.mxu0
  %v2063 = vadd.f32 0.0, %v2062
  %v2064 = vpop.f32.mrf.mxu0
  %v2065 = vadd.f32 0.0, %v2064
  %v2066 = vpop.f32.mrf.mxu0
  %v2067 = vadd.f32 0.0, %v2066
  %v2068 = vpop.f32.mrf.mxu0
  %v2069 = vadd.f32 0.0, %v2068
  %2070 = vmatprep.mubr.bf16.mxu0 %v623
  %2071 = vmatmul.mubr.bf16.gmra.mxu0 %v622
  %v2072 = vpop.f32.mrf.mxu0
  %v2073 = vadd.f32 0.0, %v2072
  %v2074 = vpop.f32.mrf.mxu0
  %v2075 = vadd.f32 0.0, %v2074
  %v2076 = vpop.f32.mrf.mxu0
  %v2077 = vpop.f32.mrf.mxu0
  %2078 = vdwg.mxu0
  %2079 = vmatprep.subr.bf16.mxu0 %v1533
  %2080 = vmatpush1.bf16.msra.mxu0 %v1532
  %2081 = vmatprep.subr.bf16.mxu0 %v1531
  %2082 = vmatpush1.bf16.msra.mxu0 %v1530
  %2083 = vmatprep.subr.bf16.mxu0 %v1529
  %2084 = vmatpush1.bf16.msra.mxu0 %v1528
  %2085 = vmatprep.subr.bf16.mxu0 %v1527
  %2086 = vmatpush1.bf16.msra.mxu0 %v1526
  %2087 = vmatprep.subr.bf16.mxu0 %v1525
  %2088 = vmatpush1.bf16.msra.mxu0 %v1524
  %2089 = vmatprep.subr.bf16.mxu0 %v1523
  %2090 = vmatpush1.bf16.msra.mxu0 %v1522
  %2091 = vmatprep.subr.bf16.mxu0 %v1521
  %2092 = vmatpush1.bf16.msra.mxu0 %v1520
  %2093 = vmatprep.subr.bf16.mxu0 %v1519
  %2094 = vmatpush1.bf16.msra.mxu0 %v1518
  %2095 = vmatprep.subr.bf16.mxu0 %v1549
  %2096 = vmatpush2.bf16.msra.mxu0 %v1548
  %2097 = vmatprep.subr.bf16.mxu0 %v1547
  %2098 = vmatpush2.bf16.msra.mxu0 %v1546
  %2099 = vmatprep.subr.bf16.mxu0 %v1545
  %2100 = vmatpush2.bf16.msra.mxu0 %v1544
  %2101 = vmatprep.subr.bf16.mxu0 %v1543
  %2102 = vmatpush2.bf16.msra.mxu0 %v1542
  %2103 = vmatprep.subr.bf16.mxu0 %v1541
  %2104 = vmatpush2.bf16.msra.mxu0 %v1540
  %2105 = vmatprep.subr.bf16.mxu0 %v1539
  %2106 = vmatpush2.bf16.msra.mxu0 %v1538
  %2107 = vmatprep.subr.bf16.mxu0 %v1537
  %2108 = vmatpush2.bf16.msra.mxu0 %v1536
  %2109 = vmatprep.subr.bf16.mxu0 %v1535
  %2110 = vmatpush2.bf16.msra.mxu0 %v1534
  %2111 = vmatprep.mubr.bf16.mxu0 %v561
  %2112 = vmatmul.mubr.bf16.gmra.mxu0 %v560
  %v2113 = vpop.f32.mrf.mxu0
  %v2114 = vadd.f32 %v2033, %v2113
  %v2115 = vpop.f32.mrf.mxu0
  %v2116 = vadd.f32 %v2035, %v2115
  %v2117 = vpop.f32.mrf.mxu0
  %v2118 = vadd.f32 %v2037, %v2117
  %v2119 = vpop.f32.mrf.mxu0
  %v2120 = vadd.f32 %v2039, %v2119
  %2121 = vmatprep.mubr.bf16.mxu0 %v577
  %2122 = vmatmul.mubr.bf16.gmra.mxu0 %v576
  %v2123 = vpop.f32.mrf.mxu0
  %v2124 = vadd.f32 %v2043, %v2123
  %v2125 = vpop.f32.mrf.mxu0
  %v2126 = vadd.f32 %v2045, %v2125
  %v2127 = vpop.f32.mrf.mxu0
  %v2128 = vadd.f32 %v2047, %v2127
  %v2129 = vpop.f32.mrf.mxu0
  %v2130 = vadd.f32 %v2049, %v2129
  %2131 = vmatprep.mubr.bf16.mxu0 %v593
  %2132 = vmatmul.mubr.bf16.gmra.mxu0 %v592
  %v2133 = vpop.f32.mrf.mxu0
  %v2134 = vadd.f32 %v2053, %v2133
  %v2135 = vpop.f32.mrf.mxu0
  %v2136 = vadd.f32 %v2055, %v2135
  %v2137 = vpop.f32.mrf.mxu0
  %v2138 = vadd.f32 %v2057, %v2137
  %v2139 = vpop.f32.mrf.mxu0
  %v2140 = vadd.f32 %v2059, %v2139
  %2141 = vmatprep.mubr.bf16.mxu0 %v609
  %2142 = vmatmul.mubr.bf16.gmra.mxu0 %v608
  %v2143 = vpop.f32.mrf.mxu0
  %v2144 = vadd.f32 %v2063, %v2143
  %v2145 = vpop.f32.mrf.mxu0
  %v2146 = vadd.f32 %v2065, %v2145
  %v2147 = vpop.f32.mrf.mxu0
  %v2148 = vadd.f32 %v2067, %v2147
  %v2149 = vpop.f32.mrf.mxu0
  %v2150 = vadd.f32 %v2069, %v2149
  %2151 = vmatprep.mubr.bf16.mxu0 %v625
  %2152 = vmatmul.mubr.bf16.gmra.mxu0 %v624
  %v2153 = vpop.f32.mrf.mxu0
  %v2154 = vadd.f32 %v2073, %v2153
  %v2155 = vpop.f32.mrf.mxu0
  %v2156 = vadd.f32 %v2075, %v2155
  %v2157 = vpop.f32.mrf.mxu0
  %v2158 = vpop.f32.mrf.mxu0
  %2159 = vdwg.mxu0
  %2160 = vmatprep.subr.bf16.mxu0 %v1565
  %2161 = vmatpush1.bf16.msra.mxu0 %v1564
  %2162 = vmatprep.subr.bf16.mxu0 %v1563
  %2163 = vmatpush1.bf16.msra.mxu0 %v1562
  %2164 = vmatprep.subr.bf16.mxu0 %v1561
  %2165 = vmatpush1.bf16.msra.mxu0 %v1560
  %2166 = vmatprep.subr.bf16.mxu0 %v1559
  %2167 = vmatpush1.bf16.msra.mxu0 %v1558
  %2168 = vmatprep.subr.bf16.mxu0 %v1557
  %2169 = vmatpush1.bf16.msra.mxu0 %v1556
  %2170 = vmatprep.subr.bf16.mxu0 %v1555
  %2171 = vmatpush1.bf16.msra.mxu0 %v1554
  %2172 = vmatprep.subr.bf16.mxu0 %v1553
  %2173 = vmatpush1.bf16.msra.mxu0 %v1552
  %2174 = vmatprep.subr.bf16.mxu0 %v1551
  %2175 = vmatpush1.bf16.msra.mxu0 %v1550
  %2176 = vmatprep.subr.bf16.mxu0 %v1581
  %2177 = vmatpush2.bf16.msra.mxu0 %v1580
  %2178 = vmatprep.subr.bf16.mxu0 %v1579
  %2179 = vmatpush2.bf16.msra.mxu0 %v1578
  %2180 = vmatprep.subr.bf16.mxu0 %v1577
  %2181 = vmatpush2.bf16.msra.mxu0 %v1576
  %2182 = vmatprep.subr.bf16.mxu0 %v1575
  %2183 = vmatpush2.bf16.msra.mxu0 %v1574
  %2184 = vmatprep.subr.bf16.mxu0 %v1573
  %2185 = vmatpush2.bf16.msra.mxu0 %v1572
  %2186 = vmatprep.subr.bf16.mxu0 %v1571
  %2187 = vmatpush2.bf16.msra.mxu0 %v1570
  %2188 = vmatprep.subr.bf16.mxu0 %v1569
  %2189 = vmatpush2.bf16.msra.mxu0 %v1568
  %2190 = vmatprep.subr.bf16.mxu0 %v1567
  %2191 = vmatpush2.bf16.msra.mxu0 %v1566
  %2192 = vmatprep.mubr.bf16.mxu0 %v563
  %2193 = vmatmul.mubr.bf16.gmra.mxu0 %v562
  %v2194 = vpop.f32.mrf.mxu0
  %v2195 = vadd.f32 %v2114, %v2194
  %v2196 = vpop.f32.mrf.mxu0
  %v2197 = vadd.f32 %v2116, %v2196
  %v2198 = vpop.f32.mrf.mxu0
  %v2199 = vadd.f32 %v2118, %v2198
  %v2200 = vpop.f32.mrf.mxu0
  %v2201 = vadd.f32 %v2120, %v2200
  %2202 = vmatprep.mubr.bf16.mxu0 %v579
  %2203 = vmatmul.mubr.bf16.gmra.mxu0 %v578
  %v2204 = vpop.f32.mrf.mxu0
  %v2205 = vadd.f32 %v2124, %v2204
  %v2206 = vpop.f32.mrf.mxu0
  %v2207 = vadd.f32 %v2126, %v2206
  %v2208 = vpop.f32.mrf.mxu0
  %v2209 = vadd.f32 %v2128, %v2208
  %v2210 = vpop.f32.mrf.mxu0
  %v2211 = vadd.f32 %v2130, %v2210
  %2212 = vmatprep.mubr.bf16.mxu0 %v595
  %2213 = vmatmul.mubr.bf16.gmra.mxu0 %v594
  %v2214 = vpop.f32.mrf.mxu0
  %v2215 = vadd.f32 %v2134, %v2214
  %v2216 = vpop.f32.mrf.mxu0
  %v2217 = vadd.f32 %v2136, %v2216
  %v2218 = vpop.f32.mrf.mxu0
  %v2219 = vadd.f32 %v2138, %v2218
  %v2220 = vpop.f32.mrf.mxu0
  %v2221 = vadd.f32 %v2140, %v2220
  %2222 = vmatprep.mubr.bf16.mxu0 %v611
  %2223 = vmatmul.mubr.bf16.gmra.mxu0 %v610
  %v2224 = vpop.f32.mrf.mxu0
  %v2225 = vadd.f32 %v2144, %v2224
  %v2226 = vpop.f32.mrf.mxu0
  %v2227 = vadd.f32 %v2146, %v2226
  %v2228 = vpop.f32.mrf.mxu0
  %v2229 = vadd.f32 %v2148, %v2228
  %v2230 = vpop.f32.mrf.mxu0
  %v2231 = vadd.f32 %v2150, %v2230
  %2232 = vmatprep.mubr.bf16.mxu0 %v627
  %2233 = vmatmul.mubr.bf16.gmra.mxu0 %v626
  %v2234 = vpop.f32.mrf.mxu0
  %v2235 = vadd.f32 %v2154, %v2234
  %v2236 = vpop.f32.mrf.mxu0
  %v2237 = vadd.f32 %v2156, %v2236
  %v2238 = vpop.f32.mrf.mxu0
  %v2239 = vpop.f32.mrf.mxu0
  %2240 = vdwg.mxu0
  %2241 = vmatprep.subr.bf16.mxu0 %v1597
  %2242 = vmatpush1.bf16.msra.mxu0 %v1596
  %2243 = vmatprep.subr.bf16.mxu0 %v1595
  %2244 = vmatpush1.bf16.msra.mxu0 %v1594
  %2245 = vmatprep.subr.bf16.mxu0 %v1593
  %2246 = vmatpush1.bf16.msra.mxu0 %v1592
  %2247 = vmatprep.subr.bf16.mxu0 %v1591
  %2248 = vmatpush1.bf16.msra.mxu0 %v1590
  %2249 = vmatprep.subr.bf16.mxu0 %v1589
  %2250 = vmatpush1.bf16.msra.mxu0 %v1588
  %2251 = vmatprep.subr.bf16.mxu0 %v1587
  %2252 = vmatpush1.bf16.msra.mxu0 %v1586
  %2253 = vmatprep.subr.bf16.mxu0 %v1585
  %2254 = vmatpush1.bf16.msra.mxu0 %v1584
  %2255 = vmatprep.subr.bf16.mxu0 %v1583
  %2256 = vmatpush1.bf16.msra.mxu0 %v1582
  %2257 = vmatprep.subr.bf16.mxu0 %v1613
  %2258 = vmatpush2.bf16.msra.mxu0 %v1612
  %2259 = vmatprep.subr.bf16.mxu0 %v1611
  %2260 = vmatpush2.bf16.msra.mxu0 %v1610
  %2261 = vmatprep.subr.bf16.mxu0 %v1609
  %2262 = vmatpush2.bf16.msra.mxu0 %v1608
  %2263 = vmatprep.subr.bf16.mxu0 %v1607
  %2264 = vmatpush2.bf16.msra.mxu0 %v1606
  %2265 = vmatprep.subr.bf16.mxu0 %v1605
  %2266 = vmatpush2.bf16.msra.mxu0 %v1604
  %2267 = vmatprep.subr.bf16.mxu0 %v1603
  %2268 = vmatpush2.bf16.msra.mxu0 %v1602
  %2269 = vmatprep.subr.bf16.mxu0 %v1601
  %2270 = vmatpush2.bf16.msra.mxu0 %v1600
  %2271 = vmatprep.subr.bf16.mxu0 %v1599
  %2272 = vmatpush2.bf16.msra.mxu0 %v1598
  %2273 = vmatprep.mubr.bf16.mxu0 %v565
  %2274 = vmatmul.mubr.bf16.gmra.mxu0 %v564
  %v2275 = vpop.f32.mrf.mxu0
  %v2276 = vadd.f32 %v2195, %v2275
  %v2277 = vpop.f32.mrf.mxu0
  %v2278 = vadd.f32 %v2197, %v2277
  %v2279 = vpop.f32.mrf.mxu0
  %v2280 = vadd.f32 %v2199, %v2279
  %v2281 = vpop.f32.mrf.mxu0
  %v2282 = vadd.f32 %v2201, %v2281
  %2283 = vmatprep.mubr.bf16.mxu0 %v581
  %2284 = vmatmul.mubr.bf16.gmra.mxu0 %v580
  %v2285 = vpop.f32.mrf.mxu0
  %v2286 = vadd.f32 %v2205, %v2285
  %v2287 = vpop.f32.mrf.mxu0
  %v2288 = vadd.f32 %v2207, %v2287
  %v2289 = vpop.f32.mrf.mxu0
  %v2290 = vadd.f32 %v2209, %v2289
  %v2291 = vpop.f32.mrf.mxu0
  %v2292 = vadd.f32 %v2211, %v2291
  %2293 = vmatprep.mubr.bf16.mxu0 %v597
  %2294 = vmatmul.mubr.bf16.gmra.mxu0 %v596
  %v2295 = vpop.f32.mrf.mxu0
  %v2296 = vadd.f32 %v2215, %v2295
  %v2297 = vpop.f32.mrf.mxu0
  %v2298 = vadd.f32 %v2217, %v2297
  %v2299 = vpop.f32.mrf.mxu0
  %v2300 = vadd.f32 %v2219, %v2299
  %v2301 = vpop.f32.mrf.mxu0
  %v2302 = vadd.f32 %v2221, %v2301
  %2303 = vmatprep.mubr.bf16.mxu0 %v613
  %2304 = vmatmul.mubr.bf16.gmra.mxu0 %v612
  %v2305 = vpop.f32.mrf.mxu0
  %v2306 = vadd.f32 %v2225, %v2305
  %v2307 = vpop.f32.mrf.mxu0
  %v2308 = vadd.f32 %v2227, %v2307
  %v2309 = vpop.f32.mrf.mxu0
  %v2310 = vadd.f32 %v2229, %v2309
  %v2311 = vpop.f32.mrf.mxu0
  %v2312 = vadd.f32 %v2231, %v2311
  %2313 = vmatprep.mubr.bf16.mxu0 %v629
  %2314 = vmatmul.mubr.bf16.gmra.mxu0 %v628
  %v2315 = vpop.f32.mrf.mxu0
  %v2316 = vadd.f32 %v2235, %v2315
  %v2317 = vpop.f32.mrf.mxu0
  %v2318 = vadd.f32 %v2237, %v2317
  %v2319 = vpop.f32.mrf.mxu0
  %v2320 = vpop.f32.mrf.mxu0
  %2321 = vdwg.mxu0
  %2322 = vmatprep.subr.bf16.mxu0 %v1629
  %2323 = vmatpush1.bf16.msra.mxu0 %v1628
  %2324 = vmatprep.subr.bf16.mxu0 %v1627
  %2325 = vmatpush1.bf16.msra.mxu0 %v1626
  %2326 = vmatprep.subr.bf16.mxu0 %v1625
  %2327 = vmatpush1.bf16.msra.mxu0 %v1624
  %2328 = vmatprep.subr.bf16.mxu0 %v1623
  %2329 = vmatpush1.bf16.msra.mxu0 %v1622
  %2330 = vmatprep.subr.bf16.mxu0 %v1621
  %2331 = vmatpush1.bf16.msra.mxu0 %v1620
  %2332 = vmatprep.subr.bf16.mxu0 %v1619
  %2333 = vmatpush1.bf16.msra.mxu0 %v1618
  %2334 = vmatprep.subr.bf16.mxu0 %v1617
  %2335 = vmatpush1.bf16.msra.mxu0 %v1616
  %2336 = vmatprep.subr.bf16.mxu0 %v1615
  %2337 = vmatpush1.bf16.msra.mxu0 %v1614
  %2338 = vmatprep.subr.bf16.mxu0 %v1645
  %2339 = vmatpush2.bf16.msra.mxu0 %v1644
  %2340 = vmatprep.subr.bf16.mxu0 %v1643
  %2341 = vmatpush2.bf16.msra.mxu0 %v1642
  %2342 = vmatprep.subr.bf16.mxu0 %v1641
  %2343 = vmatpush2.bf16.msra.mxu0 %v1640
  %2344 = vmatprep.subr.bf16.mxu0 %v1639
  %2345 = vmatpush2.bf16.msra.mxu0 %v1638
  %2346 = vmatprep.subr.bf16.mxu0 %v1637
  %2347 = vmatpush2.bf16.msra.mxu0 %v1636
  %2348 = vmatprep.subr.bf16.mxu0 %v1635
  %2349 = vmatpush2.bf16.msra.mxu0 %v1634
  %2350 = vmatprep.subr.bf16.mxu0 %v1633
  %2351 = vmatpush2.bf16.msra.mxu0 %v1632
  %2352 = vmatprep.subr.bf16.mxu0 %v1631
  %2353 = vmatpush2.bf16.msra.mxu0 %v1630
  %2354 = vmatprep.mubr.bf16.mxu0 %v567
  %2355 = vmatmul.mubr.bf16.gmra.mxu0 %v566
  %v2356 = vpop.f32.mrf.mxu0
  %v2357 = vadd.f32 %v2276, %v2356
  %v2358 = vpop.f32.mrf.mxu0
  %v2359 = vadd.f32 %v2278, %v2358
  %v2360 = vpop.f32.mrf.mxu0
  %v2361 = vadd.f32 %v2280, %v2360
  %v2362 = vpop.f32.mrf.mxu0
  %v2363 = vadd.f32 %v2282, %v2362
  %2364 = vmatprep.mubr.bf16.mxu0 %v583
  %2365 = vmatmul.mubr.bf16.gmra.mxu0 %v582
  %v2366 = vpop.f32.mrf.mxu0
  %v2367 = vadd.f32 %v2286, %v2366
  %v2368 = vpop.f32.mrf.mxu0
  %v2369 = vadd.f32 %v2288, %v2368
  %v2370 = vpop.f32.mrf.mxu0
  %v2371 = vadd.f32 %v2290, %v2370
  %v2372 = vpop.f32.mrf.mxu0
  %v2373 = vadd.f32 %v2292, %v2372
  %2374 = vmatprep.mubr.bf16.mxu0 %v599
  %2375 = vmatmul.mubr.bf16.gmra.mxu0 %v598
  %v2376 = vpop.f32.mrf.mxu0
  %v2377 = vadd.f32 %v2296, %v2376
  %v2378 = vpop.f32.mrf.mxu0
  %v2379 = vadd.f32 %v2298, %v2378
  %v2380 = vpop.f32.mrf.mxu0
  %v2381 = vadd.f32 %v2300, %v2380
  %v2382 = vpop.f32.mrf.mxu0
  %v2383 = vadd.f32 %v2302, %v2382
  %2384 = vmatprep.mubr.bf16.mxu0 %v615
  %2385 = vmatmul.mubr.bf16.gmra.mxu0 %v614
  %v2386 = vpop.f32.mrf.mxu0
  %v2387 = vadd.f32 %v2306, %v2386
  %v2388 = vpop.f32.mrf.mxu0
  %v2389 = vadd.f32 %v2308, %v2388
  %v2390 = vpop.f32.mrf.mxu0
  %v2391 = vadd.f32 %v2310, %v2390
  %v2392 = vpop.f32.mrf.mxu0
  %v2393 = vadd.f32 %v2312, %v2392
  %2394 = vmatprep.mubr.bf16.mxu0 %v631
  %2395 = vmatmul.mubr.bf16.gmra.mxu0 %v630
  %v2396 = vpop.f32.mrf.mxu0
  %v2397 = vadd.f32 %v2316, %v2396
  %v2398 = vpop.f32.mrf.mxu0
  %v2399 = vadd.f32 %v2318, %v2398
  %v2400 = vpop.f32.mrf.mxu0
  %v2401 = vpop.f32.mrf.mxu0
  %2402 = vdwg.mxu0
  %2403 = vmatprep.subr.bf16.mxu0 %v1661
  %2404 = vmatpush1.bf16.msra.mxu0 %v1660
  %2405 = vmatprep.subr.bf16.mxu0 %v1659
  %2406 = vmatpush1.bf16.msra.mxu0 %v1658
  %2407 = vmatprep.subr.bf16.mxu0 %v1657
  %2408 = vmatpush1.bf16.msra.mxu0 %v1656
  %2409 = vmatprep.subr.bf16.mxu0 %v1655
  %2410 = vmatpush1.bf16.msra.mxu0 %v1654
  %2411 = vmatprep.subr.bf16.mxu0 %v1653
  %2412 = vmatpush1.bf16.msra.mxu0 %v1652
  %2413 = vmatprep.subr.bf16.mxu0 %v1651
  %2414 = vmatpush1.bf16.msra.mxu0 %v1650
  %2415 = vmatprep.subr.bf16.mxu0 %v1649
  %2416 = vmatpush1.bf16.msra.mxu0 %v1648
  %2417 = vmatprep.subr.bf16.mxu0 %v1647
  %2418 = vmatpush1.bf16.msra.mxu0 %v1646
  %2419 = vmatprep.subr.bf16.mxu0 %v1677
  %2420 = vmatpush2.bf16.msra.mxu0 %v1676
  %2421 = vmatprep.subr.bf16.mxu0 %v1675
  %2422 = vmatpush2.bf16.msra.mxu0 %v1674
  %2423 = vmatprep.subr.bf16.mxu0 %v1673
  %2424 = vmatpush2.bf16.msra.mxu0 %v1672
  %2425 = vmatprep.subr.bf16.mxu0 %v1671
  %2426 = vmatpush2.bf16.msra.mxu0 %v1670
  %2427 = vmatprep.subr.bf16.mxu0 %v1669
  %2428 = vmatpush2.bf16.msra.mxu0 %v1668
  %2429 = vmatprep.subr.bf16.mxu0 %v1667
  %2430 = vmatpush2.bf16.msra.mxu0 %v1666
  %2431 = vmatprep.subr.bf16.mxu0 %v1665
  %2432 = vmatpush2.bf16.msra.mxu0 %v1664
  %2433 = vmatprep.subr.bf16.mxu0 %v1663
  %2434 = vmatpush2.bf16.msra.mxu0 %v1662
  %2435 = vmatprep.mubr.bf16.mxu0 %v569
  %2436 = vmatmul.mubr.bf16.gmra.mxu0 %v568
  %v2437 = vpop.f32.mrf.mxu0
  %v2438 = vadd.f32 %v2357, %v2437
  %v2439 = vpop.f32.mrf.mxu0
  %v2440 = vadd.f32 %v2359, %v2439
  %v2441 = vpop.f32.mrf.mxu0
  %v2442 = vadd.f32 %v2361, %v2441
  %v2443 = vpop.f32.mrf.mxu0
  %v2444 = vadd.f32 %v2363, %v2443
  %2445 = vmatprep.mubr.bf16.mxu0 %v585
  %2446 = vmatmul.mubr.bf16.gmra.mxu0 %v584
  %v2447 = vpop.f32.mrf.mxu0
  %v2448 = vadd.f32 %v2367, %v2447
  %v2449 = vpop.f32.mrf.mxu0
  %v2450 = vadd.f32 %v2369, %v2449
  %v2451 = vpop.f32.mrf.mxu0
  %v2452 = vadd.f32 %v2371, %v2451
  %v2453 = vpop.f32.mrf.mxu0
  %v2454 = vadd.f32 %v2373, %v2453
  %2455 = vmatprep.mubr.bf16.mxu0 %v601
  %2456 = vmatmul.mubr.bf16.gmra.mxu0 %v600
  %v2457 = vpop.f32.mrf.mxu0
  %v2458 = vadd.f32 %v2377, %v2457
  %v2459 = vpop.f32.mrf.mxu0
  %v2460 = vadd.f32 %v2379, %v2459
  %v2461 = vpop.f32.mrf.mxu0
  %v2462 = vadd.f32 %v2381, %v2461
  %v2463 = vpop.f32.mrf.mxu0
  %v2464 = vadd.f32 %v2383, %v2463
  %2465 = vmatprep.mubr.bf16.mxu0 %v617
  %2466 = vmatmul.mubr.bf16.gmra.mxu0 %v616
  %v2467 = vpop.f32.mrf.mxu0
  %v2468 = vadd.f32 %v2387, %v2467
  %v2469 = vpop.f32.mrf.mxu0
  %v2470 = vadd.f32 %v2389, %v2469
  %v2471 = vpop.f32.mrf.mxu0
  %v2472 = vadd.f32 %v2391, %v2471
  %v2473 = vpop.f32.mrf.mxu0
  %v2474 = vadd.f32 %v2393, %v2473
  %2475 = vmatprep.mubr.bf16.mxu0 %v633
  %2476 = vmatmul.mubr.bf16.gmra.mxu0 %v632
  %v2477 = vpop.f32.mrf.mxu0
  %v2478 = vadd.f32 %v2397, %v2477
  %v2479 = vpop.f32.mrf.mxu0
  %v2480 = vadd.f32 %v2399, %v2479
  %v2481 = vpop.f32.mrf.mxu0
  %v2482 = vpop.f32.mrf.mxu0
  %2483 = vdwg.mxu0
  %2484 = vmatprep.subr.bf16.mxu0 %v1693
  %2485 = vmatpush1.bf16.msra.mxu0 %v1692
  %2486 = vmatprep.subr.bf16.mxu0 %v1691
  %2487 = vmatpush1.bf16.msra.mxu0 %v1690
  %2488 = vmatprep.subr.bf16.mxu0 %v1689
  %2489 = vmatpush1.bf16.msra.mxu0 %v1688
  %2490 = vmatprep.subr.bf16.mxu0 %v1687
  %2491 = vmatpush1.bf16.msra.mxu0 %v1686
  %2492 = vmatprep.subr.bf16.mxu0 %v1685
  %2493 = vmatpush1.bf16.msra.mxu0 %v1684
  %2494 = vmatprep.subr.bf16.mxu0 %v1683
  %2495 = vmatpush1.bf16.msra.mxu0 %v1682
  %2496 = vmatprep.subr.bf16.mxu0 %v1681
  %2497 = vmatpush1.bf16.msra.mxu0 %v1680
  %2498 = vmatprep.subr.bf16.mxu0 %v1679
  %2499 = vmatpush1.bf16.msra.mxu0 %v1678
  %2500 = vmatprep.subr.bf16.mxu0 %v1709
  %2501 = vmatpush2.bf16.msra.mxu0 %v1708
  %2502 = vmatprep.subr.bf16.mxu0 %v1707
  %2503 = vmatpush2.bf16.msra.mxu0 %v1706
  %2504 = vmatprep.subr.bf16.mxu0 %v1705
  %2505 = vmatpush2.bf16.msra.mxu0 %v1704
  %2506 = vmatprep.subr.bf16.mxu0 %v1703
  %2507 = vmatpush2.bf16.msra.mxu0 %v1702
  %2508 = vmatprep.subr.bf16.mxu0 %v1701
  %2509 = vmatpush2.bf16.msra.mxu0 %v1700
  %2510 = vmatprep.subr.bf16.mxu0 %v1699
  %2511 = vmatpush2.bf16.msra.mxu0 %v1698
  %2512 = vmatprep.subr.bf16.mxu0 %v1697
  %2513 = vmatpush2.bf16.msra.mxu0 %v1696
  %2514 = vmatprep.subr.bf16.mxu0 %v1695
  %2515 = vmatpush2.bf16.msra.mxu0 %v1694
  %2516 = vmatprep.mubr.bf16.mxu0 %v571
  %2517 = vmatmul.mubr.bf16.gmra.mxu0 %v570
  %v2518 = vpop.f32.mrf.mxu0
  %v2519 = vadd.f32 %v2438, %v2518
  %v2520 = vpop.f32.mrf.mxu0
  %v2521 = vadd.f32 %v2440, %v2520
  %v2522 = vpop.f32.mrf.mxu0
  %v2523 = vadd.f32 %v2442, %v2522
  %v2524 = vpop.f32.mrf.mxu0
  %v2525 = vadd.f32 %v2444, %v2524
  %2526 = vmatprep.mubr.bf16.mxu0 %v587
  %2527 = vmatmul.mubr.bf16.gmra.mxu0 %v586
  %v2528 = vpop.f32.mrf.mxu0
  %v2529 = vadd.f32 %v2448, %v2528
  %v2530 = vpop.f32.mrf.mxu0
  %v2531 = vadd.f32 %v2450, %v2530
  %v2532 = vpop.f32.mrf.mxu0
  %v2533 = vadd.f32 %v2452, %v2532
  %v2534 = vpop.f32.mrf.mxu0
  %v2535 = vadd.f32 %v2454, %v2534
  %2536 = vmatprep.mubr.bf16.mxu0 %v603
  %2537 = vmatmul.mubr.bf16.gmra.mxu0 %v602
  %v2538 = vpop.f32.mrf.mxu0
  %v2539 = vadd.f32 %v2458, %v2538
  %v2540 = vpop.f32.mrf.mxu0
  %v2541 = vadd.f32 %v2460, %v2540
  %v2542 = vpop.f32.mrf.mxu0
  %v2543 = vadd.f32 %v2462, %v2542
  %v2544 = vpop.f32.mrf.mxu0
  %v2545 = vadd.f32 %v2464, %v2544
  %2546 = vmatprep.mubr.bf16.mxu0 %v619
  %2547 = vmatmul.mubr.bf16.gmra.mxu0 %v618
  %v2548 = vpop.f32.mrf.mxu0
  %v2549 = vadd.f32 %v2468, %v2548
  %v2550 = vpop.f32.mrf.mxu0
  %v2551 = vadd.f32 %v2470, %v2550
  %v2552 = vpop.f32.mrf.mxu0
  %v2553 = vadd.f32 %v2472, %v2552
  %v2554 = vpop.f32.mrf.mxu0
  %v2555 = vadd.f32 %v2474, %v2554
  %2556 = vmatprep.mubr.bf16.mxu0 %v635
  %2557 = vmatmul.mubr.bf16.gmra.mxu0 %v634
  %v2558 = vpop.f32.mrf.mxu0
  %v2559 = vadd.f32 %v2478, %v2558
  %v2560 = vpop.f32.mrf.mxu0
  %v2561 = vadd.f32 %v2480, %v2560
  %v2562 = vpop.f32.mrf.mxu0
  %v2563 = vpop.f32.mrf.mxu0
  %2564 = vdwg.mxu0
  %2565 = vmatprep.subr.bf16.mxu0 %v1725
  %2566 = vmatpush1.bf16.msra.mxu0 %v1724
  %2567 = vmatprep.subr.bf16.mxu0 %v1723
  %2568 = vmatpush1.bf16.msra.mxu0 %v1722
  %2569 = vmatprep.subr.bf16.mxu0 %v1721
  %2570 = vmatpush1.bf16.msra.mxu0 %v1720
  %2571 = vmatprep.subr.bf16.mxu0 %v1719
  %2572 = vmatpush1.bf16.msra.mxu0 %v1718
  %2573 = vmatprep.subr.bf16.mxu0 %v1717
  %2574 = vmatpush1.bf16.msra.mxu0 %v1716
  %2575 = vmatprep.subr.bf16.mxu0 %v1715
  %2576 = vmatpush1.bf16.msra.mxu0 %v1714
  %2577 = vmatprep.subr.bf16.mxu0 %v1713
  %2578 = vmatpush1.bf16.msra.mxu0 %v1712
  %2579 = vmatprep.subr.bf16.mxu0 %v1711
  %2580 = vmatpush1.bf16.msra.mxu0 %v1710
  %2581 = vmatprep.subr.bf16.mxu0 %v1741
  %2582 = vmatpush2.bf16.msra.mxu0 %v1740
  %2583 = vmatprep.subr.bf16.mxu0 %v1739
  %2584 = vmatpush2.bf16.msra.mxu0 %v1738
  %2585 = vmatprep.subr.bf16.mxu0 %v1737
  %2586 = vmatpush2.bf16.msra.mxu0 %v1736
  %2587 = vmatprep.subr.bf16.mxu0 %v1735
  %2588 = vmatpush2.bf16.msra.mxu0 %v1734
  %2589 = vmatprep.subr.bf16.mxu0 %v1733
  %2590 = vmatpush2.bf16.msra.mxu0 %v1732
  %2591 = vmatprep.subr.bf16.mxu0 %v1731
  %2592 = vmatpush2.bf16.msra.mxu0 %v1730
  %2593 = vmatprep.subr.bf16.mxu0 %v1729
  %2594 = vmatpush2.bf16.msra.mxu0 %v1728
  %2595 = vmatprep.subr.bf16.mxu0 %v1727
  %2596 = vmatpush2.bf16.msra.mxu0 %v1726
  %2597 = vmatprep.mubr.bf16.mxu0 %v573
  %2598 = vmatmul.mubr.bf16.gmra.mxu0 %v572
  %v2599 = vpop.f32.mrf.mxu0
  %v2600 = vadd.f32 %v2519, %v2599
  %v2601 = vpop.f32.mrf.mxu0
  %v2602 = vadd.f32 %v2521, %v2601
  %v2603 = vpop.f32.mrf.mxu0
  %v2604 = vadd.f32 %v2523, %v2603
  %v2605 = vpop.f32.mrf.mxu0
  %v2606 = vadd.f32 %v2525, %v2605
  %2607 = vmatprep.mubr.bf16.mxu0 %v589
  %2608 = vmatmul.mubr.bf16.gmra.mxu0 %v588
  %v2609 = vpop.f32.mrf.mxu0
  %v2610 = vadd.f32 %v2529, %v2609
  %v2611 = vpop.f32.mrf.mxu0
  %v2612 = vadd.f32 %v2531, %v2611
  %v2613 = vpop.f32.mrf.mxu0
  %v2614 = vadd.f32 %v2533, %v2613
  %v2615 = vpop.f32.mrf.mxu0
  %v2616 = vadd.f32 %v2535, %v2615
  %2617 = vmatprep.mubr.bf16.mxu0 %v605
  %2618 = vmatmul.mubr.bf16.gmra.mxu0 %v604
  %v2619 = vpop.f32.mrf.mxu0
  %v2620 = vadd.f32 %v2539, %v2619
  %v2621 = vpop.f32.mrf.mxu0
  %v2622 = vadd.f32 %v2541, %v2621
  %v2623 = vpop.f32.mrf.mxu0
  %v2624 = vadd.f32 %v2543, %v2623
  %v2625 = vpop.f32.mrf.mxu0
  %v2626 = vadd.f32 %v2545, %v2625
  %2627 = vmatprep.mubr.bf16.mxu0 %v621
  %2628 = vmatmul.mubr.bf16.gmra.mxu0 %v620
  %v2629 = vpop.f32.mrf.mxu0
  %v2630 = vadd.f32 %v2549, %v2629
  %v2631 = vpop.f32.mrf.mxu0
  %v2632 = vadd.f32 %v2551, %v2631
  %v2633 = vpop.f32.mrf.mxu0
  %v2634 = vadd.f32 %v2553, %v2633
  %v2635 = vpop.f32.mrf.mxu0
  %v2636 = vadd.f32 %v2555, %v2635
  %2637 = vmatprep.mubr.bf16.mxu0 %v637
  %2638 = vmatmul.mubr.bf16.gmra.mxu0 %v636
  %v2639 = vpop.f32.mrf.mxu0
  %v2640 = vadd.f32 %v2559, %v2639
  %v2641 = vpop.f32.mrf.mxu0
  %v2642 = vadd.f32 %v2561, %v2641
  %v2643 = vpop.f32.mrf.mxu0
  %v2644 = vpop.f32.mrf.mxu0
  %2645 = vdwg.mxu0
  %2646 = vst [vmem:[%s2] sm:$0xff] %v2600
  %2647 = vst [vmem:[%s2 + $0x8] sm:$0xff] %v2602
  %2648 = vst [vmem:[%s2 + $0x10] sm:$0xff] %v2604
  %2649 = vst [vmem:[%s2 + $0x18] sm:$0xff] %v2606
  %2650 = vst [vmem:[%s2 + $0x20] sm:$0xff] %v2610
  %2651 = vst [vmem:[%s2 + $0x28] sm:$0xff] %v2612
  %2652 = vst [vmem:[%s2 + $0x30] sm:$0xff] %v2614
  %2653 = vst [vmem:[%s2 + $0x38] sm:$0xff] %v2616
  %2654 = vst [vmem:[%s2 + $0x40] sm:$0xff] %v2620
  %2655 = vst [vmem:[%s2 + $0x48] sm:$0xff] %v2622
  %2656 = vst [vmem:[%s2 + $0x50] sm:$0xff] %v2624
  %2657 = vst [vmem:[%s2 + $0x58] sm:$0xff] %v2626
  %2658 = vst [vmem:[%s2 + $0x60] sm:$0xff] %v2630
  %2659 = vst [vmem:[%s2 + $0x68] sm:$0xff] %v2632
  %2660 = vst [vmem:[%s2 + $0x70] sm:$0xff] %v2634
  %2661 = vst [vmem:[%s2 + $0x78] sm:$0xff] %v2636
  %2662 = vst [vmem:[%s2 + $0x80] sm:$0xff] %v2640
  %2663 = vst [vmem:[%s2 + $0x88] sm:$0xff] %v2642
  %p2664 = scmp.eq.s32.totalorder 0, 0
  // Predicated region
  $region10: #{patch_discriminator_forward.11} parent=0 // pred_check
    %p2665 = pneg %p2664
  $region11: #{patch_discriminator_forward.11} parent=0 // pred_check_branch
    %2667 = sbr.rel (%p2665) target = $region13
  $region12: #{patch_discriminator_forward.11} parent=0 // pred_region
    %v2668 = vlaneseq
    %vm2669 = vcmp.ge.s32.totalorder %v2668, 0
    %vm2670 = vcmp.lt.s32.totalorder %v2668, 256
    %vm2671 = vmand %vm2669, %vm2670
    %2672 = vst.msk [vmem:[%s3] sm:$0x3] %vm2671, 0.0
    %2673 = vst.msk [vmem:[%s4] sm:$0x3] %vm2671, 0.0
  $region13: #{patch_discriminator_forward.11} parent=0 // pred_fallthru
    _
  %v2674 = vld [vmem:[%s3] sm:$0x3]
  %v2675 = vadd.f32 %v2600, %v2604
  %v2676 = vadd.f32 %v2675, %v2610
  %v2677 = vadd.f32 %v2676, %v2614
  %v2678 = vadd.f32 %v2677, %v2620
  %v2679 = vadd.f32 %v2678, %v2624
  %v2680 = vadd.f32 %v2679, %v2630
  %v2681 = vadd.f32 %v2680, %v2634
  %v2682 = vadd.f32 %v2681, %v2640
  %v2683 = vrot.slane %v2682, 4
  %v2684 = vadd.f32 %v2682, %v2683
  %v2685 = vrot.slane %v2684, 2
  %v2686 = vadd.f32 %v2684, %v2685
  %v2687 = vrot.slane %v2686, 1
  %v2688 = vadd.f32 %v2686, %v2687
  %v2689 = vadd.f32 %v2602, %v2606
  %v2690 = vadd.f32 %v2689, %v2612
  %v2691 = vadd.f32 %v2690, %v2616
  %v2692 = vadd.f32 %v2691, %v2622
  %v2693 = vadd.f32 %v2692, %v2626
  %v2694 = vadd.f32 %v2693, %v2632
  %v2695 = vadd.f32 %v2694, %v2636
  %v2696 = vadd.f32 %v2695, %v2642
  %v2697 = vrot.slane %v2696, 4
  %v2698 = vadd.f32 %v2696, %v2697
  %v2699 = vrot.slane %v2698, 2
  %v2700 = vadd.f32 %v2698, %v2699
  %v2701 = vrot.slane %v2700, 1
  %v2702 = vadd.f32 %v2700, %v2701
  %v2705 = vcombine.low %v2688, %v2702
  %v2707 = vunpack.c.l.s4 1966171168
  %v2708 = vunpack.c.0.s8 %v2707
  %v2709 = vlaneseq
  %v2710 = vshrl.u32 %v2709, 7
  %v2711 = vsub.s32 %v2708, %v2710
  %v2712 = vrot.slane %v2705, %v2711
  %v2714 = vunpack.c.l.s4 1966171168
  %v2715 = vunpack.c.0.s8 %v2714
  %v2716 = vlaneseq
  %v2717 = vshrl.u32 %v2716, 7
  %v2718 = vsub.s32 %v2715, %v2717
  %v2719 = vrot.slane %v2712, %v2718
  %v2721 = vadd.f32 %v2674, %v2719
  %v2722 = vlaneseq
  %vm2723 = vcmp.ge.s32.totalorder %v2722, 0
  %vm2724 = vcmp.lt.s32.totalorder %v2722, 256
  %vm2725 = vmand %vm2723, %vm2724
  %2726 = vst.msk [vmem:[%s3] sm:$0x3] %vm2725, %v2721
  %v2727 = vld [vmem:[%s4] sm:$0x3]
  %v2728 = vmul.f32 %v2600, %v2600
  %v2729 = vmul.f32 %v2602, %v2602
  %v2730 = vmul.f32 %v2604, %v2604
  %v2731 = vmul.f32 %v2606, %v2606
  %v2732 = vmul.f32 %v2610, %v2610
  %v2733 = vmul.f32 %v2612, %v2612
  %v2734 = vmul.f32 %v2614, %v2614
  %v2735 = vmul.f32 %v2616, %v2616
  %v2736 = vmul.f32 %v2620, %v2620
  %v2737 = vmul.f32 %v2622, %v2622
  %v2738 = vmul.f32 %v2624, %v2624
  %v2739 = vmul.f32 %v2626, %v2626
  %v2740 = vmul.f32 %v2630, %v2630
  %v2741 = vmul.f32 %v2632, %v2632
  %v2742 = vmul.f32 %v2634, %v2634
  %v2743 = vmul.f32 %v2636, %v2636
  %v2744 = vmul.f32 %v2640, %v2640
  %v2745 = vmul.f32 %v2642, %v2642
  %v2746 = vadd.f32 %v2728, %v2730
  %v2747 = vadd.f32 %v2746, %v2732
  %v2748 = vadd.f32 %v2747, %v2734
  %v2749 = vadd.f32 %v2748, %v2736
  %v2750 = vadd.f32 %v2749, %v2738
  %v2751 = vadd.f32 %v2750, %v2740
  %v2752 = vadd.f32 %v2751, %v2742
  %v2753 = vadd.f32 %v2752, %v2744
  %v2754 = vrot.slane %v2753, 4
  %v2755 = vadd.f32 %v2753, %v2754
  %v2756 = vrot.slane %v2755, 2
  %v2757 = vadd.f32 %v2755, %v2756
  %v2758 = vrot.slane %v2757, 1
  %v2759 = vadd.f32 %v2757, %v2758
  %v2760 = vadd.f32 %v2729, %v2731
  %v2761 = vadd.f32 %v2760, %v2733
  %v2762 = vadd.f32 %v2761, %v2735
  %v2763 = vadd.f32 %v2762, %v2737
  %v2764 = vadd.f32 %v2763, %v2739
  %v2765 = vadd.f32 %v2764, %v2741
  %v2766 = vadd.f32 %v2765, %v2743
  %v2767 = vadd.f32 %v2766, %v2745
  %v2768 = vrot.slane %v2767, 4
  %v2769 = vadd.f32 %v2767, %v2768
  %v2770 = vrot.slane %v2769, 2
  %v2771 = vadd.f32 %v2769, %v2770
  %v2772 = vrot.slane %v2771, 1
  %v2773 = vadd.f32 %v2771, %v2772
  %v2776 = vcombine.low %v2759, %v2773
  %v2778 = vunpack.c.l.s4 1966171168
  %v2779 = vunpack.c.0.s8 %v2778
  %v2780 = vlaneseq
  %v2781 = vshrl.u32 %v2780, 7
  %v2782 = vsub.s32 %v2779, %v2781
  %v2783 = vrot.slane %v2776, %v2782
  %v2785 = vunpack.c.l.s4 1966171168
  %v2786 = vunpack.c.0.s8 %v2785
  %v2787 = vlaneseq
  %v2788 = vshrl.u32 %v2787, 7
  %v2789 = vsub.s32 %v2786, %v2788
  %v2790 = vrot.slane %v2783, %v2789
  %v2792 = vadd.f32 %v2727, %v2790
  %2793 = vst.msk [vmem:[%s4] sm:$0x3] %vm2725, %v2792
  // Predicated region
  $region14: #{patch_discriminator_forward.11} parent=0 // pred_check
    _
  $region15: #{patch_discriminator_forward.11} parent=0 // pred_check_branch
    %2795 = sbr.rel (0) target = $region17
  $region16: #{patch_discriminator_forward.11} parent=0 // pred_region
    _
  $region17: #{patch_discriminator_forward.11} parent=0 // pred_fallthru
    _
  // Predicated region
  $region18: #{patch_discriminator_forward.11} parent=0 // pred_check
    _
  $region19: #{patch_discriminator_forward.11} parent=0 // pred_check_branch
    %2797 = sbr.rel (0) target = $region21
  $region20: #{patch_discriminator_forward.11} parent=0 // pred_region
    _
  $region21: #{patch_discriminator_forward.11} parent=0 // pred_fallthru
    _
  // Predicated region
  $region22: #{patch_discriminator_forward.11} parent=0 // pred_check
    _
  $region23: #{patch_discriminator_forward.11} parent=0 // pred_check_branch
    %2799 = sbr.rel (0) target = $region25
  $region24: #{patch_discriminator_forward.11} parent=0 // pred_region
    _
  $region25: #{patch_discriminator_forward.11} parent=0 // pred_fallthru
    _
  // Predicated region
  $region26: #{patch_discriminator_forward.11} parent=0 // pred_check
    _
  $region27: #{patch_discriminator_forward.11} parent=0 // pred_check_branch
    %2801 = sbr.rel (0) target = $region29
  $region28: #{patch_discriminator_forward.11} parent=0 // pred_region
    _
  $region29: #{patch_discriminator_forward.11} parent=0 // pred_fallthru
    _
  // Predicated region
  $region30: #{patch_discriminator_forward.11} parent=0 // pred_check
    _
  $region31: #{patch_discriminator_forward.11} parent=0 // pred_check_branch
    %2803 = sbr.rel (0) target = $region33
  $region32: #{patch_discriminator_forward.11} parent=0 // pred_region
    _
  $region33: #{patch_discriminator_forward.11} parent=0 // pred_fallthru
    _
  // Predicated region
  $region34: #{patch_discriminator_forward.11} parent=0 // pred_check
    _
  $region35: #{patch_discriminator_forward.11} parent=0 // pred_check_branch
    %2805 = sbr.rel (0) target = $region37
  $region36: #{patch_discriminator_forward.11} parent=0 // pred_region
    _
  $region37: #{patch_discriminator_forward.11} parent=0 // pred_fallthru
    _

// kernel: patch_discriminator_forward.12
$region0: #{patch_discriminator_forward.12}
  #allocation0 [shape = 'u32[]', space=smem, size = 0x4, offset = 0x4, fixed_abs, tag = 'smem constant byte address 0x4 - core index']
  #allocation1 [shape = 'u32[144,128]{1,0:T(1,128)}', space=vmem, size = 0x12000, scoped, tag = 'internal scratch']
  %s0 = inlined_call_operand.vmem [shape: f32[72,256], index: 0, kind: input, shape index: {}]
  %s1 = inlined_call_operand.vmem [shape: f32[1,256], index: 1, kind: input, shape index: {}]
  %s2 = inlined_call_operand.vmem [shape: f32[1,256], index: 2, kind: input, shape index: {}]
  %s3 = inlined_call_operand.vmem [shape: f32[72,256], index: 3, kind: output, shape index: {}]
  %s4 = sld [smem:[#allocation0]]
  $region22: #{patch_discriminator_forward.12} parent=0
    _
  %s6 = ssub.s32 1, %s4
  %s7 = scalar_select 0, %s6, %s4
  // Predicated region
  $region2: #{patch_discriminator_forward.12} parent=0 // pred_check
    _
  $region3: #{patch_discriminator_forward.12} parent=0 // pred_check_branch
    %9 = sbr.rel (0) target = $region5
  $region4: #{patch_discriminator_forward.12} parent=0 // pred_region
    _
  $region5: #{patch_discriminator_forward.12} parent=0 // pred_fallthru
    _
  // Predicated region
  $region6: #{patch_discriminator_forward.12} parent=0 // pred_check
    _
  $region7: #{patch_discriminator_forward.12} parent=0 // pred_check_branch
    %11 = sbr.rel (0) target = $region9
  $region8: #{patch_discriminator_forward.12} parent=0 // pred_region
    _
  $region9: #{patch_discriminator_forward.12} parent=0 // pred_fallthru
    _
  // Predicated region
  $region10: #{patch_discriminator_forward.12} parent=0 // pred_check
    _
  $region11: #{patch_discriminator_forward.12} parent=0 // pred_check_branch
    %13 = sbr.rel (0) target = $region13
  $region12: #{patch_discriminator_forward.12} parent=0 // pred_region
    _
  $region13: #{patch_discriminator_forward.12} parent=0 // pred_fallthru
    _
  %v14 = vld [vmem:[%s0] sm:$0xff]
  %v15 = vld [vmem:[%s0 + $0x8] sm:$0xff]
  %v16 = vld [vmem:[%s0 + $0x10] sm:$0xff]
  %v17 = vld [vmem:[%s0 + $0x18] sm:$0xff]
  %v18 = vld [vmem:[%s0 + $0x20] sm:$0xff]
  %v19 = vld [vmem:[%s0 + $0x28] sm:$0xff]
  %v20 = vld [vmem:[%s0 + $0x30] sm:$0xff]
  %v21 = vld [vmem:[%s0 + $0x38] sm:$0xff]
  %v22 = vld [vmem:[%s0 + $0x40] sm:$0xff]
  %v23 = vld [vmem:[%s0 + $0x48] sm:$0xff]
  %v24 = vld [vmem:[%s0 + $0x50] sm:$0xff]
  %v25 = vld [vmem:[%s0 + $0x58] sm:$0xff]
  %v26 = vld [vmem:[%s0 + $0x60] sm:$0xff]
  %v27 = vld [vmem:[%s0 + $0x68] sm:$0xff]
  %v28 = vld [vmem:[%s0 + $0x70] sm:$0xff]
  %v29 = vld [vmem:[%s0 + $0x78] sm:$0xff]
  %v30 = vld [vmem:[%s0 + $0x80] sm:$0xff]
  %v31 = vld [vmem:[%s0 + $0x88] sm:$0xff]
  %v32 = vld [vmem:[%s1] sm:$0x3]
  %v34 = vlaneseq
  %v35 = vshrl.u32 %v34, 7
  %v36 = vsub.s32 0, %v35
  %v37 = vrot.slane %v32, %v36
  %v38 = vlaneseq
  %v39 = vshrl.u32 %v38, 7
  %v40 = vsub.s32 1, %v39
  %v41 = vrot.slane %v32, %v40
  %v44 = vmul.f32 %v14, %v37
  %v45 = vmul.f32 %v15, %v41
  %v46 = vmul.f32 %v16, %v37
  %v47 = vmul.f32 %v17, %v41
  %v48 = vmul.f32 %v18, %v37
  %v49 = vmul.f32 %v19, %v41
  %v50 = vmul.f32 %v20, %v37
  %v51 = vmul.f32 %v21, %v41
  %v52 = vmul.f32 %v22, %v37
  %v53 = vmul.f32 %v23, %v41
  %v54 = vmul.f32 %v24, %v37
  %v55 = vmul.f32 %v25, %v41
  %v56 = vmul.f32 %v26, %v37
  %v57 = vmul.f32 %v27, %v41
  %v58 = vmul.f32 %v28, %v37
  %v59 = vmul.f32 %v29, %v41
  %v60 = vmul.f32 %v30, %v37
  %v61 = vmul.f32 %v31, %v41
  %v62 = vld [vmem:[%s2] sm:$0x3]
  %v64 = vlaneseq
  %v65 = vshrl.u32 %v64, 7
  %v66 = vsub.s32 0, %v65
  %v67 = vrot.slane %v62, %v66
  %v68 = vlaneseq
  %v69 = vshrl.u32 %v68, 7
  %v70 = vsub.s32 1, %v69
  %v71 = vrot.slane %v62, %v70
  %v74 = vadd.f32 %v44, %v67
  %v75 = vadd.f32 %v45, %v71
  %v76 = vadd.f32 %v46, %v67
  %v77 = vadd.f32 %v47, %v71
  %v78 = vadd.f32 %v48, %v67
  %v79 = vadd.f32 %v49, %v71
  %v80 = vadd.f32 %v50, %v67
  %v81 = vadd.f32 %v51, %v71
  %v82 = vadd.f32 %v52, %v67
  %v83 = vadd.f32 %v53, %v71
  %v84 = vadd.f32 %v54, %v67
  %v85 = vadd.f32 %v55, %v71
  %v86 = vadd.f32 %v56, %v67
  %v87 = vadd.f32 %v57, %v71
  %v88 = vadd.f32 %v58, %v67
  %v89 = vadd.f32 %v59, %v71
  %v90 = vadd.f32 %v60, %v67
  %v91 = vadd.f32 %v61, %v71
  %vm92 = vcmp.ge.f32.partialorder %v74, 0.0
  %vm93 = vcmp.ge.f32.partialorder %v75, 0.0
  %vm94 = vcmp.ge.f32.partialorder %v76, 0.0
  %vm95 = vcmp.ge.f32.partialorder %v77, 0.0
  %vm96 = vcmp.ge.f32.partialorder %v78, 0.0
  %vm97 = vcmp.ge.f32.partialorder %v79, 0.0
  %vm98 = vcmp.ge.f32.partialorder %v80, 0.0
  %vm99 = vcmp.ge.f32.partialorder %v81, 0.0
  %vm100 = vcmp.ge.f32.partialorder %v82, 0.0
  %vm101 = vcmp.ge.f32.partialorder %v83, 0.0
  %vm102 = vcmp.ge.f32.partialorder %v84, 0.0
  %vm103 = vcmp.ge.f32.partialorder %v85, 0.0
  %vm104 = vcmp.ge.f32.partialorder %v86, 0.0
  %vm105 = vcmp.ge.f32.partialorder %v87, 0.0
  %vm106 = vcmp.ge.f32.partialorder %v88, 0.0
  %vm107 = vcmp.ge.f32.partialorder %v89, 0.0
  %vm108 = vcmp.ge.f32.partialorder %v90, 0.0
  %vm109 = vcmp.ge.f32.partialorder %v91, 0.0
  %v110 = vmul.f32 %v74, 0.2
  %v111 = vmul.f32 %v75, 0.2
  %v112 = vmul.f32 %v76, 0.2
  %v113 = vmul.f32 %v77, 0.2
  %v114 = vmul.f32 %v78, 0.2
  %v115 = vmul.f32 %v79, 0.2
  %v116 = vmul.f32 %v80, 0.2
  %v117 = vmul.f32 %v81, 0.2
  %v118 = vmul.f32 %v82, 0.2
  %v119 = vmul.f32 %v83, 0.2
  %v120 = vmul.f32 %v84, 0.2
  %v121 = vmul.f32 %v85, 0.2
  %v122 = vmul.f32 %v86, 0.2
  %v123 = vmul.f32 %v87, 0.2
  %v124 = vmul.f32 %v88, 0.2
  %v125 = vmul.f32 %v89, 0.2
  %v126 = vmul.f32 %v90, 0.2
  %v127 = vmul.f32 %v91, 0.2
  %v128 = vsel %vm92, %v74, %v110
  %v129 = vsel %vm93, %v75, %v111
  %v130 = vsel %vm94, %v76, %v112
  %v131 = vsel %vm95, %v77, %v113
  %v132 = vsel %vm96, %v78, %v114
  %v133 = vsel %vm97, %v79, %v115
  %v134 = vsel %vm98, %v80, %v116
  %v135 = vsel %vm99, %v81, %v117
  %v136 = vsel %vm100, %v82, %v118
  %v137 = vsel %vm101, %v83, %v119
  %v138 = vsel %vm102, %v84, %v120
  %v139 = vsel %vm103, %v85, %v121
  %v140 = vsel %vm104, %v86, %v122
  %v141 = vsel %vm105, %v87, %v123
  %v142 = vsel %vm106, %v88, %v124
  %v143 = vsel %vm107, %v89, %v125
  %v144 = vsel %vm108, %v90, %v126
  %v145 = vsel %vm109, %v91, %v127
  %146 = vst [vmem:[%s3] sm:$0xff] %v128
  %147 = vst [vmem:[%s3 + $0x8] sm:$0xff] %v129
  %148 = vst [vmem:[%s3 + $0x10] sm:$0xff] %v130
  %149 = vst [vmem:[%s3 + $0x18] sm:$0xff] %v131
  %150 = vst [vmem:[%s3 + $0x20] sm:$0xff] %v132
  %151 = vst [vmem:[%s3 + $0x28] sm:$0xff] %v133
  %152 = vst [vmem:[%s3 + $0x30] sm:$0xff] %v134
  %153 = vst [vmem:[%s3 + $0x38] sm:$0xff] %v135
  %154 = vst [vmem:[%s3 + $0x40] sm:$0xff] %v136
  %155 = vst [vmem:[%s3 + $0x48] sm:$0xff] %v137
  %156 = vst [vmem:[%s3 + $0x50] sm:$0xff] %v138
  %157 = vst [vmem:[%s3 + $0x58] sm:$0xff] %v139
  %158 = vst [vmem:[%s3 + $0x60] sm:$0xff] %v140
  %159 = vst [vmem:[%s3 + $0x68] sm:$0xff] %v141
  %160 = vst [vmem:[%s3 + $0x70] sm:$0xff] %v142
  %161 = vst [vmem:[%s3 + $0x78] sm:$0xff] %v143
  %162 = vst [vmem:[%s3 + $0x80] sm:$0xff] %v144
  %163 = vst [vmem:[%s3 + $0x88] sm:$0xff] %v145
  // Predicated region
  $region14: #{patch_discriminator_forward.12} parent=0 // pred_check
    _
  $region15: #{patch_discriminator_forward.12} parent=0 // pred_check_branch
    %165 = sbr.rel (0) target = $region17
  $region16: #{patch_discriminator_forward.12} parent=0 // pred_region
    _
  $region17: #{patch_discriminator_forward.12} parent=0 // pred_fallthru
    _
  // Predicated region
  $region18: #{patch_discriminator_forward.12} parent=0 // pred_check
    _
  $region19: #{patch_discriminator_forward.12} parent=0 // pred_check_branch
    %167 = sbr.rel (0) target = $region21
  $region20: #{patch_discriminator_forward.12} parent=0 // pred_region
    _
  $region21: #{patch_discriminator_forward.12} parent=0 // pred_fallthru
    _

// kernel: patch_discriminator_forward.13
$region0: #{patch_discriminator_forward.13}
  #allocation0 [shape = 'u32[]', space=smem, size = 0x4, offset = 0x4, fixed_abs, tag = 'smem constant byte address 0x4 - core index']
  #allocation1 [shape = 'u32[144,128]{1,0:T(1,128)}', space=vmem, size = 0x12000, scoped, tag = 'internal scratch']
  %s0 = inlined_call_operand.vmem [shape: bf16[32,4096], index: 0, kind: input, shape index: {}]
  %s1 = inlined_call_operand.vmem [shape: bf16[4096,128], index: 1, kind: input, shape index: {}]
  %s2 = inlined_call_operand.vmem [shape: f32[1,128], index: 2, kind: input, shape index: {}]
  %s3 = inlined_call_operand.vmem [shape: f32[32,128], index: 3, kind: output, shape index: {}]
  %s4 = sld [smem:[#allocation0]]
  $region22: #{patch_discriminator_forward.13} parent=0
    _
  %s6 = ssub.s32 1, %s4
  %s7 = scalar_select 0, %s6, %s4
  // Predicated region
  $region2: #{patch_discriminator_forward.13} parent=0 // pred_check
    _
  $region3: #{patch_discriminator_forward.13} parent=0 // pred_check_branch
    %9 = sbr.rel (0) target = $region5
  $region4: #{patch_discriminator_forward.13} parent=0 // pred_region
    _
  $region5: #{patch_discriminator_forward.13} parent=0 // pred_fallthru
    _
  // Predicated region
  $region6: #{patch_discriminator_forward.13} parent=0 // pred_check
    _
  $region7: #{patch_discriminator_forward.13} parent=0 // pred_check_branch
    %11 = sbr.rel (0) target = $region9
  $region8: #{patch_discriminator_forward.13} parent=0 // pred_region
    _
  $region9: #{patch_discriminator_forward.13} parent=0 // pred_fallthru
    _
  // Predicated region
  $region10: #{patch_discriminator_forward.13} parent=0 // pred_check
    _
  $region11: #{patch_discriminator_forward.13} parent=0 // pred_check_branch
    %13 = sbr.rel (0) target = $region13
  $region12: #{patch_discriminator_forward.13} parent=0 // pred_region
    _
  $region13: #{patch_discriminator_forward.13} parent=0 // pred_fallthru
    _
  %v15 = vld [vmem:[%s0] sm:$0xff]
  %v16 = vld [vmem:[%s0 + $0x8] sm:$0xff]
  %v17 = vld [vmem:[%s0 + $0x10] sm:$0xff]
  %v18 = vld [vmem:[%s0 + $0x18] sm:$0xff]
  %v19 = vld [vmem:[%s0 + $0x20] sm:$0xff]
  %v20 = vld [vmem:[%s0 + $0x28] sm:$0xff]
  %v21 = vld [vmem:[%s0 + $0x30] sm:$0xff]
  %v22 = vld [vmem:[%s0 + $0x38] sm:$0xff]
  %v23 = vld [vmem:[%s0 + $0x40] sm:$0xff]
  %v24 = vld [vmem:[%s0 + $0x48] sm:$0xff]
  %v25 = vld [vmem:[%s0 + $0x50] sm:$0xff]
  %v26 = vld [vmem:[%s0 + $0x58] sm:$0xff]
  %v27 = vld [vmem:[%s0 + $0x60] sm:$0xff]
  %v28 = vld [vmem:[%s0 + $0x68] sm:$0xff]
  %v29 = vld [vmem:[%s0 + $0x70] sm:$0xff]
  %v30 = vld [vmem:[%s0 + $0x78] sm:$0xff]
  %v31 = vld [vmem:[%s0 + $0x80] sm:$0xff]
  %v32 = vld [vmem:[%s0 + $0x88] sm:$0xff]
  %v33 = vld [vmem:[%s0 + $0x90] sm:$0xff]
  %v34 = vld [vmem:[%s0 + $0x98] sm:$0xff]
  %v35 = vld [vmem:[%s0 + $0xa0] sm:$0xff]
  %v36 = vld [vmem:[%s0 + $0xa8] sm:$0xff]
  %v37 = vld [vmem:[%s0 + $0xb0] sm:$0xff]
  %v38 = vld [vmem:[%s0 + $0xb8] sm:$0xff]
  %v39 = vld [vmem:[%s0 + $0xc0] sm:$0xff]
  %v40 = vld [vmem:[%s0 + $0xc8] sm:$0xff]
  %v41 = vld [vmem:[%s0 + $0xd0] sm:$0xff]
  %v42 = vld [vmem:[%s0 + $0xd8] sm:$0xff]
  %v43 = vld [vmem:[%s0 + $0xe0] sm:$0xff]
  %v44 = vld [vmem:[%s0 + $0xe8] sm:$0xff]
  %v45 = vld [vmem:[%s0 + $0xf0] sm:$0xff]
  %v46 = vld [vmem:[%s0 + $0xf8] sm:$0xff]
  %v47 = vld [vmem:[%s0 + $0x100] sm:$0xff]
  %v48 = vld [vmem:[%s0 + $0x108] sm:$0xff]
  %v49 = vld [vmem:[%s0 + $0x110] sm:$0xff]
  %v50 = vld [vmem:[%s0 + $0x118] sm:$0xff]
  %v51 = vld [vmem:[%s0 + $0x120] sm:$0xff]
  %v52 = vld [vmem:[%s0 + $0x128] sm:$0xff]
  %v53 = vld [vmem:[%s0 + $0x130] sm:$0xff]
  %v54 = vld [vmem:[%s0 + $0x138] sm:$0xff]
  %v55 = vld [vmem:[%s0 + $0x140] sm:$0xff]
  %v56 = vld [vmem:[%s0 + $0x148] sm:$0xff]
  %v57 = vld [vmem:[%s0 + $0x150] sm:$0xff]
  %v58 = vld [vmem:[%s0 + $0x158] sm:$0xff]
  %v59 = vld [vmem:[%s0 + $0x160] sm:$0xff]
  %v60 = vld [vmem:[%s0 + $0x168] sm:$0xff]
  %v61 = vld [vmem:[%s0 + $0x170] sm:$0xff]
  %v62 = vld [vmem:[%s0 + $0x178] sm:$0xff]
  %v63 = vld [vmem:[%s0 + $0x180] sm:$0xff]
  %v64 = vld [vmem:[%s0 + $0x188] sm:$0xff]
  %v65 = vld [vmem:[%s0 + $0x190] sm:$0xff]
  %v66 = vld [vmem:[%s0 + $0x198] sm:$0xff]
  %v67 = vld [vmem:[%s0 + $0x1a0] sm:$0xff]
  %v68 = vld [vmem:[%s0 + $0x1a8] sm:$0xff]
  %v69 = vld [vmem:[%s0 + $0x1b0] sm:$0xff]
  %v70 = vld [vmem:[%s0 + $0x1b8] sm:$0xff]
  %v71 = vld [vmem:[%s0 + $0x1c0] sm:$0xff]
  %v72 = vld [vmem:[%s0 + $0x1c8] sm:$0xff]
  %v73 = vld [vmem:[%s0 + $0x1d0] sm:$0xff]
  %v74 = vld [vmem:[%s0 + $0x1d8] sm:$0xff]
  %v75 = vld [vmem:[%s0 + $0x1e0] sm:$0xff]
  %v76 = vld [vmem:[%s0 + $0x1e8] sm:$0xff]
  %v77 = vld [vmem:[%s0 + $0x1f0] sm:$0xff]
  %v78 = vld [vmem:[%s0 + $0x1f8] sm:$0xff]
  %v79 = vld [vmem:[%s1] sm:$0xf]
  %v80 = vld [vmem:[%s1 + $0x4] sm:$0xf]
  %v81 = vld [vmem:[%s1 + $0x8] sm:$0xf]
  %v82 = vld [vmem:[%s1 + $0xc] sm:$0xf]
  %v83 = vld [vmem:[%s1 + $0x10] sm:$0xf]
  %v84 = vld [vmem:[%s1 + $0x14] sm:$0xf]
  %v85 = vld [vmem:[%s1 + $0x18] sm:$0xf]
  %v86 = vld [vmem:[%s1 + $0x1c] sm:$0xf]
  %v87 = vld [vmem:[%s1 + $0x20] sm:$0xf]
  %v88 = vld [vmem:[%s1 + $0x24] sm:$0xf]
  %v89 = vld [vmem:[%s1 + $0x28] sm:$0xf]
  %v90 = vld [vmem:[%s1 + $0x2c] sm:$0xf]
  %v91 = vld [vmem:[%s1 + $0x30] sm:$0xf]
  %v92 = vld [vmem:[%s1 + $0x34] sm:$0xf]
  %v93 = vld [vmem:[%s1 + $0x38] sm:$0xf]
  %v94 = vld [vmem:[%s1 + $0x3c] sm:$0xf]
  %v95 = vld [vmem:[%s1 + $0x40] sm:$0xf]
  %v96 = vld [vmem:[%s1 + $0x44] sm:$0xf]
  %v97 = vld [vmem:[%s1 + $0x48] sm:$0xf]
  %v98 = vld [vmem:[%s1 + $0x4c] sm:$0xf]
  %v99 = vld [vmem:[%s1 + $0x50] sm:$0xf]
  %v100 = vld [vmem:[%s1 + $0x54] sm:$0xf]
  %v101 = vld [vmem:[%s1 + $0x58] sm:$0xf]
  %v102 = vld [vmem:[%s1 + $0x5c] sm:$0xf]
  %v103 = vld [vmem:[%s1 + $0x60] sm:$0xf]
  %v104 = vld [vmem:[%s1 + $0x64] sm:$0xf]
  %v105 = vld [vmem:[%s1 + $0x68] sm:$0xf]
  %v106 = vld [vmem:[%s1 + $0x6c] sm:$0xf]
  %v107 = vld [vmem:[%s1 + $0x70] sm:$0xf]
  %v108 = vld [vmem:[%s1 + $0x74] sm:$0xf]
  %v109 = vld [vmem:[%s1 + $0x78] sm:$0xf]
  %v110 = vld [vmem:[%s1 + $0x7c] sm:$0xf]
  %v111 = vld [vmem:[%s1 + $0x80] sm:$0xf]
  %v112 = vld [vmem:[%s1 + $0x84] sm:$0xf]
  %v113 = vld [vmem:[%s1 + $0x88] sm:$0xf]
  %v114 = vld [vmem:[%s1 + $0x8c] sm:$0xf]
  %v115 = vld [vmem:[%s1 + $0x90] sm:$0xf]
  %v116 = vld [vmem:[%s1 + $0x94] sm:$0xf]
  %v117 = vld [vmem:[%s1 + $0x98] sm:$0xf]
  %v118 = vld [vmem:[%s1 + $0x9c] sm:$0xf]
  %v119 = vld [vmem:[%s1 + $0xa0] sm:$0xf]
  %v120 = vld [vmem:[%s1 + $0xa4] sm:$0xf]
  %v121 = vld [vmem:[%s1 + $0xa8] sm:$0xf]
  %v122 = vld [vmem:[%s1 + $0xac] sm:$0xf]
  %v123 = vld [vmem:[%s1 + $0xb0] sm:$0xf]
  %v124 = vld [vmem:[%s1 + $0xb4] sm:$0xf]
  %v125 = vld [vmem:[%s1 + $0xb8] sm:$0xf]
  %v126 = vld [vmem:[%s1 + $0xbc] sm:$0xf]
  %v127 = vld [vmem:[%s1 + $0xc0] sm:$0xf]
  %v128 = vld [vmem:[%s1 + $0xc4] sm:$0xf]
  %v129 = vld [vmem:[%s1 + $0xc8] sm:$0xf]
  %v130 = vld [vmem:[%s1 + $0xcc] sm:$0xf]
  %v131 = vld [vmem:[%s1 + $0xd0] sm:$0xf]
  %v132 = vld [vmem:[%s1 + $0xd4] sm:$0xf]
  %v133 = vld [vmem:[%s1 + $0xd8] sm:$0xf]
  %v134 = vld [vmem:[%s1 + $0xdc] sm:$0xf]
  %v135 = vld [vmem:[%s1 + $0xe0] sm:$0xf]
  %v136 = vld [vmem:[%s1 + $0xe4] sm:$0xf]
  %v137 = vld [vmem:[%s1 + $0xe8] sm:$0xf]
  %v138 = vld [vmem:[%s1 + $0xec] sm:$0xf]
  %v139 = vld [vmem:[%s1 + $0xf0] sm:$0xf]
  %v140 = vld [vmem:[%s1 + $0xf4] sm:$0xf]
  %v141 = vld [vmem:[%s1 + $0xf8] sm:$0xf]
  %v142 = vld [vmem:[%s1 + $0xfc] sm:$0xf]
  %v143 = vld [vmem:[%s1 + $0x100] sm:$0xf]
  %v144 = vld [vmem:[%s1 + $0x104] sm:$0xf]
  %v145 = vld [vmem:[%s1 + $0x108] sm:$0xf]
  %v146 = vld [vmem:[%s1 + $0x10c] sm:$0xf]
  %v147 = vld [vmem:[%s1 + $0x110] sm:$0xf]
  %v148 = vld [vmem:[%s1 + $0x114] sm:$0xf]
  %v149 = vld [vmem:[%s1 + $0x118] sm:$0xf]
  %v150 = vld [vmem:[%s1 + $0x11c] sm:$0xf]
  %v151 = vld [vmem:[%s1 + $0x120] sm:$0xf]
  %v152 = vld [vmem:[%s1 + $0x124] sm:$0xf]
  %v153 = vld [vmem:[%s1 + $0x128] sm:$0xf]
  %v154 = vld [vmem:[%s1 + $0x12c] sm:$0xf]
  %v155 = vld [vmem:[%s1 + $0x130] sm:$0xf]
  %v156 = vld [vmem:[%s1 + $0x134] sm:$0xf]
  %v157 = vld [vmem:[%s1 + $0x138] sm:$0xf]
  %v158 = vld [vmem:[%s1 + $0x13c] sm:$0xf]
  %v159 = vld [vmem:[%s1 + $0x140] sm:$0xf]
  %v160 = vld [vmem:[%s1 + $0x144] sm:$0xf]
  %v161 = vld [vmem:[%s1 + $0x148] sm:$0xf]
  %v162 = vld [vmem:[%s1 + $0x14c] sm:$0xf]
  %v163 = vld [vmem:[%s1 + $0x150] sm:$0xf]
  %v164 = vld [vmem:[%s1 + $0x154] sm:$0xf]
  %v165 = vld [vmem:[%s1 + $0x158] sm:$0xf]
  %v166 = vld [vmem:[%s1 + $0x15c] sm:$0xf]
  %v167 = vld [vmem:[%s1 + $0x160] sm:$0xf]
  %v168 = vld [vmem:[%s1 + $0x164] sm:$0xf]
  %v169 = vld [vmem:[%s1 + $0x168] sm:$0xf]
  %v170 = vld [vmem:[%s1 + $0x16c] sm:$0xf]
  %v171 = vld [vmem:[%s1 + $0x170] sm:$0xf]
  %v172 = vld [vmem:[%s1 + $0x174] sm:$0xf]
  %v173 = vld [vmem:[%s1 + $0x178] sm:$0xf]
  %v174 = vld [vmem:[%s1 + $0x17c] sm:$0xf]
  %v175 = vld [vmem:[%s1 + $0x180] sm:$0xf]
  %v176 = vld [vmem:[%s1 + $0x184] sm:$0xf]
  %v177 = vld [vmem:[%s1 + $0x188] sm:$0xf]
  %v178 = vld [vmem:[%s1 + $0x18c] sm:$0xf]
  %v179 = vld [vmem:[%s1 + $0x190] sm:$0xf]
  %v180 = vld [vmem:[%s1 + $0x194] sm:$0xf]
  %v181 = vld [vmem:[%s1 + $0x198] sm:$0xf]
  %v182 = vld [vmem:[%s1 + $0x19c] sm:$0xf]
  %v183 = vld [vmem:[%s1 + $0x1a0] sm:$0xf]
  %v184 = vld [vmem:[%s1 + $0x1a4] sm:$0xf]
  %v185 = vld [vmem:[%s1 + $0x1a8] sm:$0xf]
  %v186 = vld [vmem:[%s1 + $0x1ac] sm:$0xf]
  %v187 = vld [vmem:[%s1 + $0x1b0] sm:$0xf]
  %v188 = vld [vmem:[%s1 + $0x1b4] sm:$0xf]
  %v189 = vld [vmem:[%s1 + $0x1b8] sm:$0xf]
  %v190 = vld [vmem:[%s1 + $0x1bc] sm:$0xf]
  %v191 = vld [vmem:[%s1 + $0x1c0] sm:$0xf]
  %v192 = vld [vmem:[%s1 + $0x1c4] sm:$0xf]
  %v193 = vld [vmem:[%s1 + $0x1c8] sm:$0xf]
  %v194 = vld [vmem:[%s1 + $0x1cc] sm:$0xf]
  %v195 = vld [vmem:[%s1 + $0x1d0] sm:$0xf]
  %v196 = vld [vmem:[%s1 + $0x1d4] sm:$0xf]
  %v197 = vld [vmem:[%s1 + $0x1d8] sm:$0xf]
  %v198 = vld [vmem:[%s1 + $0x1dc] sm:$0xf]
  %v199 = vld [vmem:[%s1 + $0x1e0] sm:$0xf]
  %v200 = vld [vmem:[%s1 + $0x1e4] sm:$0xf]
  %v201 = vld [vmem:[%s1 + $0x1e8] sm:$0xf]
  %v202 = vld [vmem:[%s1 + $0x1ec] sm:$0xf]
  %v203 = vld [vmem:[%s1 + $0x1f0] sm:$0xf]
  %v204 = vld [vmem:[%s1 + $0x1f4] sm:$0xf]
  %v205 = vld [vmem:[%s1 + $0x1f8] sm:$0xf]
  %v206 = vld [vmem:[%s1 + $0x1fc] sm:$0xf]
  %v207 = vld [vmem:[%s1 + $0x200] sm:$0xf]
  %v208 = vld [vmem:[%s1 + $0x204] sm:$0xf]
  %v209 = vld [vmem:[%s1 + $0x208] sm:$0xf]
  %v210 = vld [vmem:[%s1 + $0x20c] sm:$0xf]
  %v211 = vld [vmem:[%s1 + $0x210] sm:$0xf]
  %v212 = vld [vmem:[%s1 + $0x214] sm:$0xf]
  %v213 = vld [vmem:[%s1 + $0x218] sm:$0xf]
  %v214 = vld [vmem:[%s1 + $0x21c] sm:$0xf]
  %v215 = vld [vmem:[%s1 + $0x220] sm:$0xf]
  %v216 = vld [vmem:[%s1 + $0x224] sm:$0xf]
  %v217 = vld [vmem:[%s1 + $0x228] sm:$0xf]
  %v218 = vld [vmem:[%s1 + $0x22c] sm:$0xf]
  %v219 = vld [vmem:[%s1 + $0x230] sm:$0xf]
  %v220 = vld [vmem:[%s1 + $0x234] sm:$0xf]
  %v221 = vld [vmem:[%s1 + $0x238] sm:$0xf]
  %v222 = vld [vmem:[%s1 + $0x23c] sm:$0xf]
  %v223 = vld [vmem:[%s1 + $0x240] sm:$0xf]
  %v224 = vld [vmem:[%s1 + $0x244] sm:$0xf]
  %v225 = vld [vmem:[%s1 + $0x248] sm:$0xf]
  %v226 = vld [vmem:[%s1 + $0x24c] sm:$0xf]
  %v227 = vld [vmem:[%s1 + $0x250] sm:$0xf]
  %v228 = vld [vmem:[%s1 + $0x254] sm:$0xf]
  %v229 = vld [vmem:[%s1 + $0x258] sm:$0xf]
  %v230 = vld [vmem:[%s1 + $0x25c] sm:$0xf]
  %v231 = vld [vmem:[%s1 + $0x260] sm:$0xf]
  %v232 = vld [vmem:[%s1 + $0x264] sm:$0xf]
  %v233 = vld [vmem:[%s1 + $0x268] sm:$0xf]
  %v234 = vld [vmem:[%s1 + $0x26c] sm:$0xf]
  %v235 = vld [vmem:[%s1 + $0x270] sm:$0xf]
  %v236 = vld [vmem:[%s1 + $0x274] sm:$0xf]
  %v237 = vld [vmem:[%s1 + $0x278] sm:$0xf]
  %v238 = vld [vmem:[%s1 + $0x27c] sm:$0xf]
  %v239 = vld [vmem:[%s1 + $0x280] sm:$0xf]
  %v240 = vld [vmem:[%s1 + $0x284] sm:$0xf]
  %v241 = vld [vmem:[%s1 + $0x288] sm:$0xf]
  %v242 = vld [vmem:[%s1 + $0x28c] sm:$0xf]
  %v243 = vld [vmem:[%s1 + $0x290] sm:$0xf]
  %v244 = vld [vmem:[%s1 + $0x294] sm:$0xf]
  %v245 = vld [vmem:[%s1 + $0x298] sm:$0xf]
  %v246 = vld [vmem:[%s1 + $0x29c] sm:$0xf]
  %v247 = vld [vmem:[%s1 + $0x2a0] sm:$0xf]
  %v248 = vld [vmem:[%s1 + $0x2a4] sm:$0xf]
  %v249 = vld [vmem:[%s1 + $0x2a8] sm:$0xf]
  %v250 = vld [vmem:[%s1 + $0x2ac] sm:$0xf]
  %v251 = vld [vmem:[%s1 + $0x2b0] sm:$0xf]
  %v252 = vld [vmem:[%s1 + $0x2b4] sm:$0xf]
  %v253 = vld [vmem:[%s1 + $0x2b8] sm:$0xf]
  %v254 = vld [vmem:[%s1 + $0x2bc] sm:$0xf]
  %v255 = vld [vmem:[%s1 + $0x2c0] sm:$0xf]
  %v256 = vld [vmem:[%s1 + $0x2c4] sm:$0xf]
  %v257 = vld [vmem:[%s1 + $0x2c8] sm:$0xf]
  %v258 = vld [vmem:[%s1 + $0x2cc] sm:$0xf]
  %v259 = vld [vmem:[%s1 + $0x2d0] sm:$0xf]
  %v260 = vld [vmem:[%s1 + $0x2d4] sm:$0xf]
  %v261 = vld [vmem:[%s1 + $0x2d8] sm:$0xf]
  %v262 = vld [vmem:[%s1 + $0x2dc] sm:$0xf]
  %v263 = vld [vmem:[%s1 + $0x2e0] sm:$0xf]
  %v264 = vld [vmem:[%s1 + $0x2e4] sm:$0xf]
  %v265 = vld [vmem:[%s1 + $0x2e8] sm:$0xf]
  %v266 = vld [vmem:[%s1 + $0x2ec] sm:$0xf]
  %v267 = vld [vmem:[%s1 + $0x2f0] sm:$0xf]
  %v268 = vld [vmem:[%s1 + $0x2f4] sm:$0xf]
  %v269 = vld [vmem:[%s1 + $0x2f8] sm:$0xf]
  %v270 = vld [vmem:[%s1 + $0x2fc] sm:$0xf]
  %v271 = vld [vmem:[%s1 + $0x300] sm:$0xf]
  %v272 = vld [vmem:[%s1 + $0x304] sm:$0xf]
  %v273 = vld [vmem:[%s1 + $0x308] sm:$0xf]
  %v274 = vld [vmem:[%s1 + $0x30c] sm:$0xf]
  %v275 = vld [vmem:[%s1 + $0x310] sm:$0xf]
  %v276 = vld [vmem:[%s1 + $0x314] sm:$0xf]
  %v277 = vld [vmem:[%s1 + $0x318] sm:$0xf]
  %v278 = vld [vmem:[%s1 + $0x31c] sm:$0xf]
  %v279 = vld [vmem:[%s1 + $0x320] sm:$0xf]
  %v280 = vld [vmem:[%s1 + $0x324] sm:$0xf]
  %v281 = vld [vmem:[%s1 + $0x328] sm:$0xf]
  %v282 = vld [vmem:[%s1 + $0x32c] sm:$0xf]
  %v283 = vld [vmem:[%s1 + $0x330] sm:$0xf]
  %v284 = vld [vmem:[%s1 + $0x334] sm:$0xf]
  %v285 = vld [vmem:[%s1 + $0x338] sm:$0xf]
  %v286 = vld [vmem:[%s1 + $0x33c] sm:$0xf]
  %v287 = vld [vmem:[%s1 + $0x340] sm:$0xf]
  %v288 = vld [vmem:[%s1 + $0x344] sm:$0xf]
  %v289 = vld [vmem:[%s1 + $0x348] sm:$0xf]
  %v290 = vld [vmem:[%s1 + $0x34c] sm:$0xf]
  %v291 = vld [vmem:[%s1 + $0x350] sm:$0xf]
  %v292 = vld [vmem:[%s1 + $0x354] sm:$0xf]
  %v293 = vld [vmem:[%s1 + $0x358] sm:$0xf]
  %v294 = vld [vmem:[%s1 + $0x35c] sm:$0xf]
  %v295 = vld [vmem:[%s1 + $0x360] sm:$0xf]
  %v296 = vld [vmem:[%s1 + $0x364] sm:$0xf]
  %v297 = vld [vmem:[%s1 + $0x368] sm:$0xf]
  %v298 = vld [vmem:[%s1 + $0x36c] sm:$0xf]
  %v299 = vld [vmem:[%s1 + $0x370] sm:$0xf]
  %v300 = vld [vmem:[%s1 + $0x374] sm:$0xf]
  %v301 = vld [vmem:[%s1 + $0x378] sm:$0xf]
  %v302 = vld [vmem:[%s1 + $0x37c] sm:$0xf]
  %v303 = vld [vmem:[%s1 + $0x380] sm:$0xf]
  %v304 = vld [vmem:[%s1 + $0x384] sm:$0xf]
  %v305 = vld [vmem:[%s1 + $0x388] sm:$0xf]
  %v306 = vld [vmem:[%s1 + $0x38c] sm:$0xf]
  %v307 = vld [vmem:[%s1 + $0x390] sm:$0xf]
  %v308 = vld [vmem:[%s1 + $0x394] sm:$0xf]
  %v309 = vld [vmem:[%s1 + $0x398] sm:$0xf]
  %v310 = vld [vmem:[%s1 + $0x39c] sm:$0xf]
  %v311 = vld [vmem:[%s1 + $0x3a0] sm:$0xf]
  %v312 = vld [vmem:[%s1 + $0x3a4] sm:$0xf]
  %v313 = vld [vmem:[%s1 + $0x3a8] sm:$0xf]
  %v314 = vld [vmem:[%s1 + $0x3ac] sm:$0xf]
  %v315 = vld [vmem:[%s1 + $0x3b0] sm:$0xf]
  %v316 = vld [vmem:[%s1 + $0x3b4] sm:$0xf]
  %v317 = vld [vmem:[%s1 + $0x3b8] sm:$0xf]
  %v318 = vld [vmem:[%s1 + $0x3bc] sm:$0xf]
  %v319 = vld [vmem:[%s1 + $0x3c0] sm:$0xf]
  %v320 = vld [vmem:[%s1 + $0x3c4] sm:$0xf]
  %v321 = vld [vmem:[%s1 + $0x3c8] sm:$0xf]
  %v322 = vld [vmem:[%s1 + $0x3cc] sm:$0xf]
  %v323 = vld [vmem:[%s1 + $0x3d0] sm:$0xf]
  %v324 = vld [vmem:[%s1 + $0x3d4] sm:$0xf]
  %v325 = vld [vmem:[%s1 + $0x3d8] sm:$0xf]
  %v326 = vld [vmem:[%s1 + $0x3dc] sm:$0xf]
  %v327 = vld [vmem:[%s1 + $0x3e0] sm:$0xf]
  %v328 = vld [vmem:[%s1 + $0x3e4] sm:$0xf]
  %v329 = vld [vmem:[%s1 + $0x3e8] sm:$0xf]
  %v330 = vld [vmem:[%s1 + $0x3ec] sm:$0xf]
  %v331 = vld [vmem:[%s1 + $0x3f0] sm:$0xf]
  %v332 = vld [vmem:[%s1 + $0x3f4] sm:$0xf]
  %v333 = vld [vmem:[%s1 + $0x3f8] sm:$0xf]
  %v334 = vld [vmem:[%s1 + $0x3fc] sm:$0xf]
  %v335 = vld [vmem:[%s1 + $0x400] sm:$0xf]
  %v336 = vld [vmem:[%s1 + $0x404] sm:$0xf]
  %v337 = vld [vmem:[%s1 + $0x408] sm:$0xf]
  %v338 = vld [vmem:[%s1 + $0x40c] sm:$0xf]
  %v339 = vld [vmem:[%s1 + $0x410] sm:$0xf]
  %v340 = vld [vmem:[%s1 + $0x414] sm:$0xf]
  %v341 = vld [vmem:[%s1 + $0x418] sm:$0xf]
  %v342 = vld [vmem:[%s1 + $0x41c] sm:$0xf]
  %v343 = vld [vmem:[%s1 + $0x420] sm:$0xf]
  %v344 = vld [vmem:[%s1 + $0x424] sm:$0xf]
  %v345 = vld [vmem:[%s1 + $0x428] sm:$0xf]
  %v346 = vld [vmem:[%s1 + $0x42c] sm:$0xf]
  %v347 = vld [vmem:[%s1 + $0x430] sm:$0xf]
  %v348 = vld [vmem:[%s1 + $0x434] sm:$0xf]
  %v349 = vld [vmem:[%s1 + $0x438] sm:$0xf]
  %v350 = vld [vmem:[%s1 + $0x43c] sm:$0xf]
  %v351 = vld [vmem:[%s1 + $0x440] sm:$0xf]
  %v352 = vld [vmem:[%s1 + $0x444] sm:$0xf]
  %v353 = vld [vmem:[%s1 + $0x448] sm:$0xf]
  %v354 = vld [vmem:[%s1 + $0x44c] sm:$0xf]
  %v355 = vld [vmem:[%s1 + $0x450] sm:$0xf]
  %v356 = vld [vmem:[%s1 + $0x454] sm:$0xf]
  %v357 = vld [vmem:[%s1 + $0x458] sm:$0xf]
  %v358 = vld [vmem:[%s1 + $0x45c] sm:$0xf]
  %v359 = vld [vmem:[%s1 + $0x460] sm:$0xf]
  %v360 = vld [vmem:[%s1 + $0x464] sm:$0xf]
  %v361 = vld [vmem:[%s1 + $0x468] sm:$0xf]
  %v362 = vld [vmem:[%s1 + $0x46c] sm:$0xf]
  %v363 = vld [vmem:[%s1 + $0x470] sm:$0xf]
  %v364 = vld [vmem:[%s1 + $0x474] sm:$0xf]
  %v365 = vld [vmem:[%s1 + $0x478] sm:$0xf]
  %v366 = vld [vmem:[%s1 + $0x47c] sm:$0xf]
  %v367 = vld [vmem:[%s1 + $0x480] sm:$0xf]
  %v368 = vld [vmem:[%s1 + $0x484] sm:$0xf]
  %v369 = vld [vmem:[%s1 + $0x488] sm:$0xf]
  %v370 = vld [vmem:[%s1 + $0x48c] sm:$0xf]
  %v371 = vld [vmem:[%s1 + $0x490] sm:$0xf]
  %v372 = vld [vmem:[%s1 + $0x494] sm:$0xf]
  %v373 = vld [vmem:[%s1 + $0x498] sm:$0xf]
  %v374 = vld [vmem:[%s1 + $0x49c] sm:$0xf]
  %v375 = vld [vmem:[%s1 + $0x4a0] sm:$0xf]
  %v376 = vld [vmem:[%s1 + $0x4a4] sm:$0xf]
  %v377 = vld [vmem:[%s1 + $0x4a8] sm:$0xf]
  %v378 = vld [vmem:[%s1 + $0x4ac] sm:$0xf]
  %v379 = vld [vmem:[%s1 + $0x4b0] sm:$0xf]
  %v380 = vld [vmem:[%s1 + $0x4b4] sm:$0xf]
  %v381 = vld [vmem:[%s1 + $0x4b8] sm:$0xf]
  %v382 = vld [vmem:[%s1 + $0x4bc] sm:$0xf]
  %v383 = vld [vmem:[%s1 + $0x4c0] sm:$0xf]
  %v384 = vld [vmem:[%s1 + $0x4c4] sm:$0xf]
  %v385 = vld [vmem:[%s1 + $0x4c8] sm:$0xf]
  %v386 = vld [vmem:[%s1 + $0x4cc] sm:$0xf]
  %v387 = vld [vmem:[%s1 + $0x4d0] sm:$0xf]
  %v388 = vld [vmem:[%s1 + $0x4d4] sm:$0xf]
  %v389 = vld [vmem:[%s1 + $0x4d8] sm:$0xf]
  %v390 = vld [vmem:[%s1 + $0x4dc] sm:$0xf]
  %v391 = vld [vmem:[%s1 + $0x4e0] sm:$0xf]
  %v392 = vld [vmem:[%s1 + $0x4e4] sm:$0xf]
  %v393 = vld [vmem:[%s1 + $0x4e8] sm:$0xf]
  %v394 = vld [vmem:[%s1 + $0x4ec] sm:$0xf]
  %v395 = vld [vmem:[%s1 + $0x4f0] sm:$0xf]
  %v396 = vld [vmem:[%s1 + $0x4f4] sm:$0xf]
  %v397 = vld [vmem:[%s1 + $0x4f8] sm:$0xf]
  %v398 = vld [vmem:[%s1 + $0x4fc] sm:$0xf]
  %v399 = vld [vmem:[%s1 + $0x500] sm:$0xf]
  %v400 = vld [vmem:[%s1 + $0x504] sm:$0xf]
  %v401 = vld [vmem:[%s1 + $0x508] sm:$0xf]
  %v402 = vld [vmem:[%s1 + $0x50c] sm:$0xf]
  %v403 = vld [vmem:[%s1 + $0x510] sm:$0xf]
  %v404 = vld [vmem:[%s1 + $0x514] sm:$0xf]
  %v405 = vld [vmem:[%s1 + $0x518] sm:$0xf]
  %v406 = vld [vmem:[%s1 + $0x51c] sm:$0xf]
  %v407 = vld [vmem:[%s1 + $0x520] sm:$0xf]
  %v408 = vld [vmem:[%s1 + $0x524] sm:$0xf]
  %v409 = vld [vmem:[%s1 + $0x528] sm:$0xf]
  %v410 = vld [vmem:[%s1 + $0x52c] sm:$0xf]
  %v411 = vld [vmem:[%s1 + $0x530] sm:$0xf]
  %v412 = vld [vmem:[%s1 + $0x534] sm:$0xf]
  %v413 = vld [vmem:[%s1 + $0x538] sm:$0xf]
  %v414 = vld [vmem:[%s1 + $0x53c] sm:$0xf]
  %v415 = vld [vmem:[%s1 + $0x540] sm:$0xf]
  %v416 = vld [vmem:[%s1 + $0x544] sm:$0xf]
  %v417 = vld [vmem:[%s1 + $0x548] sm:$0xf]
  %v418 = vld [vmem:[%s1 + $0x54c] sm:$0xf]
  %v419 = vld [vmem:[%s1 + $0x550] sm:$0xf]
  %v420 = vld [vmem:[%s1 + $0x554] sm:$0xf]
  %v421 = vld [vmem:[%s1 + $0x558] sm:$0xf]
  %v422 = vld [vmem:[%s1 + $0x55c] sm:$0xf]
  %v423 = vld [vmem:[%s1 + $0x560] sm:$0xf]
  %v424 = vld [vmem:[%s1 + $0x564] sm:$0xf]
  %v425 = vld [vmem:[%s1 + $0x568] sm:$0xf]
  %v426 = vld [vmem:[%s1 + $0x56c] sm:$0xf]
  %v427 = vld [vmem:[%s1 + $0x570] sm:$0xf]
  %v428 = vld [vmem:[%s1 + $0x574] sm:$0xf]
  %v429 = vld [vmem:[%s1 + $0x578] sm:$0xf]
  %v430 = vld [vmem:[%s1 + $0x57c] sm:$0xf]
  %v431 = vld [vmem:[%s1 + $0x580] sm:$0xf]
  %v432 = vld [vmem:[%s1 + $0x584] sm:$0xf]
  %v433 = vld [vmem:[%s1 + $0x588] sm:$0xf]
  %v434 = vld [vmem:[%s1 + $0x58c] sm:$0xf]
  %v435 = vld [vmem:[%s1 + $0x590] sm:$0xf]
  %v436 = vld [vmem:[%s1 + $0x594] sm:$0xf]
  %v437 = vld [vmem:[%s1 + $0x598] sm:$0xf]
  %v438 = vld [vmem:[%s1 + $0x59c] sm:$0xf]
  %v439 = vld [vmem:[%s1 + $0x5a0] sm:$0xf]
  %v440 = vld [vmem:[%s1 + $0x5a4] sm:$0xf]
  %v441 = vld [vmem:[%s1 + $0x5a8] sm:$0xf]
  %v442 = vld [vmem:[%s1 + $0x5ac] sm:$0xf]
  %v443 = vld [vmem:[%s1 + $0x5b0] sm:$0xf]
  %v444 = vld [vmem:[%s1 + $0x5b4] sm:$0xf]
  %v445 = vld [vmem:[%s1 + $0x5b8] sm:$0xf]
  %v446 = vld [vmem:[%s1 + $0x5bc] sm:$0xf]
  %v447 = vld [vmem:[%s1 + $0x5c0] sm:$0xf]
  %v448 = vld [vmem:[%s1 + $0x5c4] sm:$0xf]
  %v449 = vld [vmem:[%s1 + $0x5c8] sm:$0xf]
  %v450 = vld [vmem:[%s1 + $0x5cc] sm:$0xf]
  %v451 = vld [vmem:[%s1 + $0x5d0] sm:$0xf]
  %v452 = vld [vmem:[%s1 + $0x5d4] sm:$0xf]
  %v453 = vld [vmem:[%s1 + $0x5d8] sm:$0xf]
  %v454 = vld [vmem:[%s1 + $0x5dc] sm:$0xf]
  %v455 = vld [vmem:[%s1 + $0x5e0] sm:$0xf]
  %v456 = vld [vmem:[%s1 + $0x5e4] sm:$0xf]
  %v457 = vld [vmem:[%s1 + $0x5e8] sm:$0xf]
  %v458 = vld [vmem:[%s1 + $0x5ec] sm:$0xf]
  %v459 = vld [vmem:[%s1 + $0x5f0] sm:$0xf]
  %v460 = vld [vmem:[%s1 + $0x5f4] sm:$0xf]
  %v461 = vld [vmem:[%s1 + $0x5f8] sm:$0xf]
  %v462 = vld [vmem:[%s1 + $0x5fc] sm:$0xf]
  %v463 = vld [vmem:[%s1 + $0x600] sm:$0xf]
  %v464 = vld [vmem:[%s1 + $0x604] sm:$0xf]
  %v465 = vld [vmem:[%s1 + $0x608] sm:$0xf]
  %v466 = vld [vmem:[%s1 + $0x60c] sm:$0xf]
  %v467 = vld [vmem:[%s1 + $0x610] sm:$0xf]
  %v468 = vld [vmem:[%s1 + $0x614] sm:$0xf]
  %v469 = vld [vmem:[%s1 + $0x618] sm:$0xf]
  %v470 = vld [vmem:[%s1 + $0x61c] sm:$0xf]
  %v471 = vld [vmem:[%s1 + $0x620] sm:$0xf]
  %v472 = vld [vmem:[%s1 + $0x624] sm:$0xf]
  %v473 = vld [vmem:[%s1 + $0x628] sm:$0xf]
  %v474 = vld [vmem:[%s1 + $0x62c] sm:$0xf]
  %v475 = vld [vmem:[%s1 + $0x630] sm:$0xf]
  %v476 = vld [vmem:[%s1 + $0x634] sm:$0xf]
  %v477 = vld [vmem:[%s1 + $0x638] sm:$0xf]
  %v478 = vld [vmem:[%s1 + $0x63c] sm:$0xf]
  %v479 = vld [vmem:[%s1 + $0x640] sm:$0xf]
  %v480 = vld [vmem:[%s1 + $0x644] sm:$0xf]
  %v481 = vld [vmem:[%s1 + $0x648] sm:$0xf]
  %v482 = vld [vmem:[%s1 + $0x64c] sm:$0xf]
  %v483 = vld [vmem:[%s1 + $0x650] sm:$0xf]
  %v484 = vld [vmem:[%s1 + $0x654] sm:$0xf]
  %v485 = vld [vmem:[%s1 + $0x658] sm:$0xf]
  %v486 = vld [vmem:[%s1 + $0x65c] sm:$0xf]
  %v487 = vld [vmem:[%s1 + $0x660] sm:$0xf]
  %v488 = vld [vmem:[%s1 + $0x664] sm:$0xf]
  %v489 = vld [vmem:[%s1 + $0x668] sm:$0xf]
  %v490 = vld [vmem:[%s1 + $0x66c] sm:$0xf]
  %v491 = vld [vmem:[%s1 + $0x670] sm:$0xf]
  %v492 = vld [vmem:[%s1 + $0x674] sm:$0xf]
  %v493 = vld [vmem:[%s1 + $0x678] sm:$0xf]
  %v494 = vld [vmem:[%s1 + $0x67c] sm:$0xf]
  %v495 = vld [vmem:[%s1 + $0x680] sm:$0xf]
  %v496 = vld [vmem:[%s1 + $0x684] sm:$0xf]
  %v497 = vld [vmem:[%s1 + $0x688] sm:$0xf]
  %v498 = vld [vmem:[%s1 + $0x68c] sm:$0xf]
  %v499 = vld [vmem:[%s1 + $0x690] sm:$0xf]
  %v500 = vld [vmem:[%s1 + $0x694] sm:$0xf]
  %v501 = vld [vmem:[%s1 + $0x698] sm:$0xf]
  %v502 = vld [vmem:[%s1 + $0x69c] sm:$0xf]
  %v503 = vld [vmem:[%s1 + $0x6a0] sm:$0xf]
  %v504 = vld [vmem:[%s1 + $0x6a4] sm:$0xf]
  %v505 = vld [vmem:[%s1 + $0x6a8] sm:$0xf]
  %v506 = vld [vmem:[%s1 + $0x6ac] sm:$0xf]
  %v507 = vld [vmem:[%s1 + $0x6b0] sm:$0xf]
  %v508 = vld [vmem:[%s1 + $0x6b4] sm:$0xf]
  %v509 = vld [vmem:[%s1 + $0x6b8] sm:$0xf]
  %v510 = vld [vmem:[%s1 + $0x6bc] sm:$0xf]
  %v511 = vld [vmem:[%s1 + $0x6c0] sm:$0xf]
  %v512 = vld [vmem:[%s1 + $0x6c4] sm:$0xf]
  %v513 = vld [vmem:[%s1 + $0x6c8] sm:$0xf]
  %v514 = vld [vmem:[%s1 + $0x6cc] sm:$0xf]
  %v515 = vld [vmem:[%s1 + $0x6d0] sm:$0xf]
  %v516 = vld [vmem:[%s1 + $0x6d4] sm:$0xf]
  %v517 = vld [vmem:[%s1 + $0x6d8] sm:$0xf]
  %v518 = vld [vmem:[%s1 + $0x6dc] sm:$0xf]
  %v519 = vld [vmem:[%s1 + $0x6e0] sm:$0xf]
  %v520 = vld [vmem:[%s1 + $0x6e4] sm:$0xf]
  %v521 = vld [vmem:[%s1 + $0x6e8] sm:$0xf]
  %v522 = vld [vmem:[%s1 + $0x6ec] sm:$0xf]
  %v523 = vld [vmem:[%s1 + $0x6f0] sm:$0xf]
  %v524 = vld [vmem:[%s1 + $0x6f4] sm:$0xf]
  %v525 = vld [vmem:[%s1 + $0x6f8] sm:$0xf]
  %v526 = vld [vmem:[%s1 + $0x6fc] sm:$0xf]
  %v527 = vld [vmem:[%s1 + $0x700] sm:$0xf]
  %v528 = vld [vmem:[%s1 + $0x704] sm:$0xf]
  %v529 = vld [vmem:[%s1 + $0x708] sm:$0xf]
  %v530 = vld [vmem:[%s1 + $0x70c] sm:$0xf]
  %v531 = vld [vmem:[%s1 + $0x710] sm:$0xf]
  %v532 = vld [vmem:[%s1 + $0x714] sm:$0xf]
  %v533 = vld [vmem:[%s1 + $0x718] sm:$0xf]
  %v534 = vld [vmem:[%s1 + $0x71c] sm:$0xf]
  %v535 = vld [vmem:[%s1 + $0x720] sm:$0xf]
  %v536 = vld [vmem:[%s1 + $0x724] sm:$0xf]
  %v537 = vld [vmem:[%s1 + $0x728] sm:$0xf]
  %v538 = vld [vmem:[%s1 + $0x72c] sm:$0xf]
  %v539 = vld [vmem:[%s1 + $0x730] sm:$0xf]
  %v540 = vld [vmem:[%s1 + $0x734] sm:$0xf]
  %v541 = vld [vmem:[%s1 + $0x738] sm:$0xf]
  %v542 = vld [vmem:[%s1 + $0x73c] sm:$0xf]
  %v543 = vld [vmem:[%s1 + $0x740] sm:$0xf]
  %v544 = vld [vmem:[%s1 + $0x744] sm:$0xf]
  %v545 = vld [vmem:[%s1 + $0x748] sm:$0xf]
  %v546 = vld [vmem:[%s1 + $0x74c] sm:$0xf]
  %v547 = vld [vmem:[%s1 + $0x750] sm:$0xf]
  %v548 = vld [vmem:[%s1 + $0x754] sm:$0xf]
  %v549 = vld [vmem:[%s1 + $0x758] sm:$0xf]
  %v550 = vld [vmem:[%s1 + $0x75c] sm:$0xf]
  %v551 = vld [vmem:[%s1 + $0x760] sm:$0xf]
  %v552 = vld [vmem:[%s1 + $0x764] sm:$0xf]
  %v553 = vld [vmem:[%s1 + $0x768] sm:$0xf]
  %v554 = vld [vmem:[%s1 + $0x76c] sm:$0xf]
  %v555 = vld [vmem:[%s1 + $0x770] sm:$0xf]
  %v556 = vld [vmem:[%s1 + $0x774] sm:$0xf]
  %v557 = vld [vmem:[%s1 + $0x778] sm:$0xf]
  %v558 = vld [vmem:[%s1 + $0x77c] sm:$0xf]
  %v559 = vld [vmem:[%s1 + $0x780] sm:$0xf]
  %v560 = vld [vmem:[%s1 + $0x784] sm:$0xf]
  %v561 = vld [vmem:[%s1 + $0x788] sm:$0xf]
  %v562 = vld [vmem:[%s1 + $0x78c] sm:$0xf]
  %v563 = vld [vmem:[%s1 + $0x790] sm:$0xf]
  %v564 = vld [vmem:[%s1 + $0x794] sm:$0xf]
  %v565 = vld [vmem:[%s1 + $0x798] sm:$0xf]
  %v566 = vld [vmem:[%s1 + $0x79c] sm:$0xf]
  %v567 = vld [vmem:[%s1 + $0x7a0] sm:$0xf]
  %v568 = vld [vmem:[%s1 + $0x7a4] sm:$0xf]
  %v569 = vld [vmem:[%s1 + $0x7a8] sm:$0xf]
  %v570 = vld [vmem:[%s1 + $0x7ac] sm:$0xf]
  %v571 = vld [vmem:[%s1 + $0x7b0] sm:$0xf]
  %v572 = vld [vmem:[%s1 + $0x7b4] sm:$0xf]
  %v573 = vld [vmem:[%s1 + $0x7b8] sm:$0xf]
  %v574 = vld [vmem:[%s1 + $0x7bc] sm:$0xf]
  %v575 = vld [vmem:[%s1 + $0x7c0] sm:$0xf]
  %v576 = vld [vmem:[%s1 + $0x7c4] sm:$0xf]
  %v577 = vld [vmem:[%s1 + $0x7c8] sm:$0xf]
  %v578 = vld [vmem:[%s1 + $0x7cc] sm:$0xf]
  %v579 = vld [vmem:[%s1 + $0x7d0] sm:$0xf]
  %v580 = vld [vmem:[%s1 + $0x7d4] sm:$0xf]
  %v581 = vld [vmem:[%s1 + $0x7d8] sm:$0xf]
  %v582 = vld [vmem:[%s1 + $0x7dc] sm:$0xf]
  %v583 = vld [vmem:[%s1 + $0x7e0] sm:$0xf]
  %v584 = vld [vmem:[%s1 + $0x7e4] sm:$0xf]
  %v585 = vld [vmem:[%s1 + $0x7e8] sm:$0xf]
  %v586 = vld [vmem:[%s1 + $0x7ec] sm:$0xf]
  %v587 = vld [vmem:[%s1 + $0x7f0] sm:$0xf]
  %v588 = vld [vmem:[%s1 + $0x7f4] sm:$0xf]
  %v589 = vld [vmem:[%s1 + $0x7f8] sm:$0xf]
  %v590 = vld [vmem:[%s1 + $0x7fc] sm:$0xf]
  %v591 = vld [vmem:[%s2] sm:$0x1]
  %v593 = vlaneseq
  %v594 = vshrl.u32 %v593, 7
  %v595 = vsub.s32 0, %v594
  %v596 = vrot.slane %v591, %v595
  %v662 = vunpack.c.l.b16 %v15
  %v663 = vunpack.c.h.b16 %v15
  %v664 = vunpack.c.l.b16 %v16
  %v665 = vunpack.c.h.b16 %v16
  %v666 = vunpack.c.l.b16 %v17
  %v667 = vunpack.c.h.b16 %v17
  %v668 = vunpack.c.l.b16 %v18
  %v669 = vunpack.c.h.b16 %v18
  %v670 = vunpack.c.l.b16 %v19
  %v671 = vunpack.c.h.b16 %v19
  %v672 = vunpack.c.l.b16 %v20
  %v673 = vunpack.c.h.b16 %v20
  %v674 = vunpack.c.l.b16 %v21
  %v675 = vunpack.c.h.b16 %v21
  %v676 = vunpack.c.l.b16 %v22
  %v677 = vunpack.c.h.b16 %v22
  %v678 = vunpack.c.l.b16 %v23
  %v679 = vunpack.c.h.b16 %v23
  %v680 = vunpack.c.l.b16 %v24
  %v681 = vunpack.c.h.b16 %v24
  %v682 = vunpack.c.l.b16 %v25
  %v683 = vunpack.c.h.b16 %v25
  %v684 = vunpack.c.l.b16 %v26
  %v685 = vunpack.c.h.b16 %v26
  %v686 = vunpack.c.l.b16 %v27
  %v687 = vunpack.c.h.b16 %v27
  %v688 = vunpack.c.l.b16 %v28
  %v689 = vunpack.c.h.b16 %v28
  %v690 = vunpack.c.l.b16 %v29
  %v691 = vunpack.c.h.b16 %v29
  %v692 = vunpack.c.l.b16 %v30
  %v693 = vunpack.c.h.b16 %v30
  %v694 = vunpack.c.l.b16 %v31
  %v695 = vunpack.c.h.b16 %v31
  %v696 = vunpack.c.l.b16 %v32
  %v697 = vunpack.c.h.b16 %v32
  %v698 = vunpack.c.l.b16 %v33
  %v699 = vunpack.c.h.b16 %v33
  %v700 = vunpack.c.l.b16 %v34
  %v701 = vunpack.c.h.b16 %v34
  %v702 = vunpack.c.l.b16 %v35
  %v703 = vunpack.c.h.b16 %v35
  %v704 = vunpack.c.l.b16 %v36
  %v705 = vunpack.c.h.b16 %v36
  %v706 = vunpack.c.l.b16 %v37
  %v707 = vunpack.c.h.b16 %v37
  %v708 = vunpack.c.l.b16 %v38
  %v709 = vunpack.c.h.b16 %v38
  %v710 = vunpack.c.l.b16 %v39
  %v711 = vunpack.c.h.b16 %v39
  %v712 = vunpack.c.l.b16 %v40
  %v713 = vunpack.c.h.b16 %v40
  %v714 = vunpack.c.l.b16 %v41
  %v715 = vunpack.c.h.b16 %v41
  %v716 = vunpack.c.l.b16 %v42
  %v717 = vunpack.c.h.b16 %v42
  %v718 = vunpack.c.l.b16 %v43
  %v719 = vunpack.c.h.b16 %v43
  %v720 = vunpack.c.l.b16 %v44
  %v721 = vunpack.c.h.b16 %v44
  %v722 = vunpack.c.l.b16 %v45
  %v723 = vunpack.c.h.b16 %v45
  %v724 = vunpack.c.l.b16 %v46
  %v725 = vunpack.c.h.b16 %v46
  %v726 = vunpack.c.l.b16 %v47
  %v727 = vunpack.c.h.b16 %v47
  %v728 = vunpack.c.l.b16 %v48
  %v729 = vunpack.c.h.b16 %v48
  %v730 = vunpack.c.l.b16 %v49
  %v731 = vunpack.c.h.b16 %v49
  %v732 = vunpack.c.l.b16 %v50
  %v733 = vunpack.c.h.b16 %v50
  %v734 = vunpack.c.l.b16 %v51
  %v735 = vunpack.c.h.b16 %v51
  %v736 = vunpack.c.l.b16 %v52
  %v737 = vunpack.c.h.b16 %v52
  %v738 = vunpack.c.l.b16 %v53
  %v739 = vunpack.c.h.b16 %v53
  %v740 = vunpack.c.l.b16 %v54
  %v741 = vunpack.c.h.b16 %v54
  %v742 = vunpack.c.l.b16 %v55
  %v743 = vunpack.c.h.b16 %v55
  %v744 = vunpack.c.l.b16 %v56
  %v745 = vunpack.c.h.b16 %v56
  %v746 = vunpack.c.l.b16 %v57
  %v747 = vunpack.c.h.b16 %v57
  %v748 = vunpack.c.l.b16 %v58
  %v749 = vunpack.c.h.b16 %v58
  %v750 = vunpack.c.l.b16 %v59
  %v751 = vunpack.c.h.b16 %v59
  %v752 = vunpack.c.l.b16 %v60
  %v753 = vunpack.c.h.b16 %v60
  %v754 = vunpack.c.l.b16 %v61
  %v755 = vunpack.c.h.b16 %v61
  %v756 = vunpack.c.l.b16 %v62
  %v757 = vunpack.c.h.b16 %v62
  %v758 = vunpack.c.l.b16 %v63
  %v759 = vunpack.c.h.b16 %v63
  %v760 = vunpack.c.l.b16 %v64
  %v761 = vunpack.c.h.b16 %v64
  %v762 = vunpack.c.l.b16 %v65
  %v763 = vunpack.c.h.b16 %v65
  %v764 = vunpack.c.l.b16 %v66
  %v765 = vunpack.c.h.b16 %v66
  %v766 = vunpack.c.l.b16 %v67
  %v767 = vunpack.c.h.b16 %v67
  %v768 = vunpack.c.l.b16 %v68
  %v769 = vunpack.c.h.b16 %v68
  %v770 = vunpack.c.l.b16 %v69
  %v771 = vunpack.c.h.b16 %v69
  %v772 = vunpack.c.l.b16 %v70
  %v773 = vunpack.c.h.b16 %v70
  %v774 = vunpack.c.l.b16 %v71
  %v775 = vunpack.c.h.b16 %v71
  %v776 = vunpack.c.l.b16 %v72
  %v777 = vunpack.c.h.b16 %v72
  %v778 = vunpack.c.l.b16 %v73
  %v779 = vunpack.c.h.b16 %v73
  %v780 = vunpack.c.l.b16 %v74
  %v781 = vunpack.c.h.b16 %v74
  %v782 = vunpack.c.l.b16 %v75
  %v783 = vunpack.c.h.b16 %v75
  %v784 = vunpack.c.l.b16 %v76
  %v785 = vunpack.c.h.b16 %v76
  %v786 = vunpack.c.l.b16 %v77
  %v787 = vunpack.c.h.b16 %v77
  %v788 = vunpack.c.l.b16 %v78
  %v789 = vunpack.c.h.b16 %v78
  %v790 = vpack.c.b16 %v694, %v662
  %v791 = vpack.c.b16 %v695, %v663
  %v792 = vpack.c.b16 %v696, %v664
  %v793 = vpack.c.b16 %v697, %v665
  %v794 = vpack.c.b16 %v698, %v666
  %v795 = vpack.c.b16 %v699, %v667
  %v796 = vpack.c.b16 %v700, %v668
  %v797 = vpack.c.b16 %v701, %v669
  %v798 = vpack.c.b16 %v702, %v670
  %v799 = vpack.c.b16 %v703, %v671
  %v800 = vpack.c.b16 %v704, %v672
  %v801 = vpack.c.b16 %v705, %v673
  %v802 = vpack.c.b16 %v706, %v674
  %v803 = vpack.c.b16 %v707, %v675
  %v804 = vpack.c.b16 %v708, %v676
  %v805 = vpack.c.b16 %v709, %v677
  %v806 = vpack.c.b16 %v710, %v678
  %v807 = vpack.c.b16 %v711, %v679
  %v808 = vpack.c.b16 %v712, %v680
  %v809 = vpack.c.b16 %v713, %v681
  %v810 = vpack.c.b16 %v714, %v682
  %v811 = vpack.c.b16 %v715, %v683
  %v812 = vpack.c.b16 %v716, %v684
  %v813 = vpack.c.b16 %v717, %v685
  %v814 = vpack.c.b16 %v718, %v686
  %v815 = vpack.c.b16 %v719, %v687
  %v816 = vpack.c.b16 %v720, %v688
  %v817 = vpack.c.b16 %v721, %v689
  %v818 = vpack.c.b16 %v722, %v690
  %v819 = vpack.c.b16 %v723, %v691
  %v820 = vpack.c.b16 %v724, %v692
  %v821 = vpack.c.b16 %v725, %v693
  %v822 = vpack.c.b16 %v758, %v726
  %v823 = vpack.c.b16 %v759, %v727
  %v824 = vpack.c.b16 %v760, %v728
  %v825 = vpack.c.b16 %v761, %v729
  %v826 = vpack.c.b16 %v762, %v730
  %v827 = vpack.c.b16 %v763, %v731
  %v828 = vpack.c.b16 %v764, %v732
  %v829 = vpack.c.b16 %v765, %v733
  %v830 = vpack.c.b16 %v766, %v734
  %v831 = vpack.c.b16 %v767, %v735
  %v832 = vpack.c.b16 %v768, %v736
  %v833 = vpack.c.b16 %v769, %v737
  %v834 = vpack.c.b16 %v770, %v738
  %v835 = vpack.c.b16 %v771, %v739
  %v836 = vpack.c.b16 %v772, %v740
  %v837 = vpack.c.b16 %v773, %v741
  %v838 = vpack.c.b16 %v774, %v742
  %v839 = vpack.c.b16 %v775, %v743
  %v840 = vpack.c.b16 %v776, %v744
  %v841 = vpack.c.b16 %v777, %v745
  %v842 = vpack.c.b16 %v778, %v746
  %v843 = vpack.c.b16 %v779, %v747
  %v844 = vpack.c.b16 %v780, %v748
  %v845 = vpack.c.b16 %v781, %v749
  %v846 = vpack.c.b16 %v782, %v750
  %v847 = vpack.c.b16 %v783, %v751
  %v848 = vpack.c.b16 %v784, %v752
  %v849 = vpack.c.b16 %v785, %v753
  %v850 = vpack.c.b16 %v786, %v754
  %v851 = vpack.c.b16 %v787, %v755
  %v852 = vpack.c.b16 %v788, %v756
  %v853 = vpack.c.b16 %v789, %v757
  %v1430 = vunpack.c.l.b16 %v79
  %v1431 = vunpack.c.l.b16 %v80
  %v1432 = vunpack.c.l.b16 %v81
  %v1433 = vunpack.c.l.b16 %v82
  %v1434 = vunpack.c.l.b16 %v83
  %v1435 = vunpack.c.l.b16 %v84
  %v1436 = vunpack.c.l.b16 %v85
  %v1437 = vunpack.c.l.b16 %v86
  %v1438 = vunpack.c.l.b16 %v87
  %v1439 = vunpack.c.l.b16 %v88
  %v1440 = vunpack.c.l.b16 %v89
  %v1441 = vunpack.c.l.b16 %v90
  %v1442 = vunpack.c.l.b16 %v91
  %v1443 = vunpack.c.l.b16 %v92
  %v1444 = vunpack.c.l.b16 %v93
  %v1445 = vunpack.c.l.b16 %v94
  %v1446 = vunpack.c.l.b16 %v95
  %v1447 = vunpack.c.l.b16 %v96
  %v1448 = vunpack.c.l.b16 %v97
  %v1449 = vunpack.c.l.b16 %v98
  %v1450 = vunpack.c.l.b16 %v99
  %v1451 = vunpack.c.l.b16 %v100
  %v1452 = vunpack.c.l.b16 %v101
  %v1453 = vunpack.c.l.b16 %v102
  %v1454 = vunpack.c.l.b16 %v103
  %v1455 = vunpack.c.l.b16 %v104
  %v1456 = vunpack.c.l.b16 %v105
  %v1457 = vunpack.c.l.b16 %v106
  %v1458 = vunpack.c.l.b16 %v107
  %v1459 = vunpack.c.l.b16 %v108
  %v1460 = vunpack.c.l.b16 %v109
  %v1461 = vunpack.c.l.b16 %v110
  %v1462 = vunpack.c.l.b16 %v111
  %v1463 = vunpack.c.l.b16 %v112
  %v1464 = vunpack.c.l.b16 %v113
  %v1465 = vunpack.c.l.b16 %v114
  %v1466 = vunpack.c.l.b16 %v115
  %v1467 = vunpack.c.l.b16 %v116
  %v1468 = vunpack.c.l.b16 %v117
  %v1469 = vunpack.c.l.b16 %v118
  %v1470 = vunpack.c.l.b16 %v119
  %v1471 = vunpack.c.l.b16 %v120
  %v1472 = vunpack.c.l.b16 %v121
  %v1473 = vunpack.c.l.b16 %v122
  %v1474 = vunpack.c.l.b16 %v123
  %v1475 = vunpack.c.l.b16 %v124
  %v1476 = vunpack.c.l.b16 %v125
  %v1477 = vunpack.c.l.b16 %v126
  %v1478 = vunpack.c.l.b16 %v127
  %v1479 = vunpack.c.l.b16 %v128
  %v1480 = vunpack.c.l.b16 %v129
  %v1481 = vunpack.c.l.b16 %v130
  %v1482 = vunpack.c.l.b16 %v131
  %v1483 = vunpack.c.l.b16 %v132
  %v1484 = vunpack.c.l.b16 %v133
  %v1485 = vunpack.c.l.b16 %v134
  %v1486 = vunpack.c.l.b16 %v135
  %v1487 = vunpack.c.l.b16 %v136
  %v1488 = vunpack.c.l.b16 %v137
  %v1489 = vunpack.c.l.b16 %v138
  %v1490 = vunpack.c.l.b16 %v139
  %v1491 = vunpack.c.l.b16 %v140
  %v1492 = vunpack.c.l.b16 %v141
  %v1493 = vunpack.c.l.b16 %v142
  %v1494 = vunpack.c.l.b16 %v143
  %v1495 = vunpack.c.l.b16 %v144
  %v1496 = vunpack.c.l.b16 %v145
  %v1497 = vunpack.c.l.b16 %v146
  %v1498 = vunpack.c.l.b16 %v147
  %v1499 = vunpack.c.l.b16 %v148
  %v1500 = vunpack.c.l.b16 %v149
  %v1501 = vunpack.c.l.b16 %v150
  %v1502 = vunpack.c.l.b16 %v151
  %v1503 = vunpack.c.l.b16 %v152
  %v1504 = vunpack.c.l.b16 %v153
  %v1505 = vunpack.c.l.b16 %v154
  %v1506 = vunpack.c.l.b16 %v155
  %v1507 = vunpack.c.l.b16 %v156
  %v1508 = vunpack.c.l.b16 %v157
  %v1509 = vunpack.c.l.b16 %v158
  %v1510 = vunpack.c.l.b16 %v159
  %v1511 = vunpack.c.l.b16 %v160
  %v1512 = vunpack.c.l.b16 %v161
  %v1513 = vunpack.c.l.b16 %v162
  %v1514 = vunpack.c.l.b16 %v163
  %v1515 = vunpack.c.l.b16 %v164
  %v1516 = vunpack.c.l.b16 %v165
  %v1517 = vunpack.c.l.b16 %v166
  %v1518 = vunpack.c.l.b16 %v167
  %v1519 = vunpack.c.l.b16 %v168
  %v1520 = vunpack.c.l.b16 %v169
  %v1521 = vunpack.c.l.b16 %v170
  %v1522 = vunpack.c.l.b16 %v171
  %v1523 = vunpack.c.l.b16 %v172
  %v1524 = vunpack.c.l.b16 %v173
  %v1525 = vunpack.c.l.b16 %v174
  %v1526 = vunpack.c.l.b16 %v175
  %v1527 = vunpack.c.l.b16 %v176
  %v1528 = vunpack.c.l.b16 %v177
  %v1529 = vunpack.c.l.b16 %v178
  %v1530 = vunpack.c.l.b16 %v179
  %v1531 = vunpack.c.l.b16 %v180
  %v1532 = vunpack.c.l.b16 %v181
  %v1533 = vunpack.c.l.b16 %v182
  %v1534 = vunpack.c.l.b16 %v183
  %v1535 = vunpack.c.l.b16 %v184
  %v1536 = vunpack.c.l.b16 %v185
  %v1537 = vunpack.c.l.b16 %v186
  %v1538 = vunpack.c.l.b16 %v187
  %v1539 = vunpack.c.l.b16 %v188
  %v1540 = vunpack.c.l.b16 %v189
  %v1541 = vunpack.c.l.b16 %v190
  %v1542 = vunpack.c.l.b16 %v191
  %v1543 = vunpack.c.l.b16 %v192
  %v1544 = vunpack.c.l.b16 %v193
  %v1545 = vunpack.c.l.b16 %v194
  %v1546 = vunpack.c.l.b16 %v195
  %v1547 = vunpack.c.l.b16 %v196
  %v1548 = vunpack.c.l.b16 %v197
  %v1549 = vunpack.c.l.b16 %v198
  %v1550 = vunpack.c.l.b16 %v199
  %v1551 = vunpack.c.l.b16 %v200
  %v1552 = vunpack.c.l.b16 %v201
  %v1553 = vunpack.c.l.b16 %v202
  %v1554 = vunpack.c.l.b16 %v203
  %v1555 = vunpack.c.l.b16 %v204
  %v1556 = vunpack.c.l.b16 %v205
  %v1557 = vunpack.c.l.b16 %v206
  %v1558 = vunpack.c.l.b16 %v207
  %v1559 = vunpack.c.l.b16 %v208
  %v1560 = vunpack.c.l.b16 %v209
  %v1561 = vunpack.c.l.b16 %v210
  %v1562 = vunpack.c.l.b16 %v211
  %v1563 = vunpack.c.l.b16 %v212
  %v1564 = vunpack.c.l.b16 %v213
  %v1565 = vunpack.c.l.b16 %v214
  %v1566 = vunpack.c.l.b16 %v215
  %v1567 = vunpack.c.l.b16 %v216
  %v1568 = vunpack.c.l.b16 %v217
  %v1569 = vunpack.c.l.b16 %v218
  %v1570 = vunpack.c.l.b16 %v219
  %v1571 = vunpack.c.l.b16 %v220
  %v1572 = vunpack.c.l.b16 %v221
  %v1573 = vunpack.c.l.b16 %v222
  %v1574 = vunpack.c.l.b16 %v223
  %v1575 = vunpack.c.l.b16 %v224
  %v1576 = vunpack.c.l.b16 %v225
  %v1577 = vunpack.c.l.b16 %v226
  %v1578 = vunpack.c.l.b16 %v227
  %v1579 = vunpack.c.l.b16 %v228
  %v1580 = vunpack.c.l.b16 %v229
  %v1581 = vunpack.c.l.b16 %v230
  %v1582 = vunpack.c.l.b16 %v231
  %v1583 = vunpack.c.l.b16 %v232
  %v1584 = vunpack.c.l.b16 %v233
  %v1585 = vunpack.c.l.b16 %v234
  %v1586 = vunpack.c.l.b16 %v235
  %v1587 = vunpack.c.l.b16 %v236
  %v1588 = vunpack.c.l.b16 %v237
  %v1589 = vunpack.c.l.b16 %v238
  %v1590 = vunpack.c.l.b16 %v239
  %v1591 = vunpack.c.l.b16 %v240
  %v1592 = vunpack.c.l.b16 %v241
  %v1593 = vunpack.c.l.b16 %v242
  %v1594 = vunpack.c.l.b16 %v243
  %v1595 = vunpack.c.l.b16 %v244
  %v1596 = vunpack.c.l.b16 %v245
  %v1597 = vunpack.c.l.b16 %v246
  %v1598 = vunpack.c.l.b16 %v247
  %v1599 = vunpack.c.l.b16 %v248
  %v1600 = vunpack.c.l.b16 %v249
  %v1601 = vunpack.c.l.b16 %v250
  %v1602 = vunpack.c.l.b16 %v251
  %v1603 = vunpack.c.l.b16 %v252
  %v1604 = vunpack.c.l.b16 %v253
  %v1605 = vunpack.c.l.b16 %v254
  %v1606 = vunpack.c.l.b16 %v255
  %v1607 = vunpack.c.l.b16 %v256
  %v1608 = vunpack.c.l.b16 %v257
  %v1609 = vunpack.c.l.b16 %v258
  %v1610 = vunpack.c.l.b16 %v259
  %v1611 = vunpack.c.l.b16 %v260
  %v1612 = vunpack.c.l.b16 %v261
  %v1613 = vunpack.c.l.b16 %v262
  %v1614 = vunpack.c.l.b16 %v263
  %v1615 = vunpack.c.l.b16 %v264
  %v1616 = vunpack.c.l.b16 %v265
  %v1617 = vunpack.c.l.b16 %v266
  %v1618 = vunpack.c.l.b16 %v267
  %v1619 = vunpack.c.l.b16 %v268
  %v1620 = vunpack.c.l.b16 %v269
  %v1621 = vunpack.c.l.b16 %v270
  %v1622 = vunpack.c.l.b16 %v271
  %v1623 = vunpack.c.l.b16 %v272
  %v1624 = vunpack.c.l.b16 %v273
  %v1625 = vunpack.c.l.b16 %v274
  %v1626 = vunpack.c.l.b16 %v275
  %v1627 = vunpack.c.l.b16 %v276
  %v1628 = vunpack.c.l.b16 %v277
  %v1629 = vunpack.c.l.b16 %v278
  %v1630 = vunpack.c.l.b16 %v279
  %v1631 = vunpack.c.l.b16 %v280
  %v1632 = vunpack.c.l.b16 %v281
  %v1633 = vunpack.c.l.b16 %v282
  %v1634 = vunpack.c.l.b16 %v283
  %v1635 = vunpack.c.l.b16 %v284
  %v1636 = vunpack.c.l.b16 %v285
  %v1637 = vunpack.c.l.b16 %v286
  %v1638 = vunpack.c.l.b16 %v287
  %v1639 = vunpack.c.l.b16 %v288
  %v1640 = vunpack.c.l.b16 %v289
  %v1641 = vunpack.c.l.b16 %v290
  %v1642 = vunpack.c.l.b16 %v291
  %v1643 = vunpack.c.l.b16 %v292
  %v1644 = vunpack.c.l.b16 %v293
  %v1645 = vunpack.c.l.b16 %v294
  %v1646 = vunpack.c.l.b16 %v295
  %v1647 = vunpack.c.l.b16 %v296
  %v1648 = vunpack.c.l.b16 %v297
  %v1649 = vunpack.c.l.b16 %v298
  %v1650 = vunpack.c.l.b16 %v299
  %v1651 = vunpack.c.l.b16 %v300
  %v1652 = vunpack.c.l.b16 %v301
  %v1653 = vunpack.c.l.b16 %v302
  %v1654 = vunpack.c.l.b16 %v303
  %v1655 = vunpack.c.l.b16 %v304
  %v1656 = vunpack.c.l.b16 %v305
  %v1657 = vunpack.c.l.b16 %v306
  %v1658 = vunpack.c.l.b16 %v307
  %v1659 = vunpack.c.l.b16 %v308
  %v1660 = vunpack.c.l.b16 %v309
  %v1661 = vunpack.c.l.b16 %v310
  %v1662 = vunpack.c.l.b16 %v311
  %v1663 = vunpack.c.l.b16 %v312
  %v1664 = vunpack.c.l.b16 %v313
  %v1665 = vunpack.c.l.b16 %v314
  %v1666 = vunpack.c.l.b16 %v315
  %v1667 = vunpack.c.l.b16 %v316
  %v1668 = vunpack.c.l.b16 %v317
  %v1669 = vunpack.c.l.b16 %v318
  %v1670 = vunpack.c.l.b16 %v319
  %v1671 = vunpack.c.l.b16 %v320
  %v1672 = vunpack.c.l.b16 %v321
  %v1673 = vunpack.c.l.b16 %v322
  %v1674 = vunpack.c.l.b16 %v323
  %v1675 = vunpack.c.l.b16 %v324
  %v1676 = vunpack.c.l.b16 %v325
  %v1677 = vunpack.c.l.b16 %v326
  %v1678 = vunpack.c.l.b16 %v327
  %v1679 = vunpack.c.l.b16 %v328
  %v1680 = vunpack.c.l.b16 %v329
  %v1681 = vunpack.c.l.b16 %v330
  %v1682 = vunpack.c.l.b16 %v331
  %v1683 = vunpack.c.l.b16 %v332
  %v1684 = vunpack.c.l.b16 %v333
  %v1685 = vunpack.c.l.b16 %v334
  %v1686 = vunpack.c.l.b16 %v335
  %v1687 = vunpack.c.l.b16 %v336
  %v1688 = vunpack.c.l.b16 %v337
  %v1689 = vunpack.c.l.b16 %v338
  %v1690 = vunpack.c.l.b16 %v339
  %v1691 = vunpack.c.l.b16 %v340
  %v1692 = vunpack.c.l.b16 %v341
  %v1693 = vunpack.c.l.b16 %v342
  %v1694 = vunpack.c.l.b16 %v343
  %v1695 = vunpack.c.l.b16 %v344
  %v1696 = vunpack.c.l.b16 %v345
  %v1697 = vunpack.c.l.b16 %v346
  %v1698 = vunpack.c.l.b16 %v347
  %v1699 = vunpack.c.l.b16 %v348
  %v1700 = vunpack.c.l.b16 %v349
  %v1701 = vunpack.c.l.b16 %v350
  %v1702 = vunpack.c.l.b16 %v351
  %v1703 = vunpack.c.l.b16 %v352
  %v1704 = vunpack.c.l.b16 %v353
  %v1705 = vunpack.c.l.b16 %v354
  %v1706 = vunpack.c.l.b16 %v355
  %v1707 = vunpack.c.l.b16 %v356
  %v1708 = vunpack.c.l.b16 %v357
  %v1709 = vunpack.c.l.b16 %v358
  %v1710 = vunpack.c.l.b16 %v359
  %v1711 = vunpack.c.l.b16 %v360
  %v1712 = vunpack.c.l.b16 %v361
  %v1713 = vunpack.c.l.b16 %v362
  %v1714 = vunpack.c.l.b16 %v363
  %v1715 = vunpack.c.l.b16 %v364
  %v1716 = vunpack.c.l.b16 %v365
  %v1717 = vunpack.c.l.b16 %v366
  %v1718 = vunpack.c.l.b16 %v367
  %v1719 = vunpack.c.l.b16 %v368
  %v1720 = vunpack.c.l.b16 %v369
  %v1721 = vunpack.c.l.b16 %v370
  %v1722 = vunpack.c.l.b16 %v371
  %v1723 = vunpack.c.l.b16 %v372
  %v1724 = vunpack.c.l.b16 %v373
  %v1725 = vunpack.c.l.b16 %v374
  %v1726 = vunpack.c.l.b16 %v375
  %v1727 = vunpack.c.l.b16 %v376
  %v1728 = vunpack.c.l.b16 %v377
  %v1729 = vunpack.c.l.b16 %v378
  %v1730 = vunpack.c.l.b16 %v379
  %v1731 = vunpack.c.l.b16 %v380
  %v1732 = vunpack.c.l.b16 %v381
  %v1733 = vunpack.c.l.b16 %v382
  %v1734 = vunpack.c.l.b16 %v383
  %v1735 = vunpack.c.l.b16 %v384
  %v1736 = vunpack.c.l.b16 %v385
  %v1737 = vunpack.c.l.b16 %v386
  %v1738 = vunpack.c.l.b16 %v387
  %v1739 = vunpack.c.l.b16 %v388
  %v1740 = vunpack.c.l.b16 %v389
  %v1741 = vunpack.c.l.b16 %v390
  %v1742 = vunpack.c.l.b16 %v391
  %v1743 = vunpack.c.l.b16 %v392
  %v1744 = vunpack.c.l.b16 %v393
  %v1745 = vunpack.c.l.b16 %v394
  %v1746 = vunpack.c.l.b16 %v395
  %v1747 = vunpack.c.l.b16 %v396
  %v1748 = vunpack.c.l.b16 %v397
  %v1749 = vunpack.c.l.b16 %v398
  %v1750 = vunpack.c.l.b16 %v399
  %v1751 = vunpack.c.l.b16 %v400
  %v1752 = vunpack.c.l.b16 %v401
  %v1753 = vunpack.c.l.b16 %v402
  %v1754 = vunpack.c.l.b16 %v403
  %v1755 = vunpack.c.l.b16 %v404
  %v1756 = vunpack.c.l.b16 %v405
  %v1757 = vunpack.c.l.b16 %v406
  %v1758 = vunpack.c.l.b16 %v407
  %v1759 = vunpack.c.l.b16 %v408
  %v1760 = vunpack.c.l.b16 %v409
  %v1761 = vunpack.c.l.b16 %v410
  %v1762 = vunpack.c.l.b16 %v411
  %v1763 = vunpack.c.l.b16 %v412
  %v1764 = vunpack.c.l.b16 %v413
  %v1765 = vunpack.c.l.b16 %v414
  %v1766 = vunpack.c.l.b16 %v415
  %v1767 = vunpack.c.l.b16 %v416
  %v1768 = vunpack.c.l.b16 %v417
  %v1769 = vunpack.c.l.b16 %v418
  %v1770 = vunpack.c.l.b16 %v419
  %v1771 = vunpack.c.l.b16 %v420
  %v1772 = vunpack.c.l.b16 %v421
  %v1773 = vunpack.c.l.b16 %v422
  %v1774 = vunpack.c.l.b16 %v423
  %v1775 = vunpack.c.l.b16 %v424
  %v1776 = vunpack.c.l.b16 %v425
  %v1777 = vunpack.c.l.b16 %v426
  %v1778 = vunpack.c.l.b16 %v427
  %v1779 = vunpack.c.l.b16 %v428
  %v1780 = vunpack.c.l.b16 %v429
  %v1781 = vunpack.c.l.b16 %v430
  %v1782 = vunpack.c.l.b16 %v431
  %v1783 = vunpack.c.l.b16 %v432
  %v1784 = vunpack.c.l.b16 %v433
  %v1785 = vunpack.c.l.b16 %v434
  %v1786 = vunpack.c.l.b16 %v435
  %v1787 = vunpack.c.l.b16 %v436
  %v1788 = vunpack.c.l.b16 %v437
  %v1789 = vunpack.c.l.b16 %v438
  %v1790 = vunpack.c.l.b16 %v439
  %v1791 = vunpack.c.l.b16 %v440
  %v1792 = vunpack.c.l.b16 %v441
  %v1793 = vunpack.c.l.b16 %v442
  %v1794 = vunpack.c.l.b16 %v443
  %v1795 = vunpack.c.l.b16 %v444
  %v1796 = vunpack.c.l.b16 %v445
  %v1797 = vunpack.c.l.b16 %v446
  %v1798 = vunpack.c.l.b16 %v447
  %v1799 = vunpack.c.l.b16 %v448
  %v1800 = vunpack.c.l.b16 %v449
  %v1801 = vunpack.c.l.b16 %v450
  %v1802 = vunpack.c.l.b16 %v451
  %v1803 = vunpack.c.l.b16 %v452
  %v1804 = vunpack.c.l.b16 %v453
  %v1805 = vunpack.c.l.b16 %v454
  %v1806 = vunpack.c.l.b16 %v455
  %v1807 = vunpack.c.l.b16 %v456
  %v1808 = vunpack.c.l.b16 %v457
  %v1809 = vunpack.c.l.b16 %v458
  %v1810 = vunpack.c.l.b16 %v459
  %v1811 = vunpack.c.l.b16 %v460
  %v1812 = vunpack.c.l.b16 %v461
  %v1813 = vunpack.c.l.b16 %v462
  %v1814 = vunpack.c.l.b16 %v463
  %v1815 = vunpack.c.l.b16 %v464
  %v1816 = vunpack.c.l.b16 %v465
  %v1817 = vunpack.c.l.b16 %v466
  %v1818 = vunpack.c.l.b16 %v467
  %v1819 = vunpack.c.l.b16 %v468
  %v1820 = vunpack.c.l.b16 %v469
  %v1821 = vunpack.c.l.b16 %v470
  %v1822 = vunpack.c.l.b16 %v471
  %v1823 = vunpack.c.l.b16 %v472
  %v1824 = vunpack.c.l.b16 %v473
  %v1825 = vunpack.c.l.b16 %v474
  %v1826 = vunpack.c.l.b16 %v475
  %v1827 = vunpack.c.l.b16 %v476
  %v1828 = vunpack.c.l.b16 %v477
  %v1829 = vunpack.c.l.b16 %v478
  %v1830 = vunpack.c.l.b16 %v479
  %v1831 = vunpack.c.l.b16 %v480
  %v1832 = vunpack.c.l.b16 %v481
  %v1833 = vunpack.c.l.b16 %v482
  %v1834 = vunpack.c.l.b16 %v483
  %v1835 = vunpack.c.l.b16 %v484
  %v1836 = vunpack.c.l.b16 %v485
  %v1837 = vunpack.c.l.b16 %v486
  %v1838 = vunpack.c.l.b16 %v487
  %v1839 = vunpack.c.l.b16 %v488
  %v1840 = vunpack.c.l.b16 %v489
  %v1841 = vunpack.c.l.b16 %v490
  %v1842 = vunpack.c.l.b16 %v491
  %v1843 = vunpack.c.l.b16 %v492
  %v1844 = vunpack.c.l.b16 %v493
  %v1845 = vunpack.c.l.b16 %v494
  %v1846 = vunpack.c.l.b16 %v495
  %v1847 = vunpack.c.l.b16 %v496
  %v1848 = vunpack.c.l.b16 %v497
  %v1849 = vunpack.c.l.b16 %v498
  %v1850 = vunpack.c.l.b16 %v499
  %v1851 = vunpack.c.l.b16 %v500
  %v1852 = vunpack.c.l.b16 %v501
  %v1853 = vunpack.c.l.b16 %v502
  %v1854 = vunpack.c.l.b16 %v503
  %v1855 = vunpack.c.l.b16 %v504
  %v1856 = vunpack.c.l.b16 %v505
  %v1857 = vunpack.c.l.b16 %v506
  %v1858 = vunpack.c.l.b16 %v507
  %v1859 = vunpack.c.l.b16 %v508
  %v1860 = vunpack.c.l.b16 %v509
  %v1861 = vunpack.c.l.b16 %v510
  %v1862 = vunpack.c.l.b16 %v511
  %v1863 = vunpack.c.l.b16 %v512
  %v1864 = vunpack.c.l.b16 %v513
  %v1865 = vunpack.c.l.b16 %v514
  %v1866 = vunpack.c.l.b16 %v515
  %v1867 = vunpack.c.l.b16 %v516
  %v1868 = vunpack.c.l.b16 %v517
  %v1869 = vunpack.c.l.b16 %v518
  %v1870 = vunpack.c.l.b16 %v519
  %v1871 = vunpack.c.l.b16 %v520
  %v1872 = vunpack.c.l.b16 %v521
  %v1873 = vunpack.c.l.b16 %v522
  %v1874 = vunpack.c.l.b16 %v523
  %v1875 = vunpack.c.l.b16 %v524
  %v1876 = vunpack.c.l.b16 %v525
  %v1877 = vunpack.c.l.b16 %v526
  %v1878 = vunpack.c.l.b16 %v527
  %v1879 = vunpack.c.l.b16 %v528
  %v1880 = vunpack.c.l.b16 %v529
  %v1881 = vunpack.c.l.b16 %v530
  %v1882 = vunpack.c.l.b16 %v531
  %v1883 = vunpack.c.l.b16 %v532
  %v1884 = vunpack.c.l.b16 %v533
  %v1885 = vunpack.c.l.b16 %v534
  %v1886 = vunpack.c.l.b16 %v535
  %v1887 = vunpack.c.l.b16 %v536
  %v1888 = vunpack.c.l.b16 %v537
  %v1889 = vunpack.c.l.b16 %v538
  %v1890 = vunpack.c.l.b16 %v539
  %v1891 = vunpack.c.l.b16 %v540
  %v1892 = vunpack.c.l.b16 %v541
  %v1893 = vunpack.c.l.b16 %v542
  %v1894 = vunpack.c.l.b16 %v543
  %v1895 = vunpack.c.l.b16 %v544
  %v1896 = vunpack.c.l.b16 %v545
  %v1897 = vunpack.c.l.b16 %v546
  %v1898 = vunpack.c.l.b16 %v547
  %v1899 = vunpack.c.l.b16 %v548
  %v1900 = vunpack.c.l.b16 %v549
  %v1901 = vunpack.c.l.b16 %v550
  %v1902 = vunpack.c.l.b16 %v551
  %v1903 = vunpack.c.l.b16 %v552
  %v1904 = vunpack.c.l.b16 %v553
  %v1905 = vunpack.c.l.b16 %v554
  %v1906 = vunpack.c.l.b16 %v555
  %v1907 = vunpack.c.l.b16 %v556
  %v1908 = vunpack.c.l.b16 %v557
  %v1909 = vunpack.c.l.b16 %v558
  %v1910 = vunpack.c.l.b16 %v559
  %v1911 = vunpack.c.l.b16 %v560
  %v1912 = vunpack.c.l.b16 %v561
  %v1913 = vunpack.c.l.b16 %v562
  %v1914 = vunpack.c.l.b16 %v563
  %v1915 = vunpack.c.l.b16 %v564
  %v1916 = vunpack.c.l.b16 %v565
  %v1917 = vunpack.c.l.b16 %v566
  %v1918 = vunpack.c.l.b16 %v567
  %v1919 = vunpack.c.l.b16 %v568
  %v1920 = vunpack.c.l.b16 %v569
  %v1921 = vunpack.c.l.b16 %v570
  %v1922 = vunpack.c.l.b16 %v571
  %v1923 = vunpack.c.l.b16 %v572
  %v1924 = vunpack.c.l.b16 %v573
  %v1925 = vunpack.c.l.b16 %v574
  %v1926 = vunpack.c.l.b16 %v575
  %v1927 = vunpack.c.l.b16 %v576
  %v1928 = vunpack.c.l.b16 %v577
  %v1929 = vunpack.c.l.b16 %v578
  %v1930 = vunpack.c.l.b16 %v579
  %v1931 = vunpack.c.l.b16 %v580
  %v1932 = vunpack.c.l.b16 %v581
  %v1933 = vunpack.c.l.b16 %v582
  %v1934 = vunpack.c.l.b16 %v583
  %v1935 = vunpack.c.l.b16 %v584
  %v1936 = vunpack.c.l.b16 %v585
  %v1937 = vunpack.c.l.b16 %v586
  %v1938 = vunpack.c.l.b16 %v587
  %v1939 = vunpack.c.l.b16 %v588
  %v1940 = vunpack.c.l.b16 %v589
  %v1941 = vunpack.c.l.b16 %v590
  %v1942 = vpack.c.b16 %v1431, %v1430
  %v1943 = vpack.c.b16 %v1433, %v1432
  %v1944 = vpack.c.b16 %v1435, %v1434
  %v1945 = vpack.c.b16 %v1437, %v1436
  %v1946 = vpack.c.b16 %v1439, %v1438
  %v1947 = vpack.c.b16 %v1441, %v1440
  %v1948 = vpack.c.b16 %v1443, %v1442
  %v1949 = vpack.c.b16 %v1445, %v1444
  %v1950 = vpack.c.b16 %v1447, %v1446
  %v1951 = vpack.c.b16 %v1449, %v1448
  %v1952 = vpack.c.b16 %v1451, %v1450
  %v1953 = vpack.c.b16 %v1453, %v1452
  %v1954 = vpack.c.b16 %v1455, %v1454
  %v1955 = vpack.c.b16 %v1457, %v1456
  %v1956 = vpack.c.b16 %v1459, %v1458
  %v1957 = vpack.c.b16 %v1461, %v1460
  %v1958 = vpack.c.b16 %v1463, %v1462
  %v1959 = vpack.c.b16 %v1465, %v1464
  %v1960 = vpack.c.b16 %v1467, %v1466
  %v1961 = vpack.c.b16 %v1469, %v1468
  %v1962 = vpack.c.b16 %v1471, %v1470
  %v1963 = vpack.c.b16 %v1473, %v1472
  %v1964 = vpack.c.b16 %v1475, %v1474
  %v1965 = vpack.c.b16 %v1477, %v1476
  %v1966 = vpack.c.b16 %v1479, %v1478
  %v1967 = vpack.c.b16 %v1481, %v1480
  %v1968 = vpack.c.b16 %v1483, %v1482
  %v1969 = vpack.c.b16 %v1485, %v1484
  %v1970 = vpack.c.b16 %v1487, %v1486
  %v1971 = vpack.c.b16 %v1489, %v1488
  %v1972 = vpack.c.b16 %v1491, %v1490
  %v1973 = vpack.c.b16 %v1493, %v1492
  %v1974 = vpack.c.b16 %v1495, %v1494
  %v1975 = vpack.c.b16 %v1497, %v1496
  %v1976 = vpack.c.b16 %v1499, %v1498
  %v1977 = vpack.c.b16 %v1501, %v1500
  %v1978 = vpack.c.b16 %v1503, %v1502
  %v1979 = vpack.c.b16 %v1505, %v1504
  %v1980 = vpack.c.b16 %v1507, %v1506
  %v1981 = vpack.c.b16 %v1509, %v1508
  %v1982 = vpack.c.b16 %v1511, %v1510
  %v1983 = vpack.c.b16 %v1513, %v1512
  %v1984 = vpack.c.b16 %v1515, %v1514
  %v1985 = vpack.c.b16 %v1517, %v1516
  %v1986 = vpack.c.b16 %v1519, %v1518
  %v1987 = vpack.c.b16 %v1521, %v1520
  %v1988 = vpack.c.b16 %v1523, %v1522
  %v1989 = vpack.c.b16 %v1525, %v1524
  %v1990 = vpack.c.b16 %v1527, %v1526
  %v1991 = vpack.c.b16 %v1529, %v1528
  %v1992 = vpack.c.b16 %v1531, %v1530
  %v1993 = vpack.c.b16 %v1533, %v1532
  %v1994 = vpack.c.b16 %v1535, %v1534
  %v1995 = vpack.c.b16 %v1537, %v1536
  %v1996 = vpack.c.b16 %v1539, %v1538
  %v1997 = vpack.c.b16 %v1541, %v1540
  %v1998 = vpack.c.b16 %v1543, %v1542
  %v1999 = vpack.c.b16 %v1545, %v1544
  %v2000 = vpack.c.b16 %v1547, %v1546
  %v2001 = vpack.c.b16 %v1549, %v1548
  %v2002 = vpack.c.b16 %v1551, %v1550
  %v2003 = vpack.c.b16 %v1553, %v1552
  %v2004 = vpack.c.b16 %v1555, %v1554
  %v2005 = vpack.c.b16 %v1557, %v1556
  %v2006 = vpack.c.b16 %v1559, %v1558
  %v2007 = vpack.c.b16 %v1561, %v1560
  %v2008 = vpack.c.b16 %v1563, %v1562
  %v2009 = vpack.c.b16 %v1565, %v1564
  %v2010 = vpack.c.b16 %v1567, %v1566
  %v2011 = vpack.c.b16 %v1569, %v1568
  %v2012 = vpack.c.b16 %v1571, %v1570
  %v2013 = vpack.c.b16 %v1573, %v1572
  %v2014 = vpack.c.b16 %v1575, %v1574
  %v2015 = vpack.c.b16 %v1577, %v1576
  %v2016 = vpack.c.b16 %v1579, %v1578
  %v2017 = vpack.c.b16 %v1581, %v1580
  %v2018 = vpack.c.b16 %v1583, %v1582
  %v2019 = vpack.c.b16 %v1585, %v1584
  %v2020 = vpack.c.b16 %v1587, %v1586
  %v2021 = vpack.c.b16 %v1589, %v1588
  %v2022 = vpack.c.b16 %v1591, %v1590
  %v2023 = vpack.c.b16 %v1593, %v1592
  %v2024 = vpack.c.b16 %v1595, %v1594
  %v2025 = vpack.c.b16 %v1597, %v1596
  %v2026 = vpack.c.b16 %v1599, %v1598
  %v2027 = vpack.c.b16 %v1601, %v1600
  %v2028 = vpack.c.b16 %v1603, %v1602
  %v2029 = vpack.c.b16 %v1605, %v1604
  %v2030 = vpack.c.b16 %v1607, %v1606
  %v2031 = vpack.c.b16 %v1609, %v1608
  %v2032 = vpack.c.b16 %v1611, %v1610
  %v2033 = vpack.c.b16 %v1613, %v1612
  %v2034 = vpack.c.b16 %v1615, %v1614
  %v2035 = vpack.c.b16 %v1617, %v1616
  %v2036 = vpack.c.b16 %v1619, %v1618
  %v2037 = vpack.c.b16 %v1621, %v1620
  %v2038 = vpack.c.b16 %v1623, %v1622
  %v2039 = vpack.c.b16 %v1625, %v1624
  %v2040 = vpack.c.b16 %v1627, %v1626
  %v2041 = vpack.c.b16 %v1629, %v1628
  %v2042 = vpack.c.b16 %v1631, %v1630
  %v2043 = vpack.c.b16 %v1633, %v1632
  %v2044 = vpack.c.b16 %v1635, %v1634
  %v2045 = vpack.c.b16 %v1637, %v1636
  %v2046 = vpack.c.b16 %v1639, %v1638
  %v2047 = vpack.c.b16 %v1641, %v1640
  %v2048 = vpack.c.b16 %v1643, %v1642
  %v2049 = vpack.c.b16 %v1645, %v1644
  %v2050 = vpack.c.b16 %v1647, %v1646
  %v2051 = vpack.c.b16 %v1649, %v1648
  %v2052 = vpack.c.b16 %v1651, %v1650
  %v2053 = vpack.c.b16 %v1653, %v1652
  %v2054 = vpack.c.b16 %v1655, %v1654
  %v2055 = vpack.c.b16 %v1657, %v1656
  %v2056 = vpack.c.b16 %v1659, %v1658
  %v2057 = vpack.c.b16 %v1661, %v1660
  %v2058 = vpack.c.b16 %v1663, %v1662
  %v2059 = vpack.c.b16 %v1665, %v1664
  %v2060 = vpack.c.b16 %v1667, %v1666
  %v2061 = vpack.c.b16 %v1669, %v1668
  %v2062 = vpack.c.b16 %v1671, %v1670
  %v2063 = vpack.c.b16 %v1673, %v1672
  %v2064 = vpack.c.b16 %v1675, %v1674
  %v2065 = vpack.c.b16 %v1677, %v1676
  %v2066 = vpack.c.b16 %v1679, %v1678
  %v2067 = vpack.c.b16 %v1681, %v1680
  %v2068 = vpack.c.b16 %v1683, %v1682
  %v2069 = vpack.c.b16 %v1685, %v1684
  %v2070 = vpack.c.b16 %v1687, %v1686
  %v2071 = vpack.c.b16 %v1689, %v1688
  %v2072 = vpack.c.b16 %v1691, %v1690
  %v2073 = vpack.c.b16 %v1693, %v1692
  %v2074 = vpack.c.b16 %v1695, %v1694
  %v2075 = vpack.c.b16 %v1697, %v1696
  %v2076 = vpack.c.b16 %v1699, %v1698
  %v2077 = vpack.c.b16 %v1701, %v1700
  %v2078 = vpack.c.b16 %v1703, %v1702
  %v2079 = vpack.c.b16 %v1705, %v1704
  %v2080 = vpack.c.b16 %v1707, %v1706
  %v2081 = vpack.c.b16 %v1709, %v1708
  %v2082 = vpack.c.b16 %v1711, %v1710
  %v2083 = vpack.c.b16 %v1713, %v1712
  %v2084 = vpack.c.b16 %v1715, %v1714
  %v2085 = vpack.c.b16 %v1717, %v1716
  %v2086 = vpack.c.b16 %v1719, %v1718
  %v2087 = vpack.c.b16 %v1721, %v1720
  %v2088 = vpack.c.b16 %v1723, %v1722
  %v2089 = vpack.c.b16 %v1725, %v1724
  %v2090 = vpack.c.b16 %v1727, %v1726
  %v2091 = vpack.c.b16 %v1729, %v1728
  %v2092 = vpack.c.b16 %v1731, %v1730
  %v2093 = vpack.c.b16 %v1733, %v1732
  %v2094 = vpack.c.b16 %v1735, %v1734
  %v2095 = vpack.c.b16 %v1737, %v1736
  %v2096 = vpack.c.b16 %v1739, %v1738
  %v2097 = vpack.c.b16 %v1741, %v1740
  %v2098 = vpack.c.b16 %v1743, %v1742
  %v2099 = vpack.c.b16 %v1745, %v1744
  %v2100 = vpack.c.b16 %v1747, %v1746
  %v2101 = vpack.c.b16 %v1749, %v1748
  %v2102 = vpack.c.b16 %v1751, %v1750
  %v2103 = vpack.c.b16 %v1753, %v1752
  %v2104 = vpack.c.b16 %v1755, %v1754
  %v2105 = vpack.c.b16 %v1757, %v1756
  %v2106 = vpack.c.b16 %v1759, %v1758
  %v2107 = vpack.c.b16 %v1761, %v1760
  %v2108 = vpack.c.b16 %v1763, %v1762
  %v2109 = vpack.c.b16 %v1765, %v1764
  %v2110 = vpack.c.b16 %v1767, %v1766
  %v2111 = vpack.c.b16 %v1769, %v1768
  %v2112 = vpack.c.b16 %v1771, %v1770
  %v2113 = vpack.c.b16 %v1773, %v1772
  %v2114 = vpack.c.b16 %v1775, %v1774
  %v2115 = vpack.c.b16 %v1777, %v1776
  %v2116 = vpack.c.b16 %v1779, %v1778
  %v2117 = vpack.c.b16 %v1781, %v1780
  %v2118 = vpack.c.b16 %v1783, %v1782
  %v2119 = vpack.c.b16 %v1785, %v1784
  %v2120 = vpack.c.b16 %v1787, %v1786
  %v2121 = vpack.c.b16 %v1789, %v1788
  %v2122 = vpack.c.b16 %v1791, %v1790
  %v2123 = vpack.c.b16 %v1793, %v1792
  %v2124 = vpack.c.b16 %v1795, %v1794
  %v2125 = vpack.c.b16 %v1797, %v1796
  %v2126 = vpack.c.b16 %v1799, %v1798
  %v2127 = vpack.c.b16 %v1801, %v1800
  %v2128 = vpack.c.b16 %v1803, %v1802
  %v2129 = vpack.c.b16 %v1805, %v1804
  %v2130 = vpack.c.b16 %v1807, %v1806
  %v2131 = vpack.c.b16 %v1809, %v1808
  %v2132 = vpack.c.b16 %v1811, %v1810
  %v2133 = vpack.c.b16 %v1813, %v1812
  %v2134 = vpack.c.b16 %v1815, %v1814
  %v2135 = vpack.c.b16 %v1817, %v1816
  %v2136 = vpack.c.b16 %v1819, %v1818
  %v2137 = vpack.c.b16 %v1821, %v1820
  %v2138 = vpack.c.b16 %v1823, %v1822
  %v2139 = vpack.c.b16 %v1825, %v1824
  %v2140 = vpack.c.b16 %v1827, %v1826
  %v2141 = vpack.c.b16 %v1829, %v1828
  %v2142 = vpack.c.b16 %v1831, %v1830
  %v2143 = vpack.c.b16 %v1833, %v1832
  %v2144 = vpack.c.b16 %v1835, %v1834
  %v2145 = vpack.c.b16 %v1837, %v1836
  %v2146 = vpack.c.b16 %v1839, %v1838
  %v2147 = vpack.c.b16 %v1841, %v1840
  %v2148 = vpack.c.b16 %v1843, %v1842
  %v2149 = vpack.c.b16 %v1845, %v1844
  %v2150 = vpack.c.b16 %v1847, %v1846
  %v2151 = vpack.c.b16 %v1849, %v1848
  %v2152 = vpack.c.b16 %v1851, %v1850
  %v2153 = vpack.c.b16 %v1853, %v1852
  %v2154 = vpack.c.b16 %v1855, %v1854
  %v2155 = vpack.c.b16 %v1857, %v1856
  %v2156 = vpack.c.b16 %v1859, %v1858
  %v2157 = vpack.c.b16 %v1861, %v1860
  %v2158 = vpack.c.b16 %v1863, %v1862
  %v2159 = vpack.c.b16 %v1865, %v1864
  %v2160 = vpack.c.b16 %v1867, %v1866
  %v2161 = vpack.c.b16 %v1869, %v1868
  %v2162 = vpack.c.b16 %v1871, %v1870
  %v2163 = vpack.c.b16 %v1873, %v1872
  %v2164 = vpack.c.b16 %v1875, %v1874
  %v2165 = vpack.c.b16 %v1877, %v1876
  %v2166 = vpack.c.b16 %v1879, %v1878
  %v2167 = vpack.c.b16 %v1881, %v1880
  %v2168 = vpack.c.b16 %v1883, %v1882
  %v2169 = vpack.c.b16 %v1885, %v1884
  %v2170 = vpack.c.b16 %v1887, %v1886
  %v2171 = vpack.c.b16 %v1889, %v1888
  %v2172 = vpack.c.b16 %v1891, %v1890
  %v2173 = vpack.c.b16 %v1893, %v1892
  %v2174 = vpack.c.b16 %v1895, %v1894
  %v2175 = vpack.c.b16 %v1897, %v1896
  %v2176 = vpack.c.b16 %v1899, %v1898
  %v2177 = vpack.c.b16 %v1901, %v1900
  %v2178 = vpack.c.b16 %v1903, %v1902
  %v2179 = vpack.c.b16 %v1905, %v1904
  %v2180 = vpack.c.b16 %v1907, %v1906
  %v2181 = vpack.c.b16 %v1909, %v1908
  %v2182 = vpack.c.b16 %v1911, %v1910
  %v2183 = vpack.c.b16 %v1913, %v1912
  %v2184 = vpack.c.b16 %v1915, %v1914
  %v2185 = vpack.c.b16 %v1917, %v1916
  %v2186 = vpack.c.b16 %v1919, %v1918
  %v2187 = vpack.c.b16 %v1921, %v1920
  %v2188 = vpack.c.b16 %v1923, %v1922
  %v2189 = vpack.c.b16 %v1925, %v1924
  %v2190 = vpack.c.b16 %v1927, %v1926
  %v2191 = vpack.c.b16 %v1929, %v1928
  %v2192 = vpack.c.b16 %v1931, %v1930
  %v2193 = vpack.c.b16 %v1933, %v1932
  %v2194 = vpack.c.b16 %v1935, %v1934
  %v2195 = vpack.c.b16 %v1937, %v1936
  %v2196 = vpack.c.b16 %v1939, %v1938
  %v2197 = vpack.c.b16 %v1941, %v1940
  %2454 = vmatprep.subr.bf16.mxu0 0
  %2455 = vmatpush1.bf16.msra.mxu0 %v1949
  %2456 = vmatprep.subr.bf16.mxu0 0
  %2457 = vmatpush1.bf16.msra.mxu0 %v1948
  %2458 = vmatprep.subr.bf16.mxu0 0
  %2459 = vmatpush1.bf16.msra.mxu0 %v1947
  %2460 = vmatprep.subr.bf16.mxu0 0
  %2461 = vmatpush1.bf16.msra.mxu0 %v1946
  %2462 = vmatprep.subr.bf16.mxu0 0
  %2463 = vmatpush1.bf16.msra.mxu0 %v1945
  %2464 = vmatprep.subr.bf16.mxu0 0
  %2465 = vmatpush1.bf16.msra.mxu0 %v1944
  %2466 = vmatprep.subr.bf16.mxu0 0
  %2467 = vmatpush1.bf16.msra.mxu0 %v1943
  %2468 = vmatprep.subr.bf16.mxu0 0
  %2469 = vmatpush1.bf16.msra.mxu0 %v1942
  %2470 = vmatprep.subr.bf16.mxu0 0
  %2471 = vmatpush2.bf16.msra.mxu0 %v1957
  %2472 = vmatprep.subr.bf16.mxu0 0
  %2473 = vmatpush2.bf16.msra.mxu0 %v1956
  %2474 = vmatprep.subr.bf16.mxu0 0
  %2475 = vmatpush2.bf16.msra.mxu0 %v1955
  %2476 = vmatprep.subr.bf16.mxu0 0
  %2477 = vmatpush2.bf16.msra.mxu0 %v1954
  %2478 = vmatprep.subr.bf16.mxu0 0
  %2479 = vmatpush2.bf16.msra.mxu0 %v1953
  %2480 = vmatprep.subr.bf16.mxu0 0
  %2481 = vmatpush2.bf16.msra.mxu0 %v1952
  %2482 = vmatprep.subr.bf16.mxu0 0
  %2483 = vmatpush2.bf16.msra.mxu0 %v1951
  %2484 = vmatprep.subr.bf16.mxu0 0
  %2485 = vmatpush2.bf16.msra.mxu0 %v1950
  %2486 = vmatprep.mubr.bf16.mxu0 %v791
  %2487 = vmatmul.mubr.bf16.gmra.mxu0 %v790
  %v2488 = vpop.f32.mrf.mxu0
  %v2489 = vadd.f32 %v596, %v2488
  %v2490 = vpop.f32.mrf.mxu0
  %v2491 = vpop.f32.mrf.mxu0
  %v2492 = vadd.f32 %v596, %v2491
  %v2493 = vpop.f32.mrf.mxu0
  %2494 = vmatprep.mubr.bf16.mxu0 %v823
  %2495 = vmatmul.mubr.bf16.gmra.mxu0 %v822
  %v2496 = vpop.f32.mrf.mxu0
  %v2497 = vadd.f32 %v596, %v2496
  %v2498 = vpop.f32.mrf.mxu0
  %v2499 = vpop.f32.mrf.mxu0
  %v2500 = vadd.f32 %v596, %v2499
  %v2501 = vpop.f32.mrf.mxu0
  %2502 = vdwg.mxu0
  %2503 = vmatprep.subr.bf16.mxu0 0
  %2504 = vmatpush1.bf16.msra.mxu0 %v1965
  %2505 = vmatprep.subr.bf16.mxu0 0
  %2506 = vmatpush1.bf16.msra.mxu0 %v1964
  %2507 = vmatprep.subr.bf16.mxu0 0
  %2508 = vmatpush1.bf16.msra.mxu0 %v1963
  %2509 = vmatprep.subr.bf16.mxu0 0
  %2510 = vmatpush1.bf16.msra.mxu0 %v1962
  %2511 = vmatprep.subr.bf16.mxu0 0
  %2512 = vmatpush1.bf16.msra.mxu0 %v1961
  %2513 = vmatprep.subr.bf16.mxu0 0
  %2514 = vmatpush1.bf16.msra.mxu0 %v1960
  %2515 = vmatprep.subr.bf16.mxu0 0
  %2516 = vmatpush1.bf16.msra.mxu0 %v1959
  %2517 = vmatprep.subr.bf16.mxu0 0
  %2518 = vmatpush1.bf16.msra.mxu0 %v1958
  %2519 = vmatprep.subr.bf16.mxu0 0
  %2520 = vmatpush2.bf16.msra.mxu0 %v1973
  %2521 = vmatprep.subr.bf16.mxu0 0
  %2522 = vmatpush2.bf16.msra.mxu0 %v1972
  %2523 = vmatprep.subr.bf16.mxu0 0
  %2524 = vmatpush2.bf16.msra.mxu0 %v1971
  %2525 = vmatprep.subr.bf16.mxu0 0
  %2526 = vmatpush2.bf16.msra.mxu0 %v1970
  %2527 = vmatprep.subr.bf16.mxu0 0
  %2528 = vmatpush2.bf16.msra.mxu0 %v1969
  %2529 = vmatprep.subr.bf16.mxu0 0
  %2530 = vmatpush2.bf16.msra.mxu0 %v1968
  %2531 = vmatprep.subr.bf16.mxu0 0
  %2532 = vmatpush2.bf16.msra.mxu0 %v1967
  %2533 = vmatprep.subr.bf16.mxu0 0
  %2534 = vmatpush2.bf16.msra.mxu0 %v1966
  %2535 = vmatprep.mubr.bf16.mxu0 %v793
  %2536 = vmatmul.mubr.bf16.gmra.mxu0 %v792
  %v2537 = vpop.f32.mrf.mxu0
  %v2538 = vadd.f32 %v2489, %v2537
  %v2539 = vpop.f32.mrf.mxu0
  %v2540 = vpop.f32.mrf.mxu0
  %v2541 = vadd.f32 %v2492, %v2540
  %v2542 = vpop.f32.mrf.mxu0
  %2543 = vmatprep.mubr.bf16.mxu0 %v825
  %2544 = vmatmul.mubr.bf16.gmra.mxu0 %v824
  %v2545 = vpop.f32.mrf.mxu0
  %v2546 = vadd.f32 %v2497, %v2545
  %v2547 = vpop.f32.mrf.mxu0
  %v2548 = vpop.f32.mrf.mxu0
  %v2549 = vadd.f32 %v2500, %v2548
  %v2550 = vpop.f32.mrf.mxu0
  %2551 = vdwg.mxu0
  %2552 = vmatprep.subr.bf16.mxu0 0
  %2553 = vmatpush1.bf16.msra.mxu0 %v1981
  %2554 = vmatprep.subr.bf16.mxu0 0
  %2555 = vmatpush1.bf16.msra.mxu0 %v1980
  %2556 = vmatprep.subr.bf16.mxu0 0
  %2557 = vmatpush1.bf16.msra.mxu0 %v1979
  %2558 = vmatprep.subr.bf16.mxu0 0
  %2559 = vmatpush1.bf16.msra.mxu0 %v1978
  %2560 = vmatprep.subr.bf16.mxu0 0
  %2561 = vmatpush1.bf16.msra.mxu0 %v1977
  %2562 = vmatprep.subr.bf16.mxu0 0
  %2563 = vmatpush1.bf16.msra.mxu0 %v1976
  %2564 = vmatprep.subr.bf16.mxu0 0
  %2565 = vmatpush1.bf16.msra.mxu0 %v1975
  %2566 = vmatprep.subr.bf16.mxu0 0
  %2567 = vmatpush1.bf16.msra.mxu0 %v1974
  %2568 = vmatprep.subr.bf16.mxu0 0
  %2569 = vmatpush2.bf16.msra.mxu0 %v1989
  %2570 = vmatprep.subr.bf16.mxu0 0
  %2571 = vmatpush2.bf16.msra.mxu0 %v1988
  %2572 = vmatprep.subr.bf16.mxu0 0
  %2573 = vmatpush2.bf16.msra.mxu0 %v1987
  %2574 = vmatprep.subr.bf16.mxu0 0
  %2575 = vmatpush2.bf16.msra.mxu0 %v1986
  %2576 = vmatprep.subr.bf16.mxu0 0
  %2577 = vmatpush2.bf16.msra.mxu0 %v1985
  %2578 = vmatprep.subr.bf16.mxu0 0
  %2579 = vmatpush2.bf16.msra.mxu0 %v1984
  %2580 = vmatprep.subr.bf16.mxu0 0
  %2581 = vmatpush2.bf16.msra.mxu0 %v1983
  %2582 = vmatprep.subr.bf16.mxu0 0
  %2583 = vmatpush2.bf16.msra.mxu0 %v1982
  %2584 = vmatprep.mubr.bf16.mxu0 %v795
  %2585 = vmatmul.mubr.bf16.gmra.mxu0 %v794
  %v2586 = vpop.f32.mrf.mxu0
  %v2587 = vadd.f32 %v2538, %v2586
  %v2588 = vpop.f32.mrf.mxu0
  %v2589 = vpop.f32.mrf.mxu0
  %v2590 = vadd.f32 %v2541, %v2589
  %v2591 = vpop.f32.mrf.mxu0
  %2592 = vmatprep.mubr.bf16.mxu0 %v827
  %2593 = vmatmul.mubr.bf16.gmra.mxu0 %v826
  %v2594 = vpop.f32.mrf.mxu0
  %v2595 = vadd.f32 %v2546, %v2594
  %v2596 = vpop.f32.mrf.mxu0
  %v2597 = vpop.f32.mrf.mxu0
  %v2598 = vadd.f32 %v2549, %v2597
  %v2599 = vpop.f32.mrf.mxu0
  %2600 = vdwg.mxu0
  %2601 = vmatprep.subr.bf16.mxu0 0
  %2602 = vmatpush1.bf16.msra.mxu0 %v1997
  %2603 = vmatprep.subr.bf16.mxu0 0
  %2604 = vmatpush1.bf16.msra.mxu0 %v1996
  %2605 = vmatprep.subr.bf16.mxu0 0
  %2606 = vmatpush1.bf16.msra.mxu0 %v1995
  %2607 = vmatprep.subr.bf16.mxu0 0
  %2608 = vmatpush1.bf16.msra.mxu0 %v1994
  %2609 = vmatprep.subr.bf16.mxu0 0
  %2610 = vmatpush1.bf16.msra.mxu0 %v1993
  %2611 = vmatprep.subr.bf16.mxu0 0
  %2612 = vmatpush1.bf16.msra.mxu0 %v1992
  %2613 = vmatprep.subr.bf16.mxu0 0
  %2614 = vmatpush1.bf16.msra.mxu0 %v1991
  %2615 = vmatprep.subr.bf16.mxu0 0
  %2616 = vmatpush1.bf16.msra.mxu0 %v1990
  %2617 = vmatprep.subr.bf16.mxu0 0
  %2618 = vmatpush2.bf16.msra.mxu0 %v2005
  %2619 = vmatprep.subr.bf16.mxu0 0
  %2620 = vmatpush2.bf16.msra.mxu0 %v2004
  %2621 = vmatprep.subr.bf16.mxu0 0
  %2622 = vmatpush2.bf16.msra.mxu0 %v2003
  %2623 = vmatprep.subr.bf16.mxu0 0
  %2624 = vmatpush2.bf16.msra.mxu0 %v2002
  %2625 = vmatprep.subr.bf16.mxu0 0
  %2626 = vmatpush2.bf16.msra.mxu0 %v2001
  %2627 = vmatprep.subr.bf16.mxu0 0
  %2628 = vmatpush2.bf16.msra.mxu0 %v2000
  %2629 = vmatprep.subr.bf16.mxu0 0
  %2630 = vmatpush2.bf16.msra.mxu0 %v1999
  %2631 = vmatprep.subr.bf16.mxu0 0
  %2632 = vmatpush2.bf16.msra.mxu0 %v1998
  %2633 = vmatprep.mubr.bf16.mxu0 %v797
  %2634 = vmatmul.mubr.bf16.gmra.mxu0 %v796
  %v2635 = vpop.f32.mrf.mxu0
  %v2636 = vadd.f32 %v2587, %v2635
  %v2637 = vpop.f32.mrf.mxu0
  %v2638 = vpop.f32.mrf.mxu0
  %v2639 = vadd.f32 %v2590, %v2638
  %v2640 = vpop.f32.mrf.mxu0
  %2641 = vmatprep.mubr.bf16.mxu0 %v829
  %2642 = vmatmul.mubr.bf16.gmra.mxu0 %v828
  %v2643 = vpop.f32.mrf.mxu0
  %v2644 = vadd.f32 %v2595, %v2643
  %v2645 = vpop.f32.mrf.mxu0
  %v2646 = vpop.f32.mrf.mxu0
  %v2647 = vadd.f32 %v2598, %v2646
  %v2648 = vpop.f32.mrf.mxu0
  %2649 = vdwg.mxu0
  %2650 = vmatprep.subr.bf16.mxu0 0
  %2651 = vmatpush1.bf16.msra.mxu0 %v2013
  %2652 = vmatprep.subr.bf16.mxu0 0
  %2653 = vmatpush1.bf16.msra.mxu0 %v2012
  %2654 = vmatprep.subr.bf16.mxu0 0
  %2655 = vmatpush1.bf16.msra.mxu0 %v2011
  %2656 = vmatprep.subr.bf16.mxu0 0
  %2657 = vmatpush1.bf16.msra.mxu0 %v2010
  %2658 = vmatprep.subr.bf16.mxu0 0
  %2659 = vmatpush1.bf16.msra.mxu0 %v2009
  %2660 = vmatprep.subr.bf16.mxu0 0
  %2661 = vmatpush1.bf16.msra.mxu0 %v2008
  %2662 = vmatprep.subr.bf16.mxu0 0
  %2663 = vmatpush1.bf16.msra.mxu0 %v2007
  %2664 = vmatprep.subr.bf16.mxu0 0
  %2665 = vmatpush1.bf16.msra.mxu0 %v2006
  %2666 = vmatprep.subr.bf16.mxu0 0
  %2667 = vmatpush2.bf16.msra.mxu0 %v2021
  %2668 = vmatprep.subr.bf16.mxu0 0
  %2669 = vmatpush2.bf16.msra.mxu0 %v2020
  %2670 = vmatprep.subr.bf16.mxu0 0
  %2671 = vmatpush2.bf16.msra.mxu0 %v2019
  %2672 = vmatprep.subr.bf16.mxu0 0
  %2673 = vmatpush2.bf16.msra.mxu0 %v2018
  %2674 = vmatprep.subr.bf16.mxu0 0
  %2675 = vmatpush2.bf16.msra.mxu0 %v2017
  %2676 = vmatprep.subr.bf16.mxu0 0
  %2677 = vmatpush2.bf16.msra.mxu0 %v2016
  %2678 = vmatprep.subr.bf16.mxu0 0
  %2679 = vmatpush2.bf16.msra.mxu0 %v2015
  %2680 = vmatprep.subr.bf16.mxu0 0
  %2681 = vmatpush2.bf16.msra.mxu0 %v2014
  %2682 = vmatprep.mubr.bf16.mxu0 %v799
  %2683 = vmatmul.mubr.bf16.gmra.mxu0 %v798
  %v2684 = vpop.f32.mrf.mxu0
  %v2685 = vadd.f32 %v2636, %v2684
  %v2686 = vpop.f32.mrf.mxu0
  %v2687 = vpop.f32.mrf.mxu0
  %v2688 = vadd.f32 %v2639, %v2687
  %v2689 = vpop.f32.mrf.mxu0
  %2690 = vmatprep.mubr.bf16.mxu0 %v831
  %2691 = vmatmul.mubr.bf16.gmra.mxu0 %v830
  %v2692 = vpop.f32.mrf.mxu0
  %v2693 = vadd.f32 %v2644, %v2692
  %v2694 = vpop.f32.mrf.mxu0
  %v2695 = vpop.f32.mrf.mxu0
  %v2696 = vadd.f32 %v2647, %v2695
  %v2697 = vpop.f32.mrf.mxu0
  %2698 = vdwg.mxu0
  %2699 = vmatprep.subr.bf16.mxu0 0
  %2700 = vmatpush1.bf16.msra.mxu0 %v2029
  %2701 = vmatprep.subr.bf16.mxu0 0
  %2702 = vmatpush1.bf16.msra.mxu0 %v2028
  %2703 = vmatprep.subr.bf16.mxu0 0
  %2704 = vmatpush1.bf16.msra.mxu0 %v2027
  %2705 = vmatprep.subr.bf16.mxu0 0
  %2706 = vmatpush1.bf16.msra.mxu0 %v2026
  %2707 = vmatprep.subr.bf16.mxu0 0
  %2708 = vmatpush1.bf16.msra.mxu0 %v2025
  %2709 = vmatprep.subr.bf16.mxu0 0
  %2710 = vmatpush1.bf16.msra.mxu0 %v2024
  %2711 = vmatprep.subr.bf16.mxu0 0
  %2712 = vmatpush1.bf16.msra.mxu0 %v2023
  %2713 = vmatprep.subr.bf16.mxu0 0
  %2714 = vmatpush1.bf16.msra.mxu0 %v2022
  %2715 = vmatprep.subr.bf16.mxu0 0
  %2716 = vmatpush2.bf16.msra.mxu0 %v2037
  %2717 = vmatprep.subr.bf16.mxu0 0
  %2718 = vmatpush2.bf16.msra.mxu0 %v2036
  %2719 = vmatprep.subr.bf16.mxu0 0
  %2720 = vmatpush2.bf16.msra.mxu0 %v2035
  %2721 = vmatprep.subr.bf16.mxu0 0
  %2722 = vmatpush2.bf16.msra.mxu0 %v2034
  %2723 = vmatprep.subr.bf16.mxu0 0
  %2724 = vmatpush2.bf16.msra.mxu0 %v2033
  %2725 = vmatprep.subr.bf16.mxu0 0
  %2726 = vmatpush2.bf16.msra.mxu0 %v2032
  %2727 = vmatprep.subr.bf16.mxu0 0
  %2728 = vmatpush2.bf16.msra.mxu0 %v2031
  %2729 = vmatprep.subr.bf16.mxu0 0
  %2730 = vmatpush2.bf16.msra.mxu0 %v2030
  %2731 = vmatprep.mubr.bf16.mxu0 %v801
  %2732 = vmatmul.mubr.bf16.gmra.mxu0 %v800
  %v2733 = vpop.f32.mrf.mxu0
  %v2734 = vadd.f32 %v2685, %v2733
  %v2735 = vpop.f32.mrf.mxu0
  %v2736 = vpop.f32.mrf.mxu0
  %v2737 = vadd.f32 %v2688, %v2736
  %v2738 = vpop.f32.mrf.mxu0
  %2739 = vmatprep.mubr.bf16.mxu0 %v833
  %2740 = vmatmul.mubr.bf16.gmra.mxu0 %v832
  %v2741 = vpop.f32.mrf.mxu0
  %v2742 = vadd.f32 %v2693, %v2741
  %v2743 = vpop.f32.mrf.mxu0
  %v2744 = vpop.f32.mrf.mxu0
  %v2745 = vadd.f32 %v2696, %v2744
  %v2746 = vpop.f32.mrf.mxu0
  %2747 = vdwg.mxu0
  %2748 = vmatprep.subr.bf16.mxu0 0
  %2749 = vmatpush1.bf16.msra.mxu0 %v2045
  %2750 = vmatprep.subr.bf16.mxu0 0
  %2751 = vmatpush1.bf16.msra.mxu0 %v2044
  %2752 = vmatprep.subr.bf16.mxu0 0
  %2753 = vmatpush1.bf16.msra.mxu0 %v2043
  %2754 = vmatprep.subr.bf16.mxu0 0
  %2755 = vmatpush1.bf16.msra.mxu0 %v2042
  %2756 = vmatprep.subr.bf16.mxu0 0
  %2757 = vmatpush1.bf16.msra.mxu0 %v2041
  %2758 = vmatprep.subr.bf16.mxu0 0
  %2759 = vmatpush1.bf16.msra.mxu0 %v2040
  %2760 = vmatprep.subr.bf16.mxu0 0
  %2761 = vmatpush1.bf16.msra.mxu0 %v2039
  %2762 = vmatprep.subr.bf16.mxu0 0
  %2763 = vmatpush1.bf16.msra.mxu0 %v2038
  %2764 = vmatprep.subr.bf16.mxu0 0
  %2765 = vmatpush2.bf16.msra.mxu0 %v2053
  %2766 = vmatprep.subr.bf16.mxu0 0
  %2767 = vmatpush2.bf16.msra.mxu0 %v2052
  %2768 = vmatprep.subr.bf16.mxu0 0
  %2769 = vmatpush2.bf16.msra.mxu0 %v2051
  %2770 = vmatprep.subr.bf16.mxu0 0
  %2771 = vmatpush2.bf16.msra.mxu0 %v2050
  %2772 = vmatprep.subr.bf16.mxu0 0
  %2773 = vmatpush2.bf16.msra.mxu0 %v2049
  %2774 = vmatprep.subr.bf16.mxu0 0
  %2775 = vmatpush2.bf16.msra.mxu0 %v2048
  %2776 = vmatprep.subr.bf16.mxu0 0
  %2777 = vmatpush2.bf16.msra.mxu0 %v2047
  %2778 = vmatprep.subr.bf16.mxu0 0
  %2779 = vmatpush2.bf16.msra.mxu0 %v2046
  %2780 = vmatprep.mubr.bf16.mxu0 %v803
  %2781 = vmatmul.mubr.bf16.gmra.mxu0 %v802
  %v2782 = vpop.f32.mrf.mxu0
  %v2783 = vadd.f32 %v2734, %v2782
  %v2784 = vpop.f32.mrf.mxu0
  %v2785 = vpop.f32.mrf.mxu0
  %v2786 = vadd.f32 %v2737, %v2785
  %v2787 = vpop.f32.mrf.mxu0
  %2788 = vmatprep.mubr.bf16.mxu0 %v835
  %2789 = vmatmul.mubr.bf16.gmra.mxu0 %v834
  %v2790 = vpop.f32.mrf.mxu0
  %v2791 = vadd.f32 %v2742, %v2790
  %v2792 = vpop.f32.mrf.mxu0
  %v2793 = vpop.f32.mrf.mxu0
  %v2794 = vadd.f32 %v2745, %v2793
  %v2795 = vpop.f32.mrf.mxu0
  %2796 = vdwg.mxu0
  %2797 = vmatprep.subr.bf16.mxu0 0
  %2798 = vmatpush1.bf16.msra.mxu0 %v2061
  %2799 = vmatprep.subr.bf16.mxu0 0
  %2800 = vmatpush1.bf16.msra.mxu0 %v2060
  %2801 = vmatprep.subr.bf16.mxu0 0
  %2802 = vmatpush1.bf16.msra.mxu0 %v2059
  %2803 = vmatprep.subr.bf16.mxu0 0
  %2804 = vmatpush1.bf16.msra.mxu0 %v2058
  %2805 = vmatprep.subr.bf16.mxu0 0
  %2806 = vmatpush1.bf16.msra.mxu0 %v2057
  %2807 = vmatprep.subr.bf16.mxu0 0
  %2808 = vmatpush1.bf16.msra.mxu0 %v2056
  %2809 = vmatprep.subr.bf16.mxu0 0
  %2810 = vmatpush1.bf16.msra.mxu0 %v2055
  %2811 = vmatprep.subr.bf16.mxu0 0
  %2812 = vmatpush1.bf16.msra.mxu0 %v2054
  %2813 = vmatprep.subr.bf16.mxu0 0
  %2814 = vmatpush2.bf16.msra.mxu0 %v2069
  %2815 = vmatprep.subr.bf16.mxu0 0
  %2816 = vmatpush2.bf16.msra.mxu0 %v2068
  %2817 = vmatprep.subr.bf16.mxu0 0
  %2818 = vmatpush2.bf16.msra.mxu0 %v2067
  %2819 = vmatprep.subr.bf16.mxu0 0
  %2820 = vmatpush2.bf16.msra.mxu0 %v2066
  %2821 = vmatprep.subr.bf16.mxu0 0
  %2822 = vmatpush2.bf16.msra.mxu0 %v2065
  %2823 = vmatprep.subr.bf16.mxu0 0
  %2824 = vmatpush2.bf16.msra.mxu0 %v2064
  %2825 = vmatprep.subr.bf16.mxu0 0
  %2826 = vmatpush2.bf16.msra.mxu0 %v2063
  %2827 = vmatprep.subr.bf16.mxu0 0
  %2828 = vmatpush2.bf16.msra.mxu0 %v2062
  %2829 = vmatprep.mubr.bf16.mxu0 %v805
  %2830 = vmatmul.mubr.bf16.gmra.mxu0 %v804
  %v2831 = vpop.f32.mrf.mxu0
  %v2832 = vadd.f32 %v2783, %v2831
  %v2833 = vpop.f32.mrf.mxu0
  %v2834 = vpop.f32.mrf.mxu0
  %v2835 = vadd.f32 %v2786, %v2834
  %v2836 = vpop.f32.mrf.mxu0
  %2837 = vmatprep.mubr.bf16.mxu0 %v837
  %2838 = vmatmul.mubr.bf16.gmra.mxu0 %v836
  %v2839 = vpop.f32.mrf.mxu0
  %v2840 = vadd.f32 %v2791, %v2839
  %v2841 = vpop.f32.mrf.mxu0
  %v2842 = vpop.f32.mrf.mxu0
  %v2843 = vadd.f32 %v2794, %v2842
  %v2844 = vpop.f32.mrf.mxu0
  %2845 = vdwg.mxu0
  %2846 = vmatprep.subr.bf16.mxu0 0
  %2847 = vmatpush1.bf16.msra.mxu0 %v2077
  %2848 = vmatprep.subr.bf16.mxu0 0
  %2849 = vmatpush1.bf16.msra.mxu0 %v2076
  %2850 = vmatprep.subr.bf16.mxu0 0
  %2851 = vmatpush1.bf16.msra.mxu0 %v2075
  %2852 = vmatprep.subr.bf16.mxu0 0
  %2853 = vmatpush1.bf16.msra.mxu0 %v2074
  %2854 = vmatprep.subr.bf16.mxu0 0
  %2855 = vmatpush1.bf16.msra.mxu0 %v2073
  %2856 = vmatprep.subr.bf16.mxu0 0
  %2857 = vmatpush1.bf16.msra.mxu0 %v2072
  %2858 = vmatprep.subr.bf16.mxu0 0
  %2859 = vmatpush1.bf16.msra.mxu0 %v2071
  %2860 = vmatprep.subr.bf16.mxu0 0
  %2861 = vmatpush1.bf16.msra.mxu0 %v2070
  %2862 = vmatprep.subr.bf16.mxu0 0
  %2863 = vmatpush2.bf16.msra.mxu0 %v2085
  %2864 = vmatprep.subr.bf16.mxu0 0
  %2865 = vmatpush2.bf16.msra.mxu0 %v2084
  %2866 = vmatprep.subr.bf16.mxu0 0
  %2867 = vmatpush2.bf16.msra.mxu0 %v2083
  %2868 = vmatprep.subr.bf16.mxu0 0
  %2869 = vmatpush2.bf16.msra.mxu0 %v2082
  %2870 = vmatprep.subr.bf16.mxu0 0
  %2871 = vmatpush2.bf16.msra.mxu0 %v2081
  %2872 = vmatprep.subr.bf16.mxu0 0
  %2873 = vmatpush2.bf16.msra.mxu0 %v2080
  %2874 = vmatprep.subr.bf16.mxu0 0
  %2875 = vmatpush2.bf16.msra.mxu0 %v2079
  %2876 = vmatprep.subr.bf16.mxu0 0
  %2877 = vmatpush2.bf16.msra.mxu0 %v2078
  %2878 = vmatprep.mubr.bf16.mxu0 %v807
  %2879 = vmatmul.mubr.bf16.gmra.mxu0 %v806
  %v2880 = vpop.f32.mrf.mxu0
  %v2881 = vadd.f32 %v2832, %v2880
  %v2882 = vpop.f32.mrf.mxu0
  %v2883 = vpop.f32.mrf.mxu0
  %v2884 = vadd.f32 %v2835, %v2883
  %v2885 = vpop.f32.mrf.mxu0
  %2886 = vmatprep.mubr.bf16.mxu0 %v839
  %2887 = vmatmul.mubr.bf16.gmra.mxu0 %v838
  %v2888 = vpop.f32.mrf.mxu0
  %v2889 = vadd.f32 %v2840, %v2888
  %v2890 = vpop.f32.mrf.mxu0
  %v2891 = vpop.f32.mrf.mxu0
  %v2892 = vadd.f32 %v2843, %v2891
  %v2893 = vpop.f32.mrf.mxu0
  %2894 = vdwg.mxu0
  %2895 = vmatprep.subr.bf16.mxu0 0
  %2896 = vmatpush1.bf16.msra.mxu0 %v2093
  %2897 = vmatprep.subr.bf16.mxu0 0
  %2898 = vmatpush1.bf16.msra.mxu0 %v2092
  %2899 = vmatprep.subr.bf16.mxu0 0
  %2900 = vmatpush1.bf16.msra.mxu0 %v2091
  %2901 = vmatprep.subr.bf16.mxu0 0
  %2902 = vmatpush1.bf16.msra.mxu0 %v2090
  %2903 = vmatprep.subr.bf16.mxu0 0
  %2904 = vmatpush1.bf16.msra.mxu0 %v2089
  %2905 = vmatprep.subr.bf16.mxu0 0
  %2906 = vmatpush1.bf16.msra.mxu0 %v2088
  %2907 = vmatprep.subr.bf16.mxu0 0
  %2908 = vmatpush1.bf16.msra.mxu0 %v2087
  %2909 = vmatprep.subr.bf16.mxu0 0
  %2910 = vmatpush1.bf16.msra.mxu0 %v2086
  %2911 = vmatprep.subr.bf16.mxu0 0
  %2912 = vmatpush2.bf16.msra.mxu0 %v2101
  %2913 = vmatprep.subr.bf16.mxu0 0
  %2914 = vmatpush2.bf16.msra.mxu0 %v2100
  %2915 = vmatprep.subr.bf16.mxu0 0
  %2916 = vmatpush2.bf16.msra.mxu0 %v2099
  %2917 = vmatprep.subr.bf16.mxu0 0
  %2918 = vmatpush2.bf16.msra.mxu0 %v2098
  %2919 = vmatprep.subr.bf16.mxu0 0
  %2920 = vmatpush2.bf16.msra.mxu0 %v2097
  %2921 = vmatprep.subr.bf16.mxu0 0
  %2922 = vmatpush2.bf16.msra.mxu0 %v2096
  %2923 = vmatprep.subr.bf16.mxu0 0
  %2924 = vmatpush2.bf16.msra.mxu0 %v2095
  %2925 = vmatprep.subr.bf16.mxu0 0
  %2926 = vmatpush2.bf16.msra.mxu0 %v2094
  %2927 = vmatprep.mubr.bf16.mxu0 %v809
  %2928 = vmatmul.mubr.bf16.gmra.mxu0 %v808
  %v2929 = vpop.f32.mrf.mxu0
  %v2930 = vadd.f32 %v2881, %v2929
  %v2931 = vpop.f32.mrf.mxu0
  %v2932 = vpop.f32.mrf.mxu0
  %v2933 = vadd.f32 %v2884, %v2932
  %v2934 = vpop.f32.mrf.mxu0
  %2935 = vmatprep.mubr.bf16.mxu0 %v841
  %2936 = vmatmul.mubr.bf16.gmra.mxu0 %v840
  %v2937 = vpop.f32.mrf.mxu0
  %v2938 = vadd.f32 %v2889, %v2937
  %v2939 = vpop.f32.mrf.mxu0
  %v2940 = vpop.f32.mrf.mxu0
  %v2941 = vadd.f32 %v2892, %v2940
  %v2942 = vpop.f32.mrf.mxu0
  %2943 = vdwg.mxu0
  %2944 = vmatprep.subr.bf16.mxu0 0
  %2945 = vmatpush1.bf16.msra.mxu0 %v2109
  %2946 = vmatprep.subr.bf16.mxu0 0
  %2947 = vmatpush1.bf16.msra.mxu0 %v2108
  %2948 = vmatprep.subr.bf16.mxu0 0
  %2949 = vmatpush1.bf16.msra.mxu0 %v2107
  %2950 = vmatprep.subr.bf16.mxu0 0
  %2951 = vmatpush1.bf16.msra.mxu0 %v2106
  %2952 = vmatprep.subr.bf16.mxu0 0
  %2953 = vmatpush1.bf16.msra.mxu0 %v2105
  %2954 = vmatprep.subr.bf16.mxu0 0
  %2955 = vmatpush1.bf16.msra.mxu0 %v2104
  %2956 = vmatprep.subr.bf16.mxu0 0
  %2957 = vmatpush1.bf16.msra.mxu0 %v2103
  %2958 = vmatprep.subr.bf16.mxu0 0
  %2959 = vmatpush1.bf16.msra.mxu0 %v2102
  %2960 = vmatprep.subr.bf16.mxu0 0
  %2961 = vmatpush2.bf16.msra.mxu0 %v2117
  %2962 = vmatprep.subr.bf16.mxu0 0
  %2963 = vmatpush2.bf16.msra.mxu0 %v2116
  %2964 = vmatprep.subr.bf16.mxu0 0
  %2965 = vmatpush2.bf16.msra.mxu0 %v2115
  %2966 = vmatprep.subr.bf16.mxu0 0
  %2967 = vmatpush2.bf16.msra.mxu0 %v2114
  %2968 = vmatprep.subr.bf16.mxu0 0
  %2969 = vmatpush2.bf16.msra.mxu0 %v2113
  %2970 = vmatprep.subr.bf16.mxu0 0
  %2971 = vmatpush2.bf16.msra.mxu0 %v2112
  %2972 = vmatprep.subr.bf16.mxu0 0
  %2973 = vmatpush2.bf16.msra.mxu0 %v2111
  %2974 = vmatprep.subr.bf16.mxu0 0
  %2975 = vmatpush2.bf16.msra.mxu0 %v2110
  %2976 = vmatprep.mubr.bf16.mxu0 %v811
  %2977 = vmatmul.mubr.bf16.gmra.mxu0 %v810
  %v2978 = vpop.f32.mrf.mxu0
  %v2979 = vadd.f32 %v2930, %v2978
  %v2980 = vpop.f32.mrf.mxu0
  %v2981 = vpop.f32.mrf.mxu0
  %v2982 = vadd.f32 %v2933, %v2981
  %v2983 = vpop.f32.mrf.mxu0
  %2984 = vmatprep.mubr.bf16.mxu0 %v843
  %2985 = vmatmul.mubr.bf16.gmra.mxu0 %v842
  %v2986 = vpop.f32.mrf.mxu0
  %v2987 = vadd.f32 %v2938, %v2986
  %v2988 = vpop.f32.mrf.mxu0
  %v2989 = vpop.f32.mrf.mxu0
  %v2990 = vadd.f32 %v2941, %v2989
  %v2991 = vpop.f32.mrf.mxu0
  %2992 = vdwg.mxu0
  %2993 = vmatprep.subr.bf16.mxu0 0
  %2994 = vmatpush1.bf16.msra.mxu0 %v2125
  %2995 = vmatprep.subr.bf16.mxu0 0
  %2996 = vmatpush1.bf16.msra.mxu0 %v2124
  %2997 = vmatprep.subr.bf16.mxu0 0
  %2998 = vmatpush1.bf16.msra.mxu0 %v2123
  %2999 = vmatprep.subr.bf16.mxu0 0
  %3000 = vmatpush1.bf16.msra.mxu0 %v2122
  %3001 = vmatprep.subr.bf16.mxu0 0
  %3002 = vmatpush1.bf16.msra.mxu0 %v2121
  %3003 = vmatprep.subr.bf16.mxu0 0
  %3004 = vmatpush1.bf16.msra.mxu0 %v2120
  %3005 = vmatprep.subr.bf16.mxu0 0
  %3006 = vmatpush1.bf16.msra.mxu0 %v2119
  %3007 = vmatprep.subr.bf16.mxu0 0
  %3008 = vmatpush1.bf16.msra.mxu0 %v2118
  %3009 = vmatprep.subr.bf16.mxu0 0
  %3010 = vmatpush2.bf16.msra.mxu0 %v2133
  %3011 = vmatprep.subr.bf16.mxu0 0
  %3012 = vmatpush2.bf16.msra.mxu0 %v2132
  %3013 = vmatprep.subr.bf16.mxu0 0
  %3014 = vmatpush2.bf16.msra.mxu0 %v2131
  %3015 = vmatprep.subr.bf16.mxu0 0
  %3016 = vmatpush2.bf16.msra.mxu0 %v2130
  %3017 = vmatprep.subr.bf16.mxu0 0
  %3018 = vmatpush2.bf16.msra.mxu0 %v2129
  %3019 = vmatprep.subr.bf16.mxu0 0
  %3020 = vmatpush2.bf16.msra.mxu0 %v2128
  %3021 = vmatprep.subr.bf16.mxu0 0
  %3022 = vmatpush2.bf16.msra.mxu0 %v2127
  %3023 = vmatprep.subr.bf16.mxu0 0
  %3024 = vmatpush2.bf16.msra.mxu0 %v2126
  %3025 = vmatprep.mubr.bf16.mxu0 %v813
  %3026 = vmatmul.mubr.bf16.gmra.mxu0 %v812
  %v3027 = vpop.f32.mrf.mxu0
  %v3028 = vadd.f32 %v2979, %v3027
  %v3029 = vpop.f32.mrf.mxu0
  %v3030 = vpop.f32.mrf.mxu0
  %v3031 = vadd.f32 %v2982, %v3030
  %v3032 = vpop.f32.mrf.mxu0
  %3033 = vmatprep.mubr.bf16.mxu0 %v845
  %3034 = vmatmul.mubr.bf16.gmra.mxu0 %v844
  %v3035 = vpop.f32.mrf.mxu0
  %v3036 = vadd.f32 %v2987, %v3035
  %v3037 = vpop.f32.mrf.mxu0
  %v3038 = vpop.f32.mrf.mxu0
  %v3039 = vadd.f32 %v2990, %v3038
  %v3040 = vpop.f32.mrf.mxu0
  %3041 = vdwg.mxu0
  %3042 = vmatprep.subr.bf16.mxu0 0
  %3043 = vmatpush1.bf16.msra.mxu0 %v2141
  %3044 = vmatprep.subr.bf16.mxu0 0
  %3045 = vmatpush1.bf16.msra.mxu0 %v2140
  %3046 = vmatprep.subr.bf16.mxu0 0
  %3047 = vmatpush1.bf16.msra.mxu0 %v2139
  %3048 = vmatprep.subr.bf16.mxu0 0
  %3049 = vmatpush1.bf16.msra.mxu0 %v2138
  %3050 = vmatprep.subr.bf16.mxu0 0
  %3051 = vmatpush1.bf16.msra.mxu0 %v2137
  %3052 = vmatprep.subr.bf16.mxu0 0
  %3053 = vmatpush1.bf16.msra.mxu0 %v2136
  %3054 = vmatprep.subr.bf16.mxu0 0
  %3055 = vmatpush1.bf16.msra.mxu0 %v2135
  %3056 = vmatprep.subr.bf16.mxu0 0
  %3057 = vmatpush1.bf16.msra.mxu0 %v2134
  %3058 = vmatprep.subr.bf16.mxu0 0
  %3059 = vmatpush2.bf16.msra.mxu0 %v2149
  %3060 = vmatprep.subr.bf16.mxu0 0
  %3061 = vmatpush2.bf16.msra.mxu0 %v2148
  %3062 = vmatprep.subr.bf16.mxu0 0
  %3063 = vmatpush2.bf16.msra.mxu0 %v2147
  %3064 = vmatprep.subr.bf16.mxu0 0
  %3065 = vmatpush2.bf16.msra.mxu0 %v2146
  %3066 = vmatprep.subr.bf16.mxu0 0
  %3067 = vmatpush2.bf16.msra.mxu0 %v2145
  %3068 = vmatprep.subr.bf16.mxu0 0
  %3069 = vmatpush2.bf16.msra.mxu0 %v2144
  %3070 = vmatprep.subr.bf16.mxu0 0
  %3071 = vmatpush2.bf16.msra.mxu0 %v2143
  %3072 = vmatprep.subr.bf16.mxu0 0
  %3073 = vmatpush2.bf16.msra.mxu0 %v2142
  %3074 = vmatprep.mubr.bf16.mxu0 %v815
  %3075 = vmatmul.mubr.bf16.gmra.mxu0 %v814
  %v3076 = vpop.f32.mrf.mxu0
  %v3077 = vadd.f32 %v3028, %v3076
  %v3078 = vpop.f32.mrf.mxu0
  %v3079 = vpop.f32.mrf.mxu0
  %v3080 = vadd.f32 %v3031, %v3079
  %v3081 = vpop.f32.mrf.mxu0
  %3082 = vmatprep.mubr.bf16.mxu0 %v847
  %3083 = vmatmul.mubr.bf16.gmra.mxu0 %v846
  %v3084 = vpop.f32.mrf.mxu0
  %v3085 = vadd.f32 %v3036, %v3084
  %v3086 = vpop.f32.mrf.mxu0
  %v3087 = vpop.f32.mrf.mxu0
  %v3088 = vadd.f32 %v3039, %v3087
  %v3089 = vpop.f32.mrf.mxu0
  %3090 = vdwg.mxu0
  %3091 = vmatprep.subr.bf16.mxu0 0
  %3092 = vmatpush1.bf16.msra.mxu0 %v2157
  %3093 = vmatprep.subr.bf16.mxu0 0
  %3094 = vmatpush1.bf16.msra.mxu0 %v2156
  %3095 = vmatprep.subr.bf16.mxu0 0
  %3096 = vmatpush1.bf16.msra.mxu0 %v2155
  %3097 = vmatprep.subr.bf16.mxu0 0
  %3098 = vmatpush1.bf16.msra.mxu0 %v2154
  %3099 = vmatprep.subr.bf16.mxu0 0
  %3100 = vmatpush1.bf16.msra.mxu0 %v2153
  %3101 = vmatprep.subr.bf16.mxu0 0
  %3102 = vmatpush1.bf16.msra.mxu0 %v2152
  %3103 = vmatprep.subr.bf16.mxu0 0
  %3104 = vmatpush1.bf16.msra.mxu0 %v2151
  %3105 = vmatprep.subr.bf16.mxu0 0
  %3106 = vmatpush1.bf16.msra.mxu0 %v2150
  %3107 = vmatprep.subr.bf16.mxu0 0
  %3108 = vmatpush2.bf16.msra.mxu0 %v2165
  %3109 = vmatprep.subr.bf16.mxu0 0
  %3110 = vmatpush2.bf16.msra.mxu0 %v2164
  %3111 = vmatprep.subr.bf16.mxu0 0
  %3112 = vmatpush2.bf16.msra.mxu0 %v2163
  %3113 = vmatprep.subr.bf16.mxu0 0
  %3114 = vmatpush2.bf16.msra.mxu0 %v2162
  %3115 = vmatprep.subr.bf16.mxu0 0
  %3116 = vmatpush2.bf16.msra.mxu0 %v2161
  %3117 = vmatprep.subr.bf16.mxu0 0
  %3118 = vmatpush2.bf16.msra.mxu0 %v2160
  %3119 = vmatprep.subr.bf16.mxu0 0
  %3120 = vmatpush2.bf16.msra.mxu0 %v2159
  %3121 = vmatprep.subr.bf16.mxu0 0
  %3122 = vmatpush2.bf16.msra.mxu0 %v2158
  %3123 = vmatprep.mubr.bf16.mxu0 %v817
  %3124 = vmatmul.mubr.bf16.gmra.mxu0 %v816
  %v3125 = vpop.f32.mrf.mxu0
  %v3126 = vadd.f32 %v3077, %v3125
  %v3127 = vpop.f32.mrf.mxu0
  %v3128 = vpop.f32.mrf.mxu0
  %v3129 = vadd.f32 %v3080, %v3128
  %v3130 = vpop.f32.mrf.mxu0
  %3131 = vmatprep.mubr.bf16.mxu0 %v849
  %3132 = vmatmul.mubr.bf16.gmra.mxu0 %v848
  %v3133 = vpop.f32.mrf.mxu0
  %v3134 = vadd.f32 %v3085, %v3133
  %v3135 = vpop.f32.mrf.mxu0
  %v3136 = vpop.f32.mrf.mxu0
  %v3137 = vadd.f32 %v3088, %v3136
  %v3138 = vpop.f32.mrf.mxu0
  %3139 = vdwg.mxu0
  %3140 = vmatprep.subr.bf16.mxu0 0
  %3141 = vmatpush1.bf16.msra.mxu0 %v2173
  %3142 = vmatprep.subr.bf16.mxu0 0
  %3143 = vmatpush1.bf16.msra.mxu0 %v2172
  %3144 = vmatprep.subr.bf16.mxu0 0
  %3145 = vmatpush1.bf16.msra.mxu0 %v2171
  %3146 = vmatprep.subr.bf16.mxu0 0
  %3147 = vmatpush1.bf16.msra.mxu0 %v2170
  %3148 = vmatprep.subr.bf16.mxu0 0
  %3149 = vmatpush1.bf16.msra.mxu0 %v2169
  %3150 = vmatprep.subr.bf16.mxu0 0
  %3151 = vmatpush1.bf16.msra.mxu0 %v2168
  %3152 = vmatprep.subr.bf16.mxu0 0
  %3153 = vmatpush1.bf16.msra.mxu0 %v2167
  %3154 = vmatprep.subr.bf16.mxu0 0
  %3155 = vmatpush1.bf16.msra.mxu0 %v2166
  %3156 = vmatprep.subr.bf16.mxu0 0
  %3157 = vmatpush2.bf16.msra.mxu0 %v2181
  %3158 = vmatprep.subr.bf16.mxu0 0
  %3159 = vmatpush2.bf16.msra.mxu0 %v2180
  %3160 = vmatprep.subr.bf16.mxu0 0
  %3161 = vmatpush2.bf16.msra.mxu0 %v2179
  %3162 = vmatprep.subr.bf16.mxu0 0
  %3163 = vmatpush2.bf16.msra.mxu0 %v2178
  %3164 = vmatprep.subr.bf16.mxu0 0
  %3165 = vmatpush2.bf16.msra.mxu0 %v2177
  %3166 = vmatprep.subr.bf16.mxu0 0
  %3167 = vmatpush2.bf16.msra.mxu0 %v2176
  %3168 = vmatprep.subr.bf16.mxu0 0
  %3169 = vmatpush2.bf16.msra.mxu0 %v2175
  %3170 = vmatprep.subr.bf16.mxu0 0
  %3171 = vmatpush2.bf16.msra.mxu0 %v2174
  %3172 = vmatprep.mubr.bf16.mxu0 %v819
  %3173 = vmatmul.mubr.bf16.gmra.mxu0 %v818
  %v3174 = vpop.f32.mrf.mxu0
  %v3175 = vadd.f32 %v3126, %v3174
  %v3176 = vpop.f32.mrf.mxu0
  %v3177 = vpop.f32.mrf.mxu0
  %v3178 = vadd.f32 %v3129, %v3177
  %v3179 = vpop.f32.mrf.mxu0
  %3180 = vmatprep.mubr.bf16.mxu0 %v851
  %3181 = vmatmul.mubr.bf16.gmra.mxu0 %v850
  %v3182 = vpop.f32.mrf.mxu0
  %v3183 = vadd.f32 %v3134, %v3182
  %v3184 = vpop.f32.mrf.mxu0
  %v3185 = vpop.f32.mrf.mxu0
  %v3186 = vadd.f32 %v3137, %v3185
  %v3187 = vpop.f32.mrf.mxu0
  %3188 = vdwg.mxu0
  %3189 = vmatprep.subr.bf16.mxu0 0
  %3190 = vmatpush1.bf16.msra.mxu0 %v2189
  %3191 = vmatprep.subr.bf16.mxu0 0
  %3192 = vmatpush1.bf16.msra.mxu0 %v2188
  %3193 = vmatprep.subr.bf16.mxu0 0
  %3194 = vmatpush1.bf16.msra.mxu0 %v2187
  %3195 = vmatprep.subr.bf16.mxu0 0
  %3196 = vmatpush1.bf16.msra.mxu0 %v2186
  %3197 = vmatprep.subr.bf16.mxu0 0
  %3198 = vmatpush1.bf16.msra.mxu0 %v2185
  %3199 = vmatprep.subr.bf16.mxu0 0
  %3200 = vmatpush1.bf16.msra.mxu0 %v2184
  %3201 = vmatprep.subr.bf16.mxu0 0
  %3202 = vmatpush1.bf16.msra.mxu0 %v2183
  %3203 = vmatprep.subr.bf16.mxu0 0
  %3204 = vmatpush1.bf16.msra.mxu0 %v2182
  %3205 = vmatprep.subr.bf16.mxu0 0
  %3206 = vmatpush2.bf16.msra.mxu0 %v2197
  %3207 = vmatprep.subr.bf16.mxu0 0
  %3208 = vmatpush2.bf16.msra.mxu0 %v2196
  %3209 = vmatprep.subr.bf16.mxu0 0
  %3210 = vmatpush2.bf16.msra.mxu0 %v2195
  %3211 = vmatprep.subr.bf16.mxu0 0
  %3212 = vmatpush2.bf16.msra.mxu0 %v2194
  %3213 = vmatprep.subr.bf16.mxu0 0
  %3214 = vmatpush2.bf16.msra.mxu0 %v2193
  %3215 = vmatprep.subr.bf16.mxu0 0
  %3216 = vmatpush2.bf16.msra.mxu0 %v2192
  %3217 = vmatprep.subr.bf16.mxu0 0
  %3218 = vmatpush2.bf16.msra.mxu0 %v2191
  %3219 = vmatprep.subr.bf16.mxu0 0
  %3220 = vmatpush2.bf16.msra.mxu0 %v2190
  %3221 = vmatprep.mubr.bf16.mxu0 %v821
  %3222 = vmatmul.mubr.bf16.gmra.mxu0 %v820
  %v3223 = vpop.f32.mrf.mxu0
  %v3224 = vadd.f32 %v3175, %v3223
  %v3225 = vpop.f32.mrf.mxu0
  %v3226 = vpop.f32.mrf.mxu0
  %v3227 = vadd.f32 %v3178, %v3226
  %v3228 = vpop.f32.mrf.mxu0
  %3229 = vmatprep.mubr.bf16.mxu0 %v853
  %3230 = vmatmul.mubr.bf16.gmra.mxu0 %v852
  %v3231 = vpop.f32.mrf.mxu0
  %v3232 = vadd.f32 %v3183, %v3231
  %v3233 = vpop.f32.mrf.mxu0
  %v3234 = vpop.f32.mrf.mxu0
  %v3235 = vadd.f32 %v3186, %v3234
  %v3236 = vpop.f32.mrf.mxu0
  %3237 = vdwg.mxu0
  %3238 = vst [vmem:[%s3] sm:$0xff] %v3224
  %3239 = vst [vmem:[%s3 + $0x8] sm:$0xff] %v3227
  %3240 = vst [vmem:[%s3 + $0x10] sm:$0xff] %v3232
  %3241 = vst [vmem:[%s3 + $0x18] sm:$0xff] %v3235
  // Predicated region
  $region14: #{patch_discriminator_forward.13} parent=0 // pred_check
    _
  $region15: #{patch_discriminator_forward.13} parent=0 // pred_check_branch
    %3243 = sbr.rel (0) target = $region17
  $region16: #{patch_discriminator_forward.13} parent=0 // pred_region
    _
  $region17: #{patch_discriminator_forward.13} parent=0 // pred_fallthru
    _
  // Predicated region
  $region18: #{patch_discriminator_forward.13} parent=0 // pred_check
    _
  $region19: #{patch_discriminator_forward.13} parent=0 // pred_check_branch
    %3245 = sbr.rel (0) target = $region21
  $region20: #{patch_discriminator_forward.13} parent=0 // pred_region
    _
  $region21: #{patch_discriminator_forward.13} parent=0 // pred_fallthru
    _

</llo_original>
